<compile_context>
chip_gen: v5e
topology: v5e:2x2
jax: 0.10.0
libtpu: 0.0.40
codegen_flags: <defaults>
</compile_context>

<pallas_src>
import functools

import jax
import jax.numpy as jnp
from jax.experimental import pallas as pl
from jax.experimental.pallas import tpu as pltpu

KS = 3          # kernel size
BN_EPS = 1e-5
MATMUL_DTYPE = jnp.float32   # jnp.bfloat16 recommended on v6e/v7x at real sizes

# VMEM budget used to choose the row tile: conservative enough for v7x's 64 MiB
# physical VMEM (with headroom); v5e/v6e (128 MiB) can raise it for bigger tiles.
VMEM_TILE_BUDGET_BYTES = 40 * 1024 * 1024


def _round_up(x, m):
    return (x + m - 1) // m * m


def _conv_tile(x_ref, w_ref, *, TR, Wp):
    """3x3 conv of one halo row window as 9 accumulated MXU matmuls.

    x_ref : (C_in, (TR+3)*Wp)  padded rows [row0, row0+TR+3) of one image,
                               width zero-padded to Wp (multiple of 128), flattened.
    w_ref : (9, C_out, C_in)   per-tap weights, tap = kh*3 + kw.
    Returns (C_out, TR*Wp) f32.  Columns with (j % Wp) >= W are junk (zero pad /
    row-wrap); the callers mask or crop them.
    """
    C_out = w_ref.shape[1]
    acc = jnp.zeros((C_out, TR * Wp), jnp.float32)
    for kh in range(KS):
        for kw in range(KS):
            tap = kh * KS + kw
            # Static row (kh*Wp) + column (kw) offset: a shifted lane-dense view;
            # off-by-1/2 lane offsets lower to cheap in-VMEM shifts, not masked
            # staging stores.  End index (TR+2)*Wp + kw stays in bounds thanks to
            # the 1 slack row included in the window.
            slab = x_ref[:, pl.ds(kh * Wp + kw, TR * Wp)]        # (C_in, TR*Wp)
            acc = acc + jnp.dot(w_ref[tap], slab,
                                preferred_element_type=jnp.float32)
    return acc


def _stats_kernel(x_ref, w_ref, sum_ref, sq_ref, *, TR, Wp, W_valid):
    """Phase 1: conv for this tile -> per-channel partial sum / sum-of-squares."""
    r = pl.program_id(1)
    conv = _conv_tile(x_ref, w_ref, TR=TR, Wp=Wp)                 # (C_out, TR*Wp)

    # Zero the lane-padding columns so they do not pollute the BN statistics.
    col = jax.lax.broadcasted_iota(jnp.int32, conv.shape, 1) % Wp
    conv = jnp.where(col < W_valid, conv, 0.0)

    @pl.when(r == 0)
    def _init():
        sum_ref[...] = jnp.zeros_like(sum_ref)
        sq_ref[...] = jnp.zeros_like(sq_ref)

    sum_ref[...] += jnp.sum(conv, axis=1, keepdims=True)
    sq_ref[...] += jnp.sum(conv * conv, axis=1, keepdims=True)


def _bn_apply_kernel(x_ref, w_ref, scale_ref, shift_ref, y_ref, *, TR, Wp):
    """Phase 2: recompute conv, apply BN affine (act = Identity), write y."""
    conv = _conv_tile(x_ref, w_ref, TR=TR, Wp=Wp)                 # (C_out, TR*Wp)
    y_ref[...] = (conv * scale_ref[...] + shift_ref[...]).astype(y_ref.dtype)


def _tile_vmem_bytes(tr, Wp, C_in, C_out, itemsize):
    """Double-buffered working set of one grid step (both phases, upper bound)."""
    x_tile = C_in * (tr + 3) * Wp * itemsize
    y_tile = C_out * tr * Wp * 4               # f32 output block (phase 2)
    acc = C_out * tr * Wp * 4                  # f32 conv accumulator (vregs/VMEM)
    w_bytes = KS * KS * C_out * C_in * itemsize
    return 2 * (x_tile + w_bytes) + 2 * y_tile + acc


def _pick_row_tile(H, Wp, C_in, C_out, itemsize, budget_bytes):
    """LARGEST divisor of H whose double-buffered working set fits the budget."""
    best = 1
    for tr in range(1, H + 1):
        if H % tr:
            continue
        if _tile_vmem_bytes(tr, Wp, C_in, C_out, itemsize) + (1 << 20) <= budget_bytes:
            best = tr
    return best


def conv_block_forward(x_nchw, w_oihw, b, gamma, beta, *, row_tile=None,
                       vmem_budget_bytes=VMEM_TILE_BUDGET_BYTES):
    """ConvBlock forward: Conv2d(3x3,s1,p1) -> BatchNorm2d (batch stats) -> Identity.

    x_nchw: (N, C_in, H, W) f32; w_oihw: (C_out, C_in, 3, 3); b/gamma/beta: (C_out,).
    Returns (N, C_out, H, W) f32.  The conv bias `b` is accepted for API parity
    but is mathematically cancelled by the BN mean subtraction, so never applied.
    """
    del b  # per-channel constant; cancelled exactly by training-mode BatchNorm

    N, C_in, H, W = x_nchw.shape
    C_out = w_oihw.shape[0]
    Wp = _round_up(W + 2, 128)                         # lane-dense padded width
    itemsize = jnp.dtype(MATMUL_DTYPE).itemsize

    TR = row_tile if row_tile is not None else _pick_row_tile(
        H, Wp, C_in, C_out, itemsize, vmem_budget_bytes)
    assert H % TR == 0
    R = H // TR

    # Layout glue (one fused pass under jit, NO transpose):
    #   rows padded (1, 2): 1-px conv halo top/bottom + 1 slack row (keeps the
    #     kh=2, kw>0 shifted slab slice in bounds),
    #   cols padded to Wp:  lane-dense rows,
    # then overlapping (TR+3)-row halo windows, flattened over (rows, Wp).
    x_pad = jnp.pad(x_nchw.astype(MATMUL_DTYPE),
                    ((0, 0), (0, 0), (1, 2), (1, Wp - W - 1)))     # (N,C,H+3,Wp)
    x_win = jnp.stack(
        [x_pad[:, :, r * TR:r * TR + TR + 3, :] for r in range(R)], axis=1)
    x_win = x_win.reshape(N, R, C_in, (TR + 3) * Wp)               # (N,R,C,(TR+3)Wp)

    # Per-tap weights (9, C_out, C_in), tap = kh*3 + kw.
    w_taps = jnp.transpose(w_oihw, (2, 3, 0, 1)).reshape(KS * KS, C_out, C_in)
    w_taps = w_taps.astype(MATMUL_DTYPE)

    # VMEM limit derived from the actual buffer sizes (+ headroom), not a constant.
    vmem_limit = int(max(_tile_vmem_bytes(TR, Wp, C_in, C_out, itemsize) + (8 << 20),
                         32 << 20))

    x_spec = pl.BlockSpec((None, None, C_in, (TR + 3) * Wp),
                          lambda n, r: (n, r, 0, 0))
    w_spec = pl.BlockSpec((KS * KS, C_out, C_in), lambda n, r: (0, 0, 0))

    # ---- Phase 1: BN batch statistics only (no conv activation writeback). ----
    psum, psq = pl.pallas_call(
        functools.partial(_stats_kernel, TR=TR, Wp=Wp, W_valid=W),
        out_shape=(jax.ShapeDtypeStruct((N, C_out, 1), jnp.float32),
                   jax.ShapeDtypeStruct((N, C_out, 1), jnp.float32)),
        grid=(N, R),
        in_specs=[x_spec, w_spec],
        out_specs=(pl.BlockSpec((None, C_out, 1), lambda n, r: (n, 0, 0)),
                   pl.BlockSpec((None, C_out, 1), lambda n, r: (n, 0, 0))),
        compiler_params=pltpu.CompilerParams(
            # TODO(synk): on v7x, try pltpu.CORE_PARALLEL on the batch axis (or
            # pl.core_map over a TensorCore mesh) if one TC profiles as idle.
            dimension_semantics=("parallel", "arbitrary"),
            vmem_limit_bytes=vmem_limit),
    )(x_win, w_taps)

    # Reduce per-image partials -> GLOBAL batch stats, fold BN into one affine.
    # TODO(synk): E[x^2]-E[x]^2 in f32 can cancel catastrophically at production
    # N*H*W; switch to a centered second stats pass (or Kahan) there.
    cnt = jnp.float32(N * H * W)
    mean = jnp.sum(psum[:, :, 0], axis=0) / cnt                    # (C_out,)
    var = jnp.maximum(jnp.sum(psq[:, :, 0], axis=0) / cnt - mean * mean, 0.0)
    inv_std = jax.lax.rsqrt(var + BN_EPS)
    scale = (gamma * inv_std).astype(jnp.float32).reshape(C_out, 1)
    shift = (beta - mean * gamma * inv_std).astype(jnp.float32).reshape(C_out, 1)

    # ---- Phase 2: recompute conv per tile and write y directly. ----
    y_flat = pl.pallas_call(
        functools.partial(_bn_apply_kernel, TR=TR, Wp=Wp),
        out_shape=jax.ShapeDtypeStruct((N, C_out, H * Wp), jnp.float32),
        grid=(N, R),
        in_specs=[x_spec, w_spec,
                  pl.BlockSpec((C_out, 1), lambda n, r: (0, 0)),
                  pl.BlockSpec((C_out, 1), lambda n, r: (0, 0))],
        out_specs=pl.BlockSpec((None, C_out, TR * Wp), lambda n, r: (n, 0, r)),
        compiler_params=pltpu.CompilerParams(
            dimension_semantics=("parallel", "parallel"),
            vmem_limit_bytes=vmem_limit),
    )(x_win, w_taps, scale, shift)

    # Crop the lane padding: free reshape + one strided crop pass under jit.
    return y_flat.reshape(N, C_out, H, Wp)[:, :, :, :W]


def reference_forward(x_nchw, w_oihw, b, gamma, beta):
    """Pure-JAX reference (conv with bias + training-mode BN + identity act)."""
    y = jax.lax.conv_general_dilated(
        x_nchw, w_oihw, window_strides=(1, 1), padding=((1, 1), (1, 1)),
        dimension_numbers=("NCHW", "OIHW", "NCHW"))
    y = y + b[None, :, None, None]
    mean = jnp.mean(y, axis=(0, 2, 3), keepdims=True)
    var = jnp.mean((y - mean) ** 2, axis=(0, 2, 3), keepdims=True)
    yhat = (y - mean) / jnp.sqrt(var + BN_EPS)
    return yhat * gamma[None, :, None, None] + beta[None, :, None, None]


if __name__ == "__main__":
    # Small shapes consistent with the module: batch=2, in_c=4, out_c=8, 16x16.
    N, C_in, C_out, H, W = 2, 4, 8, 16, 16

    key = jax.random.PRNGKey(0)
    kx, kw, kb, kg, kbe = jax.random.split(key, 5)

    x = jax.random.normal(kx, (N, C_in, H, W), dtype=jnp.float32)
    # Deterministic synthetic parameters (not a checkpoint load).
    w = 0.1 * jax.random.normal(kw, (C_out, C_in, KS, KS), dtype=jnp.float32)
    b = 0.1 * jax.random.normal(kb, (C_out,), dtype=jnp.float32)
    gamma = 1.0 + 0.1 * jax.random.normal(kg, (C_out,), dtype=jnp.float32)
    beta = 0.1 * jax.random.normal(kbe, (C_out,), dtype=jnp.float32)

    fwd = jax.jit(conv_block_forward)
    out = jax.block_until_ready(fwd(x, w, b, gamma, beta))

    ref = jax.block_until_ready(reference_forward(x, w, b, gamma, beta))
    assert out.shape == (N, C_out, H, W)
    assert jnp.allclose(out, ref, atol=1e-4, rtol=1e-4), "mismatch vs reference"

    print("KERNEL_OK")
</pallas_src>

<mosaic_0001>
module attributes {stable_mosaic.version = 11 : i64} {
  func.func @_stats_kernel(%arg0: i32, %arg1: i32, %arg2: memref<1x1x4x2432xf32, #tpu.memory_space<vmem>>, %arg3: memref<9x8x4xf32, #tpu.memory_space<vmem>>, %arg4: memref<1x8x1xf32, #tpu.memory_space<vmem>>, %arg5: memref<1x8x1xf32, #tpu.memory_space<vmem>>) attributes {dimension_semantics = [#tpu.dimension_semantics<parallel>, #tpu.dimension_semantics<arbitrary>], iteration_bounds = array<i64: 2, 1>, scalar_prefetch = 0 : i64, scratch_operands = 0 : i64, tpu.core_type = #tpu.core_type<tc>, window_params = [{transform_indices = @transform_0, window_bounds = array<i64: 1, 1, 4, 2432>}, {pipeline_mode = #tpu.pipeline_mode<synchronous>, transform_indices = @transform_1, window_bounds = array<i64: 9, 8, 4>}, {transform_indices = @transform_2, window_bounds = array<i64: 1, 8, 1>}, {transform_indices = @transform_3, window_bounds = array<i64: 1, 8, 1>}]} {
    %cst = arith.constant 0.000000e+00 : f32
    %0 = vector.broadcast %cst : f32 to vector<8x2048xf32>
    %c0 = arith.constant 0 : index
    %c0_0 = arith.constant 0 : index
    %c0_1 = arith.constant 0 : index
    %c0_2 = arith.constant 0 : index
    %1 = vector.load %arg2[%c0, %c0_0, %c0_1, %c0_2] : memref<1x1x4x2432xf32, #tpu.memory_space<vmem>>, vector<1x1x4x2048xf32>
    %2 = vector.shape_cast %1 : vector<1x1x4x2048xf32> to vector<4x2048xf32>
    %c0_3 = arith.constant 0 : index
    %c0_4 = arith.constant 0 : index
    %c0_5 = arith.constant 0 : index
    %3 = vector.load %arg3[%c0_3, %c0_4, %c0_5] : memref<9x8x4xf32, #tpu.memory_space<vmem>>, vector<1x8x4xf32>
    %4 = vector.shape_cast %3 : vector<1x8x4xf32> to vector<8x4xf32>
    %cst_6 = arith.constant dense<0.000000e+00> : vector<8x2048xf32>
    %5 = tpu.matmul %4, %2, %cst_6 {dimension_numbers = #tpu.dot_dimension_numbers<[1], [0], [0], [1], [0, 0, 1, 1], [], []>} : vector<8x4xf32>, vector<4x2048xf32>, vector<8x2048xf32> -> vector<8x2048xf32>
    %6 = arith.addf %0, %5 : vector<8x2048xf32>
    %c0_7 = arith.constant 0 : index
    %c0_8 = arith.constant 0 : index
    %c0_9 = arith.constant 0 : index
    %c1 = arith.constant 1 : index
    %7 = vector.load %arg2[%c0_7, %c0_8, %c0_9, %c1] : memref<1x1x4x2432xf32, #tpu.memory_space<vmem>>, vector<1x1x4x2048xf32>
    %8 = vector.shape_cast %7 : vector<1x1x4x2048xf32> to vector<4x2048xf32>
    %c1_10 = arith.constant 1 : index
    %c0_11 = arith.constant 0 : index
    %c0_12 = arith.constant 0 : index
    %9 = vector.load %arg3[%c1_10, %c0_11, %c0_12] : memref<9x8x4xf32, #tpu.memory_space<vmem>>, vector<1x8x4xf32>
    %10 = vector.shape_cast %9 : vector<1x8x4xf32> to vector<8x4xf32>
    %cst_13 = arith.constant dense<0.000000e+00> : vector<8x2048xf32>
    %11 = tpu.matmul %10, %8, %cst_13 {dimension_numbers = #tpu.dot_dimension_numbers<[1], [0], [0], [1], [0, 0, 1, 1], [], []>} : vector<8x4xf32>, vector<4x2048xf32>, vector<8x2048xf32> -> vector<8x2048xf32>
    %12 = arith.addf %6, %11 : vector<8x2048xf32>
    %c0_14 = arith.constant 0 : index
    %c0_15 = arith.constant 0 : index
    %c0_16 = arith.constant 0 : index
    %c2 = arith.constant 2 : index
    %13 = vector.load %arg2[%c0_14, %c0_15, %c0_16, %c2] : memref<1x1x4x2432xf32, #tpu.memory_space<vmem>>, vector<1x1x4x2048xf32>
    %14 = vector.shape_cast %13 : vector<1x1x4x2048xf32> to vector<4x2048xf32>
    %c2_17 = arith.constant 2 : index
    %c0_18 = arith.constant 0 : index
    %c0_19 = arith.constant 0 : index
    %15 = vector.load %arg3[%c2_17, %c0_18, %c0_19] : memref<9x8x4xf32, #tpu.memory_space<vmem>>, vector<1x8x4xf32>
    %16 = vector.shape_cast %15 : vector<1x8x4xf32> to vector<8x4xf32>
    %cst_20 = arith.constant dense<0.000000e+00> : vector<8x2048xf32>
    %17 = tpu.matmul %16, %14, %cst_20 {dimension_numbers = #tpu.dot_dimension_numbers<[1], [0], [0], [1], [0, 0, 1, 1], [], []>} : vector<8x4xf32>, vector<4x2048xf32>, vector<8x2048xf32> -> vector<8x2048xf32>
    %18 = arith.addf %12, %17 : vector<8x2048xf32>
    %c0_21 = arith.constant 0 : index
    %c0_22 = arith.constant 0 : index
    %c0_23 = arith.constant 0 : index
    %c128 = arith.constant 128 : index
    %19 = vector.load %arg2[%c0_21, %c0_22, %c0_23, %c128] : memref<1x1x4x2432xf32, #tpu.memory_space<vmem>>, vector<1x1x4x2048xf32>
    %20 = vector.shape_cast %19 : vector<1x1x4x2048xf32> to vector<4x2048xf32>
    %c3 = arith.constant 3 : index
    %c0_24 = arith.constant 0 : index
    %c0_25 = arith.constant 0 : index
    %21 = vector.load %arg3[%c3, %c0_24, %c0_25] : memref<9x8x4xf32, #tpu.memory_space<vmem>>, vector<1x8x4xf32>
    %22 = vector.shape_cast %21 : vector<1x8x4xf32> to vector<8x4xf32>
    %cst_26 = arith.constant dense<0.000000e+00> : vector<8x2048xf32>
    %23 = tpu.matmul %22, %20, %cst_26 {dimension_numbers = #tpu.dot_dimension_numbers<[1], [0], [0], [1], [0, 0, 1, 1], [], []>} : vector<8x4xf32>, vector<4x2048xf32>, vector<8x2048xf32> -> vector<8x2048xf32>
    %24 = arith.addf %18, %23 : vector<8x2048xf32>
    %c0_27 = arith.constant 0 : index
    %c0_28 = arith.constant 0 : index
    %c0_29 = arith.constant 0 : index
    %c129 = arith.constant 129 : index
    %25 = vector.load %arg2[%c0_27, %c0_28, %c0_29, %c129] : memref<1x1x4x2432xf32, #tpu.memory_space<vmem>>, vector<1x1x4x2048xf32>
    %26 = vector.shape_cast %25 : vector<1x1x4x2048xf32> to vector<4x2048xf32>
    %c4 = arith.constant 4 : index
    %c0_30 = arith.constant 0 : index
    %c0_31 = arith.constant 0 : index
    %27 = vector.load %arg3[%c4, %c0_30, %c0_31] : memref<9x8x4xf32, #tpu.memory_space<vmem>>, vector<1x8x4xf32>
    %28 = vector.shape_cast %27 : vector<1x8x4xf32> to vector<8x4xf32>
    %cst_32 = arith.constant dense<0.000000e+00> : vector<8x2048xf32>
    %29 = tpu.matmul %28, %26, %cst_32 {dimension_numbers = #tpu.dot_dimension_numbers<[1], [0], [0], [1], [0, 0, 1, 1], [], []>} : vector<8x4xf32>, vector<4x2048xf32>, vector<8x2048xf32> -> vector<8x2048xf32>
    %30 = arith.addf %24, %29 : vector<8x2048xf32>
    %c0_33 = arith.constant 0 : index
    %c0_34 = arith.constant 0 : index
    %c0_35 = arith.constant 0 : index
    %c130 = arith.constant 130 : index
    %31 = vector.load %arg2[%c0_33, %c0_34, %c0_35, %c130] : memref<1x1x4x2432xf32, #tpu.memory_space<vmem>>, vector<1x1x4x2048xf32>
    %32 = vector.shape_cast %31 : vector<1x1x4x2048xf32> to vector<4x2048xf32>
    %c5 = arith.constant 5 : index
    %c0_36 = arith.constant 0 : index
    %c0_37 = arith.constant 0 : index
    %33 = vector.load %arg3[%c5, %c0_36, %c0_37] : memref<9x8x4xf32, #tpu.memory_space<vmem>>, vector<1x8x4xf32>
    %34 = vector.shape_cast %33 : vector<1x8x4xf32> to vector<8x4xf32>
    %cst_38 = arith.constant dense<0.000000e+00> : vector<8x2048xf32>
    %35 = tpu.matmul %34, %32, %cst_38 {dimension_numbers = #tpu.dot_dimension_numbers<[1], [0], [0], [1], [0, 0, 1, 1], [], []>} : vector<8x4xf32>, vector<4x2048xf32>, vector<8x2048xf32> -> vector<8x2048xf32>
    %36 = arith.addf %30, %35 : vector<8x2048xf32>
    %c0_39 = arith.constant 0 : index
    %c0_40 = arith.constant 0 : index
    %c0_41 = arith.constant 0 : index
    %c256 = arith.constant 256 : index
    %37 = vector.load %arg2[%c0_39, %c0_40, %c0_41, %c256] : memref<1x1x4x2432xf32, #tpu.memory_space<vmem>>, vector<1x1x4x2048xf32>
    %38 = vector.shape_cast %37 : vector<1x1x4x2048xf32> to vector<4x2048xf32>
    %c6 = arith.constant 6 : index
    %c0_42 = arith.constant 0 : index
    %c0_43 = arith.constant 0 : index
    %39 = vector.load %arg3[%c6, %c0_42, %c0_43] : memref<9x8x4xf32, #tpu.memory_space<vmem>>, vector<1x8x4xf32>
    %40 = vector.shape_cast %39 : vector<1x8x4xf32> to vector<8x4xf32>
    %cst_44 = arith.constant dense<0.000000e+00> : vector<8x2048xf32>
    %41 = tpu.matmul %40, %38, %cst_44 {dimension_numbers = #tpu.dot_dimension_numbers<[1], [0], [0], [1], [0, 0, 1, 1], [], []>} : vector<8x4xf32>, vector<4x2048xf32>, vector<8x2048xf32> -> vector<8x2048xf32>
    %42 = arith.addf %36, %41 : vector<8x2048xf32>
    %c0_45 = arith.constant 0 : index
    %c0_46 = arith.constant 0 : index
    %c0_47 = arith.constant 0 : index
    %c257 = arith.constant 257 : index
    %43 = vector.load %arg2[%c0_45, %c0_46, %c0_47, %c257] : memref<1x1x4x2432xf32, #tpu.memory_space<vmem>>, vector<1x1x4x2048xf32>
    %44 = vector.shape_cast %43 : vector<1x1x4x2048xf32> to vector<4x2048xf32>
    %c7 = arith.constant 7 : index
    %c0_48 = arith.constant 0 : index
    %c0_49 = arith.constant 0 : index
    %45 = vector.load %arg3[%c7, %c0_48, %c0_49] : memref<9x8x4xf32, #tpu.memory_space<vmem>>, vector<1x8x4xf32>
    %46 = vector.shape_cast %45 : vector<1x8x4xf32> to vector<8x4xf32>
    %cst_50 = arith.constant dense<0.000000e+00> : vector<8x2048xf32>
    %47 = tpu.matmul %46, %44, %cst_50 {dimension_numbers = #tpu.dot_dimension_numbers<[1], [0], [0], [1], [0, 0, 1, 1], [], []>} : vector<8x4xf32>, vector<4x2048xf32>, vector<8x2048xf32> -> vector<8x2048xf32>
    %48 = arith.addf %42, %47 : vector<8x2048xf32>
    %c0_51 = arith.constant 0 : index
    %c0_52 = arith.constant 0 : index
    %c0_53 = arith.constant 0 : index
    %c258 = arith.constant 258 : index
    %49 = vector.load %arg2[%c0_51, %c0_52, %c0_53, %c258] : memref<1x1x4x2432xf32, #tpu.memory_space<vmem>>, vector<1x1x4x2048xf32>
    %50 = vector.shape_cast %49 : vector<1x1x4x2048xf32> to vector<4x2048xf32>
    %c8 = arith.constant 8 : index
    %c0_54 = arith.constant 0 : index
    %c0_55 = arith.constant 0 : index
    %51 = vector.load %arg3[%c8, %c0_54, %c0_55] : memref<9x8x4xf32, #tpu.memory_space<vmem>>, vector<1x8x4xf32>
    %52 = vector.shape_cast %51 : vector<1x8x4xf32> to vector<8x4xf32>
    %cst_56 = arith.constant dense<0.000000e+00> : vector<8x2048xf32>
    %53 = tpu.matmul %52, %50, %cst_56 {dimension_numbers = #tpu.dot_dimension_numbers<[1], [0], [0], [1], [0, 0, 1, 1], [], []>} : vector<8x4xf32>, vector<4x2048xf32>, vector<8x2048xf32> -> vector<8x2048xf32>
    %54 = arith.addf %48, %53 : vector<8x2048xf32>
    %55 = tpu.iota {dimensions = array<i32: 1>} : vector<8x2048xi32>
    %c128_i32 = arith.constant 128 : i32
    %c0_i32 = arith.constant 0 : i32
    %56 = arith.cmpi eq, %c128_i32, %c0_i32 : i32
    %c1_i32 = arith.constant 1 : i32
    %57 = arith.select %56, %c1_i32, %c128_i32 : i32
    %58 = vector.broadcast %57 : i32 to vector<8x2048xi32>
    %59 = arith.remsi %55, %58 : vector<8x2048xi32>
    %c0_i32_57 = arith.constant 0 : i32
    %60 = vector.broadcast %c0_i32_57 : i32 to vector<8x2048xi32>
    %61 = arith.cmpi ne, %59, %60 : vector<8x2048xi32>
    %c0_i32_58 = arith.constant 0 : i32
    %62 = vector.broadcast %c0_i32_58 : i32 to vector<8x2048xi32>
    %63 = arith.cmpi slt, %59, %62 : vector<8x2048xi32>
    %c0_i32_59 = arith.constant 0 : i32
    %64 = arith.cmpi slt, %57, %c0_i32_59 : i32
    %65 = vector.broadcast %64 : i1 to vector<8x2048xi1>
    %66 = vector.broadcast %65 : vector<8x2048xi1> to vector<8x2048xi1>
    %67 = arith.xori %63, %66 : vector<8x2048xi1>
    %68 = arith.andi %67, %61 : vector<8x2048xi1>
    %69 = vector.broadcast %57 : i32 to vector<8x2048xi32>
    %70 = arith.addi %59, %69 : vector<8x2048xi32>
    %71 = arith.select %68, %70, %59 : vector<8x2048xi1>, vector<8x2048xi32>
    %c16_i32 = arith.constant 16 : i32
    %72 = vector.broadcast %c16_i32 : i32 to vector<8x2048xi32>
    %73 = arith.cmpi slt, %71, %72 : vector<8x2048xi32>
    %cst_60 = arith.constant 0.000000e+00 : f32
    %74 = vector.broadcast %cst_60 : f32 to vector<8x2048xf32>
    %75 = arith.select %73, %54, %74 : vector<8x2048xi1>, vector<8x2048xf32>
    %c0_i32_61 = arith.constant 0 : i32
    %76 = arith.cmpi eq, %arg1, %c0_i32_61 : i32
    %77 = arith.extui %76 : i1 to i32
    %c0_i32_62 = arith.constant 0 : i32
    %78 = arith.cmpi ne, %77, %c0_i32_62 : i32
    scf.if %78 {
      %cst_77 = arith.constant 0.000000e+00 : f32
      %96 = vector.broadcast %cst_77 : f32 to vector<8x1xf32>
      %c0_78 = arith.constant 0 : index
      %c0_79 = arith.constant 0 : index
      %c0_80 = arith.constant 0 : index
      %97 = vector.load %arg4[%c0_78, %c0_79, %c0_80] : memref<1x8x1xf32, #tpu.memory_space<vmem>>, vector<1x8x1xf32>
      %98 = vector.shape_cast %97 : vector<1x8x1xf32> to vector<8x1xf32>
      %99 = vector.shape_cast %96 : vector<8x1xf32> to vector<1x8x1xf32>
      tpu.vector_store %arg4[%c0_78, %c0_79, %c0_80], %99 {strides = array<i32>} : memref<1x8x1xf32, #tpu.memory_space<vmem>>, vector<1x8x1xf32>,
      %cst_81 = arith.constant 0.000000e+00 : f32
      %100 = vector.broadcast %cst_81 : f32 to vector<8x1xf32>
      %c0_82 = arith.constant 0 : index
      %c0_83 = arith.constant 0 : index
      %c0_84 = arith.constant 0 : index
      %101 = vector.load %arg5[%c0_82, %c0_83, %c0_84] : memref<1x8x1xf32, #tpu.memory_space<vmem>>, vector<1x8x1xf32>
      %102 = vector.shape_cast %101 : vector<1x8x1xf32> to vector<8x1xf32>
      %103 = vector.shape_cast %100 : vector<8x1xf32> to vector<1x8x1xf32>
      tpu.vector_store %arg5[%c0_82, %c0_83, %c0_84], %103 {strides = array<i32>} : memref<1x8x1xf32, #tpu.memory_space<vmem>>, vector<1x8x1xf32>,
    } else {
    }
    %c0_63 = arith.constant 0 : index
    %c0_64 = arith.constant 0 : index
    %c0_65 = arith.constant 0 : index
    %79 = vector.load %arg4[%c0_63, %c0_64, %c0_65] : memref<1x8x1xf32, #tpu.memory_space<vmem>>, vector<1x8x1xf32>
    %80 = vector.shape_cast %79 : vector<1x8x1xf32> to vector<8x1xf32>
    %cst_66 = arith.constant dense<0.000000e+00> : vector<8xf32>
    %81 = vector.multi_reduction <add>, %75, %cst_66 [1] : vector<8x2048xf32> to vector<8xf32>
    %82 = vector.shape_cast %81 : vector<8xf32> to vector<8x1xf32>
    %83 = arith.addf %80, %82 : vector<8x1xf32>
    %c0_67 = arith.constant 0 : index
    %c0_68 = arith.constant 0 : index
    %c0_69 = arith.constant 0 : index
    %84 = vector.load %arg4[%c0_67, %c0_68, %c0_69] : memref<1x8x1xf32, #tpu.memory_space<vmem>>, vector<1x8x1xf32>
    %85 = vector.shape_cast %84 : vector<1x8x1xf32> to vector<8x1xf32>
    %86 = vector.shape_cast %83 : vector<8x1xf32> to vector<1x8x1xf32>
    tpu.vector_store %arg4[%c0_67, %c0_68, %c0_69], %86 {strides = array<i32>} : memref<1x8x1xf32, #tpu.memory_space<vmem>>, vector<1x8x1xf32>,
    %c0_70 = arith.constant 0 : index
    %c0_71 = arith.constant 0 : index
    %c0_72 = arith.constant 0 : index
    %87 = vector.load %arg5[%c0_70, %c0_71, %c0_72] : memref<1x8x1xf32, #tpu.memory_space<vmem>>, vector<1x8x1xf32>
    %88 = vector.shape_cast %87 : vector<1x8x1xf32> to vector<8x1xf32>
    %89 = arith.mulf %75, %75 : vector<8x2048xf32>
    %cst_73 = arith.constant dense<0.000000e+00> : vector<8xf32>
    %90 = vector.multi_reduction <add>, %89, %cst_73 [1] : vector<8x2048xf32> to vector<8xf32>
    %91 = vector.shape_cast %90 : vector<8xf32> to vector<8x1xf32>
    %92 = arith.addf %88, %91 : vector<8x1xf32>
    %c0_74 = arith.constant 0 : index
    %c0_75 = arith.constant 0 : index
    %c0_76 = arith.constant 0 : index
    %93 = vector.load %arg5[%c0_74, %c0_75, %c0_76] : memref<1x8x1xf32, #tpu.memory_space<vmem>>, vector<1x8x1xf32>
    %94 = vector.shape_cast %93 : vector<1x8x1xf32> to vector<8x1xf32>
    %95 = vector.shape_cast %92 : vector<8x1xf32> to vector<1x8x1xf32>
    tpu.vector_store %arg5[%c0_74, %c0_75, %c0_76], %95 {strides = array<i32>} : memref<1x8x1xf32, #tpu.memory_space<vmem>>, vector<1x8x1xf32>,
    return
  }
  func.func @transform_0(%arg0: i32, %arg1: i32) -> (i32, i32, i32, i32) {
    %c0_i32 = arith.constant 0 : i32
    %c0_i32_0 = arith.constant 0 : i32
    %c0_i32_1 = arith.constant 0 : i32
    return %arg0, %arg1, %c0_i32, %c0_i32_0 : i32, i32, i32, i32
  }
  func.func @transform_1(%arg0: i32, %arg1: i32) -> (i32, i32, i32) {
    %c0_i32 = arith.constant 0 : i32
    %c0_i32_0 = arith.constant 0 : i32
    %c0_i32_1 = arith.constant 0 : i32
    %c0_i32_2 = arith.constant 0 : i32
    return %c0_i32, %c0_i32_0, %c0_i32_1 : i32, i32, i32
  }
  func.func @transform_2(%arg0: i32, %arg1: i32) -> (i32, i32, i32) {
    %c0_i32 = arith.constant 0 : i32
    %c0_i32_0 = arith.constant 0 : i32
    %c0_i32_1 = arith.constant 0 : i32
    return %arg0, %c0_i32, %c0_i32_0 : i32, i32, i32
  }
  func.func @transform_3(%arg0: i32, %arg1: i32) -> (i32, i32, i32) {
    %c0_i32 = arith.constant 0 : i32
    %c0_i32_0 = arith.constant 0 : i32
    %c0_i32_1 = arith.constant 0 : i32
    return %arg0, %c0_i32, %c0_i32_0 : i32, i32, i32
  }
}

module attributes {stable_mosaic.version = 11 : i64} {
  func.func @_bn_apply_kernel(%arg0: i32, %arg1: i32, %arg2: memref<1x1x4x2432xf32, #tpu.memory_space<vmem>>, %arg3: memref<9x8x4xf32, #tpu.memory_space<vmem>>, %arg4: memref<8x1xf32, #tpu.memory_space<vmem>>, %arg5: memref<8x1xf32, #tpu.memory_space<vmem>>, %arg6: memref<1x8x2048xf32, #tpu.memory_space<vmem>>) attributes {dimension_semantics = [#tpu.dimension_semantics<parallel>, #tpu.dimension_semantics<parallel>], iteration_bounds = array<i64: 2, 1>, scalar_prefetch = 0 : i64, scratch_operands = 0 : i64, tpu.core_type = #tpu.core_type<tc>, window_params = [{transform_indices = @transform_0, window_bounds = array<i64: 1, 1, 4, 2432>}, {pipeline_mode = #tpu.pipeline_mode<synchronous>, transform_indices = @transform_1, window_bounds = array<i64: 9, 8, 4>}, {pipeline_mode = #tpu.pipeline_mode<synchronous>, transform_indices = @transform_2, window_bounds = array<i64: 8, 1>}, {pipeline_mode = #tpu.pipeline_mode<synchronous>, transform_indices = @transform_3, window_bounds = array<i64: 8, 1>}, {transform_indices = @transform_4, window_bounds = array<i64: 1, 8, 2048>}]} {
    %cst = arith.constant 0.000000e+00 : f32
    %0 = vector.broadcast %cst : f32 to vector<8x2048xf32>
    %c0 = arith.constant 0 : index
    %c0_0 = arith.constant 0 : index
    %c0_1 = arith.constant 0 : index
    %c0_2 = arith.constant 0 : index
    %1 = vector.load %arg2[%c0, %c0_0, %c0_1, %c0_2] : memref<1x1x4x2432xf32, #tpu.memory_space<vmem>>, vector<1x1x4x2048xf32>
    %2 = vector.shape_cast %1 : vector<1x1x4x2048xf32> to vector<4x2048xf32>
    %c0_3 = arith.constant 0 : index
    %c0_4 = arith.constant 0 : index
    %c0_5 = arith.constant 0 : index
    %3 = vector.load %arg3[%c0_3, %c0_4, %c0_5] : memref<9x8x4xf32, #tpu.memory_space<vmem>>, vector<1x8x4xf32>
    %4 = vector.shape_cast %3 : vector<1x8x4xf32> to vector<8x4xf32>
    %cst_6 = arith.constant dense<0.000000e+00> : vector<8x2048xf32>
    %5 = tpu.matmul %4, %2, %cst_6 {dimension_numbers = #tpu.dot_dimension_numbers<[1], [0], [0], [1], [0, 0, 1, 1], [], []>} : vector<8x4xf32>, vector<4x2048xf32>, vector<8x2048xf32> -> vector<8x2048xf32>
    %6 = arith.addf %0, %5 : vector<8x2048xf32>
    %c0_7 = arith.constant 0 : index
    %c0_8 = arith.constant 0 : index
    %c0_9 = arith.constant 0 : index
    %c1 = arith.constant 1 : index
    %7 = vector.load %arg2[%c0_7, %c0_8, %c0_9, %c1] : memref<1x1x4x2432xf32, #tpu.memory_space<vmem>>, vector<1x1x4x2048xf32>
    %8 = vector.shape_cast %7 : vector<1x1x4x2048xf32> to vector<4x2048xf32>
    %c1_10 = arith.constant 1 : index
    %c0_11 = arith.constant 0 : index
    %c0_12 = arith.constant 0 : index
    %9 = vector.load %arg3[%c1_10, %c0_11, %c0_12] : memref<9x8x4xf32, #tpu.memory_space<vmem>>, vector<1x8x4xf32>
    %10 = vector.shape_cast %9 : vector<1x8x4xf32> to vector<8x4xf32>
    %cst_13 = arith.constant dense<0.000000e+00> : vector<8x2048xf32>
    %11 = tpu.matmul %10, %8, %cst_13 {dimension_numbers = #tpu.dot_dimension_numbers<[1], [0], [0], [1], [0, 0, 1, 1], [], []>} : vector<8x4xf32>, vector<4x2048xf32>, vector<8x2048xf32> -> vector<8x2048xf32>
    %12 = arith.addf %6, %11 : vector<8x2048xf32>
    %c0_14 = arith.constant 0 : index
    %c0_15 = arith.constant 0 : index
    %c0_16 = arith.constant 0 : index
    %c2 = arith.constant 2 : index
    %13 = vector.load %arg2[%c0_14, %c0_15, %c0_16, %c2] : memref<1x1x4x2432xf32, #tpu.memory_space<vmem>>, vector<1x1x4x2048xf32>
    %14 = vector.shape_cast %13 : vector<1x1x4x2048xf32> to vector<4x2048xf32>
    %c2_17 = arith.constant 2 : index
    %c0_18 = arith.constant 0 : index
    %c0_19 = arith.constant 0 : index
    %15 = vector.load %arg3[%c2_17, %c0_18, %c0_19] : memref<9x8x4xf32, #tpu.memory_space<vmem>>, vector<1x8x4xf32>
    %16 = vector.shape_cast %15 : vector<1x8x4xf32> to vector<8x4xf32>
    %cst_20 = arith.constant dense<0.000000e+00> : vector<8x2048xf32>
    %17 = tpu.matmul %16, %14, %cst_20 {dimension_numbers = #tpu.dot_dimension_numbers<[1], [0], [0], [1], [0, 0, 1, 1], [], []>} : vector<8x4xf32>, vector<4x2048xf32>, vector<8x2048xf32> -> vector<8x2048xf32>
    %18 = arith.addf %12, %17 : vector<8x2048xf32>
    %c0_21 = arith.constant 0 : index
    %c0_22 = arith.constant 0 : index
    %c0_23 = arith.constant 0 : index
    %c128 = arith.constant 128 : index
    %19 = vector.load %arg2[%c0_21, %c0_22, %c0_23, %c128] : memref<1x1x4x2432xf32, #tpu.memory_space<vmem>>, vector<1x1x4x2048xf32>
    %20 = vector.shape_cast %19 : vector<1x1x4x2048xf32> to vector<4x2048xf32>
    %c3 = arith.constant 3 : index
    %c0_24 = arith.constant 0 : index
    %c0_25 = arith.constant 0 : index
    %21 = vector.load %arg3[%c3, %c0_24, %c0_25] : memref<9x8x4xf32, #tpu.memory_space<vmem>>, vector<1x8x4xf32>
    %22 = vector.shape_cast %21 : vector<1x8x4xf32> to vector<8x4xf32>
    %cst_26 = arith.constant dense<0.000000e+00> : vector<8x2048xf32>
    %23 = tpu.matmul %22, %20, %cst_26 {dimension_numbers = #tpu.dot_dimension_numbers<[1], [0], [0], [1], [0, 0, 1, 1], [], []>} : vector<8x4xf32>, vector<4x2048xf32>, vector<8x2048xf32> -> vector<8x2048xf32>
    %24 = arith.addf %18, %23 : vector<8x2048xf32>
    %c0_27 = arith.constant 0 : index
    %c0_28 = arith.constant 0 : index
    %c0_29 = arith.constant 0 : index
    %c129 = arith.constant 129 : index
    %25 = vector.load %arg2[%c0_27, %c0_28, %c0_29, %c129] : memref<1x1x4x2432xf32, #tpu.memory_space<vmem>>, vector<1x1x4x2048xf32>
    %26 = vector.shape_cast %25 : vector<1x1x4x2048xf32> to vector<4x2048xf32>
    %c4 = arith.constant 4 : index
    %c0_30 = arith.constant 0 : index
    %c0_31 = arith.constant 0 : index
    %27 = vector.load %arg3[%c4, %c0_30, %c0_31] : memref<9x8x4xf32, #tpu.memory_space<vmem>>, vector<1x8x4xf32>
    %28 = vector.shape_cast %27 : vector<1x8x4xf32> to vector<8x4xf32>
    %cst_32 = arith.constant dense<0.000000e+00> : vector<8x2048xf32>
    %29 = tpu.matmul %28, %26, %cst_32 {dimension_numbers = #tpu.dot_dimension_numbers<[1], [0], [0], [1], [0, 0, 1, 1], [], []>} : vector<8x4xf32>, vector<4x2048xf32>, vector<8x2048xf32> -> vector<8x2048xf32>
    %30 = arith.addf %24, %29 : vector<8x2048xf32>
    %c0_33 = arith.constant 0 : index
    %c0_34 = arith.constant 0 : index
    %c0_35 = arith.constant 0 : index
    %c130 = arith.constant 130 : index
    %31 = vector.load %arg2[%c0_33, %c0_34, %c0_35, %c130] : memref<1x1x4x2432xf32, #tpu.memory_space<vmem>>, vector<1x1x4x2048xf32>
    %32 = vector.shape_cast %31 : vector<1x1x4x2048xf32> to vector<4x2048xf32>
    %c5 = arith.constant 5 : index
    %c0_36 = arith.constant 0 : index
    %c0_37 = arith.constant 0 : index
    %33 = vector.load %arg3[%c5, %c0_36, %c0_37] : memref<9x8x4xf32, #tpu.memory_space<vmem>>, vector<1x8x4xf32>
    %34 = vector.shape_cast %33 : vector<1x8x4xf32> to vector<8x4xf32>
    %cst_38 = arith.constant dense<0.000000e+00> : vector<8x2048xf32>
    %35 = tpu.matmul %34, %32, %cst_38 {dimension_numbers = #tpu.dot_dimension_numbers<[1], [0], [0], [1], [0, 0, 1, 1], [], []>} : vector<8x4xf32>, vector<4x2048xf32>, vector<8x2048xf32> -> vector<8x2048xf32>
    %36 = arith.addf %30, %35 : vector<8x2048xf32>
    %c0_39 = arith.constant 0 : index
    %c0_40 = arith.constant 0 : index
    %c0_41 = arith.constant 0 : index
    %c256 = arith.constant 256 : index
    %37 = vector.load %arg2[%c0_39, %c0_40, %c0_41, %c256] : memref<1x1x4x2432xf32, #tpu.memory_space<vmem>>, vector<1x1x4x2048xf32>
    %38 = vector.shape_cast %37 : vector<1x1x4x2048xf32> to vector<4x2048xf32>
    %c6 = arith.constant 6 : index
    %c0_42 = arith.constant 0 : index
    %c0_43 = arith.constant 0 : index
    %39 = vector.load %arg3[%c6, %c0_42, %c0_43] : memref<9x8x4xf32, #tpu.memory_space<vmem>>, vector<1x8x4xf32>
    %40 = vector.shape_cast %39 : vector<1x8x4xf32> to vector<8x4xf32>
    %cst_44 = arith.constant dense<0.000000e+00> : vector<8x2048xf32>
    %41 = tpu.matmul %40, %38, %cst_44 {dimension_numbers = #tpu.dot_dimension_numbers<[1], [0], [0], [1], [0, 0, 1, 1], [], []>} : vector<8x4xf32>, vector<4x2048xf32>, vector<8x2048xf32> -> vector<8x2048xf32>
    %42 = arith.addf %36, %41 : vector<8x2048xf32>
    %c0_45 = arith.constant 0 : index
    %c0_46 = arith.constant 0 : index
    %c0_47 = arith.constant 0 : index
    %c257 = arith.constant 257 : index
    %43 = vector.load %arg2[%c0_45, %c0_46, %c0_47, %c257] : memref<1x1x4x2432xf32, #tpu.memory_space<vmem>>, vector<1x1x4x2048xf32>
    %44 = vector.shape_cast %43 : vector<1x1x4x2048xf32> to vector<4x2048xf32>
    %c7 = arith.constant 7 : index
    %c0_48 = arith.constant 0 : index
    %c0_49 = arith.constant 0 : index
    %45 = vector.load %arg3[%c7, %c0_48, %c0_49] : memref<9x8x4xf32, #tpu.memory_space<vmem>>, vector<1x8x4xf32>
    %46 = vector.shape_cast %45 : vector<1x8x4xf32> to vector<8x4xf32>
    %cst_50 = arith.constant dense<0.000000e+00> : vector<8x2048xf32>
    %47 = tpu.matmul %46, %44, %cst_50 {dimension_numbers = #tpu.dot_dimension_numbers<[1], [0], [0], [1], [0, 0, 1, 1], [], []>} : vector<8x4xf32>, vector<4x2048xf32>, vector<8x2048xf32> -> vector<8x2048xf32>
    %48 = arith.addf %42, %47 : vector<8x2048xf32>
    %c0_51 = arith.constant 0 : index
    %c0_52 = arith.constant 0 : index
    %c0_53 = arith.constant 0 : index
    %c258 = arith.constant 258 : index
    %49 = vector.load %arg2[%c0_51, %c0_52, %c0_53, %c258] : memref<1x1x4x2432xf32, #tpu.memory_space<vmem>>, vector<1x1x4x2048xf32>
    %50 = vector.shape_cast %49 : vector<1x1x4x2048xf32> to vector<4x2048xf32>
    %c8 = arith.constant 8 : index
    %c0_54 = arith.constant 0 : index
    %c0_55 = arith.constant 0 : index
    %51 = vector.load %arg3[%c8, %c0_54, %c0_55] : memref<9x8x4xf32, #tpu.memory_space<vmem>>, vector<1x8x4xf32>
    %52 = vector.shape_cast %51 : vector<1x8x4xf32> to vector<8x4xf32>
    %cst_56 = arith.constant dense<0.000000e+00> : vector<8x2048xf32>
    %53 = tpu.matmul %52, %50, %cst_56 {dimension_numbers = #tpu.dot_dimension_numbers<[1], [0], [0], [1], [0, 0, 1, 1], [], []>} : vector<8x4xf32>, vector<4x2048xf32>, vector<8x2048xf32> -> vector<8x2048xf32>
    %54 = arith.addf %48, %53 : vector<8x2048xf32>
    %c0_57 = arith.constant 0 : index
    %c0_58 = arith.constant 0 : index
    %55 = vector.load %arg4[%c0_57, %c0_58] : memref<8x1xf32, #tpu.memory_space<vmem>>, vector<8x1xf32>
    %56 = vector.broadcast %55 : vector<8x1xf32> to vector<8x2048xf32>
    %57 = arith.mulf %54, %56 : vector<8x2048xf32>
    %c0_59 = arith.constant 0 : index
    %c0_60 = arith.constant 0 : index
    %58 = vector.load %arg5[%c0_59, %c0_60] : memref<8x1xf32, #tpu.memory_space<vmem>>, vector<8x1xf32>
    %59 = vector.broadcast %58 : vector<8x1xf32> to vector<8x2048xf32>
    %60 = arith.addf %57, %59 : vector<8x2048xf32>
    %c0_61 = arith.constant 0 : index
    %c0_62 = arith.constant 0 : index
    %c0_63 = arith.constant 0 : index
    %61 = vector.load %arg6[%c0_61, %c0_62, %c0_63] : memref<1x8x2048xf32, #tpu.memory_space<vmem>>, vector<1x8x2048xf32>
    %62 = vector.shape_cast %61 : vector<1x8x2048xf32> to vector<8x2048xf32>
    %63 = vector.shape_cast %60 : vector<8x2048xf32> to vector<1x8x2048xf32>
    tpu.vector_store %arg6[%c0_61, %c0_62, %c0_63], %63 {strides = array<i32>} : memref<1x8x2048xf32, #tpu.memory_space<vmem>>, vector<1x8x2048xf32>,
    return
  }
  func.func @transform_0(%arg0: i32, %arg1: i32) -> (i32, i32, i32, i32) {
    %c0_i32 = arith.constant 0 : i32
    %c0_i32_0 = arith.constant 0 : i32
    %c0_i32_1 = arith.constant 0 : i32
    return %arg0, %arg1, %c0_i32, %c0_i32_0 : i32, i32, i32, i32
  }
  func.func @transform_1(%arg0: i32, %arg1: i32) -> (i32, i32, i32) {
    %c0_i32 = arith.constant 0 : i32
    %c0_i32_0 = arith.constant 0 : i32
    %c0_i32_1 = arith.constant 0 : i32
    %c0_i32_2 = arith.constant 0 : i32
    return %c0_i32, %c0_i32_0, %c0_i32_1 : i32, i32, i32
  }
  func.func @transform_2(%arg0: i32, %arg1: i32) -> (i32, i32) {
    %c0_i32 = arith.constant 0 : i32
    %c0_i32_0 = arith.constant 0 : i32
    %c0_i32_1 = arith.constant 0 : i32
    return %c0_i32, %c0_i32_0 : i32, i32
  }
  func.func @transform_3(%arg0: i32, %arg1: i32) -> (i32, i32) {
    %c0_i32 = arith.constant 0 : i32
    %c0_i32_0 = arith.constant 0 : i32
    %c0_i32_1 = arith.constant 0 : i32
    return %c0_i32, %c0_i32_0 : i32, i32
  }
  func.func @transform_4(%arg0: i32, %arg1: i32) -> (i32, i32, i32) {
    %c0_i32 = arith.constant 0 : i32
    %c0_i32_0 = arith.constant 0 : i32
    return %arg0, %c0_i32, %arg1 : i32, i32, i32
  }
}

</mosaic_0001>

<llo_original>
// kernel: conv_block_forward.2
$region0: #{conv_block_forward.2}
  #allocation0 [shape = 'u32[]', space=smem, size = 0x4, offset = 0x4, fixed_abs, tag = 'smem constant byte address 0x4 - core index']
  #allocation1 [shape = 'u32[72,128]{1,0:T(1,128)}', space=vmem, size = 0x9000, scoped, tag = 'internal scratch']
  %s0 = inlined_call_operand.vmem [shape: f32[2,1,4,2432], index: 0, kind: input, shape index: {}]
  %s1 = inlined_call_operand.vmem [shape: f32[9,8,4], index: 1, kind: input, shape index: {}]
  %s2 = inlined_call_operand.vmem [shape: f32[2,8,1], index: 2, kind: output, shape index: {0}]
  %s3 = inlined_call_operand.vmem [shape: f32[2,8,1], index: 3, kind: output, shape index: {1}]
  %4 = xla_tuple %s2, %s3
  %s5 = sld [smem:[#allocation0]]
  $region53: #{conv_block_forward.2} parent=0
    _
  %s7 = ssub.s32 1, %s5
  %s8 = scalar_select 0, %s7, %s5
  loop: start=0, step=1, limit=4
  $region2: #{conv_block_forward.2} parent=0 // loop_pre_header
    _
  $region3: #{conv_block_forward.2} parent=0 // loop_header
    %s10 = sphi 0, %s14
    %p11 = scmp.ge.s32.totalorder %s10, 4
    %s17 = sphi 0, %s29
    %s18 = sphi 0, %s25
    %s19 = sphi 0, %s17
    %s20 = sphi 0, %s18
    %s21 = sphi 0, %s19
    %s22 = sphi 0, %s20
    %s34 = sphi 0, %s36
    %s37 = sphi 0, %s34
    %s38 = sphi 0, %s37
    %s54 = sphi 0, %s38
    %s58 = sphi 0, %s58
    %s60 = sphi 0, %s58
    %s61 = sphi 0, %s60
    %s75 = sphi 0, %s61
    %s81 = sphi 0, %s83
    %s84 = sphi 0, %s81
    %s85 = sphi 0, %s84
    %s101 = sphi 0, %s85
    %s107 = sphi 0, %s109
    %s110 = sphi 0, %s107
    %s111 = sphi 0, %s110
    %s127 = sphi 0, %s111
  $region4: #{conv_block_forward.2} parent=0 // loop_header_branch
    %13 = sbr.rel (%p11) target = $region8
  $region5: #{conv_block_forward.2} parent=0 // loop_body
    %s15 = ssub.s32 %s10, 1
    %s16 = ssub.s32 %s10, 2
    %s23 = sadd.s32 1, %s18
    %p24 = scmp.ge.s32.totalorder %s23, 1
    %s25 = scalar_select %p24, 0, %s23
    %s26 = sadd.s32 1, %s17
    %s27 = scalar_select %p24, %s26, %s17
    %p28 = scmp.ge.s32.totalorder %s27, 2
    %s29 = scalar_select %p28, 0, %s27
    %s30 = ssub.s32 %s17, %s29
    %s31 = ssub.s32 %s18, %s25
    %s32 = sor.u32 %s30, %s31
    %p33 = scmp.eq.s32.totalorder %s32, 0
    %s35 = sadd.s32 %s34, 1
    %s36 = scalar_select %p33, %s34, %s35
    %p39 = pneg %p33
    %p40 = scmp.eq.s32.totalorder %s10, 1
    %p41 = por %p39, %p40
    %p42 = scmp.ne.s32.totalorder %s34, %s37
    %p43 = scmp.eq.s32.totalorder %s10, 0
    %p44 = por %p42, %p43
    %p45 = scmp.ne.s32.totalorder %s34, %s37
    %p46 = scmp.eq.s32.totalorder %s15, 1
    %p47 = por %p45, %p46
    %p48 = scmp.ne.s32.totalorder %s37, %s38
    %p49 = scmp.eq.s32.totalorder %s15, 0
    %p50 = por %p48, %p49
    %p51 = scmp.ne.s32.totalorder %s37, %s38
    %p52 = scmp.eq.s32.totalorder %s16, 1
    %p53 = por %p51, %p52
    %p55 = scmp.ne.s32.totalorder %s38, %s54
    %p56 = scmp.eq.s32.totalorder %s16, 0
    %p57 = por %p55, %p56
    %s59 = sadd.s32 %s58, 1
    %p62 = scmp.eq.s32.totalorder %s10, 1
    %p63 = scmp.ne.s32.totalorder %s58, %s60
    %p64 = scmp.eq.s32.totalorder %s10, 0
    %p65 = por %p63, %p64
    %p66 = scmp.ne.s32.totalorder %s58, %s60
    %p67 = scmp.eq.s32.totalorder %s15, 1
    %p68 = por %p66, %p67
    %p69 = scmp.ne.s32.totalorder %s60, %s61
    %p70 = scmp.eq.s32.totalorder %s15, 0
    %p71 = por %p69, %p70
    %p72 = scmp.ne.s32.totalorder %s60, %s61
    %p73 = scmp.eq.s32.totalorder %s16, 1
    %p74 = por %p72, %p73
    %p76 = scmp.ne.s32.totalorder %s61, %s75
    %p77 = scmp.eq.s32.totalorder %s16, 0
    %p78 = por %p76, %p77
    %s79 = ssub.s32 %s17, %s29
    %p80 = scmp.eq.s32.totalorder %s79, 0
    %s82 = sadd.s32 %s81, 1
    %s83 = scalar_select %p80, %s81, %s82
    %p86 = pneg %p80
    %p87 = scmp.eq.s32.totalorder %s10, 1
    %p88 = por %p86, %p87
    %p89 = scmp.ne.s32.totalorder %s81, %s84
    %p90 = scmp.eq.s32.totalorder %s10, 0
    %p91 = por %p89, %p90
    %p92 = scmp.ne.s32.totalorder %s81, %s84
    %p93 = scmp.eq.s32.totalorder %s15, 1
    %p94 = por %p92, %p93
    %p95 = scmp.ne.s32.totalorder %s84, %s85
    %p96 = scmp.eq.s32.totalorder %s15, 0
    %p97 = por %p95, %p96
    %p98 = scmp.ne.s32.totalorder %s84, %s85
    %p99 = scmp.eq.s32.totalorder %s16, 1
    %p100 = por %p98, %p99
    %p102 = scmp.ne.s32.totalorder %s85, %s101
    %p103 = scmp.eq.s32.totalorder %s16, 0
    %p104 = por %p102, %p103
    %s105 = ssub.s32 %s17, %s29
    %p106 = scmp.eq.s32.totalorder %s105, 0
    %s108 = sadd.s32 %s107, 1
    %s109 = scalar_select %p106, %s107, %s108
    %p112 = pneg %p106
    %p113 = scmp.eq.s32.totalorder %s10, 1
    %p114 = por %p112, %p113
    %p115 = scmp.ne.s32.totalorder %s107, %s110
    %p116 = scmp.eq.s32.totalorder %s10, 0
    %p117 = por %p115, %p116
    %p118 = scmp.ne.s32.totalorder %s107, %s110
    %p119 = scmp.eq.s32.totalorder %s15, 1
    %p120 = por %p118, %p119
    %p121 = scmp.ne.s32.totalorder %s110, %s111
    %p122 = scmp.eq.s32.totalorder %s15, 0
    %p123 = por %p121, %p122
    %p124 = scmp.ne.s32.totalorder %s110, %s111
    %p125 = scmp.eq.s32.totalorder %s16, 1
    %p126 = por %p124, %p125
    %p128 = scmp.ne.s32.totalorder %s111, %s127
    %p129 = scmp.eq.s32.totalorder %s16, 0
    %p130 = por %p128, %p129
    %p131 = scmp.le.s32.totalorder 1, %s10
    %p132 = scmp.lt.s32.totalorder %s10, 3
    %p133 = pnand %p131, %p132
    %p134 = pneg %p133
    // Predicated region
    $region9: #{conv_block_forward.2} parent=5 // pred_check
      _
    $region10: #{conv_block_forward.2} parent=5 // pred_check_branch
      %136 = sbr.rel (%p133) target = $region12
    $region11: #{conv_block_forward.2} parent=5 // pred_region
      %s137 = ssub.s32 %s10, 1
      // Predicated region
      $region13: #{conv_block_forward.2} parent=11 // pred_check
        %p138 = pneg %p71
      $region14: #{conv_block_forward.2} parent=11 // pred_check_branch
        %140 = sbr.rel (%p138) target = $region16
      $region15: #{conv_block_forward.2} parent=11 // pred_region
        _
      $region16: #{conv_block_forward.2} parent=11 // pred_fallthru
        _
    $region12: #{conv_block_forward.2} parent=5 // pred_fallthru
      _
    %p141 = scmp.lt.s32.totalorder %s10, 2
    // Predicated region
    $region17: #{conv_block_forward.2} parent=5 // pred_check
      %p142 = pneg %p141
    $region18: #{conv_block_forward.2} parent=5 // pred_check_branch
      %144 = sbr.rel (%p142) target = $region20
    $region19: #{conv_block_forward.2} parent=5 // pred_region
      // Predicated region
      $region21: #{conv_block_forward.2} parent=19 // pred_check
        %p145 = pneg %p44
      $region22: #{conv_block_forward.2} parent=19 // pred_check_branch
        %147 = sbr.rel (%p145) target = $region24
      $region23: #{conv_block_forward.2} parent=19 // pred_region
        %p148 = scmp.lt.s32.totalorder %s17, 1
        %s149 = scalar_select %p148, %s17, 1
        %p150 = scmp.lt.s32.totalorder %s18, 0
        %s151 = scalar_select %p150, %s18, 0
        %s152 = smul.addr %s151, 19
        %s153 = smul.addr %s149, 19
        %s154 = sadd.s32 %s152, %s153
        %s155 = smul.addr %s154, 4
        %s156 = scalar_lea.vmem %s0, %s155
      $region24: #{conv_block_forward.2} parent=19 // pred_fallthru
        _
    $region20: #{conv_block_forward.2} parent=5 // pred_fallthru
      _
    %p157 = scmp.le.s32.totalorder 1, %s10
    %p158 = scmp.lt.s32.totalorder %s10, 3
    %p159 = pnand %p157, %p158
    %p160 = pneg %p159
    // Predicated region
    $region25: #{conv_block_forward.2} parent=5 // pred_check
      _
    $region26: #{conv_block_forward.2} parent=5 // pred_check_branch
      %162 = sbr.rel (%p159) target = $region28
    $region27: #{conv_block_forward.2} parent=5 // pred_region
      %s163 = ssub.s32 %s10, 1
      %p164 = scmp.lt.s32.totalorder %s19, 1
      %s165 = scalar_select %p164, %s19, 1
      %p166 = scmp.lt.s32.totalorder %s20, 0
      %s167 = scalar_select %p166, %s20, 0
      %s168 = smul.addr %s167, 19
      %s169 = smul.addr %s165, 19
      %s170 = sadd.s32 %s168, %s169
      %s171 = smul.addr %s170, 4
      %s172 = scalar_lea.vmem %s0, %s171
      %p173 = pneg %p50
      %p174 = pneg %p47
      %p175 = pneg %p71
      %p176 = pneg %p68
      %p177 = pneg %p97
      %p178 = pneg %p94
      %p179 = scmp.lt.s32.totalorder %s19, 1
      %s180 = scalar_select %p179, %s19, 1
      %s181 = smul.addr %s180, 8
      %s182 = scalar_lea.vmem %s2, %s181
      %p183 = pneg %p123
      %p184 = pneg %p120
      %p185 = scmp.lt.s32.totalorder %s19, 1
      %s186 = scalar_select %p185, %s19, 1
      %s187 = smul.addr %s186, 8
      %s188 = scalar_lea.vmem %s3, %s187
      %p189 = scmp.lt.s32.totalorder %s19, 1
      %s190 = scalar_select %p189, %s19, 1
      %p191 = scmp.lt.s32.totalorder %s20, 0
      %s192 = scalar_select %p191, %s20, 0
      %s193 = smul.addr %s192, 19
      %s194 = smul.addr %s190, 19
      %s195 = sadd.s32 %s193, %s194
      %s196 = smul.addr %s195, 4
      %s197 = scalar_lea.vmem %s0, %s196
      %p198 = scmp.lt.s32.totalorder %s19, 1
      %s199 = scalar_select %p198, %s19, 1
      %s200 = smul.addr %s199, 8
      %s201 = scalar_lea.vmem %s2, %s200
      %p202 = scmp.lt.s32.totalorder %s19, 1
      %s203 = scalar_select %p202, %s19, 1
      %s204 = smul.addr %s203, 8
      %s205 = scalar_lea.vmem %s3, %s204
      %v206 = vld [vmem:[%s197] sm:$0xff]
      %v207 = vld [vmem:[%s197 + $0x8] sm:$0xff]
      %v208 = vld [vmem:[%s197 + $0x10] sm:$0xff]
      %v209 = vld [vmem:[%s197 + $0x18] sm:$0xff]
      %v210 = vld [vmem:[%s197 + $0x20] sm:$0xff]
      %v211 = vld [vmem:[%s197 + $0x28] sm:$0xff]
      %v212 = vld [vmem:[%s197 + $0x30] sm:$0xff]
      %v213 = vld [vmem:[%s197 + $0x38] sm:$0xff]
      %v214 = vld [vmem:[%s1] sm:$0xff]
      %v215 = vld [vmem:[%s197 + $0x40] sm:$0xf]
      %s216 = scalar_lea.vmem %s1, 8
      %v217 = vld [vmem:[%s216] sm:$0xff]
      %227 = vst [vmem:[#allocation1] ss:$2 sm:$0xff] %v206
      %s228 = scalar_lea.vmem [#allocation1], 16
      %229 = vst [vmem:[%s228] ss:$2 sm:$0xff] %v207
      %s230 = scalar_lea.vmem [#allocation1], 32
      %231 = vst [vmem:[%s230] ss:$2 sm:$0xff] %v208
      %s232 = scalar_lea.vmem [#allocation1], 48
      %233 = vst [vmem:[%s232] ss:$2 sm:$0xff] %v209
      %v234 = vld.sshfl [vmem:[#allocation1] sm:$0xff pattern:$0x75316420]
      %v235 = vld.sshfl [vmem:[#allocation1 + $0x8] sm:$0xff pattern:$0x75316420]
      %v236 = vld.sshfl [vmem:[#allocation1 + $0x10] sm:$0xff pattern:$0x75316420]
      %v237 = vld.sshfl [vmem:[#allocation1 + $0x18] sm:$0xff pattern:$0x75316420]
      %v238 = vld.sshfl [vmem:[#allocation1 + $0x20] sm:$0xff pattern:$0x75316420]
      %v239 = vld.sshfl [vmem:[#allocation1 + $0x28] sm:$0xff pattern:$0x75316420]
      %v240 = vld.sshfl [vmem:[#allocation1 + $0x30] sm:$0xff pattern:$0x75316420]
      %v241 = vld.sshfl [vmem:[#allocation1 + $0x38] sm:$0xff pattern:$0x75316420]
      %242 = vst [vmem:[#allocation1] ss:$2 sm:$0xff] %v210
      %243 = vst [vmem:[%s228] ss:$2 sm:$0xff] %v211
      %244 = vst [vmem:[%s230] ss:$2 sm:$0xff] %v212
      %245 = vst [vmem:[%s232] ss:$2 sm:$0xff] %v213
      %v246 = vld.sshfl [vmem:[#allocation1] sm:$0xff pattern:$0x75316420]
      %v247 = vld.sshfl [vmem:[#allocation1 + $0x8] sm:$0xff pattern:$0x75316420]
      %v248 = vld.sshfl [vmem:[#allocation1 + $0x10] sm:$0xff pattern:$0x75316420]
      %v249 = vld.sshfl [vmem:[#allocation1 + $0x18] sm:$0xff pattern:$0x75316420]
      %v250 = vld.sshfl [vmem:[#allocation1 + $0x20] sm:$0xff pattern:$0x75316420]
      %v251 = vld.sshfl [vmem:[#allocation1 + $0x28] sm:$0xff pattern:$0x75316420]
      %v252 = vld.sshfl [vmem:[#allocation1 + $0x30] sm:$0xff pattern:$0x75316420]
      %v253 = vld.sshfl [vmem:[#allocation1 + $0x38] sm:$0xff pattern:$0x75316420]
      %254 = vst [vmem:[#allocation1] ss:$2 sm:$0xff] %v215
      %v255 = vld.sshfl [vmem:[#allocation1] sm:$0xff pattern:$0x75316420]
      %256 = vrot.lane.b32.xlu0 %v234, 127
      %v257 = vpop.permute.xlu0 %256
      %258 = vrot.lane.b32.xlu0 %v235, 127
      %v259 = vpop.permute.xlu0 %258
      %260 = vrot.lane.b32.xlu0 %v236, 127
      %v261 = vpop.permute.xlu0 %260
      %262 = vrot.lane.b32.xlu0 %v237, 127
      %v263 = vpop.permute.xlu0 %262
      %264 = vrot.lane.b32.xlu0 %v238, 127
      %v265 = vpop.permute.xlu0 %264
      %266 = vrot.lane.b32.xlu0 %v239, 127
      %v267 = vpop.permute.xlu0 %266
      %268 = vrot.lane.b32.xlu0 %v240, 127
      %v269 = vpop.permute.xlu0 %268
      %270 = vrot.lane.b32.xlu0 %v241, 127
      %v271 = vpop.permute.xlu0 %270
      %272 = vrot.lane.b32.xlu0 %v246, 127
      %v273 = vpop.permute.xlu0 %272
      %274 = vrot.lane.b32.xlu0 %v247, 127
      %v275 = vpop.permute.xlu0 %274
      %276 = vrot.lane.b32.xlu0 %v248, 127
      %v277 = vpop.permute.xlu0 %276
      %278 = vrot.lane.b32.xlu0 %v249, 127
      %v279 = vpop.permute.xlu0 %278
      %280 = vrot.lane.b32.xlu0 %v250, 127
      %v281 = vpop.permute.xlu0 %280
      %282 = vrot.lane.b32.xlu0 %v251, 127
      %v283 = vpop.permute.xlu0 %282
      %284 = vrot.lane.b32.xlu0 %v252, 127
      %v285 = vpop.permute.xlu0 %284
      %286 = vrot.lane.b32.xlu0 %v253, 127
      %v287 = vpop.permute.xlu0 %286
      %288 = vrot.lane.b32.xlu0 %v255, 127
      %v289 = vpop.permute.xlu0 %288
      %vm290 = vcmask 1039360
      %v291 = vsel %vm290, %v257, %v259
      %v292 = vsel %vm290, %v259, %v261
      %v293 = vsel %vm290, %v261, %v263
      %v294 = vsel %vm290, %v263, %v265
      %v295 = vsel %vm290, %v265, %v267
      %v296 = vsel %vm290, %v267, %v269
      %v297 = vsel %vm290, %v269, %v271
      %v298 = vsel %vm290, %v271, %v273
      %v299 = vsel %vm290, %v273, %v275
      %v300 = vsel %vm290, %v275, %v277
      %v301 = vsel %vm290, %v277, %v279
      %v302 = vsel %vm290, %v279, %v281
      %v303 = vsel %vm290, %v281, %v283
      %v304 = vsel %vm290, %v283, %v285
      %v305 = vsel %vm290, %v285, %v287
      %v306 = vsel %vm290, %v287, %v289
      %vm307 = vcmask 31744
      %v309 = vsel %vm307, %v217, 0
      %vm311 = vcmask 1043456
      %v312 = vsel %vm311, %v291, 0
      %v314 = vsel %vm311, %v292, 0
      %v316 = vsel %vm311, %v293, 0
      %v318 = vsel %vm311, %v294, 0
      %v320 = vsel %vm311, %v295, 0
      %v322 = vsel %vm311, %v296, 0
      %v324 = vsel %vm311, %v297, 0
      %v326 = vsel %vm311, %v298, 0
      %v328 = vsel %vm311, %v299, 0
      %v330 = vsel %vm311, %v300, 0
      %v332 = vsel %vm311, %v301, 0
      %v334 = vsel %vm311, %v302, 0
      %v336 = vsel %vm311, %v303, 0
      %v338 = vsel %vm311, %v304, 0
      %v340 = vsel %vm311, %v305, 0
      %v342 = vsel %vm311, %v306, 0
      %344 = vmatpush.msra.mxu0 0.0
      %345 = vmatpush.msra.mxu0 0.0
      %346 = vmatpush.msra.mxu0 0.0
      %347 = vmatpush.msra.mxu0 0.0
      %348 = vmatpush.msra.mxu0 0.0
      %349 = vmatpush.msra.mxu0 0.0
      %350 = vmatpush.msra.mxu0 0.0
      %351 = vmatpush.msra.mxu0 0.0
      %352 = vmatpush.msra.mxu0 0.0
      %353 = vmatpush.msra.mxu0 0.0
      %354 = vmatpush.msra.mxu0 0.0
      %355 = vmatpush.msra.mxu0 0.0
      %356 = vmatpush.msra.mxu0 0.0
      %357 = vmatpush.msra.mxu0 0.0
      %358 = vmatpush.msra.mxu0 0.0
      %359 = vmatpush.msra.mxu0 %v312
      %360 = vmatmul.f32.gmra.mxu0 %v309
      %v361 = vpop.f32.mrf.mxu0
      %v362 = vadd.f32 0.0, %v361
      %363 = vdwg.mxu0
      %364 = vmatpush.msra.mxu0 0.0
      %365 = vmatpush.msra.mxu0 0.0
      %366 = vmatpush.msra.mxu0 0.0
      %367 = vmatpush.msra.mxu0 0.0
      %368 = vmatpush.msra.mxu0 0.0
      %369 = vmatpush.msra.mxu0 0.0
      %370 = vmatpush.msra.mxu0 0.0
      %371 = vmatpush.msra.mxu0 0.0
      %372 = vmatpush.msra.mxu0 0.0
      %373 = vmatpush.msra.mxu0 0.0
      %374 = vmatpush.msra.mxu0 0.0
      %375 = vmatpush.msra.mxu0 0.0
      %376 = vmatpush.msra.mxu0 0.0
      %377 = vmatpush.msra.mxu0 0.0
      %378 = vmatpush.msra.mxu0 0.0
      %379 = vmatpush.msra.mxu0 %v314
      %380 = vmatmul.f32.gmra.mxu0 %v309
      %v381 = vpop.f32.mrf.mxu0
      %v382 = vadd.f32 0.0, %v381
      %383 = vdwg.mxu0
      %384 = vmatpush.msra.mxu0 0.0
      %385 = vmatpush.msra.mxu0 0.0
      %386 = vmatpush.msra.mxu0 0.0
      %387 = vmatpush.msra.mxu0 0.0
      %388 = vmatpush.msra.mxu0 0.0
      %389 = vmatpush.msra.mxu0 0.0
      %390 = vmatpush.msra.mxu0 0.0
      %391 = vmatpush.msra.mxu0 0.0
      %392 = vmatpush.msra.mxu0 0.0
      %393 = vmatpush.msra.mxu0 0.0
      %394 = vmatpush.msra.mxu0 0.0
      %395 = vmatpush.msra.mxu0 0.0
      %396 = vmatpush.msra.mxu0 0.0
      %397 = vmatpush.msra.mxu0 0.0
      %398 = vmatpush.msra.mxu0 0.0
      %399 = vmatpush.msra.mxu0 %v316
      %400 = vmatmul.f32.gmra.mxu0 %v309
      %v401 = vpop.f32.mrf.mxu0
      %v402 = vadd.f32 0.0, %v401
      %403 = vdwg.mxu0
      %404 = vmatpush.msra.mxu0 0.0
      %405 = vmatpush.msra.mxu0 0.0
      %406 = vmatpush.msra.mxu0 0.0
      %407 = vmatpush.msra.mxu0 0.0
      %408 = vmatpush.msra.mxu0 0.0
      %409 = vmatpush.msra.mxu0 0.0
      %410 = vmatpush.msra.mxu0 0.0
      %411 = vmatpush.msra.mxu0 0.0
      %412 = vmatpush.msra.mxu0 0.0
      %413 = vmatpush.msra.mxu0 0.0
      %414 = vmatpush.msra.mxu0 0.0
      %415 = vmatpush.msra.mxu0 0.0
      %416 = vmatpush.msra.mxu0 0.0
      %417 = vmatpush.msra.mxu0 0.0
      %418 = vmatpush.msra.mxu0 0.0
      %419 = vmatpush.msra.mxu0 %v318
      %420 = vmatmul.f32.gmra.mxu0 %v309
      %v421 = vpop.f32.mrf.mxu0
      %v422 = vadd.f32 0.0, %v421
      %423 = vdwg.mxu0
      %424 = vmatpush.msra.mxu0 0.0
      %425 = vmatpush.msra.mxu0 0.0
      %426 = vmatpush.msra.mxu0 0.0
      %427 = vmatpush.msra.mxu0 0.0
      %428 = vmatpush.msra.mxu0 0.0
      %429 = vmatpush.msra.mxu0 0.0
      %430 = vmatpush.msra.mxu0 0.0
      %431 = vmatpush.msra.mxu0 0.0
      %432 = vmatpush.msra.mxu0 0.0
      %433 = vmatpush.msra.mxu0 0.0
      %434 = vmatpush.msra.mxu0 0.0
      %435 = vmatpush.msra.mxu0 0.0
      %436 = vmatpush.msra.mxu0 0.0
      %437 = vmatpush.msra.mxu0 0.0
      %438 = vmatpush.msra.mxu0 0.0
      %439 = vmatpush.msra.mxu0 %v320
      %440 = vmatmul.f32.gmra.mxu0 %v309
      %v441 = vpop.f32.mrf.mxu0
      %v442 = vadd.f32 0.0, %v441
      %443 = vdwg.mxu0
      %444 = vmatpush.msra.mxu0 0.0
      %445 = vmatpush.msra.mxu0 0.0
      %446 = vmatpush.msra.mxu0 0.0
      %447 = vmatpush.msra.mxu0 0.0
      %448 = vmatpush.msra.mxu0 0.0
      %449 = vmatpush.msra.mxu0 0.0
      %450 = vmatpush.msra.mxu0 0.0
      %451 = vmatpush.msra.mxu0 0.0
      %452 = vmatpush.msra.mxu0 0.0
      %453 = vmatpush.msra.mxu0 0.0
      %454 = vmatpush.msra.mxu0 0.0
      %455 = vmatpush.msra.mxu0 0.0
      %456 = vmatpush.msra.mxu0 0.0
      %457 = vmatpush.msra.mxu0 0.0
      %458 = vmatpush.msra.mxu0 0.0
      %459 = vmatpush.msra.mxu0 %v322
      %460 = vmatmul.f32.gmra.mxu0 %v309
      %v461 = vpop.f32.mrf.mxu0
      %v462 = vadd.f32 0.0, %v461
      %463 = vdwg.mxu0
      %464 = vmatpush.msra.mxu0 0.0
      %465 = vmatpush.msra.mxu0 0.0
      %466 = vmatpush.msra.mxu0 0.0
      %467 = vmatpush.msra.mxu0 0.0
      %468 = vmatpush.msra.mxu0 0.0
      %469 = vmatpush.msra.mxu0 0.0
      %470 = vmatpush.msra.mxu0 0.0
      %471 = vmatpush.msra.mxu0 0.0
      %472 = vmatpush.msra.mxu0 0.0
      %473 = vmatpush.msra.mxu0 0.0
      %474 = vmatpush.msra.mxu0 0.0
      %475 = vmatpush.msra.mxu0 0.0
      %476 = vmatpush.msra.mxu0 0.0
      %477 = vmatpush.msra.mxu0 0.0
      %478 = vmatpush.msra.mxu0 0.0
      %479 = vmatpush.msra.mxu0 %v324
      %480 = vmatmul.f32.gmra.mxu0 %v309
      %v481 = vpop.f32.mrf.mxu0
      %v482 = vadd.f32 0.0, %v481
      %483 = vdwg.mxu0
      %484 = vmatpush.msra.mxu0 0.0
      %485 = vmatpush.msra.mxu0 0.0
      %486 = vmatpush.msra.mxu0 0.0
      %487 = vmatpush.msra.mxu0 0.0
      %488 = vmatpush.msra.mxu0 0.0
      %489 = vmatpush.msra.mxu0 0.0
      %490 = vmatpush.msra.mxu0 0.0
      %491 = vmatpush.msra.mxu0 0.0
      %492 = vmatpush.msra.mxu0 0.0
      %493 = vmatpush.msra.mxu0 0.0
      %494 = vmatpush.msra.mxu0 0.0
      %495 = vmatpush.msra.mxu0 0.0
      %496 = vmatpush.msra.mxu0 0.0
      %497 = vmatpush.msra.mxu0 0.0
      %498 = vmatpush.msra.mxu0 0.0
      %499 = vmatpush.msra.mxu0 %v326
      %500 = vmatmul.f32.gmra.mxu0 %v309
      %v501 = vpop.f32.mrf.mxu0
      %v502 = vadd.f32 0.0, %v501
      %503 = vdwg.mxu0
      %504 = vmatpush.msra.mxu0 0.0
      %505 = vmatpush.msra.mxu0 0.0
      %506 = vmatpush.msra.mxu0 0.0
      %507 = vmatpush.msra.mxu0 0.0
      %508 = vmatpush.msra.mxu0 0.0
      %509 = vmatpush.msra.mxu0 0.0
      %510 = vmatpush.msra.mxu0 0.0
      %511 = vmatpush.msra.mxu0 0.0
      %512 = vmatpush.msra.mxu0 0.0
      %513 = vmatpush.msra.mxu0 0.0
      %514 = vmatpush.msra.mxu0 0.0
      %515 = vmatpush.msra.mxu0 0.0
      %516 = vmatpush.msra.mxu0 0.0
      %517 = vmatpush.msra.mxu0 0.0
      %518 = vmatpush.msra.mxu0 0.0
      %519 = vmatpush.msra.mxu0 %v328
      %520 = vmatmul.f32.gmra.mxu0 %v309
      %v521 = vpop.f32.mrf.mxu0
      %v522 = vadd.f32 0.0, %v521
      %523 = vdwg.mxu0
      %524 = vmatpush.msra.mxu0 0.0
      %525 = vmatpush.msra.mxu0 0.0
      %526 = vmatpush.msra.mxu0 0.0
      %527 = vmatpush.msra.mxu0 0.0
      %528 = vmatpush.msra.mxu0 0.0
      %529 = vmatpush.msra.mxu0 0.0
      %530 = vmatpush.msra.mxu0 0.0
      %531 = vmatpush.msra.mxu0 0.0
      %532 = vmatpush.msra.mxu0 0.0
      %533 = vmatpush.msra.mxu0 0.0
      %534 = vmatpush.msra.mxu0 0.0
      %535 = vmatpush.msra.mxu0 0.0
      %536 = vmatpush.msra.mxu0 0.0
      %537 = vmatpush.msra.mxu0 0.0
      %538 = vmatpush.msra.mxu0 0.0
      %539 = vmatpush.msra.mxu0 %v330
      %540 = vmatmul.f32.gmra.mxu0 %v309
      %v541 = vpop.f32.mrf.mxu0
      %v542 = vadd.f32 0.0, %v541
      %543 = vdwg.mxu0
      %544 = vmatpush.msra.mxu0 0.0
      %545 = vmatpush.msra.mxu0 0.0
      %546 = vmatpush.msra.mxu0 0.0
      %547 = vmatpush.msra.mxu0 0.0
      %548 = vmatpush.msra.mxu0 0.0
      %549 = vmatpush.msra.mxu0 0.0
      %550 = vmatpush.msra.mxu0 0.0
      %551 = vmatpush.msra.mxu0 0.0
      %552 = vmatpush.msra.mxu0 0.0
      %553 = vmatpush.msra.mxu0 0.0
      %554 = vmatpush.msra.mxu0 0.0
      %555 = vmatpush.msra.mxu0 0.0
      %556 = vmatpush.msra.mxu0 0.0
      %557 = vmatpush.msra.mxu0 0.0
      %558 = vmatpush.msra.mxu0 0.0
      %559 = vmatpush.msra.mxu0 %v332
      %560 = vmatmul.f32.gmra.mxu0 %v309
      %v561 = vpop.f32.mrf.mxu0
      %v562 = vadd.f32 0.0, %v561
      %563 = vdwg.mxu0
      %564 = vmatpush.msra.mxu0 0.0
      %565 = vmatpush.msra.mxu0 0.0
      %566 = vmatpush.msra.mxu0 0.0
      %567 = vmatpush.msra.mxu0 0.0
      %568 = vmatpush.msra.mxu0 0.0
      %569 = vmatpush.msra.mxu0 0.0
      %570 = vmatpush.msra.mxu0 0.0
      %571 = vmatpush.msra.mxu0 0.0
      %572 = vmatpush.msra.mxu0 0.0
      %573 = vmatpush.msra.mxu0 0.0
      %574 = vmatpush.msra.mxu0 0.0
      %575 = vmatpush.msra.mxu0 0.0
      %576 = vmatpush.msra.mxu0 0.0
      %577 = vmatpush.msra.mxu0 0.0
      %578 = vmatpush.msra.mxu0 0.0
      %579 = vmatpush.msra.mxu0 %v334
      %580 = vmatmul.f32.gmra.mxu0 %v309
      %v581 = vpop.f32.mrf.mxu0
      %v582 = vadd.f32 0.0, %v581
      %583 = vdwg.mxu0
      %584 = vmatpush.msra.mxu0 0.0
      %585 = vmatpush.msra.mxu0 0.0
      %586 = vmatpush.msra.mxu0 0.0
      %587 = vmatpush.msra.mxu0 0.0
      %588 = vmatpush.msra.mxu0 0.0
      %589 = vmatpush.msra.mxu0 0.0
      %590 = vmatpush.msra.mxu0 0.0
      %591 = vmatpush.msra.mxu0 0.0
      %592 = vmatpush.msra.mxu0 0.0
      %593 = vmatpush.msra.mxu0 0.0
      %594 = vmatpush.msra.mxu0 0.0
      %595 = vmatpush.msra.mxu0 0.0
      %596 = vmatpush.msra.mxu0 0.0
      %597 = vmatpush.msra.mxu0 0.0
      %598 = vmatpush.msra.mxu0 0.0
      %599 = vmatpush.msra.mxu0 %v336
      %600 = vmatmul.f32.gmra.mxu0 %v309
      %v601 = vpop.f32.mrf.mxu0
      %v602 = vadd.f32 0.0, %v601
      %603 = vdwg.mxu0
      %604 = vmatpush.msra.mxu0 0.0
      %605 = vmatpush.msra.mxu0 0.0
      %606 = vmatpush.msra.mxu0 0.0
      %607 = vmatpush.msra.mxu0 0.0
      %608 = vmatpush.msra.mxu0 0.0
      %609 = vmatpush.msra.mxu0 0.0
      %610 = vmatpush.msra.mxu0 0.0
      %611 = vmatpush.msra.mxu0 0.0
      %612 = vmatpush.msra.mxu0 0.0
      %613 = vmatpush.msra.mxu0 0.0
      %614 = vmatpush.msra.mxu0 0.0
      %615 = vmatpush.msra.mxu0 0.0
      %616 = vmatpush.msra.mxu0 0.0
      %617 = vmatpush.msra.mxu0 0.0
      %618 = vmatpush.msra.mxu0 0.0
      %619 = vmatpush.msra.mxu0 %v338
      %620 = vmatmul.f32.gmra.mxu0 %v309
      %v621 = vpop.f32.mrf.mxu0
      %v622 = vadd.f32 0.0, %v621
      %623 = vdwg.mxu0
      %624 = vmatpush.msra.mxu0 0.0
      %625 = vmatpush.msra.mxu0 0.0
      %626 = vmatpush.msra.mxu0 0.0
      %627 = vmatpush.msra.mxu0 0.0
      %628 = vmatpush.msra.mxu0 0.0
      %629 = vmatpush.msra.mxu0 0.0
      %630 = vmatpush.msra.mxu0 0.0
      %631 = vmatpush.msra.mxu0 0.0
      %632 = vmatpush.msra.mxu0 0.0
      %633 = vmatpush.msra.mxu0 0.0
      %634 = vmatpush.msra.mxu0 0.0
      %635 = vmatpush.msra.mxu0 0.0
      %636 = vmatpush.msra.mxu0 0.0
      %637 = vmatpush.msra.mxu0 0.0
      %638 = vmatpush.msra.mxu0 0.0
      %639 = vmatpush.msra.mxu0 %v340
      %640 = vmatmul.f32.gmra.mxu0 %v309
      %v641 = vpop.f32.mrf.mxu0
      %v642 = vadd.f32 0.0, %v641
      %643 = vdwg.mxu0
      %644 = vmatpush.msra.mxu0 0.0
      %645 = vmatpush.msra.mxu0 0.0
      %646 = vmatpush.msra.mxu0 0.0
      %647 = vmatpush.msra.mxu0 0.0
      %648 = vmatpush.msra.mxu0 0.0
      %649 = vmatpush.msra.mxu0 0.0
      %650 = vmatpush.msra.mxu0 0.0
      %651 = vmatpush.msra.mxu0 0.0
      %652 = vmatpush.msra.mxu0 0.0
      %653 = vmatpush.msra.mxu0 0.0
      %654 = vmatpush.msra.mxu0 0.0
      %655 = vmatpush.msra.mxu0 0.0
      %656 = vmatpush.msra.mxu0 0.0
      %657 = vmatpush.msra.mxu0 0.0
      %658 = vmatpush.msra.mxu0 0.0
      %659 = vmatpush.msra.mxu0 %v342
      %660 = vmatmul.f32.gmra.mxu0 %v309
      %v661 = vpop.f32.mrf.mxu0
      %v662 = vadd.f32 0.0, %v661
      %663 = vdwg.mxu0
      %664 = vst [vmem:[#allocation1] ss:$2 sm:$0xff] %v206
      %s665 = scalar_lea.vmem [#allocation1], 16
      %666 = vst [vmem:[%s665] ss:$2 sm:$0xff] %v207
      %s667 = scalar_lea.vmem [#allocation1], 32
      %668 = vst [vmem:[%s667] ss:$2 sm:$0xff] %v208
      %s669 = scalar_lea.vmem [#allocation1], 48
      %670 = vst [vmem:[%s669] ss:$2 sm:$0xff] %v209
      %v671 = vld.sshfl [vmem:[#allocation1] sm:$0xff pattern:$0x75316420]
      %v672 = vld.sshfl [vmem:[#allocation1 + $0x8] sm:$0xff pattern:$0x75316420]
      %v673 = vld.sshfl [vmem:[#allocation1 + $0x10] sm:$0xff pattern:$0x75316420]
      %v674 = vld.sshfl [vmem:[#allocation1 + $0x18] sm:$0xff pattern:$0x75316420]
      %v675 = vld.sshfl [vmem:[#allocation1 + $0x20] sm:$0xff pattern:$0x75316420]
      %v676 = vld.sshfl [vmem:[#allocation1 + $0x28] sm:$0xff pattern:$0x75316420]
      %v677 = vld.sshfl [vmem:[#allocation1 + $0x30] sm:$0xff pattern:$0x75316420]
      %v678 = vld.sshfl [vmem:[#allocation1 + $0x38] sm:$0xff pattern:$0x75316420]
      %679 = vst [vmem:[#allocation1] ss:$2 sm:$0xff] %v210
      %680 = vst [vmem:[%s665] ss:$2 sm:$0xff] %v211
      %681 = vst [vmem:[%s667] ss:$2 sm:$0xff] %v212
      %682 = vst [vmem:[%s669] ss:$2 sm:$0xff] %v213
      %v683 = vld.sshfl [vmem:[#allocation1] sm:$0xff pattern:$0x75316420]
      %v684 = vld.sshfl [vmem:[#allocation1 + $0x8] sm:$0xff pattern:$0x75316420]
      %v685 = vld.sshfl [vmem:[#allocation1 + $0x10] sm:$0xff pattern:$0x75316420]
      %v686 = vld.sshfl [vmem:[#allocation1 + $0x18] sm:$0xff pattern:$0x75316420]
      %v687 = vld.sshfl [vmem:[#allocation1 + $0x20] sm:$0xff pattern:$0x75316420]
      %v688 = vld.sshfl [vmem:[#allocation1 + $0x28] sm:$0xff pattern:$0x75316420]
      %v689 = vld.sshfl [vmem:[#allocation1 + $0x30] sm:$0xff pattern:$0x75316420]
      %v690 = vld.sshfl [vmem:[#allocation1 + $0x38] sm:$0xff pattern:$0x75316420]
      %v692 = vsel %vm307, %v214, 0
      %v694 = vsel %vm311, %v671, 0
      %v696 = vsel %vm311, %v672, 0
      %v698 = vsel %vm311, %v673, 0
      %v700 = vsel %vm311, %v674, 0
      %v702 = vsel %vm311, %v675, 0
      %v704 = vsel %vm311, %v676, 0
      %v706 = vsel %vm311, %v677, 0
      %v708 = vsel %vm311, %v678, 0
      %v710 = vsel %vm311, %v683, 0
      %v712 = vsel %vm311, %v684, 0
      %v714 = vsel %vm311, %v685, 0
      %v716 = vsel %vm311, %v686, 0
      %v718 = vsel %vm311, %v687, 0
      %v720 = vsel %vm311, %v688, 0
      %v722 = vsel %vm311, %v689, 0
      %v724 = vsel %vm311, %v690, 0
      %726 = vmatpush.msra.mxu0 0.0
      %727 = vmatpush.msra.mxu0 0.0
      %728 = vmatpush.msra.mxu0 0.0
      %729 = vmatpush.msra.mxu0 0.0
      %730 = vmatpush.msra.mxu0 0.0
      %731 = vmatpush.msra.mxu0 0.0
      %732 = vmatpush.msra.mxu0 0.0
      %733 = vmatpush.msra.mxu0 0.0
      %734 = vmatpush.msra.mxu0 0.0
      %735 = vmatpush.msra.mxu0 0.0
      %736 = vmatpush.msra.mxu0 0.0
      %737 = vmatpush.msra.mxu0 0.0
      %738 = vmatpush.msra.mxu0 0.0
      %739 = vmatpush.msra.mxu0 0.0
      %740 = vmatpush.msra.mxu0 0.0
      %741 = vmatpush.msra.mxu0 %v694
      %742 = vmatmul.f32.gmra.mxu0 %v692
      %v743 = vpop.f32.mrf.mxu0
      %v744 = vadd.f32 %v362, %v743
      %745 = vdwg.mxu0
      %746 = vmatpush.msra.mxu0 0.0
      %747 = vmatpush.msra.mxu0 0.0
      %748 = vmatpush.msra.mxu0 0.0
      %749 = vmatpush.msra.mxu0 0.0
      %750 = vmatpush.msra.mxu0 0.0
      %751 = vmatpush.msra.mxu0 0.0
      %752 = vmatpush.msra.mxu0 0.0
      %753 = vmatpush.msra.mxu0 0.0
      %754 = vmatpush.msra.mxu0 0.0
      %755 = vmatpush.msra.mxu0 0.0
      %756 = vmatpush.msra.mxu0 0.0
      %757 = vmatpush.msra.mxu0 0.0
      %758 = vmatpush.msra.mxu0 0.0
      %759 = vmatpush.msra.mxu0 0.0
      %760 = vmatpush.msra.mxu0 0.0
      %761 = vmatpush.msra.mxu0 %v696
      %762 = vmatmul.f32.gmra.mxu0 %v692
      %v763 = vpop.f32.mrf.mxu0
      %v764 = vadd.f32 %v382, %v763
      %765 = vdwg.mxu0
      %766 = vmatpush.msra.mxu0 0.0
      %767 = vmatpush.msra.mxu0 0.0
      %768 = vmatpush.msra.mxu0 0.0
      %769 = vmatpush.msra.mxu0 0.0
      %770 = vmatpush.msra.mxu0 0.0
      %771 = vmatpush.msra.mxu0 0.0
      %772 = vmatpush.msra.mxu0 0.0
      %773 = vmatpush.msra.mxu0 0.0
      %774 = vmatpush.msra.mxu0 0.0
      %775 = vmatpush.msra.mxu0 0.0
      %776 = vmatpush.msra.mxu0 0.0
      %777 = vmatpush.msra.mxu0 0.0
      %778 = vmatpush.msra.mxu0 0.0
      %779 = vmatpush.msra.mxu0 0.0
      %780 = vmatpush.msra.mxu0 0.0
      %781 = vmatpush.msra.mxu0 %v698
      %782 = vmatmul.f32.gmra.mxu0 %v692
      %v783 = vpop.f32.mrf.mxu0
      %v784 = vadd.f32 %v402, %v783
      %785 = vdwg.mxu0
      %786 = vmatpush.msra.mxu0 0.0
      %787 = vmatpush.msra.mxu0 0.0
      %788 = vmatpush.msra.mxu0 0.0
      %789 = vmatpush.msra.mxu0 0.0
      %790 = vmatpush.msra.mxu0 0.0
      %791 = vmatpush.msra.mxu0 0.0
      %792 = vmatpush.msra.mxu0 0.0
      %793 = vmatpush.msra.mxu0 0.0
      %794 = vmatpush.msra.mxu0 0.0
      %795 = vmatpush.msra.mxu0 0.0
      %796 = vmatpush.msra.mxu0 0.0
      %797 = vmatpush.msra.mxu0 0.0
      %798 = vmatpush.msra.mxu0 0.0
      %799 = vmatpush.msra.mxu0 0.0
      %800 = vmatpush.msra.mxu0 0.0
      %801 = vmatpush.msra.mxu0 %v700
      %802 = vmatmul.f32.gmra.mxu0 %v692
      %v803 = vpop.f32.mrf.mxu0
      %v804 = vadd.f32 %v422, %v803
      %805 = vdwg.mxu0
      %806 = vmatpush.msra.mxu0 0.0
      %807 = vmatpush.msra.mxu0 0.0
      %808 = vmatpush.msra.mxu0 0.0
      %809 = vmatpush.msra.mxu0 0.0
      %810 = vmatpush.msra.mxu0 0.0
      %811 = vmatpush.msra.mxu0 0.0
      %812 = vmatpush.msra.mxu0 0.0
      %813 = vmatpush.msra.mxu0 0.0
      %814 = vmatpush.msra.mxu0 0.0
      %815 = vmatpush.msra.mxu0 0.0
      %816 = vmatpush.msra.mxu0 0.0
      %817 = vmatpush.msra.mxu0 0.0
      %818 = vmatpush.msra.mxu0 0.0
      %819 = vmatpush.msra.mxu0 0.0
      %820 = vmatpush.msra.mxu0 0.0
      %821 = vmatpush.msra.mxu0 %v702
      %822 = vmatmul.f32.gmra.mxu0 %v692
      %v823 = vpop.f32.mrf.mxu0
      %v824 = vadd.f32 %v442, %v823
      %825 = vdwg.mxu0
      %826 = vmatpush.msra.mxu0 0.0
      %827 = vmatpush.msra.mxu0 0.0
      %828 = vmatpush.msra.mxu0 0.0
      %829 = vmatpush.msra.mxu0 0.0
      %830 = vmatpush.msra.mxu0 0.0
      %831 = vmatpush.msra.mxu0 0.0
      %832 = vmatpush.msra.mxu0 0.0
      %833 = vmatpush.msra.mxu0 0.0
      %834 = vmatpush.msra.mxu0 0.0
      %835 = vmatpush.msra.mxu0 0.0
      %836 = vmatpush.msra.mxu0 0.0
      %837 = vmatpush.msra.mxu0 0.0
      %838 = vmatpush.msra.mxu0 0.0
      %839 = vmatpush.msra.mxu0 0.0
      %840 = vmatpush.msra.mxu0 0.0
      %841 = vmatpush.msra.mxu0 %v704
      %842 = vmatmul.f32.gmra.mxu0 %v692
      %v843 = vpop.f32.mrf.mxu0
      %v844 = vadd.f32 %v462, %v843
      %845 = vdwg.mxu0
      %846 = vmatpush.msra.mxu0 0.0
      %847 = vmatpush.msra.mxu0 0.0
      %848 = vmatpush.msra.mxu0 0.0
      %849 = vmatpush.msra.mxu0 0.0
      %850 = vmatpush.msra.mxu0 0.0
      %851 = vmatpush.msra.mxu0 0.0
      %852 = vmatpush.msra.mxu0 0.0
      %853 = vmatpush.msra.mxu0 0.0
      %854 = vmatpush.msra.mxu0 0.0
      %855 = vmatpush.msra.mxu0 0.0
      %856 = vmatpush.msra.mxu0 0.0
      %857 = vmatpush.msra.mxu0 0.0
      %858 = vmatpush.msra.mxu0 0.0
      %859 = vmatpush.msra.mxu0 0.0
      %860 = vmatpush.msra.mxu0 0.0
      %861 = vmatpush.msra.mxu0 %v706
      %862 = vmatmul.f32.gmra.mxu0 %v692
      %v863 = vpop.f32.mrf.mxu0
      %v864 = vadd.f32 %v482, %v863
      %865 = vdwg.mxu0
      %866 = vmatpush.msra.mxu0 0.0
      %867 = vmatpush.msra.mxu0 0.0
      %868 = vmatpush.msra.mxu0 0.0
      %869 = vmatpush.msra.mxu0 0.0
      %870 = vmatpush.msra.mxu0 0.0
      %871 = vmatpush.msra.mxu0 0.0
      %872 = vmatpush.msra.mxu0 0.0
      %873 = vmatpush.msra.mxu0 0.0
      %874 = vmatpush.msra.mxu0 0.0
      %875 = vmatpush.msra.mxu0 0.0
      %876 = vmatpush.msra.mxu0 0.0
      %877 = vmatpush.msra.mxu0 0.0
      %878 = vmatpush.msra.mxu0 0.0
      %879 = vmatpush.msra.mxu0 0.0
      %880 = vmatpush.msra.mxu0 0.0
      %881 = vmatpush.msra.mxu0 %v708
      %882 = vmatmul.f32.gmra.mxu0 %v692
      %v883 = vpop.f32.mrf.mxu0
      %v884 = vadd.f32 %v502, %v883
      %885 = vdwg.mxu0
      %886 = vmatpush.msra.mxu0 0.0
      %887 = vmatpush.msra.mxu0 0.0
      %888 = vmatpush.msra.mxu0 0.0
      %889 = vmatpush.msra.mxu0 0.0
      %890 = vmatpush.msra.mxu0 0.0
      %891 = vmatpush.msra.mxu0 0.0
      %892 = vmatpush.msra.mxu0 0.0
      %893 = vmatpush.msra.mxu0 0.0
      %894 = vmatpush.msra.mxu0 0.0
      %895 = vmatpush.msra.mxu0 0.0
      %896 = vmatpush.msra.mxu0 0.0
      %897 = vmatpush.msra.mxu0 0.0
      %898 = vmatpush.msra.mxu0 0.0
      %899 = vmatpush.msra.mxu0 0.0
      %900 = vmatpush.msra.mxu0 0.0
      %901 = vmatpush.msra.mxu0 %v710
      %902 = vmatmul.f32.gmra.mxu0 %v692
      %v903 = vpop.f32.mrf.mxu0
      %v904 = vadd.f32 %v522, %v903
      %905 = vdwg.mxu0
      %906 = vmatpush.msra.mxu0 0.0
      %907 = vmatpush.msra.mxu0 0.0
      %908 = vmatpush.msra.mxu0 0.0
      %909 = vmatpush.msra.mxu0 0.0
      %910 = vmatpush.msra.mxu0 0.0
      %911 = vmatpush.msra.mxu0 0.0
      %912 = vmatpush.msra.mxu0 0.0
      %913 = vmatpush.msra.mxu0 0.0
      %914 = vmatpush.msra.mxu0 0.0
      %915 = vmatpush.msra.mxu0 0.0
      %916 = vmatpush.msra.mxu0 0.0
      %917 = vmatpush.msra.mxu0 0.0
      %918 = vmatpush.msra.mxu0 0.0
      %919 = vmatpush.msra.mxu0 0.0
      %920 = vmatpush.msra.mxu0 0.0
      %921 = vmatpush.msra.mxu0 %v712
      %922 = vmatmul.f32.gmra.mxu0 %v692
      %v923 = vpop.f32.mrf.mxu0
      %v924 = vadd.f32 %v542, %v923
      %925 = vdwg.mxu0
      %926 = vmatpush.msra.mxu0 0.0
      %927 = vmatpush.msra.mxu0 0.0
      %928 = vmatpush.msra.mxu0 0.0
      %929 = vmatpush.msra.mxu0 0.0
      %930 = vmatpush.msra.mxu0 0.0
      %931 = vmatpush.msra.mxu0 0.0
      %932 = vmatpush.msra.mxu0 0.0
      %933 = vmatpush.msra.mxu0 0.0
      %934 = vmatpush.msra.mxu0 0.0
      %935 = vmatpush.msra.mxu0 0.0
      %936 = vmatpush.msra.mxu0 0.0
      %937 = vmatpush.msra.mxu0 0.0
      %938 = vmatpush.msra.mxu0 0.0
      %939 = vmatpush.msra.mxu0 0.0
      %940 = vmatpush.msra.mxu0 0.0
      %941 = vmatpush.msra.mxu0 %v714
      %942 = vmatmul.f32.gmra.mxu0 %v692
      %v943 = vpop.f32.mrf.mxu0
      %v944 = vadd.f32 %v562, %v943
      %945 = vdwg.mxu0
      %946 = vmatpush.msra.mxu0 0.0
      %947 = vmatpush.msra.mxu0 0.0
      %948 = vmatpush.msra.mxu0 0.0
      %949 = vmatpush.msra.mxu0 0.0
      %950 = vmatpush.msra.mxu0 0.0
      %951 = vmatpush.msra.mxu0 0.0
      %952 = vmatpush.msra.mxu0 0.0
      %953 = vmatpush.msra.mxu0 0.0
      %954 = vmatpush.msra.mxu0 0.0
      %955 = vmatpush.msra.mxu0 0.0
      %956 = vmatpush.msra.mxu0 0.0
      %957 = vmatpush.msra.mxu0 0.0
      %958 = vmatpush.msra.mxu0 0.0
      %959 = vmatpush.msra.mxu0 0.0
      %960 = vmatpush.msra.mxu0 0.0
      %961 = vmatpush.msra.mxu0 %v716
      %962 = vmatmul.f32.gmra.mxu0 %v692
      %v963 = vpop.f32.mrf.mxu0
      %v964 = vadd.f32 %v582, %v963
      %965 = vdwg.mxu0
      %966 = vmatpush.msra.mxu0 0.0
      %967 = vmatpush.msra.mxu0 0.0
      %968 = vmatpush.msra.mxu0 0.0
      %969 = vmatpush.msra.mxu0 0.0
      %970 = vmatpush.msra.mxu0 0.0
      %971 = vmatpush.msra.mxu0 0.0
      %972 = vmatpush.msra.mxu0 0.0
      %973 = vmatpush.msra.mxu0 0.0
      %974 = vmatpush.msra.mxu0 0.0
      %975 = vmatpush.msra.mxu0 0.0
      %976 = vmatpush.msra.mxu0 0.0
      %977 = vmatpush.msra.mxu0 0.0
      %978 = vmatpush.msra.mxu0 0.0
      %979 = vmatpush.msra.mxu0 0.0
      %980 = vmatpush.msra.mxu0 0.0
      %981 = vmatpush.msra.mxu0 %v718
      %982 = vmatmul.f32.gmra.mxu0 %v692
      %v983 = vpop.f32.mrf.mxu0
      %v984 = vadd.f32 %v602, %v983
      %985 = vdwg.mxu0
      %986 = vmatpush.msra.mxu0 0.0
      %987 = vmatpush.msra.mxu0 0.0
      %988 = vmatpush.msra.mxu0 0.0
      %989 = vmatpush.msra.mxu0 0.0
      %990 = vmatpush.msra.mxu0 0.0
      %991 = vmatpush.msra.mxu0 0.0
      %992 = vmatpush.msra.mxu0 0.0
      %993 = vmatpush.msra.mxu0 0.0
      %994 = vmatpush.msra.mxu0 0.0
      %995 = vmatpush.msra.mxu0 0.0
      %996 = vmatpush.msra.mxu0 0.0
      %997 = vmatpush.msra.mxu0 0.0
      %998 = vmatpush.msra.mxu0 0.0
      %999 = vmatpush.msra.mxu0 0.0
      %1000 = vmatpush.msra.mxu0 0.0
      %1001 = vmatpush.msra.mxu0 %v720
      %1002 = vmatmul.f32.gmra.mxu0 %v692
      %v1003 = vpop.f32.mrf.mxu0
      %v1004 = vadd.f32 %v622, %v1003
      %1005 = vdwg.mxu0
      %1006 = vmatpush.msra.mxu0 0.0
      %1007 = vmatpush.msra.mxu0 0.0
      %1008 = vmatpush.msra.mxu0 0.0
      %1009 = vmatpush.msra.mxu0 0.0
      %1010 = vmatpush.msra.mxu0 0.0
      %1011 = vmatpush.msra.mxu0 0.0
      %1012 = vmatpush.msra.mxu0 0.0
      %1013 = vmatpush.msra.mxu0 0.0
      %1014 = vmatpush.msra.mxu0 0.0
      %1015 = vmatpush.msra.mxu0 0.0
      %1016 = vmatpush.msra.mxu0 0.0
      %1017 = vmatpush.msra.mxu0 0.0
      %1018 = vmatpush.msra.mxu0 0.0
      %1019 = vmatpush.msra.mxu0 0.0
      %1020 = vmatpush.msra.mxu0 0.0
      %1021 = vmatpush.msra.mxu0 %v722
      %1022 = vmatmul.f32.gmra.mxu0 %v692
      %v1023 = vpop.f32.mrf.mxu0
      %v1024 = vadd.f32 %v642, %v1023
      %1025 = vdwg.mxu0
      %1026 = vmatpush.msra.mxu0 0.0
      %1027 = vmatpush.msra.mxu0 0.0
      %1028 = vmatpush.msra.mxu0 0.0
      %1029 = vmatpush.msra.mxu0 0.0
      %1030 = vmatpush.msra.mxu0 0.0
      %1031 = vmatpush.msra.mxu0 0.0
      %1032 = vmatpush.msra.mxu0 0.0
      %1033 = vmatpush.msra.mxu0 0.0
      %1034 = vmatpush.msra.mxu0 0.0
      %1035 = vmatpush.msra.mxu0 0.0
      %1036 = vmatpush.msra.mxu0 0.0
      %1037 = vmatpush.msra.mxu0 0.0
      %1038 = vmatpush.msra.mxu0 0.0
      %1039 = vmatpush.msra.mxu0 0.0
      %1040 = vmatpush.msra.mxu0 0.0
      %1041 = vmatpush.msra.mxu0 %v724
      %1042 = vmatmul.f32.gmra.mxu0 %v692
      %v1043 = vpop.f32.mrf.mxu0
      %v1044 = vadd.f32 %v662, %v1043
      %1045 = vdwg.mxu0
      %v1046 = vld [vmem:[%s197] sm:$0xff]
      %v1047 = vld [vmem:[%s197 + $0x8] sm:$0xff]
      %v1048 = vld [vmem:[%s197 + $0x10] sm:$0xff]
      %v1049 = vld [vmem:[%s197 + $0x18] sm:$0xff]
      %v1050 = vld [vmem:[%s197 + $0x20] sm:$0xff]
      %v1051 = vld [vmem:[%s197 + $0x28] sm:$0xff]
      %v1052 = vld [vmem:[%s197 + $0x30] sm:$0xff]
      %v1053 = vld [vmem:[%s197 + $0x38] sm:$0xff]
      %v1054 = vld [vmem:[%s197 + $0x40] sm:$0xf]
      %s1055 = scalar_lea.vmem %s1, 16
      %v1056 = vld [vmem:[%s1055] sm:$0xff]
      %1066 = vst [vmem:[#allocation1] ss:$2 sm:$0xff] %v1046
      %s1067 = scalar_lea.vmem [#allocation1], 16
      %1068 = vst [vmem:[%s1067] ss:$2 sm:$0xff] %v1047
      %s1069 = scalar_lea.vmem [#allocation1], 32
      %1070 = vst [vmem:[%s1069] ss:$2 sm:$0xff] %v1048
      %s1071 = scalar_lea.vmem [#allocation1], 48
      %1072 = vst [vmem:[%s1071] ss:$2 sm:$0xff] %v1049
      %v1073 = vld.sshfl [vmem:[#allocation1] sm:$0xff pattern:$0x75316420]
      %v1074 = vld.sshfl [vmem:[#allocation1 + $0x8] sm:$0xff pattern:$0x75316420]
      %v1075 = vld.sshfl [vmem:[#allocation1 + $0x10] sm:$0xff pattern:$0x75316420]
      %v1076 = vld.sshfl [vmem:[#allocation1 + $0x18] sm:$0xff pattern:$0x75316420]
      %v1077 = vld.sshfl [vmem:[#allocation1 + $0x20] sm:$0xff pattern:$0x75316420]
      %v1078 = vld.sshfl [vmem:[#allocation1 + $0x28] sm:$0xff pattern:$0x75316420]
      %v1079 = vld.sshfl [vmem:[#allocation1 + $0x30] sm:$0xff pattern:$0x75316420]
      %v1080 = vld.sshfl [vmem:[#allocation1 + $0x38] sm:$0xff pattern:$0x75316420]
      %1081 = vst [vmem:[#allocation1] ss:$2 sm:$0xff] %v1050
      %1082 = vst [vmem:[%s1067] ss:$2 sm:$0xff] %v1051
      %1083 = vst [vmem:[%s1069] ss:$2 sm:$0xff] %v1052
      %1084 = vst [vmem:[%s1071] ss:$2 sm:$0xff] %v1053
      %v1085 = vld.sshfl [vmem:[#allocation1] sm:$0xff pattern:$0x75316420]
      %v1086 = vld.sshfl [vmem:[#allocation1 + $0x8] sm:$0xff pattern:$0x75316420]
      %v1087 = vld.sshfl [vmem:[#allocation1 + $0x10] sm:$0xff pattern:$0x75316420]
      %v1088 = vld.sshfl [vmem:[#allocation1 + $0x18] sm:$0xff pattern:$0x75316420]
      %v1089 = vld.sshfl [vmem:[#allocation1 + $0x20] sm:$0xff pattern:$0x75316420]
      %v1090 = vld.sshfl [vmem:[#allocation1 + $0x28] sm:$0xff pattern:$0x75316420]
      %v1091 = vld.sshfl [vmem:[#allocation1 + $0x30] sm:$0xff pattern:$0x75316420]
      %v1092 = vld.sshfl [vmem:[#allocation1 + $0x38] sm:$0xff pattern:$0x75316420]
      %1093 = vst [vmem:[#allocation1] ss:$2 sm:$0xff] %v1054
      %v1094 = vld.sshfl [vmem:[#allocation1] sm:$0xff pattern:$0x75316420]
      %1095 = vrot.lane.b32.xlu0 %v1073, 126
      %v1096 = vpop.permute.xlu0 %1095
      %1097 = vrot.lane.b32.xlu0 %v1074, 126
      %v1098 = vpop.permute.xlu0 %1097
      %1099 = vrot.lane.b32.xlu0 %v1075, 126
      %v1100 = vpop.permute.xlu0 %1099
      %1101 = vrot.lane.b32.xlu0 %v1076, 126
      %v1102 = vpop.permute.xlu0 %1101
      %1103 = vrot.lane.b32.xlu0 %v1077, 126
      %v1104 = vpop.permute.xlu0 %1103
      %1105 = vrot.lane.b32.xlu0 %v1078, 126
      %v1106 = vpop.permute.xlu0 %1105
      %1107 = vrot.lane.b32.xlu0 %v1079, 126
      %v1108 = vpop.permute.xlu0 %1107
      %1109 = vrot.lane.b32.xlu0 %v1080, 126
      %v1110 = vpop.permute.xlu0 %1109
      %1111 = vrot.lane.b32.xlu0 %v1085, 126
      %v1112 = vpop.permute.xlu0 %1111
      %1113 = vrot.lane.b32.xlu0 %v1086, 126
      %v1114 = vpop.permute.xlu0 %1113
      %1115 = vrot.lane.b32.xlu0 %v1087, 126
      %v1116 = vpop.permute.xlu0 %1115
      %1117 = vrot.lane.b32.xlu0 %v1088, 126
      %v1118 = vpop.permute.xlu0 %1117
      %1119 = vrot.lane.b32.xlu0 %v1089, 126
      %v1120 = vpop.permute.xlu0 %1119
      %1121 = vrot.lane.b32.xlu0 %v1090, 126
      %v1122 = vpop.permute.xlu0 %1121
      %1123 = vrot.lane.b32.xlu0 %v1091, 126
      %v1124 = vpop.permute.xlu0 %1123
      %1125 = vrot.lane.b32.xlu0 %v1092, 126
      %v1126 = vpop.permute.xlu0 %1125
      %1127 = vrot.lane.b32.xlu0 %v1094, 126
      %v1128 = vpop.permute.xlu0 %1127
      %vm1129 = vcmask 1031168
      %v1130 = vsel %vm1129, %v1096, %v1098
      %v1131 = vsel %vm1129, %v1098, %v1100
      %v1132 = vsel %vm1129, %v1100, %v1102
      %v1133 = vsel %vm1129, %v1102, %v1104
      %v1134 = vsel %vm1129, %v1104, %v1106
      %v1135 = vsel %vm1129, %v1106, %v1108
      %v1136 = vsel %vm1129, %v1108, %v1110
      %v1137 = vsel %vm1129, %v1110, %v1112
      %v1138 = vsel %vm1129, %v1112, %v1114
      %v1139 = vsel %vm1129, %v1114, %v1116
      %v1140 = vsel %vm1129, %v1116, %v1118
      %v1141 = vsel %vm1129, %v1118, %v1120
      %v1142 = vsel %vm1129, %v1120, %v1122
      %v1143 = vsel %vm1129, %v1122, %v1124
      %v1144 = vsel %vm1129, %v1124, %v1126
      %v1145 = vsel %vm1129, %v1126, %v1128
      %v1147 = vsel %vm307, %v1056, 0
      %v1149 = vsel %vm311, %v1130, 0
      %v1151 = vsel %vm311, %v1131, 0
      %v1153 = vsel %vm311, %v1132, 0
      %v1155 = vsel %vm311, %v1133, 0
      %v1157 = vsel %vm311, %v1134, 0
      %v1159 = vsel %vm311, %v1135, 0
      %v1161 = vsel %vm311, %v1136, 0
      %v1163 = vsel %vm311, %v1137, 0
      %v1165 = vsel %vm311, %v1138, 0
      %v1167 = vsel %vm311, %v1139, 0
      %v1169 = vsel %vm311, %v1140, 0
      %v1171 = vsel %vm311, %v1141, 0
      %v1173 = vsel %vm311, %v1142, 0
      %v1175 = vsel %vm311, %v1143, 0
      %v1177 = vsel %vm311, %v1144, 0
      %v1179 = vsel %vm311, %v1145, 0
      %1181 = vmatpush.msra.mxu0 0.0
      %1182 = vmatpush.msra.mxu0 0.0
      %1183 = vmatpush.msra.mxu0 0.0
      %1184 = vmatpush.msra.mxu0 0.0
      %1185 = vmatpush.msra.mxu0 0.0
      %1186 = vmatpush.msra.mxu0 0.0
      %1187 = vmatpush.msra.mxu0 0.0
      %1188 = vmatpush.msra.mxu0 0.0
      %1189 = vmatpush.msra.mxu0 0.0
      %1190 = vmatpush.msra.mxu0 0.0
      %1191 = vmatpush.msra.mxu0 0.0
      %1192 = vmatpush.msra.mxu0 0.0
      %1193 = vmatpush.msra.mxu0 0.0
      %1194 = vmatpush.msra.mxu0 0.0
      %1195 = vmatpush.msra.mxu0 0.0
      %1196 = vmatpush.msra.mxu0 %v1149
      %1197 = vmatmul.f32.gmra.mxu0 %v1147
      %v1198 = vpop.f32.mrf.mxu0
      %v1199 = vadd.f32 0.0, %v1198
      %1200 = vdwg.mxu0
      %1201 = vmatpush.msra.mxu0 0.0
      %1202 = vmatpush.msra.mxu0 0.0
      %1203 = vmatpush.msra.mxu0 0.0
      %1204 = vmatpush.msra.mxu0 0.0
      %1205 = vmatpush.msra.mxu0 0.0
      %1206 = vmatpush.msra.mxu0 0.0
      %1207 = vmatpush.msra.mxu0 0.0
      %1208 = vmatpush.msra.mxu0 0.0
      %1209 = vmatpush.msra.mxu0 0.0
      %1210 = vmatpush.msra.mxu0 0.0
      %1211 = vmatpush.msra.mxu0 0.0
      %1212 = vmatpush.msra.mxu0 0.0
      %1213 = vmatpush.msra.mxu0 0.0
      %1214 = vmatpush.msra.mxu0 0.0
      %1215 = vmatpush.msra.mxu0 0.0
      %1216 = vmatpush.msra.mxu0 %v1151
      %1217 = vmatmul.f32.gmra.mxu0 %v1147
      %v1218 = vpop.f32.mrf.mxu0
      %v1219 = vadd.f32 0.0, %v1218
      %1220 = vdwg.mxu0
      %1221 = vmatpush.msra.mxu0 0.0
      %1222 = vmatpush.msra.mxu0 0.0
      %1223 = vmatpush.msra.mxu0 0.0
      %1224 = vmatpush.msra.mxu0 0.0
      %1225 = vmatpush.msra.mxu0 0.0
      %1226 = vmatpush.msra.mxu0 0.0
      %1227 = vmatpush.msra.mxu0 0.0
      %1228 = vmatpush.msra.mxu0 0.0
      %1229 = vmatpush.msra.mxu0 0.0
      %1230 = vmatpush.msra.mxu0 0.0
      %1231 = vmatpush.msra.mxu0 0.0
      %1232 = vmatpush.msra.mxu0 0.0
      %1233 = vmatpush.msra.mxu0 0.0
      %1234 = vmatpush.msra.mxu0 0.0
      %1235 = vmatpush.msra.mxu0 0.0
      %1236 = vmatpush.msra.mxu0 %v1153
      %1237 = vmatmul.f32.gmra.mxu0 %v1147
      %v1238 = vpop.f32.mrf.mxu0
      %v1239 = vadd.f32 0.0, %v1238
      %1240 = vdwg.mxu0
      %1241 = vmatpush.msra.mxu0 0.0
      %1242 = vmatpush.msra.mxu0 0.0
      %1243 = vmatpush.msra.mxu0 0.0
      %1244 = vmatpush.msra.mxu0 0.0
      %1245 = vmatpush.msra.mxu0 0.0
      %1246 = vmatpush.msra.mxu0 0.0
      %1247 = vmatpush.msra.mxu0 0.0
      %1248 = vmatpush.msra.mxu0 0.0
      %1249 = vmatpush.msra.mxu0 0.0
      %1250 = vmatpush.msra.mxu0 0.0
      %1251 = vmatpush.msra.mxu0 0.0
      %1252 = vmatpush.msra.mxu0 0.0
      %1253 = vmatpush.msra.mxu0 0.0
      %1254 = vmatpush.msra.mxu0 0.0
      %1255 = vmatpush.msra.mxu0 0.0
      %1256 = vmatpush.msra.mxu0 %v1155
      %1257 = vmatmul.f32.gmra.mxu0 %v1147
      %v1258 = vpop.f32.mrf.mxu0
      %v1259 = vadd.f32 0.0, %v1258
      %1260 = vdwg.mxu0
      %1261 = vmatpush.msra.mxu0 0.0
      %1262 = vmatpush.msra.mxu0 0.0
      %1263 = vmatpush.msra.mxu0 0.0
      %1264 = vmatpush.msra.mxu0 0.0
      %1265 = vmatpush.msra.mxu0 0.0
      %1266 = vmatpush.msra.mxu0 0.0
      %1267 = vmatpush.msra.mxu0 0.0
      %1268 = vmatpush.msra.mxu0 0.0
      %1269 = vmatpush.msra.mxu0 0.0
      %1270 = vmatpush.msra.mxu0 0.0
      %1271 = vmatpush.msra.mxu0 0.0
      %1272 = vmatpush.msra.mxu0 0.0
      %1273 = vmatpush.msra.mxu0 0.0
      %1274 = vmatpush.msra.mxu0 0.0
      %1275 = vmatpush.msra.mxu0 0.0
      %1276 = vmatpush.msra.mxu0 %v1157
      %1277 = vmatmul.f32.gmra.mxu0 %v1147
      %v1278 = vpop.f32.mrf.mxu0
      %v1279 = vadd.f32 0.0, %v1278
      %1280 = vdwg.mxu0
      %1281 = vmatpush.msra.mxu0 0.0
      %1282 = vmatpush.msra.mxu0 0.0
      %1283 = vmatpush.msra.mxu0 0.0
      %1284 = vmatpush.msra.mxu0 0.0
      %1285 = vmatpush.msra.mxu0 0.0
      %1286 = vmatpush.msra.mxu0 0.0
      %1287 = vmatpush.msra.mxu0 0.0
      %1288 = vmatpush.msra.mxu0 0.0
      %1289 = vmatpush.msra.mxu0 0.0
      %1290 = vmatpush.msra.mxu0 0.0
      %1291 = vmatpush.msra.mxu0 0.0
      %1292 = vmatpush.msra.mxu0 0.0
      %1293 = vmatpush.msra.mxu0 0.0
      %1294 = vmatpush.msra.mxu0 0.0
      %1295 = vmatpush.msra.mxu0 0.0
      %1296 = vmatpush.msra.mxu0 %v1159
      %1297 = vmatmul.f32.gmra.mxu0 %v1147
      %v1298 = vpop.f32.mrf.mxu0
      %v1299 = vadd.f32 0.0, %v1298
      %1300 = vdwg.mxu0
      %1301 = vmatpush.msra.mxu0 0.0
      %1302 = vmatpush.msra.mxu0 0.0
      %1303 = vmatpush.msra.mxu0 0.0
      %1304 = vmatpush.msra.mxu0 0.0
      %1305 = vmatpush.msra.mxu0 0.0
      %1306 = vmatpush.msra.mxu0 0.0
      %1307 = vmatpush.msra.mxu0 0.0
      %1308 = vmatpush.msra.mxu0 0.0
      %1309 = vmatpush.msra.mxu0 0.0
      %1310 = vmatpush.msra.mxu0 0.0
      %1311 = vmatpush.msra.mxu0 0.0
      %1312 = vmatpush.msra.mxu0 0.0
      %1313 = vmatpush.msra.mxu0 0.0
      %1314 = vmatpush.msra.mxu0 0.0
      %1315 = vmatpush.msra.mxu0 0.0
      %1316 = vmatpush.msra.mxu0 %v1161
      %1317 = vmatmul.f32.gmra.mxu0 %v1147
      %v1318 = vpop.f32.mrf.mxu0
      %v1319 = vadd.f32 0.0, %v1318
      %1320 = vdwg.mxu0
      %1321 = vmatpush.msra.mxu0 0.0
      %1322 = vmatpush.msra.mxu0 0.0
      %1323 = vmatpush.msra.mxu0 0.0
      %1324 = vmatpush.msra.mxu0 0.0
      %1325 = vmatpush.msra.mxu0 0.0
      %1326 = vmatpush.msra.mxu0 0.0
      %1327 = vmatpush.msra.mxu0 0.0
      %1328 = vmatpush.msra.mxu0 0.0
      %1329 = vmatpush.msra.mxu0 0.0
      %1330 = vmatpush.msra.mxu0 0.0
      %1331 = vmatpush.msra.mxu0 0.0
      %1332 = vmatpush.msra.mxu0 0.0
      %1333 = vmatpush.msra.mxu0 0.0
      %1334 = vmatpush.msra.mxu0 0.0
      %1335 = vmatpush.msra.mxu0 0.0
      %1336 = vmatpush.msra.mxu0 %v1163
      %1337 = vmatmul.f32.gmra.mxu0 %v1147
      %v1338 = vpop.f32.mrf.mxu0
      %v1339 = vadd.f32 0.0, %v1338
      %1340 = vdwg.mxu0
      %1341 = vmatpush.msra.mxu0 0.0
      %1342 = vmatpush.msra.mxu0 0.0
      %1343 = vmatpush.msra.mxu0 0.0
      %1344 = vmatpush.msra.mxu0 0.0
      %1345 = vmatpush.msra.mxu0 0.0
      %1346 = vmatpush.msra.mxu0 0.0
      %1347 = vmatpush.msra.mxu0 0.0
      %1348 = vmatpush.msra.mxu0 0.0
      %1349 = vmatpush.msra.mxu0 0.0
      %1350 = vmatpush.msra.mxu0 0.0
      %1351 = vmatpush.msra.mxu0 0.0
      %1352 = vmatpush.msra.mxu0 0.0
      %1353 = vmatpush.msra.mxu0 0.0
      %1354 = vmatpush.msra.mxu0 0.0
      %1355 = vmatpush.msra.mxu0 0.0
      %1356 = vmatpush.msra.mxu0 %v1165
      %1357 = vmatmul.f32.gmra.mxu0 %v1147
      %v1358 = vpop.f32.mrf.mxu0
      %v1359 = vadd.f32 0.0, %v1358
      %1360 = vdwg.mxu0
      %1361 = vmatpush.msra.mxu0 0.0
      %1362 = vmatpush.msra.mxu0 0.0
      %1363 = vmatpush.msra.mxu0 0.0
      %1364 = vmatpush.msra.mxu0 0.0
      %1365 = vmatpush.msra.mxu0 0.0
      %1366 = vmatpush.msra.mxu0 0.0
      %1367 = vmatpush.msra.mxu0 0.0
      %1368 = vmatpush.msra.mxu0 0.0
      %1369 = vmatpush.msra.mxu0 0.0
      %1370 = vmatpush.msra.mxu0 0.0
      %1371 = vmatpush.msra.mxu0 0.0
      %1372 = vmatpush.msra.mxu0 0.0
      %1373 = vmatpush.msra.mxu0 0.0
      %1374 = vmatpush.msra.mxu0 0.0
      %1375 = vmatpush.msra.mxu0 0.0
      %1376 = vmatpush.msra.mxu0 %v1167
      %1377 = vmatmul.f32.gmra.mxu0 %v1147
      %v1378 = vpop.f32.mrf.mxu0
      %v1379 = vadd.f32 0.0, %v1378
      %1380 = vdwg.mxu0
      %1381 = vmatpush.msra.mxu0 0.0
      %1382 = vmatpush.msra.mxu0 0.0
      %1383 = vmatpush.msra.mxu0 0.0
      %1384 = vmatpush.msra.mxu0 0.0
      %1385 = vmatpush.msra.mxu0 0.0
      %1386 = vmatpush.msra.mxu0 0.0
      %1387 = vmatpush.msra.mxu0 0.0
      %1388 = vmatpush.msra.mxu0 0.0
      %1389 = vmatpush.msra.mxu0 0.0
      %1390 = vmatpush.msra.mxu0 0.0
      %1391 = vmatpush.msra.mxu0 0.0
      %1392 = vmatpush.msra.mxu0 0.0
      %1393 = vmatpush.msra.mxu0 0.0
      %1394 = vmatpush.msra.mxu0 0.0
      %1395 = vmatpush.msra.mxu0 0.0
      %1396 = vmatpush.msra.mxu0 %v1169
      %1397 = vmatmul.f32.gmra.mxu0 %v1147
      %v1398 = vpop.f32.mrf.mxu0
      %v1399 = vadd.f32 0.0, %v1398
      %1400 = vdwg.mxu0
      %1401 = vmatpush.msra.mxu0 0.0
      %1402 = vmatpush.msra.mxu0 0.0
      %1403 = vmatpush.msra.mxu0 0.0
      %1404 = vmatpush.msra.mxu0 0.0
      %1405 = vmatpush.msra.mxu0 0.0
      %1406 = vmatpush.msra.mxu0 0.0
      %1407 = vmatpush.msra.mxu0 0.0
      %1408 = vmatpush.msra.mxu0 0.0
      %1409 = vmatpush.msra.mxu0 0.0
      %1410 = vmatpush.msra.mxu0 0.0
      %1411 = vmatpush.msra.mxu0 0.0
      %1412 = vmatpush.msra.mxu0 0.0
      %1413 = vmatpush.msra.mxu0 0.0
      %1414 = vmatpush.msra.mxu0 0.0
      %1415 = vmatpush.msra.mxu0 0.0
      %1416 = vmatpush.msra.mxu0 %v1171
      %1417 = vmatmul.f32.gmra.mxu0 %v1147
      %v1418 = vpop.f32.mrf.mxu0
      %v1419 = vadd.f32 0.0, %v1418
      %1420 = vdwg.mxu0
      %1421 = vmatpush.msra.mxu0 0.0
      %1422 = vmatpush.msra.mxu0 0.0
      %1423 = vmatpush.msra.mxu0 0.0
      %1424 = vmatpush.msra.mxu0 0.0
      %1425 = vmatpush.msra.mxu0 0.0
      %1426 = vmatpush.msra.mxu0 0.0
      %1427 = vmatpush.msra.mxu0 0.0
      %1428 = vmatpush.msra.mxu0 0.0
      %1429 = vmatpush.msra.mxu0 0.0
      %1430 = vmatpush.msra.mxu0 0.0
      %1431 = vmatpush.msra.mxu0 0.0
      %1432 = vmatpush.msra.mxu0 0.0
      %1433 = vmatpush.msra.mxu0 0.0
      %1434 = vmatpush.msra.mxu0 0.0
      %1435 = vmatpush.msra.mxu0 0.0
      %1436 = vmatpush.msra.mxu0 %v1173
      %1437 = vmatmul.f32.gmra.mxu0 %v1147
      %v1438 = vpop.f32.mrf.mxu0
      %v1439 = vadd.f32 0.0, %v1438
      %1440 = vdwg.mxu0
      %1441 = vmatpush.msra.mxu0 0.0
      %1442 = vmatpush.msra.mxu0 0.0
      %1443 = vmatpush.msra.mxu0 0.0
      %1444 = vmatpush.msra.mxu0 0.0
      %1445 = vmatpush.msra.mxu0 0.0
      %1446 = vmatpush.msra.mxu0 0.0
      %1447 = vmatpush.msra.mxu0 0.0
      %1448 = vmatpush.msra.mxu0 0.0
      %1449 = vmatpush.msra.mxu0 0.0
      %1450 = vmatpush.msra.mxu0 0.0
      %1451 = vmatpush.msra.mxu0 0.0
      %1452 = vmatpush.msra.mxu0 0.0
      %1453 = vmatpush.msra.mxu0 0.0
      %1454 = vmatpush.msra.mxu0 0.0
      %1455 = vmatpush.msra.mxu0 0.0
      %1456 = vmatpush.msra.mxu0 %v1175
      %1457 = vmatmul.f32.gmra.mxu0 %v1147
      %v1458 = vpop.f32.mrf.mxu0
      %v1459 = vadd.f32 0.0, %v1458
      %1460 = vdwg.mxu0
      %1461 = vmatpush.msra.mxu0 0.0
      %1462 = vmatpush.msra.mxu0 0.0
      %1463 = vmatpush.msra.mxu0 0.0
      %1464 = vmatpush.msra.mxu0 0.0
      %1465 = vmatpush.msra.mxu0 0.0
      %1466 = vmatpush.msra.mxu0 0.0
      %1467 = vmatpush.msra.mxu0 0.0
      %1468 = vmatpush.msra.mxu0 0.0
      %1469 = vmatpush.msra.mxu0 0.0
      %1470 = vmatpush.msra.mxu0 0.0
      %1471 = vmatpush.msra.mxu0 0.0
      %1472 = vmatpush.msra.mxu0 0.0
      %1473 = vmatpush.msra.mxu0 0.0
      %1474 = vmatpush.msra.mxu0 0.0
      %1475 = vmatpush.msra.mxu0 0.0
      %1476 = vmatpush.msra.mxu0 %v1177
      %1477 = vmatmul.f32.gmra.mxu0 %v1147
      %v1478 = vpop.f32.mrf.mxu0
      %v1479 = vadd.f32 0.0, %v1478
      %1480 = vdwg.mxu0
      %1481 = vmatpush.msra.mxu0 0.0
      %1482 = vmatpush.msra.mxu0 0.0
      %1483 = vmatpush.msra.mxu0 0.0
      %1484 = vmatpush.msra.mxu0 0.0
      %1485 = vmatpush.msra.mxu0 0.0
      %1486 = vmatpush.msra.mxu0 0.0
      %1487 = vmatpush.msra.mxu0 0.0
      %1488 = vmatpush.msra.mxu0 0.0
      %1489 = vmatpush.msra.mxu0 0.0
      %1490 = vmatpush.msra.mxu0 0.0
      %1491 = vmatpush.msra.mxu0 0.0
      %1492 = vmatpush.msra.mxu0 0.0
      %1493 = vmatpush.msra.mxu0 0.0
      %1494 = vmatpush.msra.mxu0 0.0
      %1495 = vmatpush.msra.mxu0 0.0
      %1496 = vmatpush.msra.mxu0 %v1179
      %1497 = vmatmul.f32.gmra.mxu0 %v1147
      %v1498 = vpop.f32.mrf.mxu0
      %v1499 = vadd.f32 0.0, %v1498
      %1500 = vdwg.mxu0
      %v1501 = vadd.f32 %v744, %v1199
      %v1502 = vadd.f32 %v764, %v1219
      %v1503 = vadd.f32 %v784, %v1239
      %v1504 = vadd.f32 %v804, %v1259
      %v1505 = vadd.f32 %v824, %v1279
      %v1506 = vadd.f32 %v844, %v1299
      %v1507 = vadd.f32 %v864, %v1319
      %v1508 = vadd.f32 %v884, %v1339
      %v1509 = vadd.f32 %v904, %v1359
      %v1510 = vadd.f32 %v924, %v1379
      %v1511 = vadd.f32 %v944, %v1399
      %v1512 = vadd.f32 %v964, %v1419
      %v1513 = vadd.f32 %v984, %v1439
      %v1514 = vadd.f32 %v1004, %v1459
      %v1515 = vadd.f32 %v1024, %v1479
      %v1516 = vadd.f32 %v1044, %v1499
      %v1517 = vld [vmem:[%s197 + $0x4] sm:$0xff]
      %v1518 = vld [vmem:[%s197 + $0xc] sm:$0xff]
      %v1519 = vld [vmem:[%s197 + $0x14] sm:$0xff]
      %v1520 = vld [vmem:[%s197 + $0x1c] sm:$0xff]
      %v1521 = vld [vmem:[%s197 + $0x24] sm:$0xff]
      %v1522 = vld [vmem:[%s197 + $0x2c] sm:$0xff]
      %v1523 = vld [vmem:[%s197 + $0x34] sm:$0xff]
      %v1524 = vld [vmem:[%s197 + $0x3c] sm:$0xff]
      %s1525 = scalar_lea.vmem %s1, 24
      %v1526 = vld [vmem:[%s1525] sm:$0xff]
      %1535 = vst [vmem:[#allocation1] ss:$2 sm:$0xff] %v1517
      %s1536 = scalar_lea.vmem [#allocation1], 16
      %1537 = vst [vmem:[%s1536] ss:$2 sm:$0xff] %v1518
      %s1538 = scalar_lea.vmem [#allocation1], 32
      %1539 = vst [vmem:[%s1538] ss:$2 sm:$0xff] %v1519
      %s1540 = scalar_lea.vmem [#allocation1], 48
      %1541 = vst [vmem:[%s1540] ss:$2 sm:$0xff] %v1520
      %v1542 = vld.sshfl [vmem:[#allocation1] sm:$0xff pattern:$0x75316420]
      %v1543 = vld.sshfl [vmem:[#allocation1 + $0x8] sm:$0xff pattern:$0x75316420]
      %v1544 = vld.sshfl [vmem:[#allocation1 + $0x10] sm:$0xff pattern:$0x75316420]
      %v1545 = vld.sshfl [vmem:[#allocation1 + $0x18] sm:$0xff pattern:$0x75316420]
      %v1546 = vld.sshfl [vmem:[#allocation1 + $0x20] sm:$0xff pattern:$0x75316420]
      %v1547 = vld.sshfl [vmem:[#allocation1 + $0x28] sm:$0xff pattern:$0x75316420]
      %v1548 = vld.sshfl [vmem:[#allocation1 + $0x30] sm:$0xff pattern:$0x75316420]
      %v1549 = vld.sshfl [vmem:[#allocation1 + $0x38] sm:$0xff pattern:$0x75316420]
      %1550 = vst [vmem:[#allocation1] ss:$2 sm:$0xff] %v1521
      %1551 = vst [vmem:[%s1536] ss:$2 sm:$0xff] %v1522
      %1552 = vst [vmem:[%s1538] ss:$2 sm:$0xff] %v1523
      %1553 = vst [vmem:[%s1540] ss:$2 sm:$0xff] %v1524
      %v1554 = vld.sshfl [vmem:[#allocation1] sm:$0xff pattern:$0x75316420]
      %v1555 = vld.sshfl [vmem:[#allocation1 + $0x8] sm:$0xff pattern:$0x75316420]
      %v1556 = vld.sshfl [vmem:[#allocation1 + $0x10] sm:$0xff pattern:$0x75316420]
      %v1557 = vld.sshfl [vmem:[#allocation1 + $0x18] sm:$0xff pattern:$0x75316420]
      %v1558 = vld.sshfl [vmem:[#allocation1 + $0x20] sm:$0xff pattern:$0x75316420]
      %v1559 = vld.sshfl [vmem:[#allocation1 + $0x28] sm:$0xff pattern:$0x75316420]
      %v1560 = vld.sshfl [vmem:[#allocation1 + $0x30] sm:$0xff pattern:$0x75316420]
      %v1561 = vld.sshfl [vmem:[#allocation1 + $0x38] sm:$0xff pattern:$0x75316420]
      %v1563 = vsel %vm307, %v1526, 0
      %v1565 = vsel %vm311, %v1542, 0
      %v1567 = vsel %vm311, %v1543, 0
      %v1569 = vsel %vm311, %v1544, 0
      %v1571 = vsel %vm311, %v1545, 0
      %v1573 = vsel %vm311, %v1546, 0
      %v1575 = vsel %vm311, %v1547, 0
      %v1577 = vsel %vm311, %v1548, 0
      %v1579 = vsel %vm311, %v1549, 0
      %v1581 = vsel %vm311, %v1554, 0
      %v1583 = vsel %vm311, %v1555, 0
      %v1585 = vsel %vm311, %v1556, 0
      %v1587 = vsel %vm311, %v1557, 0
      %v1589 = vsel %vm311, %v1558, 0
      %v1591 = vsel %vm311, %v1559, 0
      %v1593 = vsel %vm311, %v1560, 0
      %v1595 = vsel %vm311, %v1561, 0
      %1597 = vmatpush.msra.mxu0 0.0
      %1598 = vmatpush.msra.mxu0 0.0
      %1599 = vmatpush.msra.mxu0 0.0
      %1600 = vmatpush.msra.mxu0 0.0
      %1601 = vmatpush.msra.mxu0 0.0
      %1602 = vmatpush.msra.mxu0 0.0
      %1603 = vmatpush.msra.mxu0 0.0
      %1604 = vmatpush.msra.mxu0 0.0
      %1605 = vmatpush.msra.mxu0 0.0
      %1606 = vmatpush.msra.mxu0 0.0
      %1607 = vmatpush.msra.mxu0 0.0
      %1608 = vmatpush.msra.mxu0 0.0
      %1609 = vmatpush.msra.mxu0 0.0
      %1610 = vmatpush.msra.mxu0 0.0
      %1611 = vmatpush.msra.mxu0 0.0
      %1612 = vmatpush.msra.mxu0 %v1565
      %1613 = vmatmul.f32.gmra.mxu0 %v1563
      %v1614 = vpop.f32.mrf.mxu0
      %v1615 = vadd.f32 0.0, %v1614
      %1616 = vdwg.mxu0
      %1617 = vmatpush.msra.mxu0 0.0
      %1618 = vmatpush.msra.mxu0 0.0
      %1619 = vmatpush.msra.mxu0 0.0
      %1620 = vmatpush.msra.mxu0 0.0
      %1621 = vmatpush.msra.mxu0 0.0
      %1622 = vmatpush.msra.mxu0 0.0
      %1623 = vmatpush.msra.mxu0 0.0
      %1624 = vmatpush.msra.mxu0 0.0
      %1625 = vmatpush.msra.mxu0 0.0
      %1626 = vmatpush.msra.mxu0 0.0
      %1627 = vmatpush.msra.mxu0 0.0
      %1628 = vmatpush.msra.mxu0 0.0
      %1629 = vmatpush.msra.mxu0 0.0
      %1630 = vmatpush.msra.mxu0 0.0
      %1631 = vmatpush.msra.mxu0 0.0
      %1632 = vmatpush.msra.mxu0 %v1567
      %1633 = vmatmul.f32.gmra.mxu0 %v1563
      %v1634 = vpop.f32.mrf.mxu0
      %v1635 = vadd.f32 0.0, %v1634
      %1636 = vdwg.mxu0
      %1637 = vmatpush.msra.mxu0 0.0
      %1638 = vmatpush.msra.mxu0 0.0
      %1639 = vmatpush.msra.mxu0 0.0
      %1640 = vmatpush.msra.mxu0 0.0
      %1641 = vmatpush.msra.mxu0 0.0
      %1642 = vmatpush.msra.mxu0 0.0
      %1643 = vmatpush.msra.mxu0 0.0
      %1644 = vmatpush.msra.mxu0 0.0
      %1645 = vmatpush.msra.mxu0 0.0
      %1646 = vmatpush.msra.mxu0 0.0
      %1647 = vmatpush.msra.mxu0 0.0
      %1648 = vmatpush.msra.mxu0 0.0
      %1649 = vmatpush.msra.mxu0 0.0
      %1650 = vmatpush.msra.mxu0 0.0
      %1651 = vmatpush.msra.mxu0 0.0
      %1652 = vmatpush.msra.mxu0 %v1569
      %1653 = vmatmul.f32.gmra.mxu0 %v1563
      %v1654 = vpop.f32.mrf.mxu0
      %v1655 = vadd.f32 0.0, %v1654
      %1656 = vdwg.mxu0
      %1657 = vmatpush.msra.mxu0 0.0
      %1658 = vmatpush.msra.mxu0 0.0
      %1659 = vmatpush.msra.mxu0 0.0
      %1660 = vmatpush.msra.mxu0 0.0
      %1661 = vmatpush.msra.mxu0 0.0
      %1662 = vmatpush.msra.mxu0 0.0
      %1663 = vmatpush.msra.mxu0 0.0
      %1664 = vmatpush.msra.mxu0 0.0
      %1665 = vmatpush.msra.mxu0 0.0
      %1666 = vmatpush.msra.mxu0 0.0
      %1667 = vmatpush.msra.mxu0 0.0
      %1668 = vmatpush.msra.mxu0 0.0
      %1669 = vmatpush.msra.mxu0 0.0
      %1670 = vmatpush.msra.mxu0 0.0
      %1671 = vmatpush.msra.mxu0 0.0
      %1672 = vmatpush.msra.mxu0 %v1571
      %1673 = vmatmul.f32.gmra.mxu0 %v1563
      %v1674 = vpop.f32.mrf.mxu0
      %v1675 = vadd.f32 0.0, %v1674
      %1676 = vdwg.mxu0
      %1677 = vmatpush.msra.mxu0 0.0
      %1678 = vmatpush.msra.mxu0 0.0
      %1679 = vmatpush.msra.mxu0 0.0
      %1680 = vmatpush.msra.mxu0 0.0
      %1681 = vmatpush.msra.mxu0 0.0
      %1682 = vmatpush.msra.mxu0 0.0
      %1683 = vmatpush.msra.mxu0 0.0
      %1684 = vmatpush.msra.mxu0 0.0
      %1685 = vmatpush.msra.mxu0 0.0
      %1686 = vmatpush.msra.mxu0 0.0
      %1687 = vmatpush.msra.mxu0 0.0
      %1688 = vmatpush.msra.mxu0 0.0
      %1689 = vmatpush.msra.mxu0 0.0
      %1690 = vmatpush.msra.mxu0 0.0
      %1691 = vmatpush.msra.mxu0 0.0
      %1692 = vmatpush.msra.mxu0 %v1573
      %1693 = vmatmul.f32.gmra.mxu0 %v1563
      %v1694 = vpop.f32.mrf.mxu0
      %v1695 = vadd.f32 0.0, %v1694
      %1696 = vdwg.mxu0
      %1697 = vmatpush.msra.mxu0 0.0
      %1698 = vmatpush.msra.mxu0 0.0
      %1699 = vmatpush.msra.mxu0 0.0
      %1700 = vmatpush.msra.mxu0 0.0
      %1701 = vmatpush.msra.mxu0 0.0
      %1702 = vmatpush.msra.mxu0 0.0
      %1703 = vmatpush.msra.mxu0 0.0
      %1704 = vmatpush.msra.mxu0 0.0
      %1705 = vmatpush.msra.mxu0 0.0
      %1706 = vmatpush.msra.mxu0 0.0
      %1707 = vmatpush.msra.mxu0 0.0
      %1708 = vmatpush.msra.mxu0 0.0
      %1709 = vmatpush.msra.mxu0 0.0
      %1710 = vmatpush.msra.mxu0 0.0
      %1711 = vmatpush.msra.mxu0 0.0
      %1712 = vmatpush.msra.mxu0 %v1575
      %1713 = vmatmul.f32.gmra.mxu0 %v1563
      %v1714 = vpop.f32.mrf.mxu0
      %v1715 = vadd.f32 0.0, %v1714
      %1716 = vdwg.mxu0
      %1717 = vmatpush.msra.mxu0 0.0
      %1718 = vmatpush.msra.mxu0 0.0
      %1719 = vmatpush.msra.mxu0 0.0
      %1720 = vmatpush.msra.mxu0 0.0
      %1721 = vmatpush.msra.mxu0 0.0
      %1722 = vmatpush.msra.mxu0 0.0
      %1723 = vmatpush.msra.mxu0 0.0
      %1724 = vmatpush.msra.mxu0 0.0
      %1725 = vmatpush.msra.mxu0 0.0
      %1726 = vmatpush.msra.mxu0 0.0
      %1727 = vmatpush.msra.mxu0 0.0
      %1728 = vmatpush.msra.mxu0 0.0
      %1729 = vmatpush.msra.mxu0 0.0
      %1730 = vmatpush.msra.mxu0 0.0
      %1731 = vmatpush.msra.mxu0 0.0
      %1732 = vmatpush.msra.mxu0 %v1577
      %1733 = vmatmul.f32.gmra.mxu0 %v1563
      %v1734 = vpop.f32.mrf.mxu0
      %v1735 = vadd.f32 0.0, %v1734
      %1736 = vdwg.mxu0
      %1737 = vmatpush.msra.mxu0 0.0
      %1738 = vmatpush.msra.mxu0 0.0
      %1739 = vmatpush.msra.mxu0 0.0
      %1740 = vmatpush.msra.mxu0 0.0
      %1741 = vmatpush.msra.mxu0 0.0
      %1742 = vmatpush.msra.mxu0 0.0
      %1743 = vmatpush.msra.mxu0 0.0
      %1744 = vmatpush.msra.mxu0 0.0
      %1745 = vmatpush.msra.mxu0 0.0
      %1746 = vmatpush.msra.mxu0 0.0
      %1747 = vmatpush.msra.mxu0 0.0
      %1748 = vmatpush.msra.mxu0 0.0
      %1749 = vmatpush.msra.mxu0 0.0
      %1750 = vmatpush.msra.mxu0 0.0
      %1751 = vmatpush.msra.mxu0 0.0
      %1752 = vmatpush.msra.mxu0 %v1579
      %1753 = vmatmul.f32.gmra.mxu0 %v1563
      %v1754 = vpop.f32.mrf.mxu0
      %v1755 = vadd.f32 0.0, %v1754
      %1756 = vdwg.mxu0
      %1757 = vmatpush.msra.mxu0 0.0
      %1758 = vmatpush.msra.mxu0 0.0
      %1759 = vmatpush.msra.mxu0 0.0
      %1760 = vmatpush.msra.mxu0 0.0
      %1761 = vmatpush.msra.mxu0 0.0
      %1762 = vmatpush.msra.mxu0 0.0
      %1763 = vmatpush.msra.mxu0 0.0
      %1764 = vmatpush.msra.mxu0 0.0
      %1765 = vmatpush.msra.mxu0 0.0
      %1766 = vmatpush.msra.mxu0 0.0
      %1767 = vmatpush.msra.mxu0 0.0
      %1768 = vmatpush.msra.mxu0 0.0
      %1769 = vmatpush.msra.mxu0 0.0
      %1770 = vmatpush.msra.mxu0 0.0
      %1771 = vmatpush.msra.mxu0 0.0
      %1772 = vmatpush.msra.mxu0 %v1581
      %1773 = vmatmul.f32.gmra.mxu0 %v1563
      %v1774 = vpop.f32.mrf.mxu0
      %v1775 = vadd.f32 0.0, %v1774
      %1776 = vdwg.mxu0
      %1777 = vmatpush.msra.mxu0 0.0
      %1778 = vmatpush.msra.mxu0 0.0
      %1779 = vmatpush.msra.mxu0 0.0
      %1780 = vmatpush.msra.mxu0 0.0
      %1781 = vmatpush.msra.mxu0 0.0
      %1782 = vmatpush.msra.mxu0 0.0
      %1783 = vmatpush.msra.mxu0 0.0
      %1784 = vmatpush.msra.mxu0 0.0
      %1785 = vmatpush.msra.mxu0 0.0
      %1786 = vmatpush.msra.mxu0 0.0
      %1787 = vmatpush.msra.mxu0 0.0
      %1788 = vmatpush.msra.mxu0 0.0
      %1789 = vmatpush.msra.mxu0 0.0
      %1790 = vmatpush.msra.mxu0 0.0
      %1791 = vmatpush.msra.mxu0 0.0
      %1792 = vmatpush.msra.mxu0 %v1583
      %1793 = vmatmul.f32.gmra.mxu0 %v1563
      %v1794 = vpop.f32.mrf.mxu0
      %v1795 = vadd.f32 0.0, %v1794
      %1796 = vdwg.mxu0
      %1797 = vmatpush.msra.mxu0 0.0
      %1798 = vmatpush.msra.mxu0 0.0
      %1799 = vmatpush.msra.mxu0 0.0
      %1800 = vmatpush.msra.mxu0 0.0
      %1801 = vmatpush.msra.mxu0 0.0
      %1802 = vmatpush.msra.mxu0 0.0
      %1803 = vmatpush.msra.mxu0 0.0
      %1804 = vmatpush.msra.mxu0 0.0
      %1805 = vmatpush.msra.mxu0 0.0
      %1806 = vmatpush.msra.mxu0 0.0
      %1807 = vmatpush.msra.mxu0 0.0
      %1808 = vmatpush.msra.mxu0 0.0
      %1809 = vmatpush.msra.mxu0 0.0
      %1810 = vmatpush.msra.mxu0 0.0
      %1811 = vmatpush.msra.mxu0 0.0
      %1812 = vmatpush.msra.mxu0 %v1585
      %1813 = vmatmul.f32.gmra.mxu0 %v1563
      %v1814 = vpop.f32.mrf.mxu0
      %v1815 = vadd.f32 0.0, %v1814
      %1816 = vdwg.mxu0
      %1817 = vmatpush.msra.mxu0 0.0
      %1818 = vmatpush.msra.mxu0 0.0
      %1819 = vmatpush.msra.mxu0 0.0
      %1820 = vmatpush.msra.mxu0 0.0
      %1821 = vmatpush.msra.mxu0 0.0
      %1822 = vmatpush.msra.mxu0 0.0
      %1823 = vmatpush.msra.mxu0 0.0
      %1824 = vmatpush.msra.mxu0 0.0
      %1825 = vmatpush.msra.mxu0 0.0
      %1826 = vmatpush.msra.mxu0 0.0
      %1827 = vmatpush.msra.mxu0 0.0
      %1828 = vmatpush.msra.mxu0 0.0
      %1829 = vmatpush.msra.mxu0 0.0
      %1830 = vmatpush.msra.mxu0 0.0
      %1831 = vmatpush.msra.mxu0 0.0
      %1832 = vmatpush.msra.mxu0 %v1587
      %1833 = vmatmul.f32.gmra.mxu0 %v1563
      %v1834 = vpop.f32.mrf.mxu0
      %v1835 = vadd.f32 0.0, %v1834
      %1836 = vdwg.mxu0
      %1837 = vmatpush.msra.mxu0 0.0
      %1838 = vmatpush.msra.mxu0 0.0
      %1839 = vmatpush.msra.mxu0 0.0
      %1840 = vmatpush.msra.mxu0 0.0
      %1841 = vmatpush.msra.mxu0 0.0
      %1842 = vmatpush.msra.mxu0 0.0
      %1843 = vmatpush.msra.mxu0 0.0
      %1844 = vmatpush.msra.mxu0 0.0
      %1845 = vmatpush.msra.mxu0 0.0
      %1846 = vmatpush.msra.mxu0 0.0
      %1847 = vmatpush.msra.mxu0 0.0
      %1848 = vmatpush.msra.mxu0 0.0
      %1849 = vmatpush.msra.mxu0 0.0
      %1850 = vmatpush.msra.mxu0 0.0
      %1851 = vmatpush.msra.mxu0 0.0
      %1852 = vmatpush.msra.mxu0 %v1589
      %1853 = vmatmul.f32.gmra.mxu0 %v1563
      %v1854 = vpop.f32.mrf.mxu0
      %v1855 = vadd.f32 0.0, %v1854
      %1856 = vdwg.mxu0
      %1857 = vmatpush.msra.mxu0 0.0
      %1858 = vmatpush.msra.mxu0 0.0
      %1859 = vmatpush.msra.mxu0 0.0
      %1860 = vmatpush.msra.mxu0 0.0
      %1861 = vmatpush.msra.mxu0 0.0
      %1862 = vmatpush.msra.mxu0 0.0
      %1863 = vmatpush.msra.mxu0 0.0
      %1864 = vmatpush.msra.mxu0 0.0
      %1865 = vmatpush.msra.mxu0 0.0
      %1866 = vmatpush.msra.mxu0 0.0
      %1867 = vmatpush.msra.mxu0 0.0
      %1868 = vmatpush.msra.mxu0 0.0
      %1869 = vmatpush.msra.mxu0 0.0
      %1870 = vmatpush.msra.mxu0 0.0
      %1871 = vmatpush.msra.mxu0 0.0
      %1872 = vmatpush.msra.mxu0 %v1591
      %1873 = vmatmul.f32.gmra.mxu0 %v1563
      %v1874 = vpop.f32.mrf.mxu0
      %v1875 = vadd.f32 0.0, %v1874
      %1876 = vdwg.mxu0
      %1877 = vmatpush.msra.mxu0 0.0
      %1878 = vmatpush.msra.mxu0 0.0
      %1879 = vmatpush.msra.mxu0 0.0
      %1880 = vmatpush.msra.mxu0 0.0
      %1881 = vmatpush.msra.mxu0 0.0
      %1882 = vmatpush.msra.mxu0 0.0
      %1883 = vmatpush.msra.mxu0 0.0
      %1884 = vmatpush.msra.mxu0 0.0
      %1885 = vmatpush.msra.mxu0 0.0
      %1886 = vmatpush.msra.mxu0 0.0
      %1887 = vmatpush.msra.mxu0 0.0
      %1888 = vmatpush.msra.mxu0 0.0
      %1889 = vmatpush.msra.mxu0 0.0
      %1890 = vmatpush.msra.mxu0 0.0
      %1891 = vmatpush.msra.mxu0 0.0
      %1892 = vmatpush.msra.mxu0 %v1593
      %1893 = vmatmul.f32.gmra.mxu0 %v1563
      %v1894 = vpop.f32.mrf.mxu0
      %v1895 = vadd.f32 0.0, %v1894
      %1896 = vdwg.mxu0
      %1897 = vmatpush.msra.mxu0 0.0
      %1898 = vmatpush.msra.mxu0 0.0
      %1899 = vmatpush.msra.mxu0 0.0
      %1900 = vmatpush.msra.mxu0 0.0
      %1901 = vmatpush.msra.mxu0 0.0
      %1902 = vmatpush.msra.mxu0 0.0
      %1903 = vmatpush.msra.mxu0 0.0
      %1904 = vmatpush.msra.mxu0 0.0
      %1905 = vmatpush.msra.mxu0 0.0
      %1906 = vmatpush.msra.mxu0 0.0
      %1907 = vmatpush.msra.mxu0 0.0
      %1908 = vmatpush.msra.mxu0 0.0
      %1909 = vmatpush.msra.mxu0 0.0
      %1910 = vmatpush.msra.mxu0 0.0
      %1911 = vmatpush.msra.mxu0 0.0
      %1912 = vmatpush.msra.mxu0 %v1595
      %1913 = vmatmul.f32.gmra.mxu0 %v1563
      %v1914 = vpop.f32.mrf.mxu0
      %v1915 = vadd.f32 0.0, %v1914
      %1916 = vdwg.mxu0
      %v1917 = vadd.f32 %v1501, %v1615
      %v1918 = vadd.f32 %v1502, %v1635
      %v1919 = vadd.f32 %v1503, %v1655
      %v1920 = vadd.f32 %v1504, %v1675
      %v1921 = vadd.f32 %v1505, %v1695
      %v1922 = vadd.f32 %v1506, %v1715
      %v1923 = vadd.f32 %v1507, %v1735
      %v1924 = vadd.f32 %v1508, %v1755
      %v1925 = vadd.f32 %v1509, %v1775
      %v1926 = vadd.f32 %v1510, %v1795
      %v1927 = vadd.f32 %v1511, %v1815
      %v1928 = vadd.f32 %v1512, %v1835
      %v1929 = vadd.f32 %v1513, %v1855
      %v1930 = vadd.f32 %v1514, %v1875
      %v1931 = vadd.f32 %v1515, %v1895
      %v1932 = vadd.f32 %v1516, %v1915
      %v1933 = vld [vmem:[%s197 + $0x4] sm:$0xff]
      %v1934 = vld [vmem:[%s197 + $0xc] sm:$0xff]
      %v1935 = vld [vmem:[%s197 + $0x14] sm:$0xff]
      %v1936 = vld [vmem:[%s197 + $0x1c] sm:$0xff]
      %v1937 = vld [vmem:[%s197 + $0x24] sm:$0xff]
      %v1938 = vld [vmem:[%s197 + $0x2c] sm:$0xff]
      %v1939 = vld [vmem:[%s197 + $0x34] sm:$0xff]
      %v1940 = vld [vmem:[%s197 + $0x3c] sm:$0xff]
      %v1941 = vld [vmem:[%s197 + $0x44] sm:$0xf]
      %s1942 = scalar_lea.vmem %s1, 32
      %v1943 = vld [vmem:[%s1942] sm:$0xff]
      %1953 = vst [vmem:[#allocation1] ss:$2 sm:$0xff] %v1933
      %s1954 = scalar_lea.vmem [#allocation1], 16
      %1955 = vst [vmem:[%s1954] ss:$2 sm:$0xff] %v1934
      %s1956 = scalar_lea.vmem [#allocation1], 32
      %1957 = vst [vmem:[%s1956] ss:$2 sm:$0xff] %v1935
      %s1958 = scalar_lea.vmem [#allocation1], 48
      %1959 = vst [vmem:[%s1958] ss:$2 sm:$0xff] %v1936
      %v1960 = vld.sshfl [vmem:[#allocation1] sm:$0xff pattern:$0x75316420]
      %v1961 = vld.sshfl [vmem:[#allocation1 + $0x8] sm:$0xff pattern:$0x75316420]
      %v1962 = vld.sshfl [vmem:[#allocation1 + $0x10] sm:$0xff pattern:$0x75316420]
      %v1963 = vld.sshfl [vmem:[#allocation1 + $0x18] sm:$0xff pattern:$0x75316420]
      %v1964 = vld.sshfl [vmem:[#allocation1 + $0x20] sm:$0xff pattern:$0x75316420]
      %v1965 = vld.sshfl [vmem:[#allocation1 + $0x28] sm:$0xff pattern:$0x75316420]
      %v1966 = vld.sshfl [vmem:[#allocation1 + $0x30] sm:$0xff pattern:$0x75316420]
      %v1967 = vld.sshfl [vmem:[#allocation1 + $0x38] sm:$0xff pattern:$0x75316420]
      %1968 = vst [vmem:[#allocation1] ss:$2 sm:$0xff] %v1937
      %1969 = vst [vmem:[%s1954] ss:$2 sm:$0xff] %v1938
      %1970 = vst [vmem:[%s1956] ss:$2 sm:$0xff] %v1939
      %1971 = vst [vmem:[%s1958] ss:$2 sm:$0xff] %v1940
      %v1972 = vld.sshfl [vmem:[#allocation1] sm:$0xff pattern:$0x75316420]
      %v1973 = vld.sshfl [vmem:[#allocation1 + $0x8] sm:$0xff pattern:$0x75316420]
      %v1974 = vld.sshfl [vmem:[#allocation1 + $0x10] sm:$0xff pattern:$0x75316420]
      %v1975 = vld.sshfl [vmem:[#allocation1 + $0x18] sm:$0xff pattern:$0x75316420]
      %v1976 = vld.sshfl [vmem:[#allocation1 + $0x20] sm:$0xff pattern:$0x75316420]
      %v1977 = vld.sshfl [vmem:[#allocation1 + $0x28] sm:$0xff pattern:$0x75316420]
      %v1978 = vld.sshfl [vmem:[#allocation1 + $0x30] sm:$0xff pattern:$0x75316420]
      %v1979 = vld.sshfl [vmem:[#allocation1 + $0x38] sm:$0xff pattern:$0x75316420]
      %1980 = vst [vmem:[#allocation1] ss:$2 sm:$0xff] %v1941
      %v1981 = vld.sshfl [vmem:[#allocation1] sm:$0xff pattern:$0x75316420]
      %1982 = vrot.lane.b32.xlu0 %v1960, 127
      %v1983 = vpop.permute.xlu0 %1982
      %1984 = vrot.lane.b32.xlu0 %v1961, 127
      %v1985 = vpop.permute.xlu0 %1984
      %1986 = vrot.lane.b32.xlu0 %v1962, 127
      %v1987 = vpop.permute.xlu0 %1986
      %1988 = vrot.lane.b32.xlu0 %v1963, 127
      %v1989 = vpop.permute.xlu0 %1988
      %1990 = vrot.lane.b32.xlu0 %v1964, 127
      %v1991 = vpop.permute.xlu0 %1990
      %1992 = vrot.lane.b32.xlu0 %v1965, 127
      %v1993 = vpop.permute.xlu0 %1992
      %1994 = vrot.lane.b32.xlu0 %v1966, 127
      %v1995 = vpop.permute.xlu0 %1994
      %1996 = vrot.lane.b32.xlu0 %v1967, 127
      %v1997 = vpop.permute.xlu0 %1996
      %1998 = vrot.lane.b32.xlu0 %v1972, 127
      %v1999 = vpop.permute.xlu0 %1998
      %2000 = vrot.lane.b32.xlu0 %v1973, 127
      %v2001 = vpop.permute.xlu0 %2000
      %2002 = vrot.lane.b32.xlu0 %v1974, 127
      %v2003 = vpop.permute.xlu0 %2002
      %2004 = vrot.lane.b32.xlu0 %v1975, 127
      %v2005 = vpop.permute.xlu0 %2004
      %2006 = vrot.lane.b32.xlu0 %v1976, 127
      %v2007 = vpop.permute.xlu0 %2006
      %2008 = vrot.lane.b32.xlu0 %v1977, 127
      %v2009 = vpop.permute.xlu0 %2008
      %2010 = vrot.lane.b32.xlu0 %v1978, 127
      %v2011 = vpop.permute.xlu0 %2010
      %2012 = vrot.lane.b32.xlu0 %v1979, 127
      %v2013 = vpop.permute.xlu0 %2012
      %2014 = vrot.lane.b32.xlu0 %v1981, 127
      %v2015 = vpop.permute.xlu0 %2014
      %v2016 = vsel %vm290, %v1983, %v1985
      %v2017 = vsel %vm290, %v1985, %v1987
      %v2018 = vsel %vm290, %v1987, %v1989
      %v2019 = vsel %vm290, %v1989, %v1991
      %v2020 = vsel %vm290, %v1991, %v1993
      %v2021 = vsel %vm290, %v1993, %v1995
      %v2022 = vsel %vm290, %v1995, %v1997
      %v2023 = vsel %vm290, %v1997, %v1999
      %v2024 = vsel %vm290, %v1999, %v2001
      %v2025 = vsel %vm290, %v2001, %v2003
      %v2026 = vsel %vm290, %v2003, %v2005
      %v2027 = vsel %vm290, %v2005, %v2007
      %v2028 = vsel %vm290, %v2007, %v2009
      %v2029 = vsel %vm290, %v2009, %v2011
      %v2030 = vsel %vm290, %v2011, %v2013
      %v2031 = vsel %vm290, %v2013, %v2015
      %v2033 = vsel %vm307, %v1943, 0
      %v2035 = vsel %vm311, %v2016, 0
      %v2037 = vsel %vm311, %v2017, 0
      %v2039 = vsel %vm311, %v2018, 0
      %v2041 = vsel %vm311, %v2019, 0
      %v2043 = vsel %vm311, %v2020, 0
      %v2045 = vsel %vm311, %v2021, 0
      %v2047 = vsel %vm311, %v2022, 0
      %v2049 = vsel %vm311, %v2023, 0
      %v2051 = vsel %vm311, %v2024, 0
      %v2053 = vsel %vm311, %v2025, 0
      %v2055 = vsel %vm311, %v2026, 0
      %v2057 = vsel %vm311, %v2027, 0
      %v2059 = vsel %vm311, %v2028, 0
      %v2061 = vsel %vm311, %v2029, 0
      %v2063 = vsel %vm311, %v2030, 0
      %v2065 = vsel %vm311, %v2031, 0
      %2067 = vmatpush.msra.mxu0 0.0
      %2068 = vmatpush.msra.mxu0 0.0
      %2069 = vmatpush.msra.mxu0 0.0
      %2070 = vmatpush.msra.mxu0 0.0
      %2071 = vmatpush.msra.mxu0 0.0
      %2072 = vmatpush.msra.mxu0 0.0
      %2073 = vmatpush.msra.mxu0 0.0
      %2074 = vmatpush.msra.mxu0 0.0
      %2075 = vmatpush.msra.mxu0 0.0
      %2076 = vmatpush.msra.mxu0 0.0
      %2077 = vmatpush.msra.mxu0 0.0
      %2078 = vmatpush.msra.mxu0 0.0
      %2079 = vmatpush.msra.mxu0 0.0
      %2080 = vmatpush.msra.mxu0 0.0
      %2081 = vmatpush.msra.mxu0 0.0
      %2082 = vmatpush.msra.mxu0 %v2035
      %2083 = vmatmul.f32.gmra.mxu0 %v2033
      %v2084 = vpop.f32.mrf.mxu0
      %v2085 = vadd.f32 0.0, %v2084
      %2086 = vdwg.mxu0
      %2087 = vmatpush.msra.mxu0 0.0
      %2088 = vmatpush.msra.mxu0 0.0
      %2089 = vmatpush.msra.mxu0 0.0
      %2090 = vmatpush.msra.mxu0 0.0
      %2091 = vmatpush.msra.mxu0 0.0
      %2092 = vmatpush.msra.mxu0 0.0
      %2093 = vmatpush.msra.mxu0 0.0
      %2094 = vmatpush.msra.mxu0 0.0
      %2095 = vmatpush.msra.mxu0 0.0
      %2096 = vmatpush.msra.mxu0 0.0
      %2097 = vmatpush.msra.mxu0 0.0
      %2098 = vmatpush.msra.mxu0 0.0
      %2099 = vmatpush.msra.mxu0 0.0
      %2100 = vmatpush.msra.mxu0 0.0
      %2101 = vmatpush.msra.mxu0 0.0
      %2102 = vmatpush.msra.mxu0 %v2037
      %2103 = vmatmul.f32.gmra.mxu0 %v2033
      %v2104 = vpop.f32.mrf.mxu0
      %v2105 = vadd.f32 0.0, %v2104
      %2106 = vdwg.mxu0
      %2107 = vmatpush.msra.mxu0 0.0
      %2108 = vmatpush.msra.mxu0 0.0
      %2109 = vmatpush.msra.mxu0 0.0
      %2110 = vmatpush.msra.mxu0 0.0
      %2111 = vmatpush.msra.mxu0 0.0
      %2112 = vmatpush.msra.mxu0 0.0
      %2113 = vmatpush.msra.mxu0 0.0
      %2114 = vmatpush.msra.mxu0 0.0
      %2115 = vmatpush.msra.mxu0 0.0
      %2116 = vmatpush.msra.mxu0 0.0
      %2117 = vmatpush.msra.mxu0 0.0
      %2118 = vmatpush.msra.mxu0 0.0
      %2119 = vmatpush.msra.mxu0 0.0
      %2120 = vmatpush.msra.mxu0 0.0
      %2121 = vmatpush.msra.mxu0 0.0
      %2122 = vmatpush.msra.mxu0 %v2039
      %2123 = vmatmul.f32.gmra.mxu0 %v2033
      %v2124 = vpop.f32.mrf.mxu0
      %v2125 = vadd.f32 0.0, %v2124
      %2126 = vdwg.mxu0
      %2127 = vmatpush.msra.mxu0 0.0
      %2128 = vmatpush.msra.mxu0 0.0
      %2129 = vmatpush.msra.mxu0 0.0
      %2130 = vmatpush.msra.mxu0 0.0
      %2131 = vmatpush.msra.mxu0 0.0
      %2132 = vmatpush.msra.mxu0 0.0
      %2133 = vmatpush.msra.mxu0 0.0
      %2134 = vmatpush.msra.mxu0 0.0
      %2135 = vmatpush.msra.mxu0 0.0
      %2136 = vmatpush.msra.mxu0 0.0
      %2137 = vmatpush.msra.mxu0 0.0
      %2138 = vmatpush.msra.mxu0 0.0
      %2139 = vmatpush.msra.mxu0 0.0
      %2140 = vmatpush.msra.mxu0 0.0
      %2141 = vmatpush.msra.mxu0 0.0
      %2142 = vmatpush.msra.mxu0 %v2041
      %2143 = vmatmul.f32.gmra.mxu0 %v2033
      %v2144 = vpop.f32.mrf.mxu0
      %v2145 = vadd.f32 0.0, %v2144
      %2146 = vdwg.mxu0
      %2147 = vmatpush.msra.mxu0 0.0
      %2148 = vmatpush.msra.mxu0 0.0
      %2149 = vmatpush.msra.mxu0 0.0
      %2150 = vmatpush.msra.mxu0 0.0
      %2151 = vmatpush.msra.mxu0 0.0
      %2152 = vmatpush.msra.mxu0 0.0
      %2153 = vmatpush.msra.mxu0 0.0
      %2154 = vmatpush.msra.mxu0 0.0
      %2155 = vmatpush.msra.mxu0 0.0
      %2156 = vmatpush.msra.mxu0 0.0
      %2157 = vmatpush.msra.mxu0 0.0
      %2158 = vmatpush.msra.mxu0 0.0
      %2159 = vmatpush.msra.mxu0 0.0
      %2160 = vmatpush.msra.mxu0 0.0
      %2161 = vmatpush.msra.mxu0 0.0
      %2162 = vmatpush.msra.mxu0 %v2043
      %2163 = vmatmul.f32.gmra.mxu0 %v2033
      %v2164 = vpop.f32.mrf.mxu0
      %v2165 = vadd.f32 0.0, %v2164
      %2166 = vdwg.mxu0
      %2167 = vmatpush.msra.mxu0 0.0
      %2168 = vmatpush.msra.mxu0 0.0
      %2169 = vmatpush.msra.mxu0 0.0
      %2170 = vmatpush.msra.mxu0 0.0
      %2171 = vmatpush.msra.mxu0 0.0
      %2172 = vmatpush.msra.mxu0 0.0
      %2173 = vmatpush.msra.mxu0 0.0
      %2174 = vmatpush.msra.mxu0 0.0
      %2175 = vmatpush.msra.mxu0 0.0
      %2176 = vmatpush.msra.mxu0 0.0
      %2177 = vmatpush.msra.mxu0 0.0
      %2178 = vmatpush.msra.mxu0 0.0
      %2179 = vmatpush.msra.mxu0 0.0
      %2180 = vmatpush.msra.mxu0 0.0
      %2181 = vmatpush.msra.mxu0 0.0
      %2182 = vmatpush.msra.mxu0 %v2045
      %2183 = vmatmul.f32.gmra.mxu0 %v2033
      %v2184 = vpop.f32.mrf.mxu0
      %v2185 = vadd.f32 0.0, %v2184
      %2186 = vdwg.mxu0
      %2187 = vmatpush.msra.mxu0 0.0
      %2188 = vmatpush.msra.mxu0 0.0
      %2189 = vmatpush.msra.mxu0 0.0
      %2190 = vmatpush.msra.mxu0 0.0
      %2191 = vmatpush.msra.mxu0 0.0
      %2192 = vmatpush.msra.mxu0 0.0
      %2193 = vmatpush.msra.mxu0 0.0
      %2194 = vmatpush.msra.mxu0 0.0
      %2195 = vmatpush.msra.mxu0 0.0
      %2196 = vmatpush.msra.mxu0 0.0
      %2197 = vmatpush.msra.mxu0 0.0
      %2198 = vmatpush.msra.mxu0 0.0
      %2199 = vmatpush.msra.mxu0 0.0
      %2200 = vmatpush.msra.mxu0 0.0
      %2201 = vmatpush.msra.mxu0 0.0
      %2202 = vmatpush.msra.mxu0 %v2047
      %2203 = vmatmul.f32.gmra.mxu0 %v2033
      %v2204 = vpop.f32.mrf.mxu0
      %v2205 = vadd.f32 0.0, %v2204
      %2206 = vdwg.mxu0
      %2207 = vmatpush.msra.mxu0 0.0
      %2208 = vmatpush.msra.mxu0 0.0
      %2209 = vmatpush.msra.mxu0 0.0
      %2210 = vmatpush.msra.mxu0 0.0
      %2211 = vmatpush.msra.mxu0 0.0
      %2212 = vmatpush.msra.mxu0 0.0
      %2213 = vmatpush.msra.mxu0 0.0
      %2214 = vmatpush.msra.mxu0 0.0
      %2215 = vmatpush.msra.mxu0 0.0
      %2216 = vmatpush.msra.mxu0 0.0
      %2217 = vmatpush.msra.mxu0 0.0
      %2218 = vmatpush.msra.mxu0 0.0
      %2219 = vmatpush.msra.mxu0 0.0
      %2220 = vmatpush.msra.mxu0 0.0
      %2221 = vmatpush.msra.mxu0 0.0
      %2222 = vmatpush.msra.mxu0 %v2049
      %2223 = vmatmul.f32.gmra.mxu0 %v2033
      %v2224 = vpop.f32.mrf.mxu0
      %v2225 = vadd.f32 0.0, %v2224
      %2226 = vdwg.mxu0
      %2227 = vmatpush.msra.mxu0 0.0
      %2228 = vmatpush.msra.mxu0 0.0
      %2229 = vmatpush.msra.mxu0 0.0
      %2230 = vmatpush.msra.mxu0 0.0
      %2231 = vmatpush.msra.mxu0 0.0
      %2232 = vmatpush.msra.mxu0 0.0
      %2233 = vmatpush.msra.mxu0 0.0
      %2234 = vmatpush.msra.mxu0 0.0
      %2235 = vmatpush.msra.mxu0 0.0
      %2236 = vmatpush.msra.mxu0 0.0
      %2237 = vmatpush.msra.mxu0 0.0
      %2238 = vmatpush.msra.mxu0 0.0
      %2239 = vmatpush.msra.mxu0 0.0
      %2240 = vmatpush.msra.mxu0 0.0
      %2241 = vmatpush.msra.mxu0 0.0
      %2242 = vmatpush.msra.mxu0 %v2051
      %2243 = vmatmul.f32.gmra.mxu0 %v2033
      %v2244 = vpop.f32.mrf.mxu0
      %v2245 = vadd.f32 0.0, %v2244
      %2246 = vdwg.mxu0
      %2247 = vmatpush.msra.mxu0 0.0
      %2248 = vmatpush.msra.mxu0 0.0
      %2249 = vmatpush.msra.mxu0 0.0
      %2250 = vmatpush.msra.mxu0 0.0
      %2251 = vmatpush.msra.mxu0 0.0
      %2252 = vmatpush.msra.mxu0 0.0
      %2253 = vmatpush.msra.mxu0 0.0
      %2254 = vmatpush.msra.mxu0 0.0
      %2255 = vmatpush.msra.mxu0 0.0
      %2256 = vmatpush.msra.mxu0 0.0
      %2257 = vmatpush.msra.mxu0 0.0
      %2258 = vmatpush.msra.mxu0 0.0
      %2259 = vmatpush.msra.mxu0 0.0
      %2260 = vmatpush.msra.mxu0 0.0
      %2261 = vmatpush.msra.mxu0 0.0
      %2262 = vmatpush.msra.mxu0 %v2053
      %2263 = vmatmul.f32.gmra.mxu0 %v2033
      %v2264 = vpop.f32.mrf.mxu0
      %v2265 = vadd.f32 0.0, %v2264
      %2266 = vdwg.mxu0
      %2267 = vmatpush.msra.mxu0 0.0
      %2268 = vmatpush.msra.mxu0 0.0
      %2269 = vmatpush.msra.mxu0 0.0
      %2270 = vmatpush.msra.mxu0 0.0
      %2271 = vmatpush.msra.mxu0 0.0
      %2272 = vmatpush.msra.mxu0 0.0
      %2273 = vmatpush.msra.mxu0 0.0
      %2274 = vmatpush.msra.mxu0 0.0
      %2275 = vmatpush.msra.mxu0 0.0
      %2276 = vmatpush.msra.mxu0 0.0
      %2277 = vmatpush.msra.mxu0 0.0
      %2278 = vmatpush.msra.mxu0 0.0
      %2279 = vmatpush.msra.mxu0 0.0
      %2280 = vmatpush.msra.mxu0 0.0
      %2281 = vmatpush.msra.mxu0 0.0
      %2282 = vmatpush.msra.mxu0 %v2055
      %2283 = vmatmul.f32.gmra.mxu0 %v2033
      %v2284 = vpop.f32.mrf.mxu0
      %v2285 = vadd.f32 0.0, %v2284
      %2286 = vdwg.mxu0
      %2287 = vmatpush.msra.mxu0 0.0
      %2288 = vmatpush.msra.mxu0 0.0
      %2289 = vmatpush.msra.mxu0 0.0
      %2290 = vmatpush.msra.mxu0 0.0
      %2291 = vmatpush.msra.mxu0 0.0
      %2292 = vmatpush.msra.mxu0 0.0
      %2293 = vmatpush.msra.mxu0 0.0
      %2294 = vmatpush.msra.mxu0 0.0
      %2295 = vmatpush.msra.mxu0 0.0
      %2296 = vmatpush.msra.mxu0 0.0
      %2297 = vmatpush.msra.mxu0 0.0
      %2298 = vmatpush.msra.mxu0 0.0
      %2299 = vmatpush.msra.mxu0 0.0
      %2300 = vmatpush.msra.mxu0 0.0
      %2301 = vmatpush.msra.mxu0 0.0
      %2302 = vmatpush.msra.mxu0 %v2057
      %2303 = vmatmul.f32.gmra.mxu0 %v2033
      %v2304 = vpop.f32.mrf.mxu0
      %v2305 = vadd.f32 0.0, %v2304
      %2306 = vdwg.mxu0
      %2307 = vmatpush.msra.mxu0 0.0
      %2308 = vmatpush.msra.mxu0 0.0
      %2309 = vmatpush.msra.mxu0 0.0
      %2310 = vmatpush.msra.mxu0 0.0
      %2311 = vmatpush.msra.mxu0 0.0
      %2312 = vmatpush.msra.mxu0 0.0
      %2313 = vmatpush.msra.mxu0 0.0
      %2314 = vmatpush.msra.mxu0 0.0
      %2315 = vmatpush.msra.mxu0 0.0
      %2316 = vmatpush.msra.mxu0 0.0
      %2317 = vmatpush.msra.mxu0 0.0
      %2318 = vmatpush.msra.mxu0 0.0
      %2319 = vmatpush.msra.mxu0 0.0
      %2320 = vmatpush.msra.mxu0 0.0
      %2321 = vmatpush.msra.mxu0 0.0
      %2322 = vmatpush.msra.mxu0 %v2059
      %2323 = vmatmul.f32.gmra.mxu0 %v2033
      %v2324 = vpop.f32.mrf.mxu0
      %v2325 = vadd.f32 0.0, %v2324
      %2326 = vdwg.mxu0
      %2327 = vmatpush.msra.mxu0 0.0
      %2328 = vmatpush.msra.mxu0 0.0
      %2329 = vmatpush.msra.mxu0 0.0
      %2330 = vmatpush.msra.mxu0 0.0
      %2331 = vmatpush.msra.mxu0 0.0
      %2332 = vmatpush.msra.mxu0 0.0
      %2333 = vmatpush.msra.mxu0 0.0
      %2334 = vmatpush.msra.mxu0 0.0
      %2335 = vmatpush.msra.mxu0 0.0
      %2336 = vmatpush.msra.mxu0 0.0
      %2337 = vmatpush.msra.mxu0 0.0
      %2338 = vmatpush.msra.mxu0 0.0
      %2339 = vmatpush.msra.mxu0 0.0
      %2340 = vmatpush.msra.mxu0 0.0
      %2341 = vmatpush.msra.mxu0 0.0
      %2342 = vmatpush.msra.mxu0 %v2061
      %2343 = vmatmul.f32.gmra.mxu0 %v2033
      %v2344 = vpop.f32.mrf.mxu0
      %v2345 = vadd.f32 0.0, %v2344
      %2346 = vdwg.mxu0
      %2347 = vmatpush.msra.mxu0 0.0
      %2348 = vmatpush.msra.mxu0 0.0
      %2349 = vmatpush.msra.mxu0 0.0
      %2350 = vmatpush.msra.mxu0 0.0
      %2351 = vmatpush.msra.mxu0 0.0
      %2352 = vmatpush.msra.mxu0 0.0
      %2353 = vmatpush.msra.mxu0 0.0
      %2354 = vmatpush.msra.mxu0 0.0
      %2355 = vmatpush.msra.mxu0 0.0
      %2356 = vmatpush.msra.mxu0 0.0
      %2357 = vmatpush.msra.mxu0 0.0
      %2358 = vmatpush.msra.mxu0 0.0
      %2359 = vmatpush.msra.mxu0 0.0
      %2360 = vmatpush.msra.mxu0 0.0
      %2361 = vmatpush.msra.mxu0 0.0
      %2362 = vmatpush.msra.mxu0 %v2063
      %2363 = vmatmul.f32.gmra.mxu0 %v2033
      %v2364 = vpop.f32.mrf.mxu0
      %v2365 = vadd.f32 0.0, %v2364
      %2366 = vdwg.mxu0
      %2367 = vmatpush.msra.mxu0 0.0
      %2368 = vmatpush.msra.mxu0 0.0
      %2369 = vmatpush.msra.mxu0 0.0
      %2370 = vmatpush.msra.mxu0 0.0
      %2371 = vmatpush.msra.mxu0 0.0
      %2372 = vmatpush.msra.mxu0 0.0
      %2373 = vmatpush.msra.mxu0 0.0
      %2374 = vmatpush.msra.mxu0 0.0
      %2375 = vmatpush.msra.mxu0 0.0
      %2376 = vmatpush.msra.mxu0 0.0
      %2377 = vmatpush.msra.mxu0 0.0
      %2378 = vmatpush.msra.mxu0 0.0
      %2379 = vmatpush.msra.mxu0 0.0
      %2380 = vmatpush.msra.mxu0 0.0
      %2381 = vmatpush.msra.mxu0 0.0
      %2382 = vmatpush.msra.mxu0 %v2065
      %2383 = vmatmul.f32.gmra.mxu0 %v2033
      %v2384 = vpop.f32.mrf.mxu0
      %v2385 = vadd.f32 0.0, %v2384
      %2386 = vdwg.mxu0
      %v2387 = vadd.f32 %v1917, %v2085
      %v2388 = vadd.f32 %v1918, %v2105
      %v2389 = vadd.f32 %v1919, %v2125
      %v2390 = vadd.f32 %v1920, %v2145
      %v2391 = vadd.f32 %v1921, %v2165
      %v2392 = vadd.f32 %v1922, %v2185
      %v2393 = vadd.f32 %v1923, %v2205
      %v2394 = vadd.f32 %v1924, %v2225
      %v2395 = vadd.f32 %v1925, %v2245
      %v2396 = vadd.f32 %v1926, %v2265
      %v2397 = vadd.f32 %v1927, %v2285
      %v2398 = vadd.f32 %v1928, %v2305
      %v2399 = vadd.f32 %v1929, %v2325
      %v2400 = vadd.f32 %v1930, %v2345
      %v2401 = vadd.f32 %v1931, %v2365
      %v2402 = vadd.f32 %v1932, %v2385
      %v2403 = vld [vmem:[%s197 + $0x4] sm:$0xff]
      %v2404 = vld [vmem:[%s197 + $0xc] sm:$0xff]
      %v2405 = vld [vmem:[%s197 + $0x14] sm:$0xff]
      %v2406 = vld [vmem:[%s197 + $0x1c] sm:$0xff]
      %v2407 = vld [vmem:[%s197 + $0x24] sm:$0xff]
      %v2408 = vld [vmem:[%s197 + $0x2c] sm:$0xff]
      %v2409 = vld [vmem:[%s197 + $0x34] sm:$0xff]
      %v2410 = vld [vmem:[%s197 + $0x3c] sm:$0xff]
      %v2411 = vld [vmem:[%s197 + $0x44] sm:$0xf]
      %s2412 = scalar_lea.vmem %s1, 40
      %v2413 = vld [vmem:[%s2412] sm:$0xff]
      %2423 = vst [vmem:[#allocation1] ss:$2 sm:$0xff] %v2403
      %s2424 = scalar_lea.vmem [#allocation1], 16
      %2425 = vst [vmem:[%s2424] ss:$2 sm:$0xff] %v2404
      %s2426 = scalar_lea.vmem [#allocation1], 32
      %2427 = vst [vmem:[%s2426] ss:$2 sm:$0xff] %v2405
      %s2428 = scalar_lea.vmem [#allocation1], 48
      %2429 = vst [vmem:[%s2428] ss:$2 sm:$0xff] %v2406
      %v2430 = vld.sshfl [vmem:[#allocation1] sm:$0xff pattern:$0x75316420]
      %v2431 = vld.sshfl [vmem:[#allocation1 + $0x8] sm:$0xff pattern:$0x75316420]
      %v2432 = vld.sshfl [vmem:[#allocation1 + $0x10] sm:$0xff pattern:$0x75316420]
      %v2433 = vld.sshfl [vmem:[#allocation1 + $0x18] sm:$0xff pattern:$0x75316420]
      %v2434 = vld.sshfl [vmem:[#allocation1 + $0x20] sm:$0xff pattern:$0x75316420]
      %v2435 = vld.sshfl [vmem:[#allocation1 + $0x28] sm:$0xff pattern:$0x75316420]
      %v2436 = vld.sshfl [vmem:[#allocation1 + $0x30] sm:$0xff pattern:$0x75316420]
      %v2437 = vld.sshfl [vmem:[#allocation1 + $0x38] sm:$0xff pattern:$0x75316420]
      %2438 = vst [vmem:[#allocation1] ss:$2 sm:$0xff] %v2407
      %2439 = vst [vmem:[%s2424] ss:$2 sm:$0xff] %v2408
      %2440 = vst [vmem:[%s2426] ss:$2 sm:$0xff] %v2409
      %2441 = vst [vmem:[%s2428] ss:$2 sm:$0xff] %v2410
      %v2442 = vld.sshfl [vmem:[#allocation1] sm:$0xff pattern:$0x75316420]
      %v2443 = vld.sshfl [vmem:[#allocation1 + $0x8] sm:$0xff pattern:$0x75316420]
      %v2444 = vld.sshfl [vmem:[#allocation1 + $0x10] sm:$0xff pattern:$0x75316420]
      %v2445 = vld.sshfl [vmem:[#allocation1 + $0x18] sm:$0xff pattern:$0x75316420]
      %v2446 = vld.sshfl [vmem:[#allocation1 + $0x20] sm:$0xff pattern:$0x75316420]
      %v2447 = vld.sshfl [vmem:[#allocation1 + $0x28] sm:$0xff pattern:$0x75316420]
      %v2448 = vld.sshfl [vmem:[#allocation1 + $0x30] sm:$0xff pattern:$0x75316420]
      %v2449 = vld.sshfl [vmem:[#allocation1 + $0x38] sm:$0xff pattern:$0x75316420]
      %2450 = vst [vmem:[#allocation1] ss:$2 sm:$0xff] %v2411
      %v2451 = vld.sshfl [vmem:[#allocation1] sm:$0xff pattern:$0x75316420]
      %2452 = vrot.lane.b32.xlu0 %v2430, 126
      %v2453 = vpop.permute.xlu0 %2452
      %2454 = vrot.lane.b32.xlu0 %v2431, 126
      %v2455 = vpop.permute.xlu0 %2454
      %2456 = vrot.lane.b32.xlu0 %v2432, 126
      %v2457 = vpop.permute.xlu0 %2456
      %2458 = vrot.lane.b32.xlu0 %v2433, 126
      %v2459 = vpop.permute.xlu0 %2458
      %2460 = vrot.lane.b32.xlu0 %v2434, 126
      %v2461 = vpop.permute.xlu0 %2460
      %2462 = vrot.lane.b32.xlu0 %v2435, 126
      %v2463 = vpop.permute.xlu0 %2462
      %2464 = vrot.lane.b32.xlu0 %v2436, 126
      %v2465 = vpop.permute.xlu0 %2464
      %2466 = vrot.lane.b32.xlu0 %v2437, 126
      %v2467 = vpop.permute.xlu0 %2466
      %2468 = vrot.lane.b32.xlu0 %v2442, 126
      %v2469 = vpop.permute.xlu0 %2468
      %2470 = vrot.lane.b32.xlu0 %v2443, 126
      %v2471 = vpop.permute.xlu0 %2470
      %2472 = vrot.lane.b32.xlu0 %v2444, 126
      %v2473 = vpop.permute.xlu0 %2472
      %2474 = vrot.lane.b32.xlu0 %v2445, 126
      %v2475 = vpop.permute.xlu0 %2474
      %2476 = vrot.lane.b32.xlu0 %v2446, 126
      %v2477 = vpop.permute.xlu0 %2476
      %2478 = vrot.lane.b32.xlu0 %v2447, 126
      %v2479 = vpop.permute.xlu0 %2478
      %2480 = vrot.lane.b32.xlu0 %v2448, 126
      %v2481 = vpop.permute.xlu0 %2480
      %2482 = vrot.lane.b32.xlu0 %v2449, 126
      %v2483 = vpop.permute.xlu0 %2482
      %2484 = vrot.lane.b32.xlu0 %v2451, 126
      %v2485 = vpop.permute.xlu0 %2484
      %v2486 = vsel %vm1129, %v2453, %v2455
      %v2487 = vsel %vm1129, %v2455, %v2457
      %v2488 = vsel %vm1129, %v2457, %v2459
      %v2489 = vsel %vm1129, %v2459, %v2461
      %v2490 = vsel %vm1129, %v2461, %v2463
      %v2491 = vsel %vm1129, %v2463, %v2465
      %v2492 = vsel %vm1129, %v2465, %v2467
      %v2493 = vsel %vm1129, %v2467, %v2469
      %v2494 = vsel %vm1129, %v2469, %v2471
      %v2495 = vsel %vm1129, %v2471, %v2473
      %v2496 = vsel %vm1129, %v2473, %v2475
      %v2497 = vsel %vm1129, %v2475, %v2477
      %v2498 = vsel %vm1129, %v2477, %v2479
      %v2499 = vsel %vm1129, %v2479, %v2481
      %v2500 = vsel %vm1129, %v2481, %v2483
      %v2501 = vsel %vm1129, %v2483, %v2485
      %v2503 = vsel %vm307, %v2413, 0
      %v2505 = vsel %vm311, %v2486, 0
      %v2507 = vsel %vm311, %v2487, 0
      %v2509 = vsel %vm311, %v2488, 0
      %v2511 = vsel %vm311, %v2489, 0
      %v2513 = vsel %vm311, %v2490, 0
      %v2515 = vsel %vm311, %v2491, 0
      %v2517 = vsel %vm311, %v2492, 0
      %v2519 = vsel %vm311, %v2493, 0
      %v2521 = vsel %vm311, %v2494, 0
      %v2523 = vsel %vm311, %v2495, 0
      %v2525 = vsel %vm311, %v2496, 0
      %v2527 = vsel %vm311, %v2497, 0
      %v2529 = vsel %vm311, %v2498, 0
      %v2531 = vsel %vm311, %v2499, 0
      %v2533 = vsel %vm311, %v2500, 0
      %v2535 = vsel %vm311, %v2501, 0
      %2537 = vmatpush.msra.mxu0 0.0
      %2538 = vmatpush.msra.mxu0 0.0
      %2539 = vmatpush.msra.mxu0 0.0
      %2540 = vmatpush.msra.mxu0 0.0
      %2541 = vmatpush.msra.mxu0 0.0
      %2542 = vmatpush.msra.mxu0 0.0
      %2543 = vmatpush.msra.mxu0 0.0
      %2544 = vmatpush.msra.mxu0 0.0
      %2545 = vmatpush.msra.mxu0 0.0
      %2546 = vmatpush.msra.mxu0 0.0
      %2547 = vmatpush.msra.mxu0 0.0
      %2548 = vmatpush.msra.mxu0 0.0
      %2549 = vmatpush.msra.mxu0 0.0
      %2550 = vmatpush.msra.mxu0 0.0
      %2551 = vmatpush.msra.mxu0 0.0
      %2552 = vmatpush.msra.mxu0 %v2505
      %2553 = vmatmul.f32.gmra.mxu0 %v2503
      %v2554 = vpop.f32.mrf.mxu0
      %v2555 = vadd.f32 0.0, %v2554
      %2556 = vdwg.mxu0
      %2557 = vmatpush.msra.mxu0 0.0
      %2558 = vmatpush.msra.mxu0 0.0
      %2559 = vmatpush.msra.mxu0 0.0
      %2560 = vmatpush.msra.mxu0 0.0
      %2561 = vmatpush.msra.mxu0 0.0
      %2562 = vmatpush.msra.mxu0 0.0
      %2563 = vmatpush.msra.mxu0 0.0
      %2564 = vmatpush.msra.mxu0 0.0
      %2565 = vmatpush.msra.mxu0 0.0
      %2566 = vmatpush.msra.mxu0 0.0
      %2567 = vmatpush.msra.mxu0 0.0
      %2568 = vmatpush.msra.mxu0 0.0
      %2569 = vmatpush.msra.mxu0 0.0
      %2570 = vmatpush.msra.mxu0 0.0
      %2571 = vmatpush.msra.mxu0 0.0
      %2572 = vmatpush.msra.mxu0 %v2507
      %2573 = vmatmul.f32.gmra.mxu0 %v2503
      %v2574 = vpop.f32.mrf.mxu0
      %v2575 = vadd.f32 0.0, %v2574
      %2576 = vdwg.mxu0
      %2577 = vmatpush.msra.mxu0 0.0
      %2578 = vmatpush.msra.mxu0 0.0
      %2579 = vmatpush.msra.mxu0 0.0
      %2580 = vmatpush.msra.mxu0 0.0
      %2581 = vmatpush.msra.mxu0 0.0
      %2582 = vmatpush.msra.mxu0 0.0
      %2583 = vmatpush.msra.mxu0 0.0
      %2584 = vmatpush.msra.mxu0 0.0
      %2585 = vmatpush.msra.mxu0 0.0
      %2586 = vmatpush.msra.mxu0 0.0
      %2587 = vmatpush.msra.mxu0 0.0
      %2588 = vmatpush.msra.mxu0 0.0
      %2589 = vmatpush.msra.mxu0 0.0
      %2590 = vmatpush.msra.mxu0 0.0
      %2591 = vmatpush.msra.mxu0 0.0
      %2592 = vmatpush.msra.mxu0 %v2509
      %2593 = vmatmul.f32.gmra.mxu0 %v2503
      %v2594 = vpop.f32.mrf.mxu0
      %v2595 = vadd.f32 0.0, %v2594
      %2596 = vdwg.mxu0
      %2597 = vmatpush.msra.mxu0 0.0
      %2598 = vmatpush.msra.mxu0 0.0
      %2599 = vmatpush.msra.mxu0 0.0
      %2600 = vmatpush.msra.mxu0 0.0
      %2601 = vmatpush.msra.mxu0 0.0
      %2602 = vmatpush.msra.mxu0 0.0
      %2603 = vmatpush.msra.mxu0 0.0
      %2604 = vmatpush.msra.mxu0 0.0
      %2605 = vmatpush.msra.mxu0 0.0
      %2606 = vmatpush.msra.mxu0 0.0
      %2607 = vmatpush.msra.mxu0 0.0
      %2608 = vmatpush.msra.mxu0 0.0
      %2609 = vmatpush.msra.mxu0 0.0
      %2610 = vmatpush.msra.mxu0 0.0
      %2611 = vmatpush.msra.mxu0 0.0
      %2612 = vmatpush.msra.mxu0 %v2511
      %2613 = vmatmul.f32.gmra.mxu0 %v2503
      %v2614 = vpop.f32.mrf.mxu0
      %v2615 = vadd.f32 0.0, %v2614
      %2616 = vdwg.mxu0
      %2617 = vmatpush.msra.mxu0 0.0
      %2618 = vmatpush.msra.mxu0 0.0
      %2619 = vmatpush.msra.mxu0 0.0
      %2620 = vmatpush.msra.mxu0 0.0
      %2621 = vmatpush.msra.mxu0 0.0
      %2622 = vmatpush.msra.mxu0 0.0
      %2623 = vmatpush.msra.mxu0 0.0
      %2624 = vmatpush.msra.mxu0 0.0
      %2625 = vmatpush.msra.mxu0 0.0
      %2626 = vmatpush.msra.mxu0 0.0
      %2627 = vmatpush.msra.mxu0 0.0
      %2628 = vmatpush.msra.mxu0 0.0
      %2629 = vmatpush.msra.mxu0 0.0
      %2630 = vmatpush.msra.mxu0 0.0
      %2631 = vmatpush.msra.mxu0 0.0
      %2632 = vmatpush.msra.mxu0 %v2513
      %2633 = vmatmul.f32.gmra.mxu0 %v2503
      %v2634 = vpop.f32.mrf.mxu0
      %v2635 = vadd.f32 0.0, %v2634
      %2636 = vdwg.mxu0
      %2637 = vmatpush.msra.mxu0 0.0
      %2638 = vmatpush.msra.mxu0 0.0
      %2639 = vmatpush.msra.mxu0 0.0
      %2640 = vmatpush.msra.mxu0 0.0
      %2641 = vmatpush.msra.mxu0 0.0
      %2642 = vmatpush.msra.mxu0 0.0
      %2643 = vmatpush.msra.mxu0 0.0
      %2644 = vmatpush.msra.mxu0 0.0
      %2645 = vmatpush.msra.mxu0 0.0
      %2646 = vmatpush.msra.mxu0 0.0
      %2647 = vmatpush.msra.mxu0 0.0
      %2648 = vmatpush.msra.mxu0 0.0
      %2649 = vmatpush.msra.mxu0 0.0
      %2650 = vmatpush.msra.mxu0 0.0
      %2651 = vmatpush.msra.mxu0 0.0
      %2652 = vmatpush.msra.mxu0 %v2515
      %2653 = vmatmul.f32.gmra.mxu0 %v2503
      %v2654 = vpop.f32.mrf.mxu0
      %v2655 = vadd.f32 0.0, %v2654
      %2656 = vdwg.mxu0
      %2657 = vmatpush.msra.mxu0 0.0
      %2658 = vmatpush.msra.mxu0 0.0
      %2659 = vmatpush.msra.mxu0 0.0
      %2660 = vmatpush.msra.mxu0 0.0
      %2661 = vmatpush.msra.mxu0 0.0
      %2662 = vmatpush.msra.mxu0 0.0
      %2663 = vmatpush.msra.mxu0 0.0
      %2664 = vmatpush.msra.mxu0 0.0
      %2665 = vmatpush.msra.mxu0 0.0
      %2666 = vmatpush.msra.mxu0 0.0
      %2667 = vmatpush.msra.mxu0 0.0
      %2668 = vmatpush.msra.mxu0 0.0
      %2669 = vmatpush.msra.mxu0 0.0
      %2670 = vmatpush.msra.mxu0 0.0
      %2671 = vmatpush.msra.mxu0 0.0
      %2672 = vmatpush.msra.mxu0 %v2517
      %2673 = vmatmul.f32.gmra.mxu0 %v2503
      %v2674 = vpop.f32.mrf.mxu0
      %v2675 = vadd.f32 0.0, %v2674
      %2676 = vdwg.mxu0
      %2677 = vmatpush.msra.mxu0 0.0
      %2678 = vmatpush.msra.mxu0 0.0
      %2679 = vmatpush.msra.mxu0 0.0
      %2680 = vmatpush.msra.mxu0 0.0
      %2681 = vmatpush.msra.mxu0 0.0
      %2682 = vmatpush.msra.mxu0 0.0
      %2683 = vmatpush.msra.mxu0 0.0
      %2684 = vmatpush.msra.mxu0 0.0
      %2685 = vmatpush.msra.mxu0 0.0
      %2686 = vmatpush.msra.mxu0 0.0
      %2687 = vmatpush.msra.mxu0 0.0
      %2688 = vmatpush.msra.mxu0 0.0
      %2689 = vmatpush.msra.mxu0 0.0
      %2690 = vmatpush.msra.mxu0 0.0
      %2691 = vmatpush.msra.mxu0 0.0
      %2692 = vmatpush.msra.mxu0 %v2519
      %2693 = vmatmul.f32.gmra.mxu0 %v2503
      %v2694 = vpop.f32.mrf.mxu0
      %v2695 = vadd.f32 0.0, %v2694
      %2696 = vdwg.mxu0
      %2697 = vmatpush.msra.mxu0 0.0
      %2698 = vmatpush.msra.mxu0 0.0
      %2699 = vmatpush.msra.mxu0 0.0
      %2700 = vmatpush.msra.mxu0 0.0
      %2701 = vmatpush.msra.mxu0 0.0
      %2702 = vmatpush.msra.mxu0 0.0
      %2703 = vmatpush.msra.mxu0 0.0
      %2704 = vmatpush.msra.mxu0 0.0
      %2705 = vmatpush.msra.mxu0 0.0
      %2706 = vmatpush.msra.mxu0 0.0
      %2707 = vmatpush.msra.mxu0 0.0
      %2708 = vmatpush.msra.mxu0 0.0
      %2709 = vmatpush.msra.mxu0 0.0
      %2710 = vmatpush.msra.mxu0 0.0
      %2711 = vmatpush.msra.mxu0 0.0
      %2712 = vmatpush.msra.mxu0 %v2521
      %2713 = vmatmul.f32.gmra.mxu0 %v2503
      %v2714 = vpop.f32.mrf.mxu0
      %v2715 = vadd.f32 0.0, %v2714
      %2716 = vdwg.mxu0
      %2717 = vmatpush.msra.mxu0 0.0
      %2718 = vmatpush.msra.mxu0 0.0
      %2719 = vmatpush.msra.mxu0 0.0
      %2720 = vmatpush.msra.mxu0 0.0
      %2721 = vmatpush.msra.mxu0 0.0
      %2722 = vmatpush.msra.mxu0 0.0
      %2723 = vmatpush.msra.mxu0 0.0
      %2724 = vmatpush.msra.mxu0 0.0
      %2725 = vmatpush.msra.mxu0 0.0
      %2726 = vmatpush.msra.mxu0 0.0
      %2727 = vmatpush.msra.mxu0 0.0
      %2728 = vmatpush.msra.mxu0 0.0
      %2729 = vmatpush.msra.mxu0 0.0
      %2730 = vmatpush.msra.mxu0 0.0
      %2731 = vmatpush.msra.mxu0 0.0
      %2732 = vmatpush.msra.mxu0 %v2523
      %2733 = vmatmul.f32.gmra.mxu0 %v2503
      %v2734 = vpop.f32.mrf.mxu0
      %v2735 = vadd.f32 0.0, %v2734
      %2736 = vdwg.mxu0
      %2737 = vmatpush.msra.mxu0 0.0
      %2738 = vmatpush.msra.mxu0 0.0
      %2739 = vmatpush.msra.mxu0 0.0
      %2740 = vmatpush.msra.mxu0 0.0
      %2741 = vmatpush.msra.mxu0 0.0
      %2742 = vmatpush.msra.mxu0 0.0
      %2743 = vmatpush.msra.mxu0 0.0
      %2744 = vmatpush.msra.mxu0 0.0
      %2745 = vmatpush.msra.mxu0 0.0
      %2746 = vmatpush.msra.mxu0 0.0
      %2747 = vmatpush.msra.mxu0 0.0
      %2748 = vmatpush.msra.mxu0 0.0
      %2749 = vmatpush.msra.mxu0 0.0
      %2750 = vmatpush.msra.mxu0 0.0
      %2751 = vmatpush.msra.mxu0 0.0
      %2752 = vmatpush.msra.mxu0 %v2525
      %2753 = vmatmul.f32.gmra.mxu0 %v2503
      %v2754 = vpop.f32.mrf.mxu0
      %v2755 = vadd.f32 0.0, %v2754
      %2756 = vdwg.mxu0
      %2757 = vmatpush.msra.mxu0 0.0
      %2758 = vmatpush.msra.mxu0 0.0
      %2759 = vmatpush.msra.mxu0 0.0
      %2760 = vmatpush.msra.mxu0 0.0
      %2761 = vmatpush.msra.mxu0 0.0
      %2762 = vmatpush.msra.mxu0 0.0
      %2763 = vmatpush.msra.mxu0 0.0
      %2764 = vmatpush.msra.mxu0 0.0
      %2765 = vmatpush.msra.mxu0 0.0
      %2766 = vmatpush.msra.mxu0 0.0
      %2767 = vmatpush.msra.mxu0 0.0
      %2768 = vmatpush.msra.mxu0 0.0
      %2769 = vmatpush.msra.mxu0 0.0
      %2770 = vmatpush.msra.mxu0 0.0
      %2771 = vmatpush.msra.mxu0 0.0
      %2772 = vmatpush.msra.mxu0 %v2527
      %2773 = vmatmul.f32.gmra.mxu0 %v2503
      %v2774 = vpop.f32.mrf.mxu0
      %v2775 = vadd.f32 0.0, %v2774
      %2776 = vdwg.mxu0
      %2777 = vmatpush.msra.mxu0 0.0
      %2778 = vmatpush.msra.mxu0 0.0
      %2779 = vmatpush.msra.mxu0 0.0
      %2780 = vmatpush.msra.mxu0 0.0
      %2781 = vmatpush.msra.mxu0 0.0
      %2782 = vmatpush.msra.mxu0 0.0
      %2783 = vmatpush.msra.mxu0 0.0
      %2784 = vmatpush.msra.mxu0 0.0
      %2785 = vmatpush.msra.mxu0 0.0
      %2786 = vmatpush.msra.mxu0 0.0
      %2787 = vmatpush.msra.mxu0 0.0
      %2788 = vmatpush.msra.mxu0 0.0
      %2789 = vmatpush.msra.mxu0 0.0
      %2790 = vmatpush.msra.mxu0 0.0
      %2791 = vmatpush.msra.mxu0 0.0
      %2792 = vmatpush.msra.mxu0 %v2529
      %2793 = vmatmul.f32.gmra.mxu0 %v2503
      %v2794 = vpop.f32.mrf.mxu0
      %v2795 = vadd.f32 0.0, %v2794
      %2796 = vdwg.mxu0
      %2797 = vmatpush.msra.mxu0 0.0
      %2798 = vmatpush.msra.mxu0 0.0
      %2799 = vmatpush.msra.mxu0 0.0
      %2800 = vmatpush.msra.mxu0 0.0
      %2801 = vmatpush.msra.mxu0 0.0
      %2802 = vmatpush.msra.mxu0 0.0
      %2803 = vmatpush.msra.mxu0 0.0
      %2804 = vmatpush.msra.mxu0 0.0
      %2805 = vmatpush.msra.mxu0 0.0
      %2806 = vmatpush.msra.mxu0 0.0
      %2807 = vmatpush.msra.mxu0 0.0
      %2808 = vmatpush.msra.mxu0 0.0
      %2809 = vmatpush.msra.mxu0 0.0
      %2810 = vmatpush.msra.mxu0 0.0
      %2811 = vmatpush.msra.mxu0 0.0
      %2812 = vmatpush.msra.mxu0 %v2531
      %2813 = vmatmul.f32.gmra.mxu0 %v2503
      %v2814 = vpop.f32.mrf.mxu0
      %v2815 = vadd.f32 0.0, %v2814
      %2816 = vdwg.mxu0
      %2817 = vmatpush.msra.mxu0 0.0
      %2818 = vmatpush.msra.mxu0 0.0
      %2819 = vmatpush.msra.mxu0 0.0
      %2820 = vmatpush.msra.mxu0 0.0
      %2821 = vmatpush.msra.mxu0 0.0
      %2822 = vmatpush.msra.mxu0 0.0
      %2823 = vmatpush.msra.mxu0 0.0
      %2824 = vmatpush.msra.mxu0 0.0
      %2825 = vmatpush.msra.mxu0 0.0
      %2826 = vmatpush.msra.mxu0 0.0
      %2827 = vmatpush.msra.mxu0 0.0
      %2828 = vmatpush.msra.mxu0 0.0
      %2829 = vmatpush.msra.mxu0 0.0
      %2830 = vmatpush.msra.mxu0 0.0
      %2831 = vmatpush.msra.mxu0 0.0
      %2832 = vmatpush.msra.mxu0 %v2533
      %2833 = vmatmul.f32.gmra.mxu0 %v2503
      %v2834 = vpop.f32.mrf.mxu0
      %v2835 = vadd.f32 0.0, %v2834
      %2836 = vdwg.mxu0
      %2837 = vmatpush.msra.mxu0 0.0
      %2838 = vmatpush.msra.mxu0 0.0
      %2839 = vmatpush.msra.mxu0 0.0
      %2840 = vmatpush.msra.mxu0 0.0
      %2841 = vmatpush.msra.mxu0 0.0
      %2842 = vmatpush.msra.mxu0 0.0
      %2843 = vmatpush.msra.mxu0 0.0
      %2844 = vmatpush.msra.mxu0 0.0
      %2845 = vmatpush.msra.mxu0 0.0
      %2846 = vmatpush.msra.mxu0 0.0
      %2847 = vmatpush.msra.mxu0 0.0
      %2848 = vmatpush.msra.mxu0 0.0
      %2849 = vmatpush.msra.mxu0 0.0
      %2850 = vmatpush.msra.mxu0 0.0
      %2851 = vmatpush.msra.mxu0 0.0
      %2852 = vmatpush.msra.mxu0 %v2535
      %2853 = vmatmul.f32.gmra.mxu0 %v2503
      %v2854 = vpop.f32.mrf.mxu0
      %v2855 = vadd.f32 0.0, %v2854
      %2856 = vdwg.mxu0
      %v2857 = vadd.f32 %v2387, %v2555
      %v2858 = vadd.f32 %v2388, %v2575
      %v2859 = vadd.f32 %v2389, %v2595
      %v2860 = vadd.f32 %v2390, %v2615
      %v2861 = vadd.f32 %v2391, %v2635
      %v2862 = vadd.f32 %v2392, %v2655
      %v2863 = vadd.f32 %v2393, %v2675
      %v2864 = vadd.f32 %v2394, %v2695
      %v2865 = vadd.f32 %v2395, %v2715
      %v2866 = vadd.f32 %v2396, %v2735
      %v2867 = vadd.f32 %v2397, %v2755
      %v2868 = vadd.f32 %v2398, %v2775
      %v2869 = vadd.f32 %v2399, %v2795
      %v2870 = vadd.f32 %v2400, %v2815
      %v2871 = vadd.f32 %v2401, %v2835
      %v2872 = vadd.f32 %v2402, %v2855
      %v2873 = vld [vmem:[%s197 + $0x8] sm:$0xff]
      %v2874 = vld [vmem:[%s197 + $0x10] sm:$0xff]
      %v2875 = vld [vmem:[%s197 + $0x18] sm:$0xff]
      %v2876 = vld [vmem:[%s197 + $0x20] sm:$0xff]
      %v2877 = vld [vmem:[%s197 + $0x28] sm:$0xff]
      %v2878 = vld [vmem:[%s197 + $0x30] sm:$0xff]
      %v2879 = vld [vmem:[%s197 + $0x38] sm:$0xff]
      %v2880 = vld [vmem:[%s197 + $0x40] sm:$0xff]
      %s2881 = scalar_lea.vmem %s1, 48
      %v2882 = vld [vmem:[%s2881] sm:$0xff]
      %2891 = vst [vmem:[#allocation1] ss:$2 sm:$0xff] %v2873
      %s2892 = scalar_lea.vmem [#allocation1], 16
      %2893 = vst [vmem:[%s2892] ss:$2 sm:$0xff] %v2874
      %s2894 = scalar_lea.vmem [#allocation1], 32
      %2895 = vst [vmem:[%s2894] ss:$2 sm:$0xff] %v2875
      %s2896 = scalar_lea.vmem [#allocation1], 48
      %2897 = vst [vmem:[%s2896] ss:$2 sm:$0xff] %v2876
      %v2898 = vld.sshfl [vmem:[#allocation1] sm:$0xff pattern:$0x75316420]
      %v2899 = vld.sshfl [vmem:[#allocation1 + $0x8] sm:$0xff pattern:$0x75316420]
      %v2900 = vld.sshfl [vmem:[#allocation1 + $0x10] sm:$0xff pattern:$0x75316420]
      %v2901 = vld.sshfl [vmem:[#allocation1 + $0x18] sm:$0xff pattern:$0x75316420]
      %v2902 = vld.sshfl [vmem:[#allocation1 + $0x20] sm:$0xff pattern:$0x75316420]
      %v2903 = vld.sshfl [vmem:[#allocation1 + $0x28] sm:$0xff pattern:$0x75316420]
      %v2904 = vld.sshfl [vmem:[#allocation1 + $0x30] sm:$0xff pattern:$0x75316420]
      %v2905 = vld.sshfl [vmem:[#allocation1 + $0x38] sm:$0xff pattern:$0x75316420]
      %2906 = vst [vmem:[#allocation1] ss:$2 sm:$0xff] %v2877
      %2907 = vst [vmem:[%s2892] ss:$2 sm:$0xff] %v2878
      %2908 = vst [vmem:[%s2894] ss:$2 sm:$0xff] %v2879
      %2909 = vst [vmem:[%s2896] ss:$2 sm:$0xff] %v2880
      %v2910 = vld.sshfl [vmem:[#allocation1] sm:$0xff pattern:$0x75316420]
      %v2911 = vld.sshfl [vmem:[#allocation1 + $0x8] sm:$0xff pattern:$0x75316420]
      %v2912 = vld.sshfl [vmem:[#allocation1 + $0x10] sm:$0xff pattern:$0x75316420]
      %v2913 = vld.sshfl [vmem:[#allocation1 + $0x18] sm:$0xff pattern:$0x75316420]
      %v2914 = vld.sshfl [vmem:[#allocation1 + $0x20] sm:$0xff pattern:$0x75316420]
      %v2915 = vld.sshfl [vmem:[#allocation1 + $0x28] sm:$0xff pattern:$0x75316420]
      %v2916 = vld.sshfl [vmem:[#allocation1 + $0x30] sm:$0xff pattern:$0x75316420]
      %v2917 = vld.sshfl [vmem:[#allocation1 + $0x38] sm:$0xff pattern:$0x75316420]
      %v2919 = vsel %vm307, %v2882, 0
      %v2921 = vsel %vm311, %v2898, 0
      %v2923 = vsel %vm311, %v2899, 0
      %v2925 = vsel %vm311, %v2900, 0
      %v2927 = vsel %vm311, %v2901, 0
      %v2929 = vsel %vm311, %v2902, 0
      %v2931 = vsel %vm311, %v2903, 0
      %v2933 = vsel %vm311, %v2904, 0
      %v2935 = vsel %vm311, %v2905, 0
      %v2937 = vsel %vm311, %v2910, 0
      %v2939 = vsel %vm311, %v2911, 0
      %v2941 = vsel %vm311, %v2912, 0
      %v2943 = vsel %vm311, %v2913, 0
      %v2945 = vsel %vm311, %v2914, 0
      %v2947 = vsel %vm311, %v2915, 0
      %v2949 = vsel %vm311, %v2916, 0
      %v2951 = vsel %vm311, %v2917, 0
      %2953 = vmatpush.msra.mxu0 0.0
      %2954 = vmatpush.msra.mxu0 0.0
      %2955 = vmatpush.msra.mxu0 0.0
      %2956 = vmatpush.msra.mxu0 0.0
      %2957 = vmatpush.msra.mxu0 0.0
      %2958 = vmatpush.msra.mxu0 0.0
      %2959 = vmatpush.msra.mxu0 0.0
      %2960 = vmatpush.msra.mxu0 0.0
      %2961 = vmatpush.msra.mxu0 0.0
      %2962 = vmatpush.msra.mxu0 0.0
      %2963 = vmatpush.msra.mxu0 0.0
      %2964 = vmatpush.msra.mxu0 0.0
      %2965 = vmatpush.msra.mxu0 0.0
      %2966 = vmatpush.msra.mxu0 0.0
      %2967 = vmatpush.msra.mxu0 0.0
      %2968 = vmatpush.msra.mxu0 %v2921
      %2969 = vmatmul.f32.gmra.mxu0 %v2919
      %v2970 = vpop.f32.mrf.mxu0
      %v2971 = vadd.f32 0.0, %v2970
      %2972 = vdwg.mxu0
      %2973 = vmatpush.msra.mxu0 0.0
      %2974 = vmatpush.msra.mxu0 0.0
      %2975 = vmatpush.msra.mxu0 0.0
      %2976 = vmatpush.msra.mxu0 0.0
      %2977 = vmatpush.msra.mxu0 0.0
      %2978 = vmatpush.msra.mxu0 0.0
      %2979 = vmatpush.msra.mxu0 0.0
      %2980 = vmatpush.msra.mxu0 0.0
      %2981 = vmatpush.msra.mxu0 0.0
      %2982 = vmatpush.msra.mxu0 0.0
      %2983 = vmatpush.msra.mxu0 0.0
      %2984 = vmatpush.msra.mxu0 0.0
      %2985 = vmatpush.msra.mxu0 0.0
      %2986 = vmatpush.msra.mxu0 0.0
      %2987 = vmatpush.msra.mxu0 0.0
      %2988 = vmatpush.msra.mxu0 %v2923
      %2989 = vmatmul.f32.gmra.mxu0 %v2919
      %v2990 = vpop.f32.mrf.mxu0
      %v2991 = vadd.f32 0.0, %v2990
      %2992 = vdwg.mxu0
      %2993 = vmatpush.msra.mxu0 0.0
      %2994 = vmatpush.msra.mxu0 0.0
      %2995 = vmatpush.msra.mxu0 0.0
      %2996 = vmatpush.msra.mxu0 0.0
      %2997 = vmatpush.msra.mxu0 0.0
      %2998 = vmatpush.msra.mxu0 0.0
      %2999 = vmatpush.msra.mxu0 0.0
      %3000 = vmatpush.msra.mxu0 0.0
      %3001 = vmatpush.msra.mxu0 0.0
      %3002 = vmatpush.msra.mxu0 0.0
      %3003 = vmatpush.msra.mxu0 0.0
      %3004 = vmatpush.msra.mxu0 0.0
      %3005 = vmatpush.msra.mxu0 0.0
      %3006 = vmatpush.msra.mxu0 0.0
      %3007 = vmatpush.msra.mxu0 0.0
      %3008 = vmatpush.msra.mxu0 %v2925
      %3009 = vmatmul.f32.gmra.mxu0 %v2919
      %v3010 = vpop.f32.mrf.mxu0
      %v3011 = vadd.f32 0.0, %v3010
      %3012 = vdwg.mxu0
      %3013 = vmatpush.msra.mxu0 0.0
      %3014 = vmatpush.msra.mxu0 0.0
      %3015 = vmatpush.msra.mxu0 0.0
      %3016 = vmatpush.msra.mxu0 0.0
      %3017 = vmatpush.msra.mxu0 0.0
      %3018 = vmatpush.msra.mxu0 0.0
      %3019 = vmatpush.msra.mxu0 0.0
      %3020 = vmatpush.msra.mxu0 0.0
      %3021 = vmatpush.msra.mxu0 0.0
      %3022 = vmatpush.msra.mxu0 0.0
      %3023 = vmatpush.msra.mxu0 0.0
      %3024 = vmatpush.msra.mxu0 0.0
      %3025 = vmatpush.msra.mxu0 0.0
      %3026 = vmatpush.msra.mxu0 0.0
      %3027 = vmatpush.msra.mxu0 0.0
      %3028 = vmatpush.msra.mxu0 %v2927
      %3029 = vmatmul.f32.gmra.mxu0 %v2919
      %v3030 = vpop.f32.mrf.mxu0
      %v3031 = vadd.f32 0.0, %v3030
      %3032 = vdwg.mxu0
      %3033 = vmatpush.msra.mxu0 0.0
      %3034 = vmatpush.msra.mxu0 0.0
      %3035 = vmatpush.msra.mxu0 0.0
      %3036 = vmatpush.msra.mxu0 0.0
      %3037 = vmatpush.msra.mxu0 0.0
      %3038 = vmatpush.msra.mxu0 0.0
      %3039 = vmatpush.msra.mxu0 0.0
      %3040 = vmatpush.msra.mxu0 0.0
      %3041 = vmatpush.msra.mxu0 0.0
      %3042 = vmatpush.msra.mxu0 0.0
      %3043 = vmatpush.msra.mxu0 0.0
      %3044 = vmatpush.msra.mxu0 0.0
      %3045 = vmatpush.msra.mxu0 0.0
      %3046 = vmatpush.msra.mxu0 0.0
      %3047 = vmatpush.msra.mxu0 0.0
      %3048 = vmatpush.msra.mxu0 %v2929
      %3049 = vmatmul.f32.gmra.mxu0 %v2919
      %v3050 = vpop.f32.mrf.mxu0
      %v3051 = vadd.f32 0.0, %v3050
      %3052 = vdwg.mxu0
      %3053 = vmatpush.msra.mxu0 0.0
      %3054 = vmatpush.msra.mxu0 0.0
      %3055 = vmatpush.msra.mxu0 0.0
      %3056 = vmatpush.msra.mxu0 0.0
      %3057 = vmatpush.msra.mxu0 0.0
      %3058 = vmatpush.msra.mxu0 0.0
      %3059 = vmatpush.msra.mxu0 0.0
      %3060 = vmatpush.msra.mxu0 0.0
      %3061 = vmatpush.msra.mxu0 0.0
      %3062 = vmatpush.msra.mxu0 0.0
      %3063 = vmatpush.msra.mxu0 0.0
      %3064 = vmatpush.msra.mxu0 0.0
      %3065 = vmatpush.msra.mxu0 0.0
      %3066 = vmatpush.msra.mxu0 0.0
      %3067 = vmatpush.msra.mxu0 0.0
      %3068 = vmatpush.msra.mxu0 %v2931
      %3069 = vmatmul.f32.gmra.mxu0 %v2919
      %v3070 = vpop.f32.mrf.mxu0
      %v3071 = vadd.f32 0.0, %v3070
      %3072 = vdwg.mxu0
      %3073 = vmatpush.msra.mxu0 0.0
      %3074 = vmatpush.msra.mxu0 0.0
      %3075 = vmatpush.msra.mxu0 0.0
      %3076 = vmatpush.msra.mxu0 0.0
      %3077 = vmatpush.msra.mxu0 0.0
      %3078 = vmatpush.msra.mxu0 0.0
      %3079 = vmatpush.msra.mxu0 0.0
      %3080 = vmatpush.msra.mxu0 0.0
      %3081 = vmatpush.msra.mxu0 0.0
      %3082 = vmatpush.msra.mxu0 0.0
      %3083 = vmatpush.msra.mxu0 0.0
      %3084 = vmatpush.msra.mxu0 0.0
      %3085 = vmatpush.msra.mxu0 0.0
      %3086 = vmatpush.msra.mxu0 0.0
      %3087 = vmatpush.msra.mxu0 0.0
      %3088 = vmatpush.msra.mxu0 %v2933
      %3089 = vmatmul.f32.gmra.mxu0 %v2919
      %v3090 = vpop.f32.mrf.mxu0
      %v3091 = vadd.f32 0.0, %v3090
      %3092 = vdwg.mxu0
      %3093 = vmatpush.msra.mxu0 0.0
      %3094 = vmatpush.msra.mxu0 0.0
      %3095 = vmatpush.msra.mxu0 0.0
      %3096 = vmatpush.msra.mxu0 0.0
      %3097 = vmatpush.msra.mxu0 0.0
      %3098 = vmatpush.msra.mxu0 0.0
      %3099 = vmatpush.msra.mxu0 0.0
      %3100 = vmatpush.msra.mxu0 0.0
      %3101 = vmatpush.msra.mxu0 0.0
      %3102 = vmatpush.msra.mxu0 0.0
      %3103 = vmatpush.msra.mxu0 0.0
      %3104 = vmatpush.msra.mxu0 0.0
      %3105 = vmatpush.msra.mxu0 0.0
      %3106 = vmatpush.msra.mxu0 0.0
      %3107 = vmatpush.msra.mxu0 0.0
      %3108 = vmatpush.msra.mxu0 %v2935
      %3109 = vmatmul.f32.gmra.mxu0 %v2919
      %v3110 = vpop.f32.mrf.mxu0
      %v3111 = vadd.f32 0.0, %v3110
      %3112 = vdwg.mxu0
      %3113 = vmatpush.msra.mxu0 0.0
      %3114 = vmatpush.msra.mxu0 0.0
      %3115 = vmatpush.msra.mxu0 0.0
      %3116 = vmatpush.msra.mxu0 0.0
      %3117 = vmatpush.msra.mxu0 0.0
      %3118 = vmatpush.msra.mxu0 0.0
      %3119 = vmatpush.msra.mxu0 0.0
      %3120 = vmatpush.msra.mxu0 0.0
      %3121 = vmatpush.msra.mxu0 0.0
      %3122 = vmatpush.msra.mxu0 0.0
      %3123 = vmatpush.msra.mxu0 0.0
      %3124 = vmatpush.msra.mxu0 0.0
      %3125 = vmatpush.msra.mxu0 0.0
      %3126 = vmatpush.msra.mxu0 0.0
      %3127 = vmatpush.msra.mxu0 0.0
      %3128 = vmatpush.msra.mxu0 %v2937
      %3129 = vmatmul.f32.gmra.mxu0 %v2919
      %v3130 = vpop.f32.mrf.mxu0
      %v3131 = vadd.f32 0.0, %v3130
      %3132 = vdwg.mxu0
      %3133 = vmatpush.msra.mxu0 0.0
      %3134 = vmatpush.msra.mxu0 0.0
      %3135 = vmatpush.msra.mxu0 0.0
      %3136 = vmatpush.msra.mxu0 0.0
      %3137 = vmatpush.msra.mxu0 0.0
      %3138 = vmatpush.msra.mxu0 0.0
      %3139 = vmatpush.msra.mxu0 0.0
      %3140 = vmatpush.msra.mxu0 0.0
      %3141 = vmatpush.msra.mxu0 0.0
      %3142 = vmatpush.msra.mxu0 0.0
      %3143 = vmatpush.msra.mxu0 0.0
      %3144 = vmatpush.msra.mxu0 0.0
      %3145 = vmatpush.msra.mxu0 0.0
      %3146 = vmatpush.msra.mxu0 0.0
      %3147 = vmatpush.msra.mxu0 0.0
      %3148 = vmatpush.msra.mxu0 %v2939
      %3149 = vmatmul.f32.gmra.mxu0 %v2919
      %v3150 = vpop.f32.mrf.mxu0
      %v3151 = vadd.f32 0.0, %v3150
      %3152 = vdwg.mxu0
      %3153 = vmatpush.msra.mxu0 0.0
      %3154 = vmatpush.msra.mxu0 0.0
      %3155 = vmatpush.msra.mxu0 0.0
      %3156 = vmatpush.msra.mxu0 0.0
      %3157 = vmatpush.msra.mxu0 0.0
      %3158 = vmatpush.msra.mxu0 0.0
      %3159 = vmatpush.msra.mxu0 0.0
      %3160 = vmatpush.msra.mxu0 0.0
      %3161 = vmatpush.msra.mxu0 0.0
      %3162 = vmatpush.msra.mxu0 0.0
      %3163 = vmatpush.msra.mxu0 0.0
      %3164 = vmatpush.msra.mxu0 0.0
      %3165 = vmatpush.msra.mxu0 0.0
      %3166 = vmatpush.msra.mxu0 0.0
      %3167 = vmatpush.msra.mxu0 0.0
      %3168 = vmatpush.msra.mxu0 %v2941
      %3169 = vmatmul.f32.gmra.mxu0 %v2919
      %v3170 = vpop.f32.mrf.mxu0
      %v3171 = vadd.f32 0.0, %v3170
      %3172 = vdwg.mxu0
      %3173 = vmatpush.msra.mxu0 0.0
      %3174 = vmatpush.msra.mxu0 0.0
      %3175 = vmatpush.msra.mxu0 0.0
      %3176 = vmatpush.msra.mxu0 0.0
      %3177 = vmatpush.msra.mxu0 0.0
      %3178 = vmatpush.msra.mxu0 0.0
      %3179 = vmatpush.msra.mxu0 0.0
      %3180 = vmatpush.msra.mxu0 0.0
      %3181 = vmatpush.msra.mxu0 0.0
      %3182 = vmatpush.msra.mxu0 0.0
      %3183 = vmatpush.msra.mxu0 0.0
      %3184 = vmatpush.msra.mxu0 0.0
      %3185 = vmatpush.msra.mxu0 0.0
      %3186 = vmatpush.msra.mxu0 0.0
      %3187 = vmatpush.msra.mxu0 0.0
      %3188 = vmatpush.msra.mxu0 %v2943
      %3189 = vmatmul.f32.gmra.mxu0 %v2919
      %v3190 = vpop.f32.mrf.mxu0
      %v3191 = vadd.f32 0.0, %v3190
      %3192 = vdwg.mxu0
      %3193 = vmatpush.msra.mxu0 0.0
      %3194 = vmatpush.msra.mxu0 0.0
      %3195 = vmatpush.msra.mxu0 0.0
      %3196 = vmatpush.msra.mxu0 0.0
      %3197 = vmatpush.msra.mxu0 0.0
      %3198 = vmatpush.msra.mxu0 0.0
      %3199 = vmatpush.msra.mxu0 0.0
      %3200 = vmatpush.msra.mxu0 0.0
      %3201 = vmatpush.msra.mxu0 0.0
      %3202 = vmatpush.msra.mxu0 0.0
      %3203 = vmatpush.msra.mxu0 0.0
      %3204 = vmatpush.msra.mxu0 0.0
      %3205 = vmatpush.msra.mxu0 0.0
      %3206 = vmatpush.msra.mxu0 0.0
      %3207 = vmatpush.msra.mxu0 0.0
      %3208 = vmatpush.msra.mxu0 %v2945
      %3209 = vmatmul.f32.gmra.mxu0 %v2919
      %v3210 = vpop.f32.mrf.mxu0
      %v3211 = vadd.f32 0.0, %v3210
      %3212 = vdwg.mxu0
      %3213 = vmatpush.msra.mxu0 0.0
      %3214 = vmatpush.msra.mxu0 0.0
      %3215 = vmatpush.msra.mxu0 0.0
      %3216 = vmatpush.msra.mxu0 0.0
      %3217 = vmatpush.msra.mxu0 0.0
      %3218 = vmatpush.msra.mxu0 0.0
      %3219 = vmatpush.msra.mxu0 0.0
      %3220 = vmatpush.msra.mxu0 0.0
      %3221 = vmatpush.msra.mxu0 0.0
      %3222 = vmatpush.msra.mxu0 0.0
      %3223 = vmatpush.msra.mxu0 0.0
      %3224 = vmatpush.msra.mxu0 0.0
      %3225 = vmatpush.msra.mxu0 0.0
      %3226 = vmatpush.msra.mxu0 0.0
      %3227 = vmatpush.msra.mxu0 0.0
      %3228 = vmatpush.msra.mxu0 %v2947
      %3229 = vmatmul.f32.gmra.mxu0 %v2919
      %v3230 = vpop.f32.mrf.mxu0
      %v3231 = vadd.f32 0.0, %v3230
      %3232 = vdwg.mxu0
      %3233 = vmatpush.msra.mxu0 0.0
      %3234 = vmatpush.msra.mxu0 0.0
      %3235 = vmatpush.msra.mxu0 0.0
      %3236 = vmatpush.msra.mxu0 0.0
      %3237 = vmatpush.msra.mxu0 0.0
      %3238 = vmatpush.msra.mxu0 0.0
      %3239 = vmatpush.msra.mxu0 0.0
      %3240 = vmatpush.msra.mxu0 0.0
      %3241 = vmatpush.msra.mxu0 0.0
      %3242 = vmatpush.msra.mxu0 0.0
      %3243 = vmatpush.msra.mxu0 0.0
      %3244 = vmatpush.msra.mxu0 0.0
      %3245 = vmatpush.msra.mxu0 0.0
      %3246 = vmatpush.msra.mxu0 0.0
      %3247 = vmatpush.msra.mxu0 0.0
      %3248 = vmatpush.msra.mxu0 %v2949
      %3249 = vmatmul.f32.gmra.mxu0 %v2919
      %v3250 = vpop.f32.mrf.mxu0
      %v3251 = vadd.f32 0.0, %v3250
      %3252 = vdwg.mxu0
      %3253 = vmatpush.msra.mxu0 0.0
      %3254 = vmatpush.msra.mxu0 0.0
      %3255 = vmatpush.msra.mxu0 0.0
      %3256 = vmatpush.msra.mxu0 0.0
      %3257 = vmatpush.msra.mxu0 0.0
      %3258 = vmatpush.msra.mxu0 0.0
      %3259 = vmatpush.msra.mxu0 0.0
      %3260 = vmatpush.msra.mxu0 0.0
      %3261 = vmatpush.msra.mxu0 0.0
      %3262 = vmatpush.msra.mxu0 0.0
      %3263 = vmatpush.msra.mxu0 0.0
      %3264 = vmatpush.msra.mxu0 0.0
      %3265 = vmatpush.msra.mxu0 0.0
      %3266 = vmatpush.msra.mxu0 0.0
      %3267 = vmatpush.msra.mxu0 0.0
      %3268 = vmatpush.msra.mxu0 %v2951
      %3269 = vmatmul.f32.gmra.mxu0 %v2919
      %v3270 = vpop.f32.mrf.mxu0
      %v3271 = vadd.f32 0.0, %v3270
      %3272 = vdwg.mxu0
      %v3273 = vadd.f32 %v2857, %v2971
      %v3274 = vadd.f32 %v2858, %v2991
      %v3275 = vadd.f32 %v2859, %v3011
      %v3276 = vadd.f32 %v2860, %v3031
      %v3277 = vadd.f32 %v2861, %v3051
      %v3278 = vadd.f32 %v2862, %v3071
      %v3279 = vadd.f32 %v2863, %v3091
      %v3280 = vadd.f32 %v2864, %v3111
      %v3281 = vadd.f32 %v2865, %v3131
      %v3282 = vadd.f32 %v2866, %v3151
      %v3283 = vadd.f32 %v2867, %v3171
      %v3284 = vadd.f32 %v2868, %v3191
      %v3285 = vadd.f32 %v2869, %v3211
      %v3286 = vadd.f32 %v2870, %v3231
      %v3287 = vadd.f32 %v2871, %v3251
      %v3288 = vadd.f32 %v2872, %v3271
      %v3289 = vld [vmem:[%s197 + $0x8] sm:$0xff]
      %v3290 = vld [vmem:[%s197 + $0x10] sm:$0xff]
      %v3291 = vld [vmem:[%s197 + $0x18] sm:$0xff]
      %v3292 = vld [vmem:[%s197 + $0x20] sm:$0xff]
      %v3293 = vld [vmem:[%s197 + $0x28] sm:$0xff]
      %v3294 = vld [vmem:[%s197 + $0x30] sm:$0xff]
      %v3295 = vld [vmem:[%s197 + $0x38] sm:$0xff]
      %v3296 = vld [vmem:[%s197 + $0x40] sm:$0xff]
      %v3297 = vld [vmem:[%s197 + $0x48] sm:$0xf]
      %s3298 = scalar_lea.vmem %s1, 56
      %v3299 = vld [vmem:[%s3298] sm:$0xff]
      %3309 = vst [vmem:[#allocation1] ss:$2 sm:$0xff] %v3289
      %s3310 = scalar_lea.vmem [#allocation1], 16
      %3311 = vst [vmem:[%s3310] ss:$2 sm:$0xff] %v3290
      %s3312 = scalar_lea.vmem [#allocation1], 32
      %3313 = vst [vmem:[%s3312] ss:$2 sm:$0xff] %v3291
      %s3314 = scalar_lea.vmem [#allocation1], 48
      %3315 = vst [vmem:[%s3314] ss:$2 sm:$0xff] %v3292
      %v3316 = vld.sshfl [vmem:[#allocation1] sm:$0xff pattern:$0x75316420]
      %v3317 = vld.sshfl [vmem:[#allocation1 + $0x8] sm:$0xff pattern:$0x75316420]
      %v3318 = vld.sshfl [vmem:[#allocation1 + $0x10] sm:$0xff pattern:$0x75316420]
      %v3319 = vld.sshfl [vmem:[#allocation1 + $0x18] sm:$0xff pattern:$0x75316420]
      %v3320 = vld.sshfl [vmem:[#allocation1 + $0x20] sm:$0xff pattern:$0x75316420]
      %v3321 = vld.sshfl [vmem:[#allocation1 + $0x28] sm:$0xff pattern:$0x75316420]
      %v3322 = vld.sshfl [vmem:[#allocation1 + $0x30] sm:$0xff pattern:$0x75316420]
      %v3323 = vld.sshfl [vmem:[#allocation1 + $0x38] sm:$0xff pattern:$0x75316420]
      %3324 = vst [vmem:[#allocation1] ss:$2 sm:$0xff] %v3293
      %3325 = vst [vmem:[%s3310] ss:$2 sm:$0xff] %v3294
      %3326 = vst [vmem:[%s3312] ss:$2 sm:$0xff] %v3295
      %3327 = vst [vmem:[%s3314] ss:$2 sm:$0xff] %v3296
      %v3328 = vld.sshfl [vmem:[#allocation1] sm:$0xff pattern:$0x75316420]
      %v3329 = vld.sshfl [vmem:[#allocation1 + $0x8] sm:$0xff pattern:$0x75316420]
      %v3330 = vld.sshfl [vmem:[#allocation1 + $0x10] sm:$0xff pattern:$0x75316420]
      %v3331 = vld.sshfl [vmem:[#allocation1 + $0x18] sm:$0xff pattern:$0x75316420]
      %v3332 = vld.sshfl [vmem:[#allocation1 + $0x20] sm:$0xff pattern:$0x75316420]
      %v3333 = vld.sshfl [vmem:[#allocation1 + $0x28] sm:$0xff pattern:$0x75316420]
      %v3334 = vld.sshfl [vmem:[#allocation1 + $0x30] sm:$0xff pattern:$0x75316420]
      %v3335 = vld.sshfl [vmem:[#allocation1 + $0x38] sm:$0xff pattern:$0x75316420]
      %3336 = vst [vmem:[#allocation1] ss:$2 sm:$0xff] %v3297
      %v3337 = vld.sshfl [vmem:[#allocation1] sm:$0xff pattern:$0x75316420]
      %3338 = vrot.lane.b32.xlu0 %v3316, 127
      %v3339 = vpop.permute.xlu0 %3338
      %3340 = vrot.lane.b32.xlu0 %v3317, 127
      %v3341 = vpop.permute.xlu0 %3340
      %3342 = vrot.lane.b32.xlu0 %v3318, 127
      %v3343 = vpop.permute.xlu0 %3342
      %3344 = vrot.lane.b32.xlu0 %v3319, 127
      %v3345 = vpop.permute.xlu0 %3344
      %3346 = vrot.lane.b32.xlu0 %v3320, 127
      %v3347 = vpop.permute.xlu0 %3346
      %3348 = vrot.lane.b32.xlu0 %v3321, 127
      %v3349 = vpop.permute.xlu0 %3348
      %3350 = vrot.lane.b32.xlu0 %v3322, 127
      %v3351 = vpop.permute.xlu0 %3350
      %3352 = vrot.lane.b32.xlu0 %v3323, 127
      %v3353 = vpop.permute.xlu0 %3352
      %3354 = vrot.lane.b32.xlu0 %v3328, 127
      %v3355 = vpop.permute.xlu0 %3354
      %3356 = vrot.lane.b32.xlu0 %v3329, 127
      %v3357 = vpop.permute.xlu0 %3356
      %3358 = vrot.lane.b32.xlu0 %v3330, 127
      %v3359 = vpop.permute.xlu0 %3358
      %3360 = vrot.lane.b32.xlu0 %v3331, 127
      %v3361 = vpop.permute.xlu0 %3360
      %3362 = vrot.lane.b32.xlu0 %v3332, 127
      %v3363 = vpop.permute.xlu0 %3362
      %3364 = vrot.lane.b32.xlu0 %v3333, 127
      %v3365 = vpop.permute.xlu0 %3364
      %3366 = vrot.lane.b32.xlu0 %v3334, 127
      %v3367 = vpop.permute.xlu0 %3366
      %3368 = vrot.lane.b32.xlu0 %v3335, 127
      %v3369 = vpop.permute.xlu0 %3368
      %3370 = vrot.lane.b32.xlu0 %v3337, 127
      %v3371 = vpop.permute.xlu0 %3370
      %v3372 = vsel %vm290, %v3339, %v3341
      %v3373 = vsel %vm290, %v3341, %v3343
      %v3374 = vsel %vm290, %v3343, %v3345
      %v3375 = vsel %vm290, %v3345, %v3347
      %v3376 = vsel %vm290, %v3347, %v3349
      %v3377 = vsel %vm290, %v3349, %v3351
      %v3378 = vsel %vm290, %v3351, %v3353
      %v3379 = vsel %vm290, %v3353, %v3355
      %v3380 = vsel %vm290, %v3355, %v3357
      %v3381 = vsel %vm290, %v3357, %v3359
      %v3382 = vsel %vm290, %v3359, %v3361
      %v3383 = vsel %vm290, %v3361, %v3363
      %v3384 = vsel %vm290, %v3363, %v3365
      %v3385 = vsel %vm290, %v3365, %v3367
      %v3386 = vsel %vm290, %v3367, %v3369
      %v3387 = vsel %vm290, %v3369, %v3371
      %v3389 = vsel %vm307, %v3299, 0
      %v3391 = vsel %vm311, %v3372, 0
      %v3393 = vsel %vm311, %v3373, 0
      %v3395 = vsel %vm311, %v3374, 0
      %v3397 = vsel %vm311, %v3375, 0
      %v3399 = vsel %vm311, %v3376, 0
      %v3401 = vsel %vm311, %v3377, 0
      %v3403 = vsel %vm311, %v3378, 0
      %v3405 = vsel %vm311, %v3379, 0
      %v3407 = vsel %vm311, %v3380, 0
      %v3409 = vsel %vm311, %v3381, 0
      %v3411 = vsel %vm311, %v3382, 0
      %v3413 = vsel %vm311, %v3383, 0
      %v3415 = vsel %vm311, %v3384, 0
      %v3417 = vsel %vm311, %v3385, 0
      %v3419 = vsel %vm311, %v3386, 0
      %v3421 = vsel %vm311, %v3387, 0
      %3423 = vmatpush.msra.mxu0 0.0
      %3424 = vmatpush.msra.mxu0 0.0
      %3425 = vmatpush.msra.mxu0 0.0
      %3426 = vmatpush.msra.mxu0 0.0
      %3427 = vmatpush.msra.mxu0 0.0
      %3428 = vmatpush.msra.mxu0 0.0
      %3429 = vmatpush.msra.mxu0 0.0
      %3430 = vmatpush.msra.mxu0 0.0
      %3431 = vmatpush.msra.mxu0 0.0
      %3432 = vmatpush.msra.mxu0 0.0
      %3433 = vmatpush.msra.mxu0 0.0
      %3434 = vmatpush.msra.mxu0 0.0
      %3435 = vmatpush.msra.mxu0 0.0
      %3436 = vmatpush.msra.mxu0 0.0
      %3437 = vmatpush.msra.mxu0 0.0
      %3438 = vmatpush.msra.mxu0 %v3391
      %3439 = vmatmul.f32.gmra.mxu0 %v3389
      %v3440 = vpop.f32.mrf.mxu0
      %v3441 = vadd.f32 0.0, %v3440
      %3442 = vdwg.mxu0
      %3443 = vmatpush.msra.mxu0 0.0
      %3444 = vmatpush.msra.mxu0 0.0
      %3445 = vmatpush.msra.mxu0 0.0
      %3446 = vmatpush.msra.mxu0 0.0
      %3447 = vmatpush.msra.mxu0 0.0
      %3448 = vmatpush.msra.mxu0 0.0
      %3449 = vmatpush.msra.mxu0 0.0
      %3450 = vmatpush.msra.mxu0 0.0
      %3451 = vmatpush.msra.mxu0 0.0
      %3452 = vmatpush.msra.mxu0 0.0
      %3453 = vmatpush.msra.mxu0 0.0
      %3454 = vmatpush.msra.mxu0 0.0
      %3455 = vmatpush.msra.mxu0 0.0
      %3456 = vmatpush.msra.mxu0 0.0
      %3457 = vmatpush.msra.mxu0 0.0
      %3458 = vmatpush.msra.mxu0 %v3393
      %3459 = vmatmul.f32.gmra.mxu0 %v3389
      %v3460 = vpop.f32.mrf.mxu0
      %v3461 = vadd.f32 0.0, %v3460
      %3462 = vdwg.mxu0
      %3463 = vmatpush.msra.mxu0 0.0
      %3464 = vmatpush.msra.mxu0 0.0
      %3465 = vmatpush.msra.mxu0 0.0
      %3466 = vmatpush.msra.mxu0 0.0
      %3467 = vmatpush.msra.mxu0 0.0
      %3468 = vmatpush.msra.mxu0 0.0
      %3469 = vmatpush.msra.mxu0 0.0
      %3470 = vmatpush.msra.mxu0 0.0
      %3471 = vmatpush.msra.mxu0 0.0
      %3472 = vmatpush.msra.mxu0 0.0
      %3473 = vmatpush.msra.mxu0 0.0
      %3474 = vmatpush.msra.mxu0 0.0
      %3475 = vmatpush.msra.mxu0 0.0
      %3476 = vmatpush.msra.mxu0 0.0
      %3477 = vmatpush.msra.mxu0 0.0
      %3478 = vmatpush.msra.mxu0 %v3395
      %3479 = vmatmul.f32.gmra.mxu0 %v3389
      %v3480 = vpop.f32.mrf.mxu0
      %v3481 = vadd.f32 0.0, %v3480
      %3482 = vdwg.mxu0
      %3483 = vmatpush.msra.mxu0 0.0
      %3484 = vmatpush.msra.mxu0 0.0
      %3485 = vmatpush.msra.mxu0 0.0
      %3486 = vmatpush.msra.mxu0 0.0
      %3487 = vmatpush.msra.mxu0 0.0
      %3488 = vmatpush.msra.mxu0 0.0
      %3489 = vmatpush.msra.mxu0 0.0
      %3490 = vmatpush.msra.mxu0 0.0
      %3491 = vmatpush.msra.mxu0 0.0
      %3492 = vmatpush.msra.mxu0 0.0
      %3493 = vmatpush.msra.mxu0 0.0
      %3494 = vmatpush.msra.mxu0 0.0
      %3495 = vmatpush.msra.mxu0 0.0
      %3496 = vmatpush.msra.mxu0 0.0
      %3497 = vmatpush.msra.mxu0 0.0
      %3498 = vmatpush.msra.mxu0 %v3397
      %3499 = vmatmul.f32.gmra.mxu0 %v3389
      %v3500 = vpop.f32.mrf.mxu0
      %v3501 = vadd.f32 0.0, %v3500
      %3502 = vdwg.mxu0
      %3503 = vmatpush.msra.mxu0 0.0
      %3504 = vmatpush.msra.mxu0 0.0
      %3505 = vmatpush.msra.mxu0 0.0
      %3506 = vmatpush.msra.mxu0 0.0
      %3507 = vmatpush.msra.mxu0 0.0
      %3508 = vmatpush.msra.mxu0 0.0
      %3509 = vmatpush.msra.mxu0 0.0
      %3510 = vmatpush.msra.mxu0 0.0
      %3511 = vmatpush.msra.mxu0 0.0
      %3512 = vmatpush.msra.mxu0 0.0
      %3513 = vmatpush.msra.mxu0 0.0
      %3514 = vmatpush.msra.mxu0 0.0
      %3515 = vmatpush.msra.mxu0 0.0
      %3516 = vmatpush.msra.mxu0 0.0
      %3517 = vmatpush.msra.mxu0 0.0
      %3518 = vmatpush.msra.mxu0 %v3399
      %3519 = vmatmul.f32.gmra.mxu0 %v3389
      %v3520 = vpop.f32.mrf.mxu0
      %v3521 = vadd.f32 0.0, %v3520
      %3522 = vdwg.mxu0
      %3523 = vmatpush.msra.mxu0 0.0
      %3524 = vmatpush.msra.mxu0 0.0
      %3525 = vmatpush.msra.mxu0 0.0
      %3526 = vmatpush.msra.mxu0 0.0
      %3527 = vmatpush.msra.mxu0 0.0
      %3528 = vmatpush.msra.mxu0 0.0
      %3529 = vmatpush.msra.mxu0 0.0
      %3530 = vmatpush.msra.mxu0 0.0
      %3531 = vmatpush.msra.mxu0 0.0
      %3532 = vmatpush.msra.mxu0 0.0
      %3533 = vmatpush.msra.mxu0 0.0
      %3534 = vmatpush.msra.mxu0 0.0
      %3535 = vmatpush.msra.mxu0 0.0
      %3536 = vmatpush.msra.mxu0 0.0
      %3537 = vmatpush.msra.mxu0 0.0
      %3538 = vmatpush.msra.mxu0 %v3401
      %3539 = vmatmul.f32.gmra.mxu0 %v3389
      %v3540 = vpop.f32.mrf.mxu0
      %v3541 = vadd.f32 0.0, %v3540
      %3542 = vdwg.mxu0
      %3543 = vmatpush.msra.mxu0 0.0
      %3544 = vmatpush.msra.mxu0 0.0
      %3545 = vmatpush.msra.mxu0 0.0
      %3546 = vmatpush.msra.mxu0 0.0
      %3547 = vmatpush.msra.mxu0 0.0
      %3548 = vmatpush.msra.mxu0 0.0
      %3549 = vmatpush.msra.mxu0 0.0
      %3550 = vmatpush.msra.mxu0 0.0
      %3551 = vmatpush.msra.mxu0 0.0
      %3552 = vmatpush.msra.mxu0 0.0
      %3553 = vmatpush.msra.mxu0 0.0
      %3554 = vmatpush.msra.mxu0 0.0
      %3555 = vmatpush.msra.mxu0 0.0
      %3556 = vmatpush.msra.mxu0 0.0
      %3557 = vmatpush.msra.mxu0 0.0
      %3558 = vmatpush.msra.mxu0 %v3403
      %3559 = vmatmul.f32.gmra.mxu0 %v3389
      %v3560 = vpop.f32.mrf.mxu0
      %v3561 = vadd.f32 0.0, %v3560
      %3562 = vdwg.mxu0
      %3563 = vmatpush.msra.mxu0 0.0
      %3564 = vmatpush.msra.mxu0 0.0
      %3565 = vmatpush.msra.mxu0 0.0
      %3566 = vmatpush.msra.mxu0 0.0
      %3567 = vmatpush.msra.mxu0 0.0
      %3568 = vmatpush.msra.mxu0 0.0
      %3569 = vmatpush.msra.mxu0 0.0
      %3570 = vmatpush.msra.mxu0 0.0
      %3571 = vmatpush.msra.mxu0 0.0
      %3572 = vmatpush.msra.mxu0 0.0
      %3573 = vmatpush.msra.mxu0 0.0
      %3574 = vmatpush.msra.mxu0 0.0
      %3575 = vmatpush.msra.mxu0 0.0
      %3576 = vmatpush.msra.mxu0 0.0
      %3577 = vmatpush.msra.mxu0 0.0
      %3578 = vmatpush.msra.mxu0 %v3405
      %3579 = vmatmul.f32.gmra.mxu0 %v3389
      %v3580 = vpop.f32.mrf.mxu0
      %v3581 = vadd.f32 0.0, %v3580
      %3582 = vdwg.mxu0
      %3583 = vmatpush.msra.mxu0 0.0
      %3584 = vmatpush.msra.mxu0 0.0
      %3585 = vmatpush.msra.mxu0 0.0
      %3586 = vmatpush.msra.mxu0 0.0
      %3587 = vmatpush.msra.mxu0 0.0
      %3588 = vmatpush.msra.mxu0 0.0
      %3589 = vmatpush.msra.mxu0 0.0
      %3590 = vmatpush.msra.mxu0 0.0
      %3591 = vmatpush.msra.mxu0 0.0
      %3592 = vmatpush.msra.mxu0 0.0
      %3593 = vmatpush.msra.mxu0 0.0
      %3594 = vmatpush.msra.mxu0 0.0
      %3595 = vmatpush.msra.mxu0 0.0
      %3596 = vmatpush.msra.mxu0 0.0
      %3597 = vmatpush.msra.mxu0 0.0
      %3598 = vmatpush.msra.mxu0 %v3407
      %3599 = vmatmul.f32.gmra.mxu0 %v3389
      %v3600 = vpop.f32.mrf.mxu0
      %v3601 = vadd.f32 0.0, %v3600
      %3602 = vdwg.mxu0
      %3603 = vmatpush.msra.mxu0 0.0
      %3604 = vmatpush.msra.mxu0 0.0
      %3605 = vmatpush.msra.mxu0 0.0
      %3606 = vmatpush.msra.mxu0 0.0
      %3607 = vmatpush.msra.mxu0 0.0
      %3608 = vmatpush.msra.mxu0 0.0
      %3609 = vmatpush.msra.mxu0 0.0
      %3610 = vmatpush.msra.mxu0 0.0
      %3611 = vmatpush.msra.mxu0 0.0
      %3612 = vmatpush.msra.mxu0 0.0
      %3613 = vmatpush.msra.mxu0 0.0
      %3614 = vmatpush.msra.mxu0 0.0
      %3615 = vmatpush.msra.mxu0 0.0
      %3616 = vmatpush.msra.mxu0 0.0
      %3617 = vmatpush.msra.mxu0 0.0
      %3618 = vmatpush.msra.mxu0 %v3409
      %3619 = vmatmul.f32.gmra.mxu0 %v3389
      %v3620 = vpop.f32.mrf.mxu0
      %v3621 = vadd.f32 0.0, %v3620
      %3622 = vdwg.mxu0
      %3623 = vmatpush.msra.mxu0 0.0
      %3624 = vmatpush.msra.mxu0 0.0
      %3625 = vmatpush.msra.mxu0 0.0
      %3626 = vmatpush.msra.mxu0 0.0
      %3627 = vmatpush.msra.mxu0 0.0
      %3628 = vmatpush.msra.mxu0 0.0
      %3629 = vmatpush.msra.mxu0 0.0
      %3630 = vmatpush.msra.mxu0 0.0
      %3631 = vmatpush.msra.mxu0 0.0
      %3632 = vmatpush.msra.mxu0 0.0
      %3633 = vmatpush.msra.mxu0 0.0
      %3634 = vmatpush.msra.mxu0 0.0
      %3635 = vmatpush.msra.mxu0 0.0
      %3636 = vmatpush.msra.mxu0 0.0
      %3637 = vmatpush.msra.mxu0 0.0
      %3638 = vmatpush.msra.mxu0 %v3411
      %3639 = vmatmul.f32.gmra.mxu0 %v3389
      %v3640 = vpop.f32.mrf.mxu0
      %v3641 = vadd.f32 0.0, %v3640
      %3642 = vdwg.mxu0
      %3643 = vmatpush.msra.mxu0 0.0
      %3644 = vmatpush.msra.mxu0 0.0
      %3645 = vmatpush.msra.mxu0 0.0
      %3646 = vmatpush.msra.mxu0 0.0
      %3647 = vmatpush.msra.mxu0 0.0
      %3648 = vmatpush.msra.mxu0 0.0
      %3649 = vmatpush.msra.mxu0 0.0
      %3650 = vmatpush.msra.mxu0 0.0
      %3651 = vmatpush.msra.mxu0 0.0
      %3652 = vmatpush.msra.mxu0 0.0
      %3653 = vmatpush.msra.mxu0 0.0
      %3654 = vmatpush.msra.mxu0 0.0
      %3655 = vmatpush.msra.mxu0 0.0
      %3656 = vmatpush.msra.mxu0 0.0
      %3657 = vmatpush.msra.mxu0 0.0
      %3658 = vmatpush.msra.mxu0 %v3413
      %3659 = vmatmul.f32.gmra.mxu0 %v3389
      %v3660 = vpop.f32.mrf.mxu0
      %v3661 = vadd.f32 0.0, %v3660
      %3662 = vdwg.mxu0
      %3663 = vmatpush.msra.mxu0 0.0
      %3664 = vmatpush.msra.mxu0 0.0
      %3665 = vmatpush.msra.mxu0 0.0
      %3666 = vmatpush.msra.mxu0 0.0
      %3667 = vmatpush.msra.mxu0 0.0
      %3668 = vmatpush.msra.mxu0 0.0
      %3669 = vmatpush.msra.mxu0 0.0
      %3670 = vmatpush.msra.mxu0 0.0
      %3671 = vmatpush.msra.mxu0 0.0
      %3672 = vmatpush.msra.mxu0 0.0
      %3673 = vmatpush.msra.mxu0 0.0
      %3674 = vmatpush.msra.mxu0 0.0
      %3675 = vmatpush.msra.mxu0 0.0
      %3676 = vmatpush.msra.mxu0 0.0
      %3677 = vmatpush.msra.mxu0 0.0
      %3678 = vmatpush.msra.mxu0 %v3415
      %3679 = vmatmul.f32.gmra.mxu0 %v3389
      %v3680 = vpop.f32.mrf.mxu0
      %v3681 = vadd.f32 0.0, %v3680
      %3682 = vdwg.mxu0
      %3683 = vmatpush.msra.mxu0 0.0
      %3684 = vmatpush.msra.mxu0 0.0
      %3685 = vmatpush.msra.mxu0 0.0
      %3686 = vmatpush.msra.mxu0 0.0
      %3687 = vmatpush.msra.mxu0 0.0
      %3688 = vmatpush.msra.mxu0 0.0
      %3689 = vmatpush.msra.mxu0 0.0
      %3690 = vmatpush.msra.mxu0 0.0
      %3691 = vmatpush.msra.mxu0 0.0
      %3692 = vmatpush.msra.mxu0 0.0
      %3693 = vmatpush.msra.mxu0 0.0
      %3694 = vmatpush.msra.mxu0 0.0
      %3695 = vmatpush.msra.mxu0 0.0
      %3696 = vmatpush.msra.mxu0 0.0
      %3697 = vmatpush.msra.mxu0 0.0
      %3698 = vmatpush.msra.mxu0 %v3417
      %3699 = vmatmul.f32.gmra.mxu0 %v3389
      %v3700 = vpop.f32.mrf.mxu0
      %v3701 = vadd.f32 0.0, %v3700
      %3702 = vdwg.mxu0
      %3703 = vmatpush.msra.mxu0 0.0
      %3704 = vmatpush.msra.mxu0 0.0
      %3705 = vmatpush.msra.mxu0 0.0
      %3706 = vmatpush.msra.mxu0 0.0
      %3707 = vmatpush.msra.mxu0 0.0
      %3708 = vmatpush.msra.mxu0 0.0
      %3709 = vmatpush.msra.mxu0 0.0
      %3710 = vmatpush.msra.mxu0 0.0
      %3711 = vmatpush.msra.mxu0 0.0
      %3712 = vmatpush.msra.mxu0 0.0
      %3713 = vmatpush.msra.mxu0 0.0
      %3714 = vmatpush.msra.mxu0 0.0
      %3715 = vmatpush.msra.mxu0 0.0
      %3716 = vmatpush.msra.mxu0 0.0
      %3717 = vmatpush.msra.mxu0 0.0
      %3718 = vmatpush.msra.mxu0 %v3419
      %3719 = vmatmul.f32.gmra.mxu0 %v3389
      %v3720 = vpop.f32.mrf.mxu0
      %v3721 = vadd.f32 0.0, %v3720
      %3722 = vdwg.mxu0
      %3723 = vmatpush.msra.mxu0 0.0
      %3724 = vmatpush.msra.mxu0 0.0
      %3725 = vmatpush.msra.mxu0 0.0
      %3726 = vmatpush.msra.mxu0 0.0
      %3727 = vmatpush.msra.mxu0 0.0
      %3728 = vmatpush.msra.mxu0 0.0
      %3729 = vmatpush.msra.mxu0 0.0
      %3730 = vmatpush.msra.mxu0 0.0
      %3731 = vmatpush.msra.mxu0 0.0
      %3732 = vmatpush.msra.mxu0 0.0
      %3733 = vmatpush.msra.mxu0 0.0
      %3734 = vmatpush.msra.mxu0 0.0
      %3735 = vmatpush.msra.mxu0 0.0
      %3736 = vmatpush.msra.mxu0 0.0
      %3737 = vmatpush.msra.mxu0 0.0
      %3738 = vmatpush.msra.mxu0 %v3421
      %3739 = vmatmul.f32.gmra.mxu0 %v3389
      %v3740 = vpop.f32.mrf.mxu0
      %v3741 = vadd.f32 0.0, %v3740
      %3742 = vdwg.mxu0
      %v3743 = vadd.f32 %v3273, %v3441
      %v3744 = vadd.f32 %v3274, %v3461
      %v3745 = vadd.f32 %v3275, %v3481
      %v3746 = vadd.f32 %v3276, %v3501
      %v3747 = vadd.f32 %v3277, %v3521
      %v3748 = vadd.f32 %v3278, %v3541
      %v3749 = vadd.f32 %v3279, %v3561
      %v3750 = vadd.f32 %v3280, %v3581
      %v3751 = vadd.f32 %v3281, %v3601
      %v3752 = vadd.f32 %v3282, %v3621
      %v3753 = vadd.f32 %v3283, %v3641
      %v3754 = vadd.f32 %v3284, %v3661
      %v3755 = vadd.f32 %v3285, %v3681
      %v3756 = vadd.f32 %v3286, %v3701
      %v3757 = vadd.f32 %v3287, %v3721
      %v3758 = vadd.f32 %v3288, %v3741
      %v3759 = vld [vmem:[%s197 + $0x8] sm:$0xff]
      %v3760 = vld [vmem:[%s197 + $0x10] sm:$0xff]
      %v3761 = vld [vmem:[%s197 + $0x18] sm:$0xff]
      %v3762 = vld [vmem:[%s197 + $0x20] sm:$0xff]
      %v3763 = vld [vmem:[%s197 + $0x28] sm:$0xff]
      %v3764 = vld [vmem:[%s197 + $0x30] sm:$0xff]
      %v3765 = vld [vmem:[%s197 + $0x38] sm:$0xff]
      %v3766 = vld [vmem:[%s197 + $0x40] sm:$0xff]
      %v3767 = vld [vmem:[%s197 + $0x48] sm:$0xf]
      %s3768 = scalar_lea.vmem %s1, 64
      %v3769 = vld [vmem:[%s3768] sm:$0xff]
      %3779 = vst [vmem:[#allocation1] ss:$2 sm:$0xff] %v3759
      %s3780 = scalar_lea.vmem [#allocation1], 16
      %3781 = vst [vmem:[%s3780] ss:$2 sm:$0xff] %v3760
      %s3782 = scalar_lea.vmem [#allocation1], 32
      %3783 = vst [vmem:[%s3782] ss:$2 sm:$0xff] %v3761
      %s3784 = scalar_lea.vmem [#allocation1], 48
      %3785 = vst [vmem:[%s3784] ss:$2 sm:$0xff] %v3762
      %v3786 = vld.sshfl [vmem:[#allocation1] sm:$0xff pattern:$0x75316420]
      %v3787 = vld.sshfl [vmem:[#allocation1 + $0x8] sm:$0xff pattern:$0x75316420]
      %v3788 = vld.sshfl [vmem:[#allocation1 + $0x10] sm:$0xff pattern:$0x75316420]
      %v3789 = vld.sshfl [vmem:[#allocation1 + $0x18] sm:$0xff pattern:$0x75316420]
      %v3790 = vld.sshfl [vmem:[#allocation1 + $0x20] sm:$0xff pattern:$0x75316420]
      %v3791 = vld.sshfl [vmem:[#allocation1 + $0x28] sm:$0xff pattern:$0x75316420]
      %v3792 = vld.sshfl [vmem:[#allocation1 + $0x30] sm:$0xff pattern:$0x75316420]
      %v3793 = vld.sshfl [vmem:[#allocation1 + $0x38] sm:$0xff pattern:$0x75316420]
      %3794 = vst [vmem:[#allocation1] ss:$2 sm:$0xff] %v3763
      %3795 = vst [vmem:[%s3780] ss:$2 sm:$0xff] %v3764
      %3796 = vst [vmem:[%s3782] ss:$2 sm:$0xff] %v3765
      %3797 = vst [vmem:[%s3784] ss:$2 sm:$0xff] %v3766
      %v3798 = vld.sshfl [vmem:[#allocation1] sm:$0xff pattern:$0x75316420]
      %v3799 = vld.sshfl [vmem:[#allocation1 + $0x8] sm:$0xff pattern:$0x75316420]
      %v3800 = vld.sshfl [vmem:[#allocation1 + $0x10] sm:$0xff pattern:$0x75316420]
      %v3801 = vld.sshfl [vmem:[#allocation1 + $0x18] sm:$0xff pattern:$0x75316420]
      %v3802 = vld.sshfl [vmem:[#allocation1 + $0x20] sm:$0xff pattern:$0x75316420]
      %v3803 = vld.sshfl [vmem:[#allocation1 + $0x28] sm:$0xff pattern:$0x75316420]
      %v3804 = vld.sshfl [vmem:[#allocation1 + $0x30] sm:$0xff pattern:$0x75316420]
      %v3805 = vld.sshfl [vmem:[#allocation1 + $0x38] sm:$0xff pattern:$0x75316420]
      %3806 = vst [vmem:[#allocation1] ss:$2 sm:$0xff] %v3767
      %v3807 = vld.sshfl [vmem:[#allocation1] sm:$0xff pattern:$0x75316420]
      %3808 = vrot.lane.b32.xlu0 %v3786, 126
      %v3809 = vpop.permute.xlu0 %3808
      %3810 = vrot.lane.b32.xlu0 %v3787, 126
      %v3811 = vpop.permute.xlu0 %3810
      %3812 = vrot.lane.b32.xlu0 %v3788, 126
      %v3813 = vpop.permute.xlu0 %3812
      %3814 = vrot.lane.b32.xlu0 %v3789, 126
      %v3815 = vpop.permute.xlu0 %3814
      %3816 = vrot.lane.b32.xlu0 %v3790, 126
      %v3817 = vpop.permute.xlu0 %3816
      %3818 = vrot.lane.b32.xlu0 %v3791, 126
      %v3819 = vpop.permute.xlu0 %3818
      %3820 = vrot.lane.b32.xlu0 %v3792, 126
      %v3821 = vpop.permute.xlu0 %3820
      %3822 = vrot.lane.b32.xlu0 %v3793, 126
      %v3823 = vpop.permute.xlu0 %3822
      %3824 = vrot.lane.b32.xlu0 %v3798, 126
      %v3825 = vpop.permute.xlu0 %3824
      %3826 = vrot.lane.b32.xlu0 %v3799, 126
      %v3827 = vpop.permute.xlu0 %3826
      %3828 = vrot.lane.b32.xlu0 %v3800, 126
      %v3829 = vpop.permute.xlu0 %3828
      %3830 = vrot.lane.b32.xlu0 %v3801, 126
      %v3831 = vpop.permute.xlu0 %3830
      %3832 = vrot.lane.b32.xlu0 %v3802, 126
      %v3833 = vpop.permute.xlu0 %3832
      %3834 = vrot.lane.b32.xlu0 %v3803, 126
      %v3835 = vpop.permute.xlu0 %3834
      %3836 = vrot.lane.b32.xlu0 %v3804, 126
      %v3837 = vpop.permute.xlu0 %3836
      %3838 = vrot.lane.b32.xlu0 %v3805, 126
      %v3839 = vpop.permute.xlu0 %3838
      %3840 = vrot.lane.b32.xlu0 %v3807, 126
      %v3841 = vpop.permute.xlu0 %3840
      %v3842 = vsel %vm1129, %v3809, %v3811
      %v3843 = vsel %vm1129, %v3811, %v3813
      %v3844 = vsel %vm1129, %v3813, %v3815
      %v3845 = vsel %vm1129, %v3815, %v3817
      %v3846 = vsel %vm1129, %v3817, %v3819
      %v3847 = vsel %vm1129, %v3819, %v3821
      %v3848 = vsel %vm1129, %v3821, %v3823
      %v3849 = vsel %vm1129, %v3823, %v3825
      %v3850 = vsel %vm1129, %v3825, %v3827
      %v3851 = vsel %vm1129, %v3827, %v3829
      %v3852 = vsel %vm1129, %v3829, %v3831
      %v3853 = vsel %vm1129, %v3831, %v3833
      %v3854 = vsel %vm1129, %v3833, %v3835
      %v3855 = vsel %vm1129, %v3835, %v3837
      %v3856 = vsel %vm1129, %v3837, %v3839
      %v3857 = vsel %vm1129, %v3839, %v3841
      %v3859 = vsel %vm307, %v3769, 0
      %v3861 = vsel %vm311, %v3842, 0
      %v3863 = vsel %vm311, %v3843, 0
      %v3865 = vsel %vm311, %v3844, 0
      %v3867 = vsel %vm311, %v3845, 0
      %v3869 = vsel %vm311, %v3846, 0
      %v3871 = vsel %vm311, %v3847, 0
      %v3873 = vsel %vm311, %v3848, 0
      %v3875 = vsel %vm311, %v3849, 0
      %v3877 = vsel %vm311, %v3850, 0
      %v3879 = vsel %vm311, %v3851, 0
      %v3881 = vsel %vm311, %v3852, 0
      %v3883 = vsel %vm311, %v3853, 0
      %v3885 = vsel %vm311, %v3854, 0
      %v3887 = vsel %vm311, %v3855, 0
      %v3889 = vsel %vm311, %v3856, 0
      %v3891 = vsel %vm311, %v3857, 0
      %3893 = vmatpush.msra.mxu0 0.0
      %3894 = vmatpush.msra.mxu0 0.0
      %3895 = vmatpush.msra.mxu0 0.0
      %3896 = vmatpush.msra.mxu0 0.0
      %3897 = vmatpush.msra.mxu0 0.0
      %3898 = vmatpush.msra.mxu0 0.0
      %3899 = vmatpush.msra.mxu0 0.0
      %3900 = vmatpush.msra.mxu0 0.0
      %3901 = vmatpush.msra.mxu0 0.0
      %3902 = vmatpush.msra.mxu0 0.0
      %3903 = vmatpush.msra.mxu0 0.0
      %3904 = vmatpush.msra.mxu0 0.0
      %3905 = vmatpush.msra.mxu0 0.0
      %3906 = vmatpush.msra.mxu0 0.0
      %3907 = vmatpush.msra.mxu0 0.0
      %3908 = vmatpush.msra.mxu0 %v3861
      %3909 = vmatmul.f32.gmra.mxu0 %v3859
      %v3910 = vpop.f32.mrf.mxu0
      %v3911 = vadd.f32 0.0, %v3910
      %3912 = vdwg.mxu0
      %3913 = vmatpush.msra.mxu0 0.0
      %3914 = vmatpush.msra.mxu0 0.0
      %3915 = vmatpush.msra.mxu0 0.0
      %3916 = vmatpush.msra.mxu0 0.0
      %3917 = vmatpush.msra.mxu0 0.0
      %3918 = vmatpush.msra.mxu0 0.0
      %3919 = vmatpush.msra.mxu0 0.0
      %3920 = vmatpush.msra.mxu0 0.0
      %3921 = vmatpush.msra.mxu0 0.0
      %3922 = vmatpush.msra.mxu0 0.0
      %3923 = vmatpush.msra.mxu0 0.0
      %3924 = vmatpush.msra.mxu0 0.0
      %3925 = vmatpush.msra.mxu0 0.0
      %3926 = vmatpush.msra.mxu0 0.0
      %3927 = vmatpush.msra.mxu0 0.0
      %3928 = vmatpush.msra.mxu0 %v3863
      %3929 = vmatmul.f32.gmra.mxu0 %v3859
      %v3930 = vpop.f32.mrf.mxu0
      %v3931 = vadd.f32 0.0, %v3930
      %3932 = vdwg.mxu0
      %3933 = vmatpush.msra.mxu0 0.0
      %3934 = vmatpush.msra.mxu0 0.0
      %3935 = vmatpush.msra.mxu0 0.0
      %3936 = vmatpush.msra.mxu0 0.0
      %3937 = vmatpush.msra.mxu0 0.0
      %3938 = vmatpush.msra.mxu0 0.0
      %3939 = vmatpush.msra.mxu0 0.0
      %3940 = vmatpush.msra.mxu0 0.0
      %3941 = vmatpush.msra.mxu0 0.0
      %3942 = vmatpush.msra.mxu0 0.0
      %3943 = vmatpush.msra.mxu0 0.0
      %3944 = vmatpush.msra.mxu0 0.0
      %3945 = vmatpush.msra.mxu0 0.0
      %3946 = vmatpush.msra.mxu0 0.0
      %3947 = vmatpush.msra.mxu0 0.0
      %3948 = vmatpush.msra.mxu0 %v3865
      %3949 = vmatmul.f32.gmra.mxu0 %v3859
      %v3950 = vpop.f32.mrf.mxu0
      %v3951 = vadd.f32 0.0, %v3950
      %3952 = vdwg.mxu0
      %3953 = vmatpush.msra.mxu0 0.0
      %3954 = vmatpush.msra.mxu0 0.0
      %3955 = vmatpush.msra.mxu0 0.0
      %3956 = vmatpush.msra.mxu0 0.0
      %3957 = vmatpush.msra.mxu0 0.0
      %3958 = vmatpush.msra.mxu0 0.0
      %3959 = vmatpush.msra.mxu0 0.0
      %3960 = vmatpush.msra.mxu0 0.0
      %3961 = vmatpush.msra.mxu0 0.0
      %3962 = vmatpush.msra.mxu0 0.0
      %3963 = vmatpush.msra.mxu0 0.0
      %3964 = vmatpush.msra.mxu0 0.0
      %3965 = vmatpush.msra.mxu0 0.0
      %3966 = vmatpush.msra.mxu0 0.0
      %3967 = vmatpush.msra.mxu0 0.0
      %3968 = vmatpush.msra.mxu0 %v3867
      %3969 = vmatmul.f32.gmra.mxu0 %v3859
      %v3970 = vpop.f32.mrf.mxu0
      %v3971 = vadd.f32 0.0, %v3970
      %3972 = vdwg.mxu0
      %3973 = vmatpush.msra.mxu0 0.0
      %3974 = vmatpush.msra.mxu0 0.0
      %3975 = vmatpush.msra.mxu0 0.0
      %3976 = vmatpush.msra.mxu0 0.0
      %3977 = vmatpush.msra.mxu0 0.0
      %3978 = vmatpush.msra.mxu0 0.0
      %3979 = vmatpush.msra.mxu0 0.0
      %3980 = vmatpush.msra.mxu0 0.0
      %3981 = vmatpush.msra.mxu0 0.0
      %3982 = vmatpush.msra.mxu0 0.0
      %3983 = vmatpush.msra.mxu0 0.0
      %3984 = vmatpush.msra.mxu0 0.0
      %3985 = vmatpush.msra.mxu0 0.0
      %3986 = vmatpush.msra.mxu0 0.0
      %3987 = vmatpush.msra.mxu0 0.0
      %3988 = vmatpush.msra.mxu0 %v3869
      %3989 = vmatmul.f32.gmra.mxu0 %v3859
      %v3990 = vpop.f32.mrf.mxu0
      %v3991 = vadd.f32 0.0, %v3990
      %3992 = vdwg.mxu0
      %3993 = vmatpush.msra.mxu0 0.0
      %3994 = vmatpush.msra.mxu0 0.0
      %3995 = vmatpush.msra.mxu0 0.0
      %3996 = vmatpush.msra.mxu0 0.0
      %3997 = vmatpush.msra.mxu0 0.0
      %3998 = vmatpush.msra.mxu0 0.0
      %3999 = vmatpush.msra.mxu0 0.0
      %4000 = vmatpush.msra.mxu0 0.0
      %4001 = vmatpush.msra.mxu0 0.0
      %4002 = vmatpush.msra.mxu0 0.0
      %4003 = vmatpush.msra.mxu0 0.0
      %4004 = vmatpush.msra.mxu0 0.0
      %4005 = vmatpush.msra.mxu0 0.0
      %4006 = vmatpush.msra.mxu0 0.0
      %4007 = vmatpush.msra.mxu0 0.0
      %4008 = vmatpush.msra.mxu0 %v3871
      %4009 = vmatmul.f32.gmra.mxu0 %v3859
      %v4010 = vpop.f32.mrf.mxu0
      %v4011 = vadd.f32 0.0, %v4010
      %4012 = vdwg.mxu0
      %4013 = vmatpush.msra.mxu0 0.0
      %4014 = vmatpush.msra.mxu0 0.0
      %4015 = vmatpush.msra.mxu0 0.0
      %4016 = vmatpush.msra.mxu0 0.0
      %4017 = vmatpush.msra.mxu0 0.0
      %4018 = vmatpush.msra.mxu0 0.0
      %4019 = vmatpush.msra.mxu0 0.0
      %4020 = vmatpush.msra.mxu0 0.0
      %4021 = vmatpush.msra.mxu0 0.0
      %4022 = vmatpush.msra.mxu0 0.0
      %4023 = vmatpush.msra.mxu0 0.0
      %4024 = vmatpush.msra.mxu0 0.0
      %4025 = vmatpush.msra.mxu0 0.0
      %4026 = vmatpush.msra.mxu0 0.0
      %4027 = vmatpush.msra.mxu0 0.0
      %4028 = vmatpush.msra.mxu0 %v3873
      %4029 = vmatmul.f32.gmra.mxu0 %v3859
      %v4030 = vpop.f32.mrf.mxu0
      %v4031 = vadd.f32 0.0, %v4030
      %4032 = vdwg.mxu0
      %4033 = vmatpush.msra.mxu0 0.0
      %4034 = vmatpush.msra.mxu0 0.0
      %4035 = vmatpush.msra.mxu0 0.0
      %4036 = vmatpush.msra.mxu0 0.0
      %4037 = vmatpush.msra.mxu0 0.0
      %4038 = vmatpush.msra.mxu0 0.0
      %4039 = vmatpush.msra.mxu0 0.0
      %4040 = vmatpush.msra.mxu0 0.0
      %4041 = vmatpush.msra.mxu0 0.0
      %4042 = vmatpush.msra.mxu0 0.0
      %4043 = vmatpush.msra.mxu0 0.0
      %4044 = vmatpush.msra.mxu0 0.0
      %4045 = vmatpush.msra.mxu0 0.0
      %4046 = vmatpush.msra.mxu0 0.0
      %4047 = vmatpush.msra.mxu0 0.0
      %4048 = vmatpush.msra.mxu0 %v3875
      %4049 = vmatmul.f32.gmra.mxu0 %v3859
      %v4050 = vpop.f32.mrf.mxu0
      %v4051 = vadd.f32 0.0, %v4050
      %4052 = vdwg.mxu0
      %4053 = vmatpush.msra.mxu0 0.0
      %4054 = vmatpush.msra.mxu0 0.0
      %4055 = vmatpush.msra.mxu0 0.0
      %4056 = vmatpush.msra.mxu0 0.0
      %4057 = vmatpush.msra.mxu0 0.0
      %4058 = vmatpush.msra.mxu0 0.0
      %4059 = vmatpush.msra.mxu0 0.0
      %4060 = vmatpush.msra.mxu0 0.0
      %4061 = vmatpush.msra.mxu0 0.0
      %4062 = vmatpush.msra.mxu0 0.0
      %4063 = vmatpush.msra.mxu0 0.0
      %4064 = vmatpush.msra.mxu0 0.0
      %4065 = vmatpush.msra.mxu0 0.0
      %4066 = vmatpush.msra.mxu0 0.0
      %4067 = vmatpush.msra.mxu0 0.0
      %4068 = vmatpush.msra.mxu0 %v3877
      %4069 = vmatmul.f32.gmra.mxu0 %v3859
      %v4070 = vpop.f32.mrf.mxu0
      %v4071 = vadd.f32 0.0, %v4070
      %4072 = vdwg.mxu0
      %4073 = vmatpush.msra.mxu0 0.0
      %4074 = vmatpush.msra.mxu0 0.0
      %4075 = vmatpush.msra.mxu0 0.0
      %4076 = vmatpush.msra.mxu0 0.0
      %4077 = vmatpush.msra.mxu0 0.0
      %4078 = vmatpush.msra.mxu0 0.0
      %4079 = vmatpush.msra.mxu0 0.0
      %4080 = vmatpush.msra.mxu0 0.0
      %4081 = vmatpush.msra.mxu0 0.0
      %4082 = vmatpush.msra.mxu0 0.0
      %4083 = vmatpush.msra.mxu0 0.0
      %4084 = vmatpush.msra.mxu0 0.0
      %4085 = vmatpush.msra.mxu0 0.0
      %4086 = vmatpush.msra.mxu0 0.0
      %4087 = vmatpush.msra.mxu0 0.0
      %4088 = vmatpush.msra.mxu0 %v3879
      %4089 = vmatmul.f32.gmra.mxu0 %v3859
      %v4090 = vpop.f32.mrf.mxu0
      %v4091 = vadd.f32 0.0, %v4090
      %4092 = vdwg.mxu0
      %4093 = vmatpush.msra.mxu0 0.0
      %4094 = vmatpush.msra.mxu0 0.0
      %4095 = vmatpush.msra.mxu0 0.0
      %4096 = vmatpush.msra.mxu0 0.0
      %4097 = vmatpush.msra.mxu0 0.0
      %4098 = vmatpush.msra.mxu0 0.0
      %4099 = vmatpush.msra.mxu0 0.0
      %4100 = vmatpush.msra.mxu0 0.0
      %4101 = vmatpush.msra.mxu0 0.0
      %4102 = vmatpush.msra.mxu0 0.0
      %4103 = vmatpush.msra.mxu0 0.0
      %4104 = vmatpush.msra.mxu0 0.0
      %4105 = vmatpush.msra.mxu0 0.0
      %4106 = vmatpush.msra.mxu0 0.0
      %4107 = vmatpush.msra.mxu0 0.0
      %4108 = vmatpush.msra.mxu0 %v3881
      %4109 = vmatmul.f32.gmra.mxu0 %v3859
      %v4110 = vpop.f32.mrf.mxu0
      %v4111 = vadd.f32 0.0, %v4110
      %4112 = vdwg.mxu0
      %4113 = vmatpush.msra.mxu0 0.0
      %4114 = vmatpush.msra.mxu0 0.0
      %4115 = vmatpush.msra.mxu0 0.0
      %4116 = vmatpush.msra.mxu0 0.0
      %4117 = vmatpush.msra.mxu0 0.0
      %4118 = vmatpush.msra.mxu0 0.0
      %4119 = vmatpush.msra.mxu0 0.0
      %4120 = vmatpush.msra.mxu0 0.0
      %4121 = vmatpush.msra.mxu0 0.0
      %4122 = vmatpush.msra.mxu0 0.0
      %4123 = vmatpush.msra.mxu0 0.0
      %4124 = vmatpush.msra.mxu0 0.0
      %4125 = vmatpush.msra.mxu0 0.0
      %4126 = vmatpush.msra.mxu0 0.0
      %4127 = vmatpush.msra.mxu0 0.0
      %4128 = vmatpush.msra.mxu0 %v3883
      %4129 = vmatmul.f32.gmra.mxu0 %v3859
      %v4130 = vpop.f32.mrf.mxu0
      %v4131 = vadd.f32 0.0, %v4130
      %4132 = vdwg.mxu0
      %4133 = vmatpush.msra.mxu0 0.0
      %4134 = vmatpush.msra.mxu0 0.0
      %4135 = vmatpush.msra.mxu0 0.0
      %4136 = vmatpush.msra.mxu0 0.0
      %4137 = vmatpush.msra.mxu0 0.0
      %4138 = vmatpush.msra.mxu0 0.0
      %4139 = vmatpush.msra.mxu0 0.0
      %4140 = vmatpush.msra.mxu0 0.0
      %4141 = vmatpush.msra.mxu0 0.0
      %4142 = vmatpush.msra.mxu0 0.0
      %4143 = vmatpush.msra.mxu0 0.0
      %4144 = vmatpush.msra.mxu0 0.0
      %4145 = vmatpush.msra.mxu0 0.0
      %4146 = vmatpush.msra.mxu0 0.0
      %4147 = vmatpush.msra.mxu0 0.0
      %4148 = vmatpush.msra.mxu0 %v3885
      %4149 = vmatmul.f32.gmra.mxu0 %v3859
      %v4150 = vpop.f32.mrf.mxu0
      %v4151 = vadd.f32 0.0, %v4150
      %4152 = vdwg.mxu0
      %4153 = vmatpush.msra.mxu0 0.0
      %4154 = vmatpush.msra.mxu0 0.0
      %4155 = vmatpush.msra.mxu0 0.0
      %4156 = vmatpush.msra.mxu0 0.0
      %4157 = vmatpush.msra.mxu0 0.0
      %4158 = vmatpush.msra.mxu0 0.0
      %4159 = vmatpush.msra.mxu0 0.0
      %4160 = vmatpush.msra.mxu0 0.0
      %4161 = vmatpush.msra.mxu0 0.0
      %4162 = vmatpush.msra.mxu0 0.0
      %4163 = vmatpush.msra.mxu0 0.0
      %4164 = vmatpush.msra.mxu0 0.0
      %4165 = vmatpush.msra.mxu0 0.0
      %4166 = vmatpush.msra.mxu0 0.0
      %4167 = vmatpush.msra.mxu0 0.0
      %4168 = vmatpush.msra.mxu0 %v3887
      %4169 = vmatmul.f32.gmra.mxu0 %v3859
      %v4170 = vpop.f32.mrf.mxu0
      %v4171 = vadd.f32 0.0, %v4170
      %4172 = vdwg.mxu0
      %4173 = vmatpush.msra.mxu0 0.0
      %4174 = vmatpush.msra.mxu0 0.0
      %4175 = vmatpush.msra.mxu0 0.0
      %4176 = vmatpush.msra.mxu0 0.0
      %4177 = vmatpush.msra.mxu0 0.0
      %4178 = vmatpush.msra.mxu0 0.0
      %4179 = vmatpush.msra.mxu0 0.0
      %4180 = vmatpush.msra.mxu0 0.0
      %4181 = vmatpush.msra.mxu0 0.0
      %4182 = vmatpush.msra.mxu0 0.0
      %4183 = vmatpush.msra.mxu0 0.0
      %4184 = vmatpush.msra.mxu0 0.0
      %4185 = vmatpush.msra.mxu0 0.0
      %4186 = vmatpush.msra.mxu0 0.0
      %4187 = vmatpush.msra.mxu0 0.0
      %4188 = vmatpush.msra.mxu0 %v3889
      %4189 = vmatmul.f32.gmra.mxu0 %v3859
      %v4190 = vpop.f32.mrf.mxu0
      %v4191 = vadd.f32 0.0, %v4190
      %4192 = vdwg.mxu0
      %4193 = vmatpush.msra.mxu0 0.0
      %4194 = vmatpush.msra.mxu0 0.0
      %4195 = vmatpush.msra.mxu0 0.0
      %4196 = vmatpush.msra.mxu0 0.0
      %4197 = vmatpush.msra.mxu0 0.0
      %4198 = vmatpush.msra.mxu0 0.0
      %4199 = vmatpush.msra.mxu0 0.0
      %4200 = vmatpush.msra.mxu0 0.0
      %4201 = vmatpush.msra.mxu0 0.0
      %4202 = vmatpush.msra.mxu0 0.0
      %4203 = vmatpush.msra.mxu0 0.0
      %4204 = vmatpush.msra.mxu0 0.0
      %4205 = vmatpush.msra.mxu0 0.0
      %4206 = vmatpush.msra.mxu0 0.0
      %4207 = vmatpush.msra.mxu0 0.0
      %4208 = vmatpush.msra.mxu0 %v3891
      %4209 = vmatmul.f32.gmra.mxu0 %v3859
      %v4210 = vpop.f32.mrf.mxu0
      %v4211 = vadd.f32 0.0, %v4210
      %4212 = vdwg.mxu0
      %v4213 = vadd.f32 %v3743, %v3911
      %v4214 = vadd.f32 %v3744, %v3931
      %v4215 = vadd.f32 %v3745, %v3951
      %v4216 = vadd.f32 %v3746, %v3971
      %v4217 = vadd.f32 %v3747, %v3991
      %v4218 = vadd.f32 %v3748, %v4011
      %v4219 = vadd.f32 %v3749, %v4031
      %v4220 = vadd.f32 %v3750, %v4051
      %v4221 = vadd.f32 %v3751, %v4071
      %v4222 = vadd.f32 %v3752, %v4091
      %v4223 = vadd.f32 %v3753, %v4111
      %v4224 = vadd.f32 %v3754, %v4131
      %v4225 = vadd.f32 %v3755, %v4151
      %v4226 = vadd.f32 %v3756, %v4171
      %v4227 = vadd.f32 %v3757, %v4191
      %v4228 = vadd.f32 %v3758, %v4211
      %v4229 = vlaneseq
      %v4230 = vand.u32 %v4229, 127
      %v4231 = vadd.s32 %v4230, 128
      %v4232 = vadd.s32 %v4230, 256
      %v4233 = vadd.s32 %v4230, 384
      %v4234 = vadd.s32 %v4230, 512
      %v4235 = vadd.s32 %v4230, 640
      %v4236 = vadd.s32 %v4230, 768
      %v4237 = vadd.s32 %v4230, 896
      %v4238 = vadd.s32 %v4230, 1024
      %v4239 = vadd.s32 %v4230, 1152
      %v4240 = vadd.s32 %v4230, 1280
      %v4241 = vadd.s32 %v4230, 1408
      %v4242 = vadd.s32 %v4230, 1536
      %v4243 = vadd.s32 %v4230, 1664
      %v4244 = vadd.s32 %v4230, 1792
      %v4245 = vadd.s32 %v4230, 1920
      %vm4246 = vcmp.lt.s32.totalorder %v4230, 0
      %v4247 = vsub.s32 0, %v4230
      %v4248 = vsel %vm4246, %v4247, %v4230
      %v4249 = vshrl.u32 %v4248, 7
      %v4250 = vand.u32 %v4248, 127
      %v4251 = vsub.s32 0, %v4250
      %v4252 = vsel %vm4246, %v4251, %v4250
      %vm4253 = vcmp.lt.s32.totalorder %v4231, 0
      %v4254 = vsub.s32 0, %v4231
      %v4255 = vsel %vm4253, %v4254, %v4231
      %v4256 = vshrl.u32 %v4255, 7
      %v4257 = vand.u32 %v4255, 127
      %v4258 = vsub.s32 0, %v4257
      %v4259 = vsel %vm4253, %v4258, %v4257
      %vm4260 = vcmp.lt.s32.totalorder %v4232, 0
      %v4261 = vsub.s32 0, %v4232
      %v4262 = vsel %vm4260, %v4261, %v4232
      %v4263 = vshrl.u32 %v4262, 7
      %v4264 = vand.u32 %v4262, 127
      %v4265 = vsub.s32 0, %v4264
      %v4266 = vsel %vm4260, %v4265, %v4264
      %vm4267 = vcmp.lt.s32.totalorder %v4233, 0
      %v4268 = vsub.s32 0, %v4233
      %v4269 = vsel %vm4267, %v4268, %v4233
      %v4270 = vshrl.u32 %v4269, 7
      %v4271 = vand.u32 %v4269, 127
      %v4272 = vsub.s32 0, %v4271
      %v4273 = vsel %vm4267, %v4272, %v4271
      %vm4274 = vcmp.lt.s32.totalorder %v4234, 0
      %v4275 = vsub.s32 0, %v4234
      %v4276 = vsel %vm4274, %v4275, %v4234
      %v4277 = vshrl.u32 %v4276, 7
      %v4278 = vand.u32 %v4276, 127
      %v4279 = vsub.s32 0, %v4278
      %v4280 = vsel %vm4274, %v4279, %v4278
      %vm4281 = vcmp.lt.s32.totalorder %v4235, 0
      %v4282 = vsub.s32 0, %v4235
      %v4283 = vsel %vm4281, %v4282, %v4235
      %v4284 = vshrl.u32 %v4283, 7
      %v4285 = vand.u32 %v4283, 127
      %v4286 = vsub.s32 0, %v4285
      %v4287 = vsel %vm4281, %v4286, %v4285
      %vm4288 = vcmp.lt.s32.totalorder %v4236, 0
      %v4289 = vsub.s32 0, %v4236
      %v4290 = vsel %vm4288, %v4289, %v4236
      %v4291 = vshrl.u32 %v4290, 7
      %v4292 = vand.u32 %v4290, 127
      %v4293 = vsub.s32 0, %v4292
      %v4294 = vsel %vm4288, %v4293, %v4292
      %vm4295 = vcmp.lt.s32.totalorder %v4237, 0
      %v4296 = vsub.s32 0, %v4237
      %v4297 = vsel %vm4295, %v4296, %v4237
      %v4298 = vshrl.u32 %v4297, 7
      %v4299 = vand.u32 %v4297, 127
      %v4300 = vsub.s32 0, %v4299
      %v4301 = vsel %vm4295, %v4300, %v4299
      %vm4302 = vcmp.lt.s32.totalorder %v4238, 0
      %v4303 = vsub.s32 0, %v4238
      %v4304 = vsel %vm4302, %v4303, %v4238
      %v4305 = vshrl.u32 %v4304, 7
      %v4306 = vand.u32 %v4304, 127
      %v4307 = vsub.s32 0, %v4306
      %v4308 = vsel %vm4302, %v4307, %v4306
      %vm4309 = vcmp.lt.s32.totalorder %v4239, 0
      %v4310 = vsub.s32 0, %v4239
      %v4311 = vsel %vm4309, %v4310, %v4239
      %v4312 = vshrl.u32 %v4311, 7
      %v4313 = vand.u32 %v4311, 127
      %v4314 = vsub.s32 0, %v4313
      %v4315 = vsel %vm4309, %v4314, %v4313
      %vm4316 = vcmp.lt.s32.totalorder %v4240, 0
      %v4317 = vsub.s32 0, %v4240
      %v4318 = vsel %vm4316, %v4317, %v4240
      %v4319 = vshrl.u32 %v4318, 7
      %v4320 = vand.u32 %v4318, 127
      %v4321 = vsub.s32 0, %v4320
      %v4322 = vsel %vm4316, %v4321, %v4320
      %vm4323 = vcmp.lt.s32.totalorder %v4241, 0
      %v4324 = vsub.s32 0, %v4241
      %v4325 = vsel %vm4323, %v4324, %v4241
      %v4326 = vshrl.u32 %v4325, 7
      %v4327 = vand.u32 %v4325, 127
      %v4328 = vsub.s32 0, %v4327
      %v4329 = vsel %vm4323, %v4328, %v4327
      %vm4330 = vcmp.lt.s32.totalorder %v4242, 0
      %v4331 = vsub.s32 0, %v4242
      %v4332 = vsel %vm4330, %v4331, %v4242
      %v4333 = vshrl.u32 %v4332, 7
      %v4334 = vand.u32 %v4332, 127
      %v4335 = vsub.s32 0, %v4334
      %v4336 = vsel %vm4330, %v4335, %v4334
      %vm4337 = vcmp.lt.s32.totalorder %v4243, 0
      %v4338 = vsub.s32 0, %v4243
      %v4339 = vsel %vm4337, %v4338, %v4243
      %v4340 = vshrl.u32 %v4339, 7
      %v4341 = vand.u32 %v4339, 127
      %v4342 = vsub.s32 0, %v4341
      %v4343 = vsel %vm4337, %v4342, %v4341
      %vm4344 = vcmp.lt.s32.totalorder %v4244, 0
      %v4345 = vsub.s32 0, %v4244
      %v4346 = vsel %vm4344, %v4345, %v4244
      %v4347 = vshrl.u32 %v4346, 7
      %v4348 = vand.u32 %v4346, 127
      %v4349 = vsub.s32 0, %v4348
      %v4350 = vsel %vm4344, %v4349, %v4348
      %vm4351 = vcmp.lt.s32.totalorder %v4245, 0
      %v4352 = vsub.s32 0, %v4245
      %v4353 = vsel %vm4351, %v4352, %v4245
      %v4354 = vshrl.u32 %v4353, 7
      %v4355 = vand.u32 %v4353, 127
      %v4356 = vsub.s32 0, %v4355
      %v4357 = vsel %vm4351, %v4356, %v4355
      %vm4358 = vcmp.ne.s32.totalorder %v4252, 0
      %vm4359 = vcmp.ne.s32.totalorder %v4259, 0
      %vm4360 = vcmp.ne.s32.totalorder %v4266, 0
      %vm4361 = vcmp.ne.s32.totalorder %v4273, 0
      %vm4362 = vcmp.ne.s32.totalorder %v4280, 0
      %vm4363 = vcmp.ne.s32.totalorder %v4287, 0
      %vm4364 = vcmp.ne.s32.totalorder %v4294, 0
      %vm4365 = vcmp.ne.s32.totalorder %v4301, 0
      %vm4366 = vcmp.ne.s32.totalorder %v4308, 0
      %vm4367 = vcmp.ne.s32.totalorder %v4315, 0
      %vm4368 = vcmp.ne.s32.totalorder %v4322, 0
      %vm4369 = vcmp.ne.s32.totalorder %v4329, 0
      %vm4370 = vcmp.ne.s32.totalorder %v4336, 0
      %vm4371 = vcmp.ne.s32.totalorder %v4343, 0
      %vm4372 = vcmp.ne.s32.totalorder %v4350, 0
      %vm4373 = vcmp.ne.s32.totalorder %v4357, 0
      %vm4374 = vcmp.lt.s32.totalorder %v4252, 0
      %vm4375 = vcmp.lt.s32.totalorder %v4259, 0
      %vm4376 = vcmp.lt.s32.totalorder %v4266, 0
      %vm4377 = vcmp.lt.s32.totalorder %v4273, 0
      %vm4378 = vcmp.lt.s32.totalorder %v4280, 0
      %vm4379 = vcmp.lt.s32.totalorder %v4287, 0
      %vm4380 = vcmp.lt.s32.totalorder %v4294, 0
      %vm4381 = vcmp.lt.s32.totalorder %v4301, 0
      %vm4382 = vcmp.lt.s32.totalorder %v4308, 0
      %vm4383 = vcmp.lt.s32.totalorder %v4315, 0
      %vm4384 = vcmp.lt.s32.totalorder %v4322, 0
      %vm4385 = vcmp.lt.s32.totalorder %v4329, 0
      %vm4386 = vcmp.lt.s32.totalorder %v4336, 0
      %vm4387 = vcmp.lt.s32.totalorder %v4343, 0
      %vm4388 = vcmp.lt.s32.totalorder %v4350, 0
      %vm4389 = vcmp.lt.s32.totalorder %v4357, 0
      %vm4390 = vmand %vm4374, %vm4358
      %vm4391 = vmand %vm4375, %vm4359
      %vm4392 = vmand %vm4376, %vm4360
      %vm4393 = vmand %vm4377, %vm4361
      %vm4394 = vmand %vm4378, %vm4362
      %vm4395 = vmand %vm4379, %vm4363
      %vm4396 = vmand %vm4380, %vm4364
      %vm4397 = vmand %vm4381, %vm4365
      %vm4398 = vmand %vm4382, %vm4366
      %vm4399 = vmand %vm4383, %vm4367
      %vm4400 = vmand %vm4384, %vm4368
      %vm4401 = vmand %vm4385, %vm4369
      %vm4402 = vmand %vm4386, %vm4370
      %vm4403 = vmand %vm4387, %vm4371
      %vm4404 = vmand %vm4388, %vm4372
      %vm4405 = vmand %vm4389, %vm4373
      %v4406 = vadd.s32 %v4252, 128
      %v4407 = vadd.s32 %v4259, 128
      %v4408 = vadd.s32 %v4266, 128
      %v4409 = vadd.s32 %v4273, 128
      %v4410 = vadd.s32 %v4280, 128
      %v4411 = vadd.s32 %v4287, 128
      %v4412 = vadd.s32 %v4294, 128
      %v4413 = vadd.s32 %v4301, 128
      %v4414 = vadd.s32 %v4308, 128
      %v4415 = vadd.s32 %v4315, 128
      %v4416 = vadd.s32 %v4322, 128
      %v4417 = vadd.s32 %v4329, 128
      %v4418 = vadd.s32 %v4336, 128
      %v4419 = vadd.s32 %v4343, 128
      %v4420 = vadd.s32 %v4350, 128
      %v4421 = vadd.s32 %v4357, 128
      %v4422 = vsel %vm4390, %v4406, %v4252
      %v4423 = vsel %vm4391, %v4407, %v4259
      %v4424 = vsel %vm4392, %v4408, %v4266
      %v4425 = vsel %vm4393, %v4409, %v4273
      %v4426 = vsel %vm4394, %v4410, %v4280
      %v4427 = vsel %vm4395, %v4411, %v4287
      %v4428 = vsel %vm4396, %v4412, %v4294
      %v4429 = vsel %vm4397, %v4413, %v4301
      %v4430 = vsel %vm4398, %v4414, %v4308
      %v4431 = vsel %vm4399, %v4415, %v4315
      %v4432 = vsel %vm4400, %v4416, %v4322
      %v4433 = vsel %vm4401, %v4417, %v4329
      %v4434 = vsel %vm4402, %v4418, %v4336
      %v4435 = vsel %vm4403, %v4419, %v4343
      %v4436 = vsel %vm4404, %v4420, %v4350
      %v4437 = vsel %vm4405, %v4421, %v4357
      %vm4438 = vcmp.lt.s32.totalorder %v4422, 16
      %vm4439 = vcmp.lt.s32.totalorder %v4423, 16
      %vm4440 = vcmp.lt.s32.totalorder %v4424, 16
      %vm4441 = vcmp.lt.s32.totalorder %v4425, 16
      %vm4442 = vcmp.lt.s32.totalorder %v4426, 16
      %vm4443 = vcmp.lt.s32.totalorder %v4427, 16
      %vm4444 = vcmp.lt.s32.totalorder %v4428, 16
      %vm4445 = vcmp.lt.s32.totalorder %v4429, 16
      %vm4446 = vcmp.lt.s32.totalorder %v4430, 16
      %vm4447 = vcmp.lt.s32.totalorder %v4431, 16
      %vm4448 = vcmp.lt.s32.totalorder %v4432, 16
      %vm4449 = vcmp.lt.s32.totalorder %v4433, 16
      %vm4450 = vcmp.lt.s32.totalorder %v4434, 16
      %vm4451 = vcmp.lt.s32.totalorder %v4435, 16
      %vm4452 = vcmp.lt.s32.totalorder %v4436, 16
      %vm4453 = vcmp.lt.s32.totalorder %v4437, 16
      %v4454 = vsel %vm4438, %v4213, 0.0
      %v4455 = vsel %vm4439, %v4214, 0.0
      %v4456 = vsel %vm4440, %v4215, 0.0
      %v4457 = vsel %vm4441, %v4216, 0.0
      %v4458 = vsel %vm4442, %v4217, 0.0
      %v4459 = vsel %vm4443, %v4218, 0.0
      %v4460 = vsel %vm4444, %v4219, 0.0
      %v4461 = vsel %vm4445, %v4220, 0.0
      %v4462 = vsel %vm4446, %v4221, 0.0
      %v4463 = vsel %vm4447, %v4222, 0.0
      %v4464 = vsel %vm4448, %v4223, 0.0
      %v4465 = vsel %vm4449, %v4224, 0.0
      %v4466 = vsel %vm4450, %v4225, 0.0
      %v4467 = vsel %vm4451, %v4226, 0.0
      %v4468 = vsel %vm4452, %v4227, 0.0
      %v4469 = vsel %vm4453, %v4228, 0.0
      %p4470 = scmp.eq.s32.totalorder %s20, 0
      // Predicated region
      $region29: #{conv_block_forward.2} parent=27 // pred_check
        %p4471 = pneg %p4470
      $region30: #{conv_block_forward.2} parent=27 // pred_check_branch
        %4473 = sbr.rel (%p4471) target = $region32
      $region31: #{conv_block_forward.2} parent=27 // pred_region
        %vm4474 = vcmask 7168
        %4475 = vst.msk [vmem:[%s201] sm:$0xff] %vm4474, 0.0
        %4476 = vst.msk [vmem:[%s205] sm:$0xff] %vm4474, 0.0
      $region32: #{conv_block_forward.2} parent=27 // pred_fallthru
        _
      %v4477 = vld [vmem:[%s201] sm:$0xff]
      %v4478 = vadd.f32 %v4454, %v4455
      %v4479 = vadd.f32 %v4478, %v4456
      %v4480 = vadd.f32 %v4479, %v4457
      %v4481 = vadd.f32 %v4480, %v4458
      %v4482 = vadd.f32 %v4481, %v4459
      %v4483 = vadd.f32 %v4482, %v4460
      %v4484 = vadd.f32 %v4483, %v4461
      %v4485 = vadd.f32 %v4484, %v4462
      %v4486 = vadd.f32 %v4485, %v4463
      %v4487 = vadd.f32 %v4486, %v4464
      %v4488 = vadd.f32 %v4487, %v4465
      %v4489 = vadd.f32 %v4488, %v4466
      %v4490 = vadd.f32 %v4489, %v4467
      %v4491 = vadd.f32 %v4490, %v4468
      %v4492 = vadd.f32 %v4491, %v4469
      %4493 = vadd.xlane.f32.xlu0 %v4492
      %v4494 = vpop.xlane.xlu0 %4493
      %v4495 = vadd.f32 %v4477, %v4494
      %vm4496 = vcmask 7168
      %4497 = vst.msk [vmem:[%s201] sm:$0xff] %vm4496, %v4495
      %v4498 = vld [vmem:[%s205] sm:$0xff]
      %v4499 = vmul.f32 %v4454, %v4454
      %v4500 = vmul.f32 %v4455, %v4455
      %v4501 = vmul.f32 %v4456, %v4456
      %v4502 = vmul.f32 %v4457, %v4457
      %v4503 = vmul.f32 %v4458, %v4458
      %v4504 = vmul.f32 %v4459, %v4459
      %v4505 = vmul.f32 %v4460, %v4460
      %v4506 = vmul.f32 %v4461, %v4461
      %v4507 = vmul.f32 %v4462, %v4462
      %v4508 = vmul.f32 %v4463, %v4463
      %v4509 = vmul.f32 %v4464, %v4464
      %v4510 = vmul.f32 %v4465, %v4465
      %v4511 = vmul.f32 %v4466, %v4466
      %v4512 = vmul.f32 %v4467, %v4467
      %v4513 = vmul.f32 %v4468, %v4468
      %v4514 = vmul.f32 %v4469, %v4469
      %v4515 = vadd.f32 %v4499, %v4500
      %v4516 = vadd.f32 %v4515, %v4501
      %v4517 = vadd.f32 %v4516, %v4502
      %v4518 = vadd.f32 %v4517, %v4503
      %v4519 = vadd.f32 %v4518, %v4504
      %v4520 = vadd.f32 %v4519, %v4505
      %v4521 = vadd.f32 %v4520, %v4506
      %v4522 = vadd.f32 %v4521, %v4507
      %v4523 = vadd.f32 %v4522, %v4508
      %v4524 = vadd.f32 %v4523, %v4509
      %v4525 = vadd.f32 %v4524, %v4510
      %v4526 = vadd.f32 %v4525, %v4511
      %v4527 = vadd.f32 %v4526, %v4512
      %v4528 = vadd.f32 %v4527, %v4513
      %v4529 = vadd.f32 %v4528, %v4514
      %4530 = vadd.xlane.f32.xlu0 %v4529
      %v4531 = vpop.xlane.xlu0 %4530
      %v4532 = vadd.f32 %v4498, %v4531
      %4533 = vst.msk [vmem:[%s205] sm:$0xff] %vm4496, %v4532
      %p4534 = scmp.lt.s32.totalorder %s19, 1
      %s4535 = scalar_select %p4534, %s19, 1
      %s4536 = smul.addr %s4535, 8
      %s4537 = scalar_lea.vmem %s2, %s4536
      %p4538 = scmp.lt.s32.totalorder %s19, 1
      %s4539 = scalar_select %p4538, %s19, 1
      %s4540 = smul.addr %s4539, 8
      %s4541 = scalar_lea.vmem %s3, %s4540
      // Predicated region
      $region33: #{conv_block_forward.2} parent=27 // pred_check
        %p4542 = pneg %p94
      $region34: #{conv_block_forward.2} parent=27 // pred_check_branch
        %4544 = sbr.rel (%p4542) target = $region36
      $region35: #{conv_block_forward.2} parent=27 // pred_region
        _
      $region36: #{conv_block_forward.2} parent=27 // pred_fallthru
        _
      // Predicated region
      $region37: #{conv_block_forward.2} parent=27 // pred_check
        %p4545 = pneg %p120
      $region38: #{conv_block_forward.2} parent=27 // pred_check_branch
        %4547 = sbr.rel (%p4545) target = $region40
      $region39: #{conv_block_forward.2} parent=27 // pred_region
        _
      $region40: #{conv_block_forward.2} parent=27 // pred_fallthru
        _
    $region28: #{conv_block_forward.2} parent=5 // pred_fallthru
      _
    %p4548 = scmp.le.s32.totalorder 2, %s10
    // Predicated region
    $region41: #{conv_block_forward.2} parent=5 // pred_check
      %p4549 = pneg %p4548
    $region42: #{conv_block_forward.2} parent=5 // pred_check_branch
      %4551 = sbr.rel (%p4549) target = $region44
    $region43: #{conv_block_forward.2} parent=5 // pred_region
      %s4552 = ssub.s32 %s10, 2
      // Predicated region
      $region45: #{conv_block_forward.2} parent=43 // pred_check
        %p4553 = pneg %p100
      $region46: #{conv_block_forward.2} parent=43 // pred_check_branch
        %4555 = sbr.rel (%p4553) target = $region48
      $region47: #{conv_block_forward.2} parent=43 // pred_region
        %p4556 = scmp.lt.s32.totalorder %s21, 1
        %s4557 = scalar_select %p4556, %s21, 1
        %s4558 = smul.addr %s4557, 8
        %s4559 = scalar_lea.vmem %s2, %s4558
      $region48: #{conv_block_forward.2} parent=43 // pred_fallthru
        _
      // Predicated region
      $region49: #{conv_block_forward.2} parent=43 // pred_check
        %p4560 = pneg %p126
      $region50: #{conv_block_forward.2} parent=43 // pred_check_branch
        %4562 = sbr.rel (%p4560) target = $region52
      $region51: #{conv_block_forward.2} parent=43 // pred_region
        %p4563 = scmp.lt.s32.totalorder %s21, 1
        %s4564 = scalar_select %p4563, %s21, 1
        %s4565 = smul.addr %s4564, 8
        %s4566 = scalar_lea.vmem %s3, %s4565
      $region52: #{conv_block_forward.2} parent=43 // pred_fallthru
        _
    $region44: #{conv_block_forward.2} parent=5 // pred_fallthru
      _
  $region6: #{conv_block_forward.2} parent=0 // loop_footer
    %s14 = sadd.s32 1, %s10
  $region7: #{conv_block_forward.2} parent=0 // loop_footer_branch
    %9 = sbr.rel target = $region3
  $region8: #{conv_block_forward.2} parent=0 // loop_exit
    _

// kernel: conv_block_forward.3
$region0: #{conv_block_forward.3}
  #allocation0 [shape = 'u32[]', space=smem, size = 0x4, offset = 0x4, fixed_abs, tag = 'smem constant byte address 0x4 - core index']
  #allocation1 [shape = 'u32[72,128]{1,0:T(1,128)}', space=vmem, size = 0x9000, scoped, tag = 'internal scratch']
  %s0 = inlined_call_operand.vmem [shape: f32[2,1,4,2432], index: 0, kind: input, shape index: {}]
  %s1 = inlined_call_operand.vmem [shape: f32[9,8,4], index: 1, kind: input, shape index: {}]
  %s2 = inlined_call_operand.vmem [shape: f32[8,1], index: 2, kind: input, shape index: {}]
  %s3 = inlined_call_operand.vmem [shape: f32[8,1], index: 3, kind: input, shape index: {}]
  %s4 = inlined_call_operand.vmem [shape: f32[2,8,2048], index: 4, kind: output, shape index: {}]
  %s5 = sld [smem:[#allocation0]]
  $region49: #{conv_block_forward.3} parent=0
    _
  %s7 = ssub.s32 1, %s5
  %s8 = scalar_select 0, %s7, %s5
  loop: start=0, step=1, limit=4
  $region2: #{conv_block_forward.3} parent=0 // loop_pre_header
    _
  $region3: #{conv_block_forward.3} parent=0 // loop_header
    %s10 = sphi 0, %s14
    %p11 = scmp.ge.s32.totalorder %s10, 4
    %s17 = sphi 0, %s29
    %s18 = sphi 0, %s25
    %s19 = sphi 0, %s17
    %s20 = sphi 0, %s18
    %s21 = sphi 0, %s19
    %s22 = sphi 0, %s20
    %s34 = sphi 0, %s36
    %s37 = sphi 0, %s34
    %s38 = sphi 0, %s37
    %s54 = sphi 0, %s38
    %s58 = sphi 0, %s58
    %s60 = sphi 0, %s58
    %s61 = sphi 0, %s60
    %s75 = sphi 0, %s61
    %s79 = sphi 0, %s79
    %s81 = sphi 0, %s79
    %s82 = sphi 0, %s81
    %s96 = sphi 0, %s82
    %s100 = sphi 0, %s100
    %s102 = sphi 0, %s100
    %s103 = sphi 0, %s102
    %s117 = sphi 0, %s103
    %s125 = sphi 0, %s127
    %s128 = sphi 0, %s125
    %s129 = sphi 0, %s128
    %s145 = sphi 0, %s129
  $region4: #{conv_block_forward.3} parent=0 // loop_header_branch
    %13 = sbr.rel (%p11) target = $region8
  $region5: #{conv_block_forward.3} parent=0 // loop_body
    %s15 = ssub.s32 %s10, 1
    %s16 = ssub.s32 %s10, 2
    %s23 = sadd.s32 1, %s18
    %p24 = scmp.ge.s32.totalorder %s23, 1
    %s25 = scalar_select %p24, 0, %s23
    %s26 = sadd.s32 1, %s17
    %s27 = scalar_select %p24, %s26, %s17
    %p28 = scmp.ge.s32.totalorder %s27, 2
    %s29 = scalar_select %p28, 0, %s27
    %s30 = ssub.s32 %s17, %s29
    %s31 = ssub.s32 %s18, %s25
    %s32 = sor.u32 %s30, %s31
    %p33 = scmp.eq.s32.totalorder %s32, 0
    %s35 = sadd.s32 %s34, 1
    %s36 = scalar_select %p33, %s34, %s35
    %p39 = pneg %p33
    %p40 = scmp.eq.s32.totalorder %s10, 1
    %p41 = por %p39, %p40
    %p42 = scmp.ne.s32.totalorder %s34, %s37
    %p43 = scmp.eq.s32.totalorder %s10, 0
    %p44 = por %p42, %p43
    %p45 = scmp.ne.s32.totalorder %s34, %s37
    %p46 = scmp.eq.s32.totalorder %s15, 1
    %p47 = por %p45, %p46
    %p48 = scmp.ne.s32.totalorder %s37, %s38
    %p49 = scmp.eq.s32.totalorder %s15, 0
    %p50 = por %p48, %p49
    %p51 = scmp.ne.s32.totalorder %s37, %s38
    %p52 = scmp.eq.s32.totalorder %s16, 1
    %p53 = por %p51, %p52
    %p55 = scmp.ne.s32.totalorder %s38, %s54
    %p56 = scmp.eq.s32.totalorder %s16, 0
    %p57 = por %p55, %p56
    %s59 = sadd.s32 %s58, 1
    %p62 = scmp.eq.s32.totalorder %s10, 1
    %p63 = scmp.ne.s32.totalorder %s58, %s60
    %p64 = scmp.eq.s32.totalorder %s10, 0
    %p65 = por %p63, %p64
    %p66 = scmp.ne.s32.totalorder %s58, %s60
    %p67 = scmp.eq.s32.totalorder %s15, 1
    %p68 = por %p66, %p67
    %p69 = scmp.ne.s32.totalorder %s60, %s61
    %p70 = scmp.eq.s32.totalorder %s15, 0
    %p71 = por %p69, %p70
    %p72 = scmp.ne.s32.totalorder %s60, %s61
    %p73 = scmp.eq.s32.totalorder %s16, 1
    %p74 = por %p72, %p73
    %p76 = scmp.ne.s32.totalorder %s61, %s75
    %p77 = scmp.eq.s32.totalorder %s16, 0
    %p78 = por %p76, %p77
    %s80 = sadd.s32 %s79, 1
    %p83 = scmp.eq.s32.totalorder %s10, 1
    %p84 = scmp.ne.s32.totalorder %s79, %s81
    %p85 = scmp.eq.s32.totalorder %s10, 0
    %p86 = por %p84, %p85
    %p87 = scmp.ne.s32.totalorder %s79, %s81
    %p88 = scmp.eq.s32.totalorder %s15, 1
    %p89 = por %p87, %p88
    %p90 = scmp.ne.s32.totalorder %s81, %s82
    %p91 = scmp.eq.s32.totalorder %s15, 0
    %p92 = por %p90, %p91
    %p93 = scmp.ne.s32.totalorder %s81, %s82
    %p94 = scmp.eq.s32.totalorder %s16, 1
    %p95 = por %p93, %p94
    %p97 = scmp.ne.s32.totalorder %s82, %s96
    %p98 = scmp.eq.s32.totalorder %s16, 0
    %p99 = por %p97, %p98
    %s101 = sadd.s32 %s100, 1
    %p104 = scmp.eq.s32.totalorder %s10, 1
    %p105 = scmp.ne.s32.totalorder %s100, %s102
    %p106 = scmp.eq.s32.totalorder %s10, 0
    %p107 = por %p105, %p106
    %p108 = scmp.ne.s32.totalorder %s100, %s102
    %p109 = scmp.eq.s32.totalorder %s15, 1
    %p110 = por %p108, %p109
    %p111 = scmp.ne.s32.totalorder %s102, %s103
    %p112 = scmp.eq.s32.totalorder %s15, 0
    %p113 = por %p111, %p112
    %p114 = scmp.ne.s32.totalorder %s102, %s103
    %p115 = scmp.eq.s32.totalorder %s16, 1
    %p116 = por %p114, %p115
    %p118 = scmp.ne.s32.totalorder %s103, %s117
    %p119 = scmp.eq.s32.totalorder %s16, 0
    %p120 = por %p118, %p119
    %s121 = ssub.s32 %s17, %s29
    %s122 = ssub.s32 %s18, %s25
    %s123 = sor.u32 %s121, %s122
    %p124 = scmp.eq.s32.totalorder %s123, 0
    %s126 = sadd.s32 %s125, 1
    %s127 = scalar_select %p124, %s125, %s126
    %p130 = pneg %p124
    %p131 = scmp.eq.s32.totalorder %s10, 1
    %p132 = por %p130, %p131
    %p133 = scmp.ne.s32.totalorder %s125, %s128
    %p134 = scmp.eq.s32.totalorder %s10, 0
    %p135 = por %p133, %p134
    %p136 = scmp.ne.s32.totalorder %s125, %s128
    %p137 = scmp.eq.s32.totalorder %s15, 1
    %p138 = por %p136, %p137
    %p139 = scmp.ne.s32.totalorder %s128, %s129
    %p140 = scmp.eq.s32.totalorder %s15, 0
    %p141 = por %p139, %p140
    %p142 = scmp.ne.s32.totalorder %s128, %s129
    %p143 = scmp.eq.s32.totalorder %s16, 1
    %p144 = por %p142, %p143
    %p146 = scmp.ne.s32.totalorder %s129, %s145
    %p147 = scmp.eq.s32.totalorder %s16, 0
    %p148 = por %p146, %p147
    %p149 = scmp.le.s32.totalorder 1, %s10
    %p150 = scmp.lt.s32.totalorder %s10, 3
    %p151 = pnand %p149, %p150
    %p152 = pneg %p151
    // Predicated region
    $region9: #{conv_block_forward.3} parent=5 // pred_check
      _
    $region10: #{conv_block_forward.3} parent=5 // pred_check_branch
      %154 = sbr.rel (%p151) target = $region12
    $region11: #{conv_block_forward.3} parent=5 // pred_region
      %s155 = ssub.s32 %s10, 1
      // Predicated region
      $region13: #{conv_block_forward.3} parent=11 // pred_check
        %p156 = pneg %p71
      $region14: #{conv_block_forward.3} parent=11 // pred_check_branch
        %158 = sbr.rel (%p156) target = $region16
      $region15: #{conv_block_forward.3} parent=11 // pred_region
        _
      $region16: #{conv_block_forward.3} parent=11 // pred_fallthru
        _
      // Predicated region
      $region17: #{conv_block_forward.3} parent=11 // pred_check
        %p159 = pneg %p92
      $region18: #{conv_block_forward.3} parent=11 // pred_check_branch
        %161 = sbr.rel (%p159) target = $region20
      $region19: #{conv_block_forward.3} parent=11 // pred_region
        _
      $region20: #{conv_block_forward.3} parent=11 // pred_fallthru
        _
      // Predicated region
      $region21: #{conv_block_forward.3} parent=11 // pred_check
        %p162 = pneg %p113
      $region22: #{conv_block_forward.3} parent=11 // pred_check_branch
        %164 = sbr.rel (%p162) target = $region24
      $region23: #{conv_block_forward.3} parent=11 // pred_region
        _
      $region24: #{conv_block_forward.3} parent=11 // pred_fallthru
        _
    $region12: #{conv_block_forward.3} parent=5 // pred_fallthru
      _
    %p165 = scmp.lt.s32.totalorder %s10, 2
    // Predicated region
    $region25: #{conv_block_forward.3} parent=5 // pred_check
      %p166 = pneg %p165
    $region26: #{conv_block_forward.3} parent=5 // pred_check_branch
      %168 = sbr.rel (%p166) target = $region28
    $region27: #{conv_block_forward.3} parent=5 // pred_region
      // Predicated region
      $region29: #{conv_block_forward.3} parent=27 // pred_check
        %p169 = pneg %p44
      $region30: #{conv_block_forward.3} parent=27 // pred_check_branch
        %171 = sbr.rel (%p169) target = $region32
      $region31: #{conv_block_forward.3} parent=27 // pred_region
        %p172 = scmp.lt.s32.totalorder %s17, 1
        %s173 = scalar_select %p172, %s17, 1
        %p174 = scmp.lt.s32.totalorder %s18, 0
        %s175 = scalar_select %p174, %s18, 0
        %s176 = smul.addr %s175, 19
        %s177 = smul.addr %s173, 19
        %s178 = sadd.s32 %s176, %s177
        %s179 = smul.addr %s178, 4
        %s180 = scalar_lea.vmem %s0, %s179
      $region32: #{conv_block_forward.3} parent=27 // pred_fallthru
        _
    $region28: #{conv_block_forward.3} parent=5 // pred_fallthru
      _
    %p181 = scmp.le.s32.totalorder 1, %s10
    %p182 = scmp.lt.s32.totalorder %s10, 3
    %p183 = pnand %p181, %p182
    %p184 = pneg %p183
    // Predicated region
    $region33: #{conv_block_forward.3} parent=5 // pred_check
      _
    $region34: #{conv_block_forward.3} parent=5 // pred_check_branch
      %186 = sbr.rel (%p183) target = $region36
    $region35: #{conv_block_forward.3} parent=5 // pred_region
      %s187 = ssub.s32 %s10, 1
      %p188 = scmp.lt.s32.totalorder %s19, 1
      %s189 = scalar_select %p188, %s19, 1
      %p190 = scmp.lt.s32.totalorder %s20, 0
      %s191 = scalar_select %p190, %s20, 0
      %s192 = smul.addr %s191, 19
      %s193 = smul.addr %s189, 19
      %s194 = sadd.s32 %s192, %s193
      %s195 = smul.addr %s194, 4
      %s196 = scalar_lea.vmem %s0, %s195
      %p197 = pneg %p50
      %p198 = pneg %p47
      %p199 = pneg %p71
      %p200 = pneg %p68
      %p201 = pneg %p92
      %p202 = pneg %p89
      %p203 = pneg %p113
      %p204 = pneg %p110
      %p205 = pneg %p141
      %p206 = pneg %p138
      %s207 = smul.u32 16, %s20
      %p208 = scmp.lt.s32.totalorder %s19, 1
      %s209 = scalar_select %p208, %s19, 1
      %p210 = scmp.lt.s32.totalorder %s207, 15
      %s211 = scalar_select %p210, %s207, 15
      %s212 = smul.addr %s209, 16
      %s213 = sadd.s32 %s211, %s212
      %s214 = smul.addr %s213, 8
      %s215 = scalar_lea.vmem %s4, %s214
      %p216 = scmp.lt.s32.totalorder %s19, 1
      %s217 = scalar_select %p216, %s19, 1
      %p218 = scmp.lt.s32.totalorder %s20, 0
      %s219 = scalar_select %p218, %s20, 0
      %s220 = smul.addr %s219, 19
      %s221 = smul.addr %s217, 19
      %s222 = sadd.s32 %s220, %s221
      %s223 = smul.addr %s222, 4
      %s224 = scalar_lea.vmem %s0, %s223
      %s225 = smul.u32 16, %s20
      %p226 = scmp.lt.s32.totalorder %s19, 1
      %s227 = scalar_select %p226, %s19, 1
      %p228 = scmp.lt.s32.totalorder %s225, 15
      %s229 = scalar_select %p228, %s225, 15
      %s230 = smul.addr %s227, 16
      %s231 = sadd.s32 %s229, %s230
      %s232 = smul.addr %s231, 8
      %s233 = scalar_lea.vmem %s4, %s232
      %s234 = smul.u32 16, %s20
      %v235 = vld [vmem:[%s224] sm:$0xff]
      %v236 = vld [vmem:[%s224 + $0x8] sm:$0xff]
      %v237 = vld [vmem:[%s224 + $0x10] sm:$0xff]
      %v238 = vld [vmem:[%s224 + $0x18] sm:$0xff]
      %v239 = vld [vmem:[%s224 + $0x20] sm:$0xff]
      %v240 = vld [vmem:[%s224 + $0x28] sm:$0xff]
      %v241 = vld [vmem:[%s224 + $0x30] sm:$0xff]
      %v242 = vld [vmem:[%s224 + $0x38] sm:$0xff]
      %v243 = vld [vmem:[%s1] sm:$0xff]
      %v244 = vld [vmem:[%s224 + $0x40] sm:$0xf]
      %s245 = scalar_lea.vmem %s1, 8
      %v246 = vld [vmem:[%s245] sm:$0xff]
      %256 = vst [vmem:[#allocation1] ss:$2 sm:$0xff] %v235
      %s257 = scalar_lea.vmem [#allocation1], 16
      %258 = vst [vmem:[%s257] ss:$2 sm:$0xff] %v236
      %s259 = scalar_lea.vmem [#allocation1], 32
      %260 = vst [vmem:[%s259] ss:$2 sm:$0xff] %v237
      %s261 = scalar_lea.vmem [#allocation1], 48
      %262 = vst [vmem:[%s261] ss:$2 sm:$0xff] %v238
      %v263 = vld.sshfl [vmem:[#allocation1] sm:$0xff pattern:$0x75316420]
      %v264 = vld.sshfl [vmem:[#allocation1 + $0x8] sm:$0xff pattern:$0x75316420]
      %v265 = vld.sshfl [vmem:[#allocation1 + $0x10] sm:$0xff pattern:$0x75316420]
      %v266 = vld.sshfl [vmem:[#allocation1 + $0x18] sm:$0xff pattern:$0x75316420]
      %v267 = vld.sshfl [vmem:[#allocation1 + $0x20] sm:$0xff pattern:$0x75316420]
      %v268 = vld.sshfl [vmem:[#allocation1 + $0x28] sm:$0xff pattern:$0x75316420]
      %v269 = vld.sshfl [vmem:[#allocation1 + $0x30] sm:$0xff pattern:$0x75316420]
      %v270 = vld.sshfl [vmem:[#allocation1 + $0x38] sm:$0xff pattern:$0x75316420]
      %271 = vst [vmem:[#allocation1] ss:$2 sm:$0xff] %v239
      %272 = vst [vmem:[%s257] ss:$2 sm:$0xff] %v240
      %273 = vst [vmem:[%s259] ss:$2 sm:$0xff] %v241
      %274 = vst [vmem:[%s261] ss:$2 sm:$0xff] %v242
      %v275 = vld.sshfl [vmem:[#allocation1] sm:$0xff pattern:$0x75316420]
      %v276 = vld.sshfl [vmem:[#allocation1 + $0x8] sm:$0xff pattern:$0x75316420]
      %v277 = vld.sshfl [vmem:[#allocation1 + $0x10] sm:$0xff pattern:$0x75316420]
      %v278 = vld.sshfl [vmem:[#allocation1 + $0x18] sm:$0xff pattern:$0x75316420]
      %v279 = vld.sshfl [vmem:[#allocation1 + $0x20] sm:$0xff pattern:$0x75316420]
      %v280 = vld.sshfl [vmem:[#allocation1 + $0x28] sm:$0xff pattern:$0x75316420]
      %v281 = vld.sshfl [vmem:[#allocation1 + $0x30] sm:$0xff pattern:$0x75316420]
      %v282 = vld.sshfl [vmem:[#allocation1 + $0x38] sm:$0xff pattern:$0x75316420]
      %283 = vst [vmem:[#allocation1] ss:$2 sm:$0xff] %v244
      %v284 = vld.sshfl [vmem:[#allocation1] sm:$0xff pattern:$0x75316420]
      %285 = vrot.lane.b32.xlu0 %v263, 127
      %v286 = vpop.permute.xlu0 %285
      %287 = vrot.lane.b32.xlu0 %v264, 127
      %v288 = vpop.permute.xlu0 %287
      %289 = vrot.lane.b32.xlu0 %v265, 127
      %v290 = vpop.permute.xlu0 %289
      %291 = vrot.lane.b32.xlu0 %v266, 127
      %v292 = vpop.permute.xlu0 %291
      %293 = vrot.lane.b32.xlu0 %v267, 127
      %v294 = vpop.permute.xlu0 %293
      %295 = vrot.lane.b32.xlu0 %v268, 127
      %v296 = vpop.permute.xlu0 %295
      %297 = vrot.lane.b32.xlu0 %v269, 127
      %v298 = vpop.permute.xlu0 %297
      %299 = vrot.lane.b32.xlu0 %v270, 127
      %v300 = vpop.permute.xlu0 %299
      %301 = vrot.lane.b32.xlu0 %v275, 127
      %v302 = vpop.permute.xlu0 %301
      %303 = vrot.lane.b32.xlu0 %v276, 127
      %v304 = vpop.permute.xlu0 %303
      %305 = vrot.lane.b32.xlu0 %v277, 127
      %v306 = vpop.permute.xlu0 %305
      %307 = vrot.lane.b32.xlu0 %v278, 127
      %v308 = vpop.permute.xlu0 %307
      %309 = vrot.lane.b32.xlu0 %v279, 127
      %v310 = vpop.permute.xlu0 %309
      %311 = vrot.lane.b32.xlu0 %v280, 127
      %v312 = vpop.permute.xlu0 %311
      %313 = vrot.lane.b32.xlu0 %v281, 127
      %v314 = vpop.permute.xlu0 %313
      %315 = vrot.lane.b32.xlu0 %v282, 127
      %v316 = vpop.permute.xlu0 %315
      %317 = vrot.lane.b32.xlu0 %v284, 127
      %v318 = vpop.permute.xlu0 %317
      %vm319 = vcmask 1039360
      %v320 = vsel %vm319, %v286, %v288
      %v321 = vsel %vm319, %v288, %v290
      %v322 = vsel %vm319, %v290, %v292
      %v323 = vsel %vm319, %v292, %v294
      %v324 = vsel %vm319, %v294, %v296
      %v325 = vsel %vm319, %v296, %v298
      %v326 = vsel %vm319, %v298, %v300
      %v327 = vsel %vm319, %v300, %v302
      %v328 = vsel %vm319, %v302, %v304
      %v329 = vsel %vm319, %v304, %v306
      %v330 = vsel %vm319, %v306, %v308
      %v331 = vsel %vm319, %v308, %v310
      %v332 = vsel %vm319, %v310, %v312
      %v333 = vsel %vm319, %v312, %v314
      %v334 = vsel %vm319, %v314, %v316
      %v335 = vsel %vm319, %v316, %v318
      %vm336 = vcmask 31744
      %v338 = vsel %vm336, %v246, 0
      %vm340 = vcmask 1043456
      %v341 = vsel %vm340, %v320, 0
      %v343 = vsel %vm340, %v321, 0
      %v345 = vsel %vm340, %v322, 0
      %v347 = vsel %vm340, %v323, 0
      %v349 = vsel %vm340, %v324, 0
      %v351 = vsel %vm340, %v325, 0
      %v353 = vsel %vm340, %v326, 0
      %v355 = vsel %vm340, %v327, 0
      %v357 = vsel %vm340, %v328, 0
      %v359 = vsel %vm340, %v329, 0
      %v361 = vsel %vm340, %v330, 0
      %v363 = vsel %vm340, %v331, 0
      %v365 = vsel %vm340, %v332, 0
      %v367 = vsel %vm340, %v333, 0
      %v369 = vsel %vm340, %v334, 0
      %v371 = vsel %vm340, %v335, 0
      %373 = vmatpush.msra.mxu0 0.0
      %374 = vmatpush.msra.mxu0 0.0
      %375 = vmatpush.msra.mxu0 0.0
      %376 = vmatpush.msra.mxu0 0.0
      %377 = vmatpush.msra.mxu0 0.0
      %378 = vmatpush.msra.mxu0 0.0
      %379 = vmatpush.msra.mxu0 0.0
      %380 = vmatpush.msra.mxu0 0.0
      %381 = vmatpush.msra.mxu0 0.0
      %382 = vmatpush.msra.mxu0 0.0
      %383 = vmatpush.msra.mxu0 0.0
      %384 = vmatpush.msra.mxu0 0.0
      %385 = vmatpush.msra.mxu0 0.0
      %386 = vmatpush.msra.mxu0 0.0
      %387 = vmatpush.msra.mxu0 0.0
      %388 = vmatpush.msra.mxu0 %v341
      %389 = vmatmul.f32.gmra.mxu0 %v338
      %v390 = vpop.f32.mrf.mxu0
      %v391 = vadd.f32 0.0, %v390
      %392 = vdwg.mxu0
      %393 = vmatpush.msra.mxu0 0.0
      %394 = vmatpush.msra.mxu0 0.0
      %395 = vmatpush.msra.mxu0 0.0
      %396 = vmatpush.msra.mxu0 0.0
      %397 = vmatpush.msra.mxu0 0.0
      %398 = vmatpush.msra.mxu0 0.0
      %399 = vmatpush.msra.mxu0 0.0
      %400 = vmatpush.msra.mxu0 0.0
      %401 = vmatpush.msra.mxu0 0.0
      %402 = vmatpush.msra.mxu0 0.0
      %403 = vmatpush.msra.mxu0 0.0
      %404 = vmatpush.msra.mxu0 0.0
      %405 = vmatpush.msra.mxu0 0.0
      %406 = vmatpush.msra.mxu0 0.0
      %407 = vmatpush.msra.mxu0 0.0
      %408 = vmatpush.msra.mxu0 %v343
      %409 = vmatmul.f32.gmra.mxu0 %v338
      %v410 = vpop.f32.mrf.mxu0
      %v411 = vadd.f32 0.0, %v410
      %412 = vdwg.mxu0
      %413 = vmatpush.msra.mxu0 0.0
      %414 = vmatpush.msra.mxu0 0.0
      %415 = vmatpush.msra.mxu0 0.0
      %416 = vmatpush.msra.mxu0 0.0
      %417 = vmatpush.msra.mxu0 0.0
      %418 = vmatpush.msra.mxu0 0.0
      %419 = vmatpush.msra.mxu0 0.0
      %420 = vmatpush.msra.mxu0 0.0
      %421 = vmatpush.msra.mxu0 0.0
      %422 = vmatpush.msra.mxu0 0.0
      %423 = vmatpush.msra.mxu0 0.0
      %424 = vmatpush.msra.mxu0 0.0
      %425 = vmatpush.msra.mxu0 0.0
      %426 = vmatpush.msra.mxu0 0.0
      %427 = vmatpush.msra.mxu0 0.0
      %428 = vmatpush.msra.mxu0 %v345
      %429 = vmatmul.f32.gmra.mxu0 %v338
      %v430 = vpop.f32.mrf.mxu0
      %v431 = vadd.f32 0.0, %v430
      %432 = vdwg.mxu0
      %433 = vmatpush.msra.mxu0 0.0
      %434 = vmatpush.msra.mxu0 0.0
      %435 = vmatpush.msra.mxu0 0.0
      %436 = vmatpush.msra.mxu0 0.0
      %437 = vmatpush.msra.mxu0 0.0
      %438 = vmatpush.msra.mxu0 0.0
      %439 = vmatpush.msra.mxu0 0.0
      %440 = vmatpush.msra.mxu0 0.0
      %441 = vmatpush.msra.mxu0 0.0
      %442 = vmatpush.msra.mxu0 0.0
      %443 = vmatpush.msra.mxu0 0.0
      %444 = vmatpush.msra.mxu0 0.0
      %445 = vmatpush.msra.mxu0 0.0
      %446 = vmatpush.msra.mxu0 0.0
      %447 = vmatpush.msra.mxu0 0.0
      %448 = vmatpush.msra.mxu0 %v347
      %449 = vmatmul.f32.gmra.mxu0 %v338
      %v450 = vpop.f32.mrf.mxu0
      %v451 = vadd.f32 0.0, %v450
      %452 = vdwg.mxu0
      %453 = vmatpush.msra.mxu0 0.0
      %454 = vmatpush.msra.mxu0 0.0
      %455 = vmatpush.msra.mxu0 0.0
      %456 = vmatpush.msra.mxu0 0.0
      %457 = vmatpush.msra.mxu0 0.0
      %458 = vmatpush.msra.mxu0 0.0
      %459 = vmatpush.msra.mxu0 0.0
      %460 = vmatpush.msra.mxu0 0.0
      %461 = vmatpush.msra.mxu0 0.0
      %462 = vmatpush.msra.mxu0 0.0
      %463 = vmatpush.msra.mxu0 0.0
      %464 = vmatpush.msra.mxu0 0.0
      %465 = vmatpush.msra.mxu0 0.0
      %466 = vmatpush.msra.mxu0 0.0
      %467 = vmatpush.msra.mxu0 0.0
      %468 = vmatpush.msra.mxu0 %v349
      %469 = vmatmul.f32.gmra.mxu0 %v338
      %v470 = vpop.f32.mrf.mxu0
      %v471 = vadd.f32 0.0, %v470
      %472 = vdwg.mxu0
      %473 = vmatpush.msra.mxu0 0.0
      %474 = vmatpush.msra.mxu0 0.0
      %475 = vmatpush.msra.mxu0 0.0
      %476 = vmatpush.msra.mxu0 0.0
      %477 = vmatpush.msra.mxu0 0.0
      %478 = vmatpush.msra.mxu0 0.0
      %479 = vmatpush.msra.mxu0 0.0
      %480 = vmatpush.msra.mxu0 0.0
      %481 = vmatpush.msra.mxu0 0.0
      %482 = vmatpush.msra.mxu0 0.0
      %483 = vmatpush.msra.mxu0 0.0
      %484 = vmatpush.msra.mxu0 0.0
      %485 = vmatpush.msra.mxu0 0.0
      %486 = vmatpush.msra.mxu0 0.0
      %487 = vmatpush.msra.mxu0 0.0
      %488 = vmatpush.msra.mxu0 %v351
      %489 = vmatmul.f32.gmra.mxu0 %v338
      %v490 = vpop.f32.mrf.mxu0
      %v491 = vadd.f32 0.0, %v490
      %492 = vdwg.mxu0
      %493 = vmatpush.msra.mxu0 0.0
      %494 = vmatpush.msra.mxu0 0.0
      %495 = vmatpush.msra.mxu0 0.0
      %496 = vmatpush.msra.mxu0 0.0
      %497 = vmatpush.msra.mxu0 0.0
      %498 = vmatpush.msra.mxu0 0.0
      %499 = vmatpush.msra.mxu0 0.0
      %500 = vmatpush.msra.mxu0 0.0
      %501 = vmatpush.msra.mxu0 0.0
      %502 = vmatpush.msra.mxu0 0.0
      %503 = vmatpush.msra.mxu0 0.0
      %504 = vmatpush.msra.mxu0 0.0
      %505 = vmatpush.msra.mxu0 0.0
      %506 = vmatpush.msra.mxu0 0.0
      %507 = vmatpush.msra.mxu0 0.0
      %508 = vmatpush.msra.mxu0 %v353
      %509 = vmatmul.f32.gmra.mxu0 %v338
      %v510 = vpop.f32.mrf.mxu0
      %v511 = vadd.f32 0.0, %v510
      %512 = vdwg.mxu0
      %513 = vmatpush.msra.mxu0 0.0
      %514 = vmatpush.msra.mxu0 0.0
      %515 = vmatpush.msra.mxu0 0.0
      %516 = vmatpush.msra.mxu0 0.0
      %517 = vmatpush.msra.mxu0 0.0
      %518 = vmatpush.msra.mxu0 0.0
      %519 = vmatpush.msra.mxu0 0.0
      %520 = vmatpush.msra.mxu0 0.0
      %521 = vmatpush.msra.mxu0 0.0
      %522 = vmatpush.msra.mxu0 0.0
      %523 = vmatpush.msra.mxu0 0.0
      %524 = vmatpush.msra.mxu0 0.0
      %525 = vmatpush.msra.mxu0 0.0
      %526 = vmatpush.msra.mxu0 0.0
      %527 = vmatpush.msra.mxu0 0.0
      %528 = vmatpush.msra.mxu0 %v355
      %529 = vmatmul.f32.gmra.mxu0 %v338
      %v530 = vpop.f32.mrf.mxu0
      %v531 = vadd.f32 0.0, %v530
      %532 = vdwg.mxu0
      %533 = vmatpush.msra.mxu0 0.0
      %534 = vmatpush.msra.mxu0 0.0
      %535 = vmatpush.msra.mxu0 0.0
      %536 = vmatpush.msra.mxu0 0.0
      %537 = vmatpush.msra.mxu0 0.0
      %538 = vmatpush.msra.mxu0 0.0
      %539 = vmatpush.msra.mxu0 0.0
      %540 = vmatpush.msra.mxu0 0.0
      %541 = vmatpush.msra.mxu0 0.0
      %542 = vmatpush.msra.mxu0 0.0
      %543 = vmatpush.msra.mxu0 0.0
      %544 = vmatpush.msra.mxu0 0.0
      %545 = vmatpush.msra.mxu0 0.0
      %546 = vmatpush.msra.mxu0 0.0
      %547 = vmatpush.msra.mxu0 0.0
      %548 = vmatpush.msra.mxu0 %v357
      %549 = vmatmul.f32.gmra.mxu0 %v338
      %v550 = vpop.f32.mrf.mxu0
      %v551 = vadd.f32 0.0, %v550
      %552 = vdwg.mxu0
      %553 = vmatpush.msra.mxu0 0.0
      %554 = vmatpush.msra.mxu0 0.0
      %555 = vmatpush.msra.mxu0 0.0
      %556 = vmatpush.msra.mxu0 0.0
      %557 = vmatpush.msra.mxu0 0.0
      %558 = vmatpush.msra.mxu0 0.0
      %559 = vmatpush.msra.mxu0 0.0
      %560 = vmatpush.msra.mxu0 0.0
      %561 = vmatpush.msra.mxu0 0.0
      %562 = vmatpush.msra.mxu0 0.0
      %563 = vmatpush.msra.mxu0 0.0
      %564 = vmatpush.msra.mxu0 0.0
      %565 = vmatpush.msra.mxu0 0.0
      %566 = vmatpush.msra.mxu0 0.0
      %567 = vmatpush.msra.mxu0 0.0
      %568 = vmatpush.msra.mxu0 %v359
      %569 = vmatmul.f32.gmra.mxu0 %v338
      %v570 = vpop.f32.mrf.mxu0
      %v571 = vadd.f32 0.0, %v570
      %572 = vdwg.mxu0
      %573 = vmatpush.msra.mxu0 0.0
      %574 = vmatpush.msra.mxu0 0.0
      %575 = vmatpush.msra.mxu0 0.0
      %576 = vmatpush.msra.mxu0 0.0
      %577 = vmatpush.msra.mxu0 0.0
      %578 = vmatpush.msra.mxu0 0.0
      %579 = vmatpush.msra.mxu0 0.0
      %580 = vmatpush.msra.mxu0 0.0
      %581 = vmatpush.msra.mxu0 0.0
      %582 = vmatpush.msra.mxu0 0.0
      %583 = vmatpush.msra.mxu0 0.0
      %584 = vmatpush.msra.mxu0 0.0
      %585 = vmatpush.msra.mxu0 0.0
      %586 = vmatpush.msra.mxu0 0.0
      %587 = vmatpush.msra.mxu0 0.0
      %588 = vmatpush.msra.mxu0 %v361
      %589 = vmatmul.f32.gmra.mxu0 %v338
      %v590 = vpop.f32.mrf.mxu0
      %v591 = vadd.f32 0.0, %v590
      %592 = vdwg.mxu0
      %593 = vmatpush.msra.mxu0 0.0
      %594 = vmatpush.msra.mxu0 0.0
      %595 = vmatpush.msra.mxu0 0.0
      %596 = vmatpush.msra.mxu0 0.0
      %597 = vmatpush.msra.mxu0 0.0
      %598 = vmatpush.msra.mxu0 0.0
      %599 = vmatpush.msra.mxu0 0.0
      %600 = vmatpush.msra.mxu0 0.0
      %601 = vmatpush.msra.mxu0 0.0
      %602 = vmatpush.msra.mxu0 0.0
      %603 = vmatpush.msra.mxu0 0.0
      %604 = vmatpush.msra.mxu0 0.0
      %605 = vmatpush.msra.mxu0 0.0
      %606 = vmatpush.msra.mxu0 0.0
      %607 = vmatpush.msra.mxu0 0.0
      %608 = vmatpush.msra.mxu0 %v363
      %609 = vmatmul.f32.gmra.mxu0 %v338
      %v610 = vpop.f32.mrf.mxu0
      %v611 = vadd.f32 0.0, %v610
      %612 = vdwg.mxu0
      %613 = vmatpush.msra.mxu0 0.0
      %614 = vmatpush.msra.mxu0 0.0
      %615 = vmatpush.msra.mxu0 0.0
      %616 = vmatpush.msra.mxu0 0.0
      %617 = vmatpush.msra.mxu0 0.0
      %618 = vmatpush.msra.mxu0 0.0
      %619 = vmatpush.msra.mxu0 0.0
      %620 = vmatpush.msra.mxu0 0.0
      %621 = vmatpush.msra.mxu0 0.0
      %622 = vmatpush.msra.mxu0 0.0
      %623 = vmatpush.msra.mxu0 0.0
      %624 = vmatpush.msra.mxu0 0.0
      %625 = vmatpush.msra.mxu0 0.0
      %626 = vmatpush.msra.mxu0 0.0
      %627 = vmatpush.msra.mxu0 0.0
      %628 = vmatpush.msra.mxu0 %v365
      %629 = vmatmul.f32.gmra.mxu0 %v338
      %v630 = vpop.f32.mrf.mxu0
      %v631 = vadd.f32 0.0, %v630
      %632 = vdwg.mxu0
      %633 = vmatpush.msra.mxu0 0.0
      %634 = vmatpush.msra.mxu0 0.0
      %635 = vmatpush.msra.mxu0 0.0
      %636 = vmatpush.msra.mxu0 0.0
      %637 = vmatpush.msra.mxu0 0.0
      %638 = vmatpush.msra.mxu0 0.0
      %639 = vmatpush.msra.mxu0 0.0
      %640 = vmatpush.msra.mxu0 0.0
      %641 = vmatpush.msra.mxu0 0.0
      %642 = vmatpush.msra.mxu0 0.0
      %643 = vmatpush.msra.mxu0 0.0
      %644 = vmatpush.msra.mxu0 0.0
      %645 = vmatpush.msra.mxu0 0.0
      %646 = vmatpush.msra.mxu0 0.0
      %647 = vmatpush.msra.mxu0 0.0
      %648 = vmatpush.msra.mxu0 %v367
      %649 = vmatmul.f32.gmra.mxu0 %v338
      %v650 = vpop.f32.mrf.mxu0
      %v651 = vadd.f32 0.0, %v650
      %652 = vdwg.mxu0
      %653 = vmatpush.msra.mxu0 0.0
      %654 = vmatpush.msra.mxu0 0.0
      %655 = vmatpush.msra.mxu0 0.0
      %656 = vmatpush.msra.mxu0 0.0
      %657 = vmatpush.msra.mxu0 0.0
      %658 = vmatpush.msra.mxu0 0.0
      %659 = vmatpush.msra.mxu0 0.0
      %660 = vmatpush.msra.mxu0 0.0
      %661 = vmatpush.msra.mxu0 0.0
      %662 = vmatpush.msra.mxu0 0.0
      %663 = vmatpush.msra.mxu0 0.0
      %664 = vmatpush.msra.mxu0 0.0
      %665 = vmatpush.msra.mxu0 0.0
      %666 = vmatpush.msra.mxu0 0.0
      %667 = vmatpush.msra.mxu0 0.0
      %668 = vmatpush.msra.mxu0 %v369
      %669 = vmatmul.f32.gmra.mxu0 %v338
      %v670 = vpop.f32.mrf.mxu0
      %v671 = vadd.f32 0.0, %v670
      %672 = vdwg.mxu0
      %673 = vmatpush.msra.mxu0 0.0
      %674 = vmatpush.msra.mxu0 0.0
      %675 = vmatpush.msra.mxu0 0.0
      %676 = vmatpush.msra.mxu0 0.0
      %677 = vmatpush.msra.mxu0 0.0
      %678 = vmatpush.msra.mxu0 0.0
      %679 = vmatpush.msra.mxu0 0.0
      %680 = vmatpush.msra.mxu0 0.0
      %681 = vmatpush.msra.mxu0 0.0
      %682 = vmatpush.msra.mxu0 0.0
      %683 = vmatpush.msra.mxu0 0.0
      %684 = vmatpush.msra.mxu0 0.0
      %685 = vmatpush.msra.mxu0 0.0
      %686 = vmatpush.msra.mxu0 0.0
      %687 = vmatpush.msra.mxu0 0.0
      %688 = vmatpush.msra.mxu0 %v371
      %689 = vmatmul.f32.gmra.mxu0 %v338
      %v690 = vpop.f32.mrf.mxu0
      %v691 = vadd.f32 0.0, %v690
      %692 = vdwg.mxu0
      %693 = vst [vmem:[#allocation1] ss:$2 sm:$0xff] %v235
      %s694 = scalar_lea.vmem [#allocation1], 16
      %695 = vst [vmem:[%s694] ss:$2 sm:$0xff] %v236
      %s696 = scalar_lea.vmem [#allocation1], 32
      %697 = vst [vmem:[%s696] ss:$2 sm:$0xff] %v237
      %s698 = scalar_lea.vmem [#allocation1], 48
      %699 = vst [vmem:[%s698] ss:$2 sm:$0xff] %v238
      %v700 = vld.sshfl [vmem:[#allocation1] sm:$0xff pattern:$0x75316420]
      %v701 = vld.sshfl [vmem:[#allocation1 + $0x8] sm:$0xff pattern:$0x75316420]
      %v702 = vld.sshfl [vmem:[#allocation1 + $0x10] sm:$0xff pattern:$0x75316420]
      %v703 = vld.sshfl [vmem:[#allocation1 + $0x18] sm:$0xff pattern:$0x75316420]
      %v704 = vld.sshfl [vmem:[#allocation1 + $0x20] sm:$0xff pattern:$0x75316420]
      %v705 = vld.sshfl [vmem:[#allocation1 + $0x28] sm:$0xff pattern:$0x75316420]
      %v706 = vld.sshfl [vmem:[#allocation1 + $0x30] sm:$0xff pattern:$0x75316420]
      %v707 = vld.sshfl [vmem:[#allocation1 + $0x38] sm:$0xff pattern:$0x75316420]
      %708 = vst [vmem:[#allocation1] ss:$2 sm:$0xff] %v239
      %709 = vst [vmem:[%s694] ss:$2 sm:$0xff] %v240
      %710 = vst [vmem:[%s696] ss:$2 sm:$0xff] %v241
      %711 = vst [vmem:[%s698] ss:$2 sm:$0xff] %v242
      %v712 = vld.sshfl [vmem:[#allocation1] sm:$0xff pattern:$0x75316420]
      %v713 = vld.sshfl [vmem:[#allocation1 + $0x8] sm:$0xff pattern:$0x75316420]
      %v714 = vld.sshfl [vmem:[#allocation1 + $0x10] sm:$0xff pattern:$0x75316420]
      %v715 = vld.sshfl [vmem:[#allocation1 + $0x18] sm:$0xff pattern:$0x75316420]
      %v716 = vld.sshfl [vmem:[#allocation1 + $0x20] sm:$0xff pattern:$0x75316420]
      %v717 = vld.sshfl [vmem:[#allocation1 + $0x28] sm:$0xff pattern:$0x75316420]
      %v718 = vld.sshfl [vmem:[#allocation1 + $0x30] sm:$0xff pattern:$0x75316420]
      %v719 = vld.sshfl [vmem:[#allocation1 + $0x38] sm:$0xff pattern:$0x75316420]
      %v721 = vsel %vm336, %v243, 0
      %v723 = vsel %vm340, %v700, 0
      %v725 = vsel %vm340, %v701, 0
      %v727 = vsel %vm340, %v702, 0
      %v729 = vsel %vm340, %v703, 0
      %v731 = vsel %vm340, %v704, 0
      %v733 = vsel %vm340, %v705, 0
      %v735 = vsel %vm340, %v706, 0
      %v737 = vsel %vm340, %v707, 0
      %v739 = vsel %vm340, %v712, 0
      %v741 = vsel %vm340, %v713, 0
      %v743 = vsel %vm340, %v714, 0
      %v745 = vsel %vm340, %v715, 0
      %v747 = vsel %vm340, %v716, 0
      %v749 = vsel %vm340, %v717, 0
      %v751 = vsel %vm340, %v718, 0
      %v753 = vsel %vm340, %v719, 0
      %755 = vmatpush.msra.mxu0 0.0
      %756 = vmatpush.msra.mxu0 0.0
      %757 = vmatpush.msra.mxu0 0.0
      %758 = vmatpush.msra.mxu0 0.0
      %759 = vmatpush.msra.mxu0 0.0
      %760 = vmatpush.msra.mxu0 0.0
      %761 = vmatpush.msra.mxu0 0.0
      %762 = vmatpush.msra.mxu0 0.0
      %763 = vmatpush.msra.mxu0 0.0
      %764 = vmatpush.msra.mxu0 0.0
      %765 = vmatpush.msra.mxu0 0.0
      %766 = vmatpush.msra.mxu0 0.0
      %767 = vmatpush.msra.mxu0 0.0
      %768 = vmatpush.msra.mxu0 0.0
      %769 = vmatpush.msra.mxu0 0.0
      %770 = vmatpush.msra.mxu0 %v723
      %771 = vmatmul.f32.gmra.mxu0 %v721
      %v772 = vpop.f32.mrf.mxu0
      %v773 = vadd.f32 %v391, %v772
      %774 = vdwg.mxu0
      %775 = vmatpush.msra.mxu0 0.0
      %776 = vmatpush.msra.mxu0 0.0
      %777 = vmatpush.msra.mxu0 0.0
      %778 = vmatpush.msra.mxu0 0.0
      %779 = vmatpush.msra.mxu0 0.0
      %780 = vmatpush.msra.mxu0 0.0
      %781 = vmatpush.msra.mxu0 0.0
      %782 = vmatpush.msra.mxu0 0.0
      %783 = vmatpush.msra.mxu0 0.0
      %784 = vmatpush.msra.mxu0 0.0
      %785 = vmatpush.msra.mxu0 0.0
      %786 = vmatpush.msra.mxu0 0.0
      %787 = vmatpush.msra.mxu0 0.0
      %788 = vmatpush.msra.mxu0 0.0
      %789 = vmatpush.msra.mxu0 0.0
      %790 = vmatpush.msra.mxu0 %v725
      %791 = vmatmul.f32.gmra.mxu0 %v721
      %v792 = vpop.f32.mrf.mxu0
      %v793 = vadd.f32 %v411, %v792
      %794 = vdwg.mxu0
      %795 = vmatpush.msra.mxu0 0.0
      %796 = vmatpush.msra.mxu0 0.0
      %797 = vmatpush.msra.mxu0 0.0
      %798 = vmatpush.msra.mxu0 0.0
      %799 = vmatpush.msra.mxu0 0.0
      %800 = vmatpush.msra.mxu0 0.0
      %801 = vmatpush.msra.mxu0 0.0
      %802 = vmatpush.msra.mxu0 0.0
      %803 = vmatpush.msra.mxu0 0.0
      %804 = vmatpush.msra.mxu0 0.0
      %805 = vmatpush.msra.mxu0 0.0
      %806 = vmatpush.msra.mxu0 0.0
      %807 = vmatpush.msra.mxu0 0.0
      %808 = vmatpush.msra.mxu0 0.0
      %809 = vmatpush.msra.mxu0 0.0
      %810 = vmatpush.msra.mxu0 %v727
      %811 = vmatmul.f32.gmra.mxu0 %v721
      %v812 = vpop.f32.mrf.mxu0
      %v813 = vadd.f32 %v431, %v812
      %814 = vdwg.mxu0
      %815 = vmatpush.msra.mxu0 0.0
      %816 = vmatpush.msra.mxu0 0.0
      %817 = vmatpush.msra.mxu0 0.0
      %818 = vmatpush.msra.mxu0 0.0
      %819 = vmatpush.msra.mxu0 0.0
      %820 = vmatpush.msra.mxu0 0.0
      %821 = vmatpush.msra.mxu0 0.0
      %822 = vmatpush.msra.mxu0 0.0
      %823 = vmatpush.msra.mxu0 0.0
      %824 = vmatpush.msra.mxu0 0.0
      %825 = vmatpush.msra.mxu0 0.0
      %826 = vmatpush.msra.mxu0 0.0
      %827 = vmatpush.msra.mxu0 0.0
      %828 = vmatpush.msra.mxu0 0.0
      %829 = vmatpush.msra.mxu0 0.0
      %830 = vmatpush.msra.mxu0 %v729
      %831 = vmatmul.f32.gmra.mxu0 %v721
      %v832 = vpop.f32.mrf.mxu0
      %v833 = vadd.f32 %v451, %v832
      %834 = vdwg.mxu0
      %835 = vmatpush.msra.mxu0 0.0
      %836 = vmatpush.msra.mxu0 0.0
      %837 = vmatpush.msra.mxu0 0.0
      %838 = vmatpush.msra.mxu0 0.0
      %839 = vmatpush.msra.mxu0 0.0
      %840 = vmatpush.msra.mxu0 0.0
      %841 = vmatpush.msra.mxu0 0.0
      %842 = vmatpush.msra.mxu0 0.0
      %843 = vmatpush.msra.mxu0 0.0
      %844 = vmatpush.msra.mxu0 0.0
      %845 = vmatpush.msra.mxu0 0.0
      %846 = vmatpush.msra.mxu0 0.0
      %847 = vmatpush.msra.mxu0 0.0
      %848 = vmatpush.msra.mxu0 0.0
      %849 = vmatpush.msra.mxu0 0.0
      %850 = vmatpush.msra.mxu0 %v731
      %851 = vmatmul.f32.gmra.mxu0 %v721
      %v852 = vpop.f32.mrf.mxu0
      %v853 = vadd.f32 %v471, %v852
      %854 = vdwg.mxu0
      %855 = vmatpush.msra.mxu0 0.0
      %856 = vmatpush.msra.mxu0 0.0
      %857 = vmatpush.msra.mxu0 0.0
      %858 = vmatpush.msra.mxu0 0.0
      %859 = vmatpush.msra.mxu0 0.0
      %860 = vmatpush.msra.mxu0 0.0
      %861 = vmatpush.msra.mxu0 0.0
      %862 = vmatpush.msra.mxu0 0.0
      %863 = vmatpush.msra.mxu0 0.0
      %864 = vmatpush.msra.mxu0 0.0
      %865 = vmatpush.msra.mxu0 0.0
      %866 = vmatpush.msra.mxu0 0.0
      %867 = vmatpush.msra.mxu0 0.0
      %868 = vmatpush.msra.mxu0 0.0
      %869 = vmatpush.msra.mxu0 0.0
      %870 = vmatpush.msra.mxu0 %v733
      %871 = vmatmul.f32.gmra.mxu0 %v721
      %v872 = vpop.f32.mrf.mxu0
      %v873 = vadd.f32 %v491, %v872
      %874 = vdwg.mxu0
      %875 = vmatpush.msra.mxu0 0.0
      %876 = vmatpush.msra.mxu0 0.0
      %877 = vmatpush.msra.mxu0 0.0
      %878 = vmatpush.msra.mxu0 0.0
      %879 = vmatpush.msra.mxu0 0.0
      %880 = vmatpush.msra.mxu0 0.0
      %881 = vmatpush.msra.mxu0 0.0
      %882 = vmatpush.msra.mxu0 0.0
      %883 = vmatpush.msra.mxu0 0.0
      %884 = vmatpush.msra.mxu0 0.0
      %885 = vmatpush.msra.mxu0 0.0
      %886 = vmatpush.msra.mxu0 0.0
      %887 = vmatpush.msra.mxu0 0.0
      %888 = vmatpush.msra.mxu0 0.0
      %889 = vmatpush.msra.mxu0 0.0
      %890 = vmatpush.msra.mxu0 %v735
      %891 = vmatmul.f32.gmra.mxu0 %v721
      %v892 = vpop.f32.mrf.mxu0
      %v893 = vadd.f32 %v511, %v892
      %894 = vdwg.mxu0
      %895 = vmatpush.msra.mxu0 0.0
      %896 = vmatpush.msra.mxu0 0.0
      %897 = vmatpush.msra.mxu0 0.0
      %898 = vmatpush.msra.mxu0 0.0
      %899 = vmatpush.msra.mxu0 0.0
      %900 = vmatpush.msra.mxu0 0.0
      %901 = vmatpush.msra.mxu0 0.0
      %902 = vmatpush.msra.mxu0 0.0
      %903 = vmatpush.msra.mxu0 0.0
      %904 = vmatpush.msra.mxu0 0.0
      %905 = vmatpush.msra.mxu0 0.0
      %906 = vmatpush.msra.mxu0 0.0
      %907 = vmatpush.msra.mxu0 0.0
      %908 = vmatpush.msra.mxu0 0.0
      %909 = vmatpush.msra.mxu0 0.0
      %910 = vmatpush.msra.mxu0 %v737
      %911 = vmatmul.f32.gmra.mxu0 %v721
      %v912 = vpop.f32.mrf.mxu0
      %v913 = vadd.f32 %v531, %v912
      %914 = vdwg.mxu0
      %915 = vmatpush.msra.mxu0 0.0
      %916 = vmatpush.msra.mxu0 0.0
      %917 = vmatpush.msra.mxu0 0.0
      %918 = vmatpush.msra.mxu0 0.0
      %919 = vmatpush.msra.mxu0 0.0
      %920 = vmatpush.msra.mxu0 0.0
      %921 = vmatpush.msra.mxu0 0.0
      %922 = vmatpush.msra.mxu0 0.0
      %923 = vmatpush.msra.mxu0 0.0
      %924 = vmatpush.msra.mxu0 0.0
      %925 = vmatpush.msra.mxu0 0.0
      %926 = vmatpush.msra.mxu0 0.0
      %927 = vmatpush.msra.mxu0 0.0
      %928 = vmatpush.msra.mxu0 0.0
      %929 = vmatpush.msra.mxu0 0.0
      %930 = vmatpush.msra.mxu0 %v739
      %931 = vmatmul.f32.gmra.mxu0 %v721
      %v932 = vpop.f32.mrf.mxu0
      %v933 = vadd.f32 %v551, %v932
      %934 = vdwg.mxu0
      %935 = vmatpush.msra.mxu0 0.0
      %936 = vmatpush.msra.mxu0 0.0
      %937 = vmatpush.msra.mxu0 0.0
      %938 = vmatpush.msra.mxu0 0.0
      %939 = vmatpush.msra.mxu0 0.0
      %940 = vmatpush.msra.mxu0 0.0
      %941 = vmatpush.msra.mxu0 0.0
      %942 = vmatpush.msra.mxu0 0.0
      %943 = vmatpush.msra.mxu0 0.0
      %944 = vmatpush.msra.mxu0 0.0
      %945 = vmatpush.msra.mxu0 0.0
      %946 = vmatpush.msra.mxu0 0.0
      %947 = vmatpush.msra.mxu0 0.0
      %948 = vmatpush.msra.mxu0 0.0
      %949 = vmatpush.msra.mxu0 0.0
      %950 = vmatpush.msra.mxu0 %v741
      %951 = vmatmul.f32.gmra.mxu0 %v721
      %v952 = vpop.f32.mrf.mxu0
      %v953 = vadd.f32 %v571, %v952
      %954 = vdwg.mxu0
      %955 = vmatpush.msra.mxu0 0.0
      %956 = vmatpush.msra.mxu0 0.0
      %957 = vmatpush.msra.mxu0 0.0
      %958 = vmatpush.msra.mxu0 0.0
      %959 = vmatpush.msra.mxu0 0.0
      %960 = vmatpush.msra.mxu0 0.0
      %961 = vmatpush.msra.mxu0 0.0
      %962 = vmatpush.msra.mxu0 0.0
      %963 = vmatpush.msra.mxu0 0.0
      %964 = vmatpush.msra.mxu0 0.0
      %965 = vmatpush.msra.mxu0 0.0
      %966 = vmatpush.msra.mxu0 0.0
      %967 = vmatpush.msra.mxu0 0.0
      %968 = vmatpush.msra.mxu0 0.0
      %969 = vmatpush.msra.mxu0 0.0
      %970 = vmatpush.msra.mxu0 %v743
      %971 = vmatmul.f32.gmra.mxu0 %v721
      %v972 = vpop.f32.mrf.mxu0
      %v973 = vadd.f32 %v591, %v972
      %974 = vdwg.mxu0
      %975 = vmatpush.msra.mxu0 0.0
      %976 = vmatpush.msra.mxu0 0.0
      %977 = vmatpush.msra.mxu0 0.0
      %978 = vmatpush.msra.mxu0 0.0
      %979 = vmatpush.msra.mxu0 0.0
      %980 = vmatpush.msra.mxu0 0.0
      %981 = vmatpush.msra.mxu0 0.0
      %982 = vmatpush.msra.mxu0 0.0
      %983 = vmatpush.msra.mxu0 0.0
      %984 = vmatpush.msra.mxu0 0.0
      %985 = vmatpush.msra.mxu0 0.0
      %986 = vmatpush.msra.mxu0 0.0
      %987 = vmatpush.msra.mxu0 0.0
      %988 = vmatpush.msra.mxu0 0.0
      %989 = vmatpush.msra.mxu0 0.0
      %990 = vmatpush.msra.mxu0 %v745
      %991 = vmatmul.f32.gmra.mxu0 %v721
      %v992 = vpop.f32.mrf.mxu0
      %v993 = vadd.f32 %v611, %v992
      %994 = vdwg.mxu0
      %995 = vmatpush.msra.mxu0 0.0
      %996 = vmatpush.msra.mxu0 0.0
      %997 = vmatpush.msra.mxu0 0.0
      %998 = vmatpush.msra.mxu0 0.0
      %999 = vmatpush.msra.mxu0 0.0
      %1000 = vmatpush.msra.mxu0 0.0
      %1001 = vmatpush.msra.mxu0 0.0
      %1002 = vmatpush.msra.mxu0 0.0
      %1003 = vmatpush.msra.mxu0 0.0
      %1004 = vmatpush.msra.mxu0 0.0
      %1005 = vmatpush.msra.mxu0 0.0
      %1006 = vmatpush.msra.mxu0 0.0
      %1007 = vmatpush.msra.mxu0 0.0
      %1008 = vmatpush.msra.mxu0 0.0
      %1009 = vmatpush.msra.mxu0 0.0
      %1010 = vmatpush.msra.mxu0 %v747
      %1011 = vmatmul.f32.gmra.mxu0 %v721
      %v1012 = vpop.f32.mrf.mxu0
      %v1013 = vadd.f32 %v631, %v1012
      %1014 = vdwg.mxu0
      %1015 = vmatpush.msra.mxu0 0.0
      %1016 = vmatpush.msra.mxu0 0.0
      %1017 = vmatpush.msra.mxu0 0.0
      %1018 = vmatpush.msra.mxu0 0.0
      %1019 = vmatpush.msra.mxu0 0.0
      %1020 = vmatpush.msra.mxu0 0.0
      %1021 = vmatpush.msra.mxu0 0.0
      %1022 = vmatpush.msra.mxu0 0.0
      %1023 = vmatpush.msra.mxu0 0.0
      %1024 = vmatpush.msra.mxu0 0.0
      %1025 = vmatpush.msra.mxu0 0.0
      %1026 = vmatpush.msra.mxu0 0.0
      %1027 = vmatpush.msra.mxu0 0.0
      %1028 = vmatpush.msra.mxu0 0.0
      %1029 = vmatpush.msra.mxu0 0.0
      %1030 = vmatpush.msra.mxu0 %v749
      %1031 = vmatmul.f32.gmra.mxu0 %v721
      %v1032 = vpop.f32.mrf.mxu0
      %v1033 = vadd.f32 %v651, %v1032
      %1034 = vdwg.mxu0
      %1035 = vmatpush.msra.mxu0 0.0
      %1036 = vmatpush.msra.mxu0 0.0
      %1037 = vmatpush.msra.mxu0 0.0
      %1038 = vmatpush.msra.mxu0 0.0
      %1039 = vmatpush.msra.mxu0 0.0
      %1040 = vmatpush.msra.mxu0 0.0
      %1041 = vmatpush.msra.mxu0 0.0
      %1042 = vmatpush.msra.mxu0 0.0
      %1043 = vmatpush.msra.mxu0 0.0
      %1044 = vmatpush.msra.mxu0 0.0
      %1045 = vmatpush.msra.mxu0 0.0
      %1046 = vmatpush.msra.mxu0 0.0
      %1047 = vmatpush.msra.mxu0 0.0
      %1048 = vmatpush.msra.mxu0 0.0
      %1049 = vmatpush.msra.mxu0 0.0
      %1050 = vmatpush.msra.mxu0 %v751
      %1051 = vmatmul.f32.gmra.mxu0 %v721
      %v1052 = vpop.f32.mrf.mxu0
      %v1053 = vadd.f32 %v671, %v1052
      %1054 = vdwg.mxu0
      %1055 = vmatpush.msra.mxu0 0.0
      %1056 = vmatpush.msra.mxu0 0.0
      %1057 = vmatpush.msra.mxu0 0.0
      %1058 = vmatpush.msra.mxu0 0.0
      %1059 = vmatpush.msra.mxu0 0.0
      %1060 = vmatpush.msra.mxu0 0.0
      %1061 = vmatpush.msra.mxu0 0.0
      %1062 = vmatpush.msra.mxu0 0.0
      %1063 = vmatpush.msra.mxu0 0.0
      %1064 = vmatpush.msra.mxu0 0.0
      %1065 = vmatpush.msra.mxu0 0.0
      %1066 = vmatpush.msra.mxu0 0.0
      %1067 = vmatpush.msra.mxu0 0.0
      %1068 = vmatpush.msra.mxu0 0.0
      %1069 = vmatpush.msra.mxu0 0.0
      %1070 = vmatpush.msra.mxu0 %v753
      %1071 = vmatmul.f32.gmra.mxu0 %v721
      %v1072 = vpop.f32.mrf.mxu0
      %v1073 = vadd.f32 %v691, %v1072
      %1074 = vdwg.mxu0
      %v1075 = vld [vmem:[%s224] sm:$0xff]
      %v1076 = vld [vmem:[%s224 + $0x8] sm:$0xff]
      %v1077 = vld [vmem:[%s224 + $0x10] sm:$0xff]
      %v1078 = vld [vmem:[%s224 + $0x18] sm:$0xff]
      %v1079 = vld [vmem:[%s224 + $0x20] sm:$0xff]
      %v1080 = vld [vmem:[%s224 + $0x28] sm:$0xff]
      %v1081 = vld [vmem:[%s224 + $0x30] sm:$0xff]
      %v1082 = vld [vmem:[%s224 + $0x38] sm:$0xff]
      %v1083 = vld [vmem:[%s224 + $0x40] sm:$0xf]
      %s1084 = scalar_lea.vmem %s1, 16
      %v1085 = vld [vmem:[%s1084] sm:$0xff]
      %1095 = vst [vmem:[#allocation1] ss:$2 sm:$0xff] %v1075
      %s1096 = scalar_lea.vmem [#allocation1], 16
      %1097 = vst [vmem:[%s1096] ss:$2 sm:$0xff] %v1076
      %s1098 = scalar_lea.vmem [#allocation1], 32
      %1099 = vst [vmem:[%s1098] ss:$2 sm:$0xff] %v1077
      %s1100 = scalar_lea.vmem [#allocation1], 48
      %1101 = vst [vmem:[%s1100] ss:$2 sm:$0xff] %v1078
      %v1102 = vld.sshfl [vmem:[#allocation1] sm:$0xff pattern:$0x75316420]
      %v1103 = vld.sshfl [vmem:[#allocation1 + $0x8] sm:$0xff pattern:$0x75316420]
      %v1104 = vld.sshfl [vmem:[#allocation1 + $0x10] sm:$0xff pattern:$0x75316420]
      %v1105 = vld.sshfl [vmem:[#allocation1 + $0x18] sm:$0xff pattern:$0x75316420]
      %v1106 = vld.sshfl [vmem:[#allocation1 + $0x20] sm:$0xff pattern:$0x75316420]
      %v1107 = vld.sshfl [vmem:[#allocation1 + $0x28] sm:$0xff pattern:$0x75316420]
      %v1108 = vld.sshfl [vmem:[#allocation1 + $0x30] sm:$0xff pattern:$0x75316420]
      %v1109 = vld.sshfl [vmem:[#allocation1 + $0x38] sm:$0xff pattern:$0x75316420]
      %1110 = vst [vmem:[#allocation1] ss:$2 sm:$0xff] %v1079
      %1111 = vst [vmem:[%s1096] ss:$2 sm:$0xff] %v1080
      %1112 = vst [vmem:[%s1098] ss:$2 sm:$0xff] %v1081
      %1113 = vst [vmem:[%s1100] ss:$2 sm:$0xff] %v1082
      %v1114 = vld.sshfl [vmem:[#allocation1] sm:$0xff pattern:$0x75316420]
      %v1115 = vld.sshfl [vmem:[#allocation1 + $0x8] sm:$0xff pattern:$0x75316420]
      %v1116 = vld.sshfl [vmem:[#allocation1 + $0x10] sm:$0xff pattern:$0x75316420]
      %v1117 = vld.sshfl [vmem:[#allocation1 + $0x18] sm:$0xff pattern:$0x75316420]
      %v1118 = vld.sshfl [vmem:[#allocation1 + $0x20] sm:$0xff pattern:$0x75316420]
      %v1119 = vld.sshfl [vmem:[#allocation1 + $0x28] sm:$0xff pattern:$0x75316420]
      %v1120 = vld.sshfl [vmem:[#allocation1 + $0x30] sm:$0xff pattern:$0x75316420]
      %v1121 = vld.sshfl [vmem:[#allocation1 + $0x38] sm:$0xff pattern:$0x75316420]
      %1122 = vst [vmem:[#allocation1] ss:$2 sm:$0xff] %v1083
      %v1123 = vld.sshfl [vmem:[#allocation1] sm:$0xff pattern:$0x75316420]
      %1124 = vrot.lane.b32.xlu0 %v1102, 126
      %v1125 = vpop.permute.xlu0 %1124
      %1126 = vrot.lane.b32.xlu0 %v1103, 126
      %v1127 = vpop.permute.xlu0 %1126
      %1128 = vrot.lane.b32.xlu0 %v1104, 126
      %v1129 = vpop.permute.xlu0 %1128
      %1130 = vrot.lane.b32.xlu0 %v1105, 126
      %v1131 = vpop.permute.xlu0 %1130
      %1132 = vrot.lane.b32.xlu0 %v1106, 126
      %v1133 = vpop.permute.xlu0 %1132
      %1134 = vrot.lane.b32.xlu0 %v1107, 126
      %v1135 = vpop.permute.xlu0 %1134
      %1136 = vrot.lane.b32.xlu0 %v1108, 126
      %v1137 = vpop.permute.xlu0 %1136
      %1138 = vrot.lane.b32.xlu0 %v1109, 126
      %v1139 = vpop.permute.xlu0 %1138
      %1140 = vrot.lane.b32.xlu0 %v1114, 126
      %v1141 = vpop.permute.xlu0 %1140
      %1142 = vrot.lane.b32.xlu0 %v1115, 126
      %v1143 = vpop.permute.xlu0 %1142
      %1144 = vrot.lane.b32.xlu0 %v1116, 126
      %v1145 = vpop.permute.xlu0 %1144
      %1146 = vrot.lane.b32.xlu0 %v1117, 126
      %v1147 = vpop.permute.xlu0 %1146
      %1148 = vrot.lane.b32.xlu0 %v1118, 126
      %v1149 = vpop.permute.xlu0 %1148
      %1150 = vrot.lane.b32.xlu0 %v1119, 126
      %v1151 = vpop.permute.xlu0 %1150
      %1152 = vrot.lane.b32.xlu0 %v1120, 126
      %v1153 = vpop.permute.xlu0 %1152
      %1154 = vrot.lane.b32.xlu0 %v1121, 126
      %v1155 = vpop.permute.xlu0 %1154
      %1156 = vrot.lane.b32.xlu0 %v1123, 126
      %v1157 = vpop.permute.xlu0 %1156
      %vm1158 = vcmask 1031168
      %v1159 = vsel %vm1158, %v1125, %v1127
      %v1160 = vsel %vm1158, %v1127, %v1129
      %v1161 = vsel %vm1158, %v1129, %v1131
      %v1162 = vsel %vm1158, %v1131, %v1133
      %v1163 = vsel %vm1158, %v1133, %v1135
      %v1164 = vsel %vm1158, %v1135, %v1137
      %v1165 = vsel %vm1158, %v1137, %v1139
      %v1166 = vsel %vm1158, %v1139, %v1141
      %v1167 = vsel %vm1158, %v1141, %v1143
      %v1168 = vsel %vm1158, %v1143, %v1145
      %v1169 = vsel %vm1158, %v1145, %v1147
      %v1170 = vsel %vm1158, %v1147, %v1149
      %v1171 = vsel %vm1158, %v1149, %v1151
      %v1172 = vsel %vm1158, %v1151, %v1153
      %v1173 = vsel %vm1158, %v1153, %v1155
      %v1174 = vsel %vm1158, %v1155, %v1157
      %v1176 = vsel %vm336, %v1085, 0
      %v1178 = vsel %vm340, %v1159, 0
      %v1180 = vsel %vm340, %v1160, 0
      %v1182 = vsel %vm340, %v1161, 0
      %v1184 = vsel %vm340, %v1162, 0
      %v1186 = vsel %vm340, %v1163, 0
      %v1188 = vsel %vm340, %v1164, 0
      %v1190 = vsel %vm340, %v1165, 0
      %v1192 = vsel %vm340, %v1166, 0
      %v1194 = vsel %vm340, %v1167, 0
      %v1196 = vsel %vm340, %v1168, 0
      %v1198 = vsel %vm340, %v1169, 0
      %v1200 = vsel %vm340, %v1170, 0
      %v1202 = vsel %vm340, %v1171, 0
      %v1204 = vsel %vm340, %v1172, 0
      %v1206 = vsel %vm340, %v1173, 0
      %v1208 = vsel %vm340, %v1174, 0
      %1210 = vmatpush.msra.mxu0 0.0
      %1211 = vmatpush.msra.mxu0 0.0
      %1212 = vmatpush.msra.mxu0 0.0
      %1213 = vmatpush.msra.mxu0 0.0
      %1214 = vmatpush.msra.mxu0 0.0
      %1215 = vmatpush.msra.mxu0 0.0
      %1216 = vmatpush.msra.mxu0 0.0
      %1217 = vmatpush.msra.mxu0 0.0
      %1218 = vmatpush.msra.mxu0 0.0
      %1219 = vmatpush.msra.mxu0 0.0
      %1220 = vmatpush.msra.mxu0 0.0
      %1221 = vmatpush.msra.mxu0 0.0
      %1222 = vmatpush.msra.mxu0 0.0
      %1223 = vmatpush.msra.mxu0 0.0
      %1224 = vmatpush.msra.mxu0 0.0
      %1225 = vmatpush.msra.mxu0 %v1178
      %1226 = vmatmul.f32.gmra.mxu0 %v1176
      %v1227 = vpop.f32.mrf.mxu0
      %v1228 = vadd.f32 0.0, %v1227
      %1229 = vdwg.mxu0
      %1230 = vmatpush.msra.mxu0 0.0
      %1231 = vmatpush.msra.mxu0 0.0
      %1232 = vmatpush.msra.mxu0 0.0
      %1233 = vmatpush.msra.mxu0 0.0
      %1234 = vmatpush.msra.mxu0 0.0
      %1235 = vmatpush.msra.mxu0 0.0
      %1236 = vmatpush.msra.mxu0 0.0
      %1237 = vmatpush.msra.mxu0 0.0
      %1238 = vmatpush.msra.mxu0 0.0
      %1239 = vmatpush.msra.mxu0 0.0
      %1240 = vmatpush.msra.mxu0 0.0
      %1241 = vmatpush.msra.mxu0 0.0
      %1242 = vmatpush.msra.mxu0 0.0
      %1243 = vmatpush.msra.mxu0 0.0
      %1244 = vmatpush.msra.mxu0 0.0
      %1245 = vmatpush.msra.mxu0 %v1180
      %1246 = vmatmul.f32.gmra.mxu0 %v1176
      %v1247 = vpop.f32.mrf.mxu0
      %v1248 = vadd.f32 0.0, %v1247
      %1249 = vdwg.mxu0
      %1250 = vmatpush.msra.mxu0 0.0
      %1251 = vmatpush.msra.mxu0 0.0
      %1252 = vmatpush.msra.mxu0 0.0
      %1253 = vmatpush.msra.mxu0 0.0
      %1254 = vmatpush.msra.mxu0 0.0
      %1255 = vmatpush.msra.mxu0 0.0
      %1256 = vmatpush.msra.mxu0 0.0
      %1257 = vmatpush.msra.mxu0 0.0
      %1258 = vmatpush.msra.mxu0 0.0
      %1259 = vmatpush.msra.mxu0 0.0
      %1260 = vmatpush.msra.mxu0 0.0
      %1261 = vmatpush.msra.mxu0 0.0
      %1262 = vmatpush.msra.mxu0 0.0
      %1263 = vmatpush.msra.mxu0 0.0
      %1264 = vmatpush.msra.mxu0 0.0
      %1265 = vmatpush.msra.mxu0 %v1182
      %1266 = vmatmul.f32.gmra.mxu0 %v1176
      %v1267 = vpop.f32.mrf.mxu0
      %v1268 = vadd.f32 0.0, %v1267
      %1269 = vdwg.mxu0
      %1270 = vmatpush.msra.mxu0 0.0
      %1271 = vmatpush.msra.mxu0 0.0
      %1272 = vmatpush.msra.mxu0 0.0
      %1273 = vmatpush.msra.mxu0 0.0
      %1274 = vmatpush.msra.mxu0 0.0
      %1275 = vmatpush.msra.mxu0 0.0
      %1276 = vmatpush.msra.mxu0 0.0
      %1277 = vmatpush.msra.mxu0 0.0
      %1278 = vmatpush.msra.mxu0 0.0
      %1279 = vmatpush.msra.mxu0 0.0
      %1280 = vmatpush.msra.mxu0 0.0
      %1281 = vmatpush.msra.mxu0 0.0
      %1282 = vmatpush.msra.mxu0 0.0
      %1283 = vmatpush.msra.mxu0 0.0
      %1284 = vmatpush.msra.mxu0 0.0
      %1285 = vmatpush.msra.mxu0 %v1184
      %1286 = vmatmul.f32.gmra.mxu0 %v1176
      %v1287 = vpop.f32.mrf.mxu0
      %v1288 = vadd.f32 0.0, %v1287
      %1289 = vdwg.mxu0
      %1290 = vmatpush.msra.mxu0 0.0
      %1291 = vmatpush.msra.mxu0 0.0
      %1292 = vmatpush.msra.mxu0 0.0
      %1293 = vmatpush.msra.mxu0 0.0
      %1294 = vmatpush.msra.mxu0 0.0
      %1295 = vmatpush.msra.mxu0 0.0
      %1296 = vmatpush.msra.mxu0 0.0
      %1297 = vmatpush.msra.mxu0 0.0
      %1298 = vmatpush.msra.mxu0 0.0
      %1299 = vmatpush.msra.mxu0 0.0
      %1300 = vmatpush.msra.mxu0 0.0
      %1301 = vmatpush.msra.mxu0 0.0
      %1302 = vmatpush.msra.mxu0 0.0
      %1303 = vmatpush.msra.mxu0 0.0
      %1304 = vmatpush.msra.mxu0 0.0
      %1305 = vmatpush.msra.mxu0 %v1186
      %1306 = vmatmul.f32.gmra.mxu0 %v1176
      %v1307 = vpop.f32.mrf.mxu0
      %v1308 = vadd.f32 0.0, %v1307
      %1309 = vdwg.mxu0
      %1310 = vmatpush.msra.mxu0 0.0
      %1311 = vmatpush.msra.mxu0 0.0
      %1312 = vmatpush.msra.mxu0 0.0
      %1313 = vmatpush.msra.mxu0 0.0
      %1314 = vmatpush.msra.mxu0 0.0
      %1315 = vmatpush.msra.mxu0 0.0
      %1316 = vmatpush.msra.mxu0 0.0
      %1317 = vmatpush.msra.mxu0 0.0
      %1318 = vmatpush.msra.mxu0 0.0
      %1319 = vmatpush.msra.mxu0 0.0
      %1320 = vmatpush.msra.mxu0 0.0
      %1321 = vmatpush.msra.mxu0 0.0
      %1322 = vmatpush.msra.mxu0 0.0
      %1323 = vmatpush.msra.mxu0 0.0
      %1324 = vmatpush.msra.mxu0 0.0
      %1325 = vmatpush.msra.mxu0 %v1188
      %1326 = vmatmul.f32.gmra.mxu0 %v1176
      %v1327 = vpop.f32.mrf.mxu0
      %v1328 = vadd.f32 0.0, %v1327
      %1329 = vdwg.mxu0
      %1330 = vmatpush.msra.mxu0 0.0
      %1331 = vmatpush.msra.mxu0 0.0
      %1332 = vmatpush.msra.mxu0 0.0
      %1333 = vmatpush.msra.mxu0 0.0
      %1334 = vmatpush.msra.mxu0 0.0
      %1335 = vmatpush.msra.mxu0 0.0
      %1336 = vmatpush.msra.mxu0 0.0
      %1337 = vmatpush.msra.mxu0 0.0
      %1338 = vmatpush.msra.mxu0 0.0
      %1339 = vmatpush.msra.mxu0 0.0
      %1340 = vmatpush.msra.mxu0 0.0
      %1341 = vmatpush.msra.mxu0 0.0
      %1342 = vmatpush.msra.mxu0 0.0
      %1343 = vmatpush.msra.mxu0 0.0
      %1344 = vmatpush.msra.mxu0 0.0
      %1345 = vmatpush.msra.mxu0 %v1190
      %1346 = vmatmul.f32.gmra.mxu0 %v1176
      %v1347 = vpop.f32.mrf.mxu0
      %v1348 = vadd.f32 0.0, %v1347
      %1349 = vdwg.mxu0
      %1350 = vmatpush.msra.mxu0 0.0
      %1351 = vmatpush.msra.mxu0 0.0
      %1352 = vmatpush.msra.mxu0 0.0
      %1353 = vmatpush.msra.mxu0 0.0
      %1354 = vmatpush.msra.mxu0 0.0
      %1355 = vmatpush.msra.mxu0 0.0
      %1356 = vmatpush.msra.mxu0 0.0
      %1357 = vmatpush.msra.mxu0 0.0
      %1358 = vmatpush.msra.mxu0 0.0
      %1359 = vmatpush.msra.mxu0 0.0
      %1360 = vmatpush.msra.mxu0 0.0
      %1361 = vmatpush.msra.mxu0 0.0
      %1362 = vmatpush.msra.mxu0 0.0
      %1363 = vmatpush.msra.mxu0 0.0
      %1364 = vmatpush.msra.mxu0 0.0
      %1365 = vmatpush.msra.mxu0 %v1192
      %1366 = vmatmul.f32.gmra.mxu0 %v1176
      %v1367 = vpop.f32.mrf.mxu0
      %v1368 = vadd.f32 0.0, %v1367
      %1369 = vdwg.mxu0
      %1370 = vmatpush.msra.mxu0 0.0
      %1371 = vmatpush.msra.mxu0 0.0
      %1372 = vmatpush.msra.mxu0 0.0
      %1373 = vmatpush.msra.mxu0 0.0
      %1374 = vmatpush.msra.mxu0 0.0
      %1375 = vmatpush.msra.mxu0 0.0
      %1376 = vmatpush.msra.mxu0 0.0
      %1377 = vmatpush.msra.mxu0 0.0
      %1378 = vmatpush.msra.mxu0 0.0
      %1379 = vmatpush.msra.mxu0 0.0
      %1380 = vmatpush.msra.mxu0 0.0
      %1381 = vmatpush.msra.mxu0 0.0
      %1382 = vmatpush.msra.mxu0 0.0
      %1383 = vmatpush.msra.mxu0 0.0
      %1384 = vmatpush.msra.mxu0 0.0
      %1385 = vmatpush.msra.mxu0 %v1194
      %1386 = vmatmul.f32.gmra.mxu0 %v1176
      %v1387 = vpop.f32.mrf.mxu0
      %v1388 = vadd.f32 0.0, %v1387
      %1389 = vdwg.mxu0
      %1390 = vmatpush.msra.mxu0 0.0
      %1391 = vmatpush.msra.mxu0 0.0
      %1392 = vmatpush.msra.mxu0 0.0
      %1393 = vmatpush.msra.mxu0 0.0
      %1394 = vmatpush.msra.mxu0 0.0
      %1395 = vmatpush.msra.mxu0 0.0
      %1396 = vmatpush.msra.mxu0 0.0
      %1397 = vmatpush.msra.mxu0 0.0
      %1398 = vmatpush.msra.mxu0 0.0
      %1399 = vmatpush.msra.mxu0 0.0
      %1400 = vmatpush.msra.mxu0 0.0
      %1401 = vmatpush.msra.mxu0 0.0
      %1402 = vmatpush.msra.mxu0 0.0
      %1403 = vmatpush.msra.mxu0 0.0
      %1404 = vmatpush.msra.mxu0 0.0
      %1405 = vmatpush.msra.mxu0 %v1196
      %1406 = vmatmul.f32.gmra.mxu0 %v1176
      %v1407 = vpop.f32.mrf.mxu0
      %v1408 = vadd.f32 0.0, %v1407
      %1409 = vdwg.mxu0
      %1410 = vmatpush.msra.mxu0 0.0
      %1411 = vmatpush.msra.mxu0 0.0
      %1412 = vmatpush.msra.mxu0 0.0
      %1413 = vmatpush.msra.mxu0 0.0
      %1414 = vmatpush.msra.mxu0 0.0
      %1415 = vmatpush.msra.mxu0 0.0
      %1416 = vmatpush.msra.mxu0 0.0
      %1417 = vmatpush.msra.mxu0 0.0
      %1418 = vmatpush.msra.mxu0 0.0
      %1419 = vmatpush.msra.mxu0 0.0
      %1420 = vmatpush.msra.mxu0 0.0
      %1421 = vmatpush.msra.mxu0 0.0
      %1422 = vmatpush.msra.mxu0 0.0
      %1423 = vmatpush.msra.mxu0 0.0
      %1424 = vmatpush.msra.mxu0 0.0
      %1425 = vmatpush.msra.mxu0 %v1198
      %1426 = vmatmul.f32.gmra.mxu0 %v1176
      %v1427 = vpop.f32.mrf.mxu0
      %v1428 = vadd.f32 0.0, %v1427
      %1429 = vdwg.mxu0
      %1430 = vmatpush.msra.mxu0 0.0
      %1431 = vmatpush.msra.mxu0 0.0
      %1432 = vmatpush.msra.mxu0 0.0
      %1433 = vmatpush.msra.mxu0 0.0
      %1434 = vmatpush.msra.mxu0 0.0
      %1435 = vmatpush.msra.mxu0 0.0
      %1436 = vmatpush.msra.mxu0 0.0
      %1437 = vmatpush.msra.mxu0 0.0
      %1438 = vmatpush.msra.mxu0 0.0
      %1439 = vmatpush.msra.mxu0 0.0
      %1440 = vmatpush.msra.mxu0 0.0
      %1441 = vmatpush.msra.mxu0 0.0
      %1442 = vmatpush.msra.mxu0 0.0
      %1443 = vmatpush.msra.mxu0 0.0
      %1444 = vmatpush.msra.mxu0 0.0
      %1445 = vmatpush.msra.mxu0 %v1200
      %1446 = vmatmul.f32.gmra.mxu0 %v1176
      %v1447 = vpop.f32.mrf.mxu0
      %v1448 = vadd.f32 0.0, %v1447
      %1449 = vdwg.mxu0
      %1450 = vmatpush.msra.mxu0 0.0
      %1451 = vmatpush.msra.mxu0 0.0
      %1452 = vmatpush.msra.mxu0 0.0
      %1453 = vmatpush.msra.mxu0 0.0
      %1454 = vmatpush.msra.mxu0 0.0
      %1455 = vmatpush.msra.mxu0 0.0
      %1456 = vmatpush.msra.mxu0 0.0
      %1457 = vmatpush.msra.mxu0 0.0
      %1458 = vmatpush.msra.mxu0 0.0
      %1459 = vmatpush.msra.mxu0 0.0
      %1460 = vmatpush.msra.mxu0 0.0
      %1461 = vmatpush.msra.mxu0 0.0
      %1462 = vmatpush.msra.mxu0 0.0
      %1463 = vmatpush.msra.mxu0 0.0
      %1464 = vmatpush.msra.mxu0 0.0
      %1465 = vmatpush.msra.mxu0 %v1202
      %1466 = vmatmul.f32.gmra.mxu0 %v1176
      %v1467 = vpop.f32.mrf.mxu0
      %v1468 = vadd.f32 0.0, %v1467
      %1469 = vdwg.mxu0
      %1470 = vmatpush.msra.mxu0 0.0
      %1471 = vmatpush.msra.mxu0 0.0
      %1472 = vmatpush.msra.mxu0 0.0
      %1473 = vmatpush.msra.mxu0 0.0
      %1474 = vmatpush.msra.mxu0 0.0
      %1475 = vmatpush.msra.mxu0 0.0
      %1476 = vmatpush.msra.mxu0 0.0
      %1477 = vmatpush.msra.mxu0 0.0
      %1478 = vmatpush.msra.mxu0 0.0
      %1479 = vmatpush.msra.mxu0 0.0
      %1480 = vmatpush.msra.mxu0 0.0
      %1481 = vmatpush.msra.mxu0 0.0
      %1482 = vmatpush.msra.mxu0 0.0
      %1483 = vmatpush.msra.mxu0 0.0
      %1484 = vmatpush.msra.mxu0 0.0
      %1485 = vmatpush.msra.mxu0 %v1204
      %1486 = vmatmul.f32.gmra.mxu0 %v1176
      %v1487 = vpop.f32.mrf.mxu0
      %v1488 = vadd.f32 0.0, %v1487
      %1489 = vdwg.mxu0
      %1490 = vmatpush.msra.mxu0 0.0
      %1491 = vmatpush.msra.mxu0 0.0
      %1492 = vmatpush.msra.mxu0 0.0
      %1493 = vmatpush.msra.mxu0 0.0
      %1494 = vmatpush.msra.mxu0 0.0
      %1495 = vmatpush.msra.mxu0 0.0
      %1496 = vmatpush.msra.mxu0 0.0
      %1497 = vmatpush.msra.mxu0 0.0
      %1498 = vmatpush.msra.mxu0 0.0
      %1499 = vmatpush.msra.mxu0 0.0
      %1500 = vmatpush.msra.mxu0 0.0
      %1501 = vmatpush.msra.mxu0 0.0
      %1502 = vmatpush.msra.mxu0 0.0
      %1503 = vmatpush.msra.mxu0 0.0
      %1504 = vmatpush.msra.mxu0 0.0
      %1505 = vmatpush.msra.mxu0 %v1206
      %1506 = vmatmul.f32.gmra.mxu0 %v1176
      %v1507 = vpop.f32.mrf.mxu0
      %v1508 = vadd.f32 0.0, %v1507
      %1509 = vdwg.mxu0
      %1510 = vmatpush.msra.mxu0 0.0
      %1511 = vmatpush.msra.mxu0 0.0
      %1512 = vmatpush.msra.mxu0 0.0
      %1513 = vmatpush.msra.mxu0 0.0
      %1514 = vmatpush.msra.mxu0 0.0
      %1515 = vmatpush.msra.mxu0 0.0
      %1516 = vmatpush.msra.mxu0 0.0
      %1517 = vmatpush.msra.mxu0 0.0
      %1518 = vmatpush.msra.mxu0 0.0
      %1519 = vmatpush.msra.mxu0 0.0
      %1520 = vmatpush.msra.mxu0 0.0
      %1521 = vmatpush.msra.mxu0 0.0
      %1522 = vmatpush.msra.mxu0 0.0
      %1523 = vmatpush.msra.mxu0 0.0
      %1524 = vmatpush.msra.mxu0 0.0
      %1525 = vmatpush.msra.mxu0 %v1208
      %1526 = vmatmul.f32.gmra.mxu0 %v1176
      %v1527 = vpop.f32.mrf.mxu0
      %v1528 = vadd.f32 0.0, %v1527
      %1529 = vdwg.mxu0
      %v1530 = vadd.f32 %v773, %v1228
      %v1531 = vadd.f32 %v793, %v1248
      %v1532 = vadd.f32 %v813, %v1268
      %v1533 = vadd.f32 %v833, %v1288
      %v1534 = vadd.f32 %v853, %v1308
      %v1535 = vadd.f32 %v873, %v1328
      %v1536 = vadd.f32 %v893, %v1348
      %v1537 = vadd.f32 %v913, %v1368
      %v1538 = vadd.f32 %v933, %v1388
      %v1539 = vadd.f32 %v953, %v1408
      %v1540 = vadd.f32 %v973, %v1428
      %v1541 = vadd.f32 %v993, %v1448
      %v1542 = vadd.f32 %v1013, %v1468
      %v1543 = vadd.f32 %v1033, %v1488
      %v1544 = vadd.f32 %v1053, %v1508
      %v1545 = vadd.f32 %v1073, %v1528
      %v1546 = vld [vmem:[%s224 + $0x4] sm:$0xff]
      %v1547 = vld [vmem:[%s224 + $0xc] sm:$0xff]
      %v1548 = vld [vmem:[%s224 + $0x14] sm:$0xff]
      %v1549 = vld [vmem:[%s224 + $0x1c] sm:$0xff]
      %v1550 = vld [vmem:[%s224 + $0x24] sm:$0xff]
      %v1551 = vld [vmem:[%s224 + $0x2c] sm:$0xff]
      %v1552 = vld [vmem:[%s224 + $0x34] sm:$0xff]
      %v1553 = vld [vmem:[%s224 + $0x3c] sm:$0xff]
      %s1554 = scalar_lea.vmem %s1, 24
      %v1555 = vld [vmem:[%s1554] sm:$0xff]
      %1564 = vst [vmem:[#allocation1] ss:$2 sm:$0xff] %v1546
      %s1565 = scalar_lea.vmem [#allocation1], 16
      %1566 = vst [vmem:[%s1565] ss:$2 sm:$0xff] %v1547
      %s1567 = scalar_lea.vmem [#allocation1], 32
      %1568 = vst [vmem:[%s1567] ss:$2 sm:$0xff] %v1548
      %s1569 = scalar_lea.vmem [#allocation1], 48
      %1570 = vst [vmem:[%s1569] ss:$2 sm:$0xff] %v1549
      %v1571 = vld.sshfl [vmem:[#allocation1] sm:$0xff pattern:$0x75316420]
      %v1572 = vld.sshfl [vmem:[#allocation1 + $0x8] sm:$0xff pattern:$0x75316420]
      %v1573 = vld.sshfl [vmem:[#allocation1 + $0x10] sm:$0xff pattern:$0x75316420]
      %v1574 = vld.sshfl [vmem:[#allocation1 + $0x18] sm:$0xff pattern:$0x75316420]
      %v1575 = vld.sshfl [vmem:[#allocation1 + $0x20] sm:$0xff pattern:$0x75316420]
      %v1576 = vld.sshfl [vmem:[#allocation1 + $0x28] sm:$0xff pattern:$0x75316420]
      %v1577 = vld.sshfl [vmem:[#allocation1 + $0x30] sm:$0xff pattern:$0x75316420]
      %v1578 = vld.sshfl [vmem:[#allocation1 + $0x38] sm:$0xff pattern:$0x75316420]
      %1579 = vst [vmem:[#allocation1] ss:$2 sm:$0xff] %v1550
      %1580 = vst [vmem:[%s1565] ss:$2 sm:$0xff] %v1551
      %1581 = vst [vmem:[%s1567] ss:$2 sm:$0xff] %v1552
      %1582 = vst [vmem:[%s1569] ss:$2 sm:$0xff] %v1553
      %v1583 = vld.sshfl [vmem:[#allocation1] sm:$0xff pattern:$0x75316420]
      %v1584 = vld.sshfl [vmem:[#allocation1 + $0x8] sm:$0xff pattern:$0x75316420]
      %v1585 = vld.sshfl [vmem:[#allocation1 + $0x10] sm:$0xff pattern:$0x75316420]
      %v1586 = vld.sshfl [vmem:[#allocation1 + $0x18] sm:$0xff pattern:$0x75316420]
      %v1587 = vld.sshfl [vmem:[#allocation1 + $0x20] sm:$0xff pattern:$0x75316420]
      %v1588 = vld.sshfl [vmem:[#allocation1 + $0x28] sm:$0xff pattern:$0x75316420]
      %v1589 = vld.sshfl [vmem:[#allocation1 + $0x30] sm:$0xff pattern:$0x75316420]
      %v1590 = vld.sshfl [vmem:[#allocation1 + $0x38] sm:$0xff pattern:$0x75316420]
      %v1592 = vsel %vm336, %v1555, 0
      %v1594 = vsel %vm340, %v1571, 0
      %v1596 = vsel %vm340, %v1572, 0
      %v1598 = vsel %vm340, %v1573, 0
      %v1600 = vsel %vm340, %v1574, 0
      %v1602 = vsel %vm340, %v1575, 0
      %v1604 = vsel %vm340, %v1576, 0
      %v1606 = vsel %vm340, %v1577, 0
      %v1608 = vsel %vm340, %v1578, 0
      %v1610 = vsel %vm340, %v1583, 0
      %v1612 = vsel %vm340, %v1584, 0
      %v1614 = vsel %vm340, %v1585, 0
      %v1616 = vsel %vm340, %v1586, 0
      %v1618 = vsel %vm340, %v1587, 0
      %v1620 = vsel %vm340, %v1588, 0
      %v1622 = vsel %vm340, %v1589, 0
      %v1624 = vsel %vm340, %v1590, 0
      %1626 = vmatpush.msra.mxu0 0.0
      %1627 = vmatpush.msra.mxu0 0.0
      %1628 = vmatpush.msra.mxu0 0.0
      %1629 = vmatpush.msra.mxu0 0.0
      %1630 = vmatpush.msra.mxu0 0.0
      %1631 = vmatpush.msra.mxu0 0.0
      %1632 = vmatpush.msra.mxu0 0.0
      %1633 = vmatpush.msra.mxu0 0.0
      %1634 = vmatpush.msra.mxu0 0.0
      %1635 = vmatpush.msra.mxu0 0.0
      %1636 = vmatpush.msra.mxu0 0.0
      %1637 = vmatpush.msra.mxu0 0.0
      %1638 = vmatpush.msra.mxu0 0.0
      %1639 = vmatpush.msra.mxu0 0.0
      %1640 = vmatpush.msra.mxu0 0.0
      %1641 = vmatpush.msra.mxu0 %v1594
      %1642 = vmatmul.f32.gmra.mxu0 %v1592
      %v1643 = vpop.f32.mrf.mxu0
      %v1644 = vadd.f32 0.0, %v1643
      %1645 = vdwg.mxu0
      %1646 = vmatpush.msra.mxu0 0.0
      %1647 = vmatpush.msra.mxu0 0.0
      %1648 = vmatpush.msra.mxu0 0.0
      %1649 = vmatpush.msra.mxu0 0.0
      %1650 = vmatpush.msra.mxu0 0.0
      %1651 = vmatpush.msra.mxu0 0.0
      %1652 = vmatpush.msra.mxu0 0.0
      %1653 = vmatpush.msra.mxu0 0.0
      %1654 = vmatpush.msra.mxu0 0.0
      %1655 = vmatpush.msra.mxu0 0.0
      %1656 = vmatpush.msra.mxu0 0.0
      %1657 = vmatpush.msra.mxu0 0.0
      %1658 = vmatpush.msra.mxu0 0.0
      %1659 = vmatpush.msra.mxu0 0.0
      %1660 = vmatpush.msra.mxu0 0.0
      %1661 = vmatpush.msra.mxu0 %v1596
      %1662 = vmatmul.f32.gmra.mxu0 %v1592
      %v1663 = vpop.f32.mrf.mxu0
      %v1664 = vadd.f32 0.0, %v1663
      %1665 = vdwg.mxu0
      %1666 = vmatpush.msra.mxu0 0.0
      %1667 = vmatpush.msra.mxu0 0.0
      %1668 = vmatpush.msra.mxu0 0.0
      %1669 = vmatpush.msra.mxu0 0.0
      %1670 = vmatpush.msra.mxu0 0.0
      %1671 = vmatpush.msra.mxu0 0.0
      %1672 = vmatpush.msra.mxu0 0.0
      %1673 = vmatpush.msra.mxu0 0.0
      %1674 = vmatpush.msra.mxu0 0.0
      %1675 = vmatpush.msra.mxu0 0.0
      %1676 = vmatpush.msra.mxu0 0.0
      %1677 = vmatpush.msra.mxu0 0.0
      %1678 = vmatpush.msra.mxu0 0.0
      %1679 = vmatpush.msra.mxu0 0.0
      %1680 = vmatpush.msra.mxu0 0.0
      %1681 = vmatpush.msra.mxu0 %v1598
      %1682 = vmatmul.f32.gmra.mxu0 %v1592
      %v1683 = vpop.f32.mrf.mxu0
      %v1684 = vadd.f32 0.0, %v1683
      %1685 = vdwg.mxu0
      %1686 = vmatpush.msra.mxu0 0.0
      %1687 = vmatpush.msra.mxu0 0.0
      %1688 = vmatpush.msra.mxu0 0.0
      %1689 = vmatpush.msra.mxu0 0.0
      %1690 = vmatpush.msra.mxu0 0.0
      %1691 = vmatpush.msra.mxu0 0.0
      %1692 = vmatpush.msra.mxu0 0.0
      %1693 = vmatpush.msra.mxu0 0.0
      %1694 = vmatpush.msra.mxu0 0.0
      %1695 = vmatpush.msra.mxu0 0.0
      %1696 = vmatpush.msra.mxu0 0.0
      %1697 = vmatpush.msra.mxu0 0.0
      %1698 = vmatpush.msra.mxu0 0.0
      %1699 = vmatpush.msra.mxu0 0.0
      %1700 = vmatpush.msra.mxu0 0.0
      %1701 = vmatpush.msra.mxu0 %v1600
      %1702 = vmatmul.f32.gmra.mxu0 %v1592
      %v1703 = vpop.f32.mrf.mxu0
      %v1704 = vadd.f32 0.0, %v1703
      %1705 = vdwg.mxu0
      %1706 = vmatpush.msra.mxu0 0.0
      %1707 = vmatpush.msra.mxu0 0.0
      %1708 = vmatpush.msra.mxu0 0.0
      %1709 = vmatpush.msra.mxu0 0.0
      %1710 = vmatpush.msra.mxu0 0.0
      %1711 = vmatpush.msra.mxu0 0.0
      %1712 = vmatpush.msra.mxu0 0.0
      %1713 = vmatpush.msra.mxu0 0.0
      %1714 = vmatpush.msra.mxu0 0.0
      %1715 = vmatpush.msra.mxu0 0.0
      %1716 = vmatpush.msra.mxu0 0.0
      %1717 = vmatpush.msra.mxu0 0.0
      %1718 = vmatpush.msra.mxu0 0.0
      %1719 = vmatpush.msra.mxu0 0.0
      %1720 = vmatpush.msra.mxu0 0.0
      %1721 = vmatpush.msra.mxu0 %v1602
      %1722 = vmatmul.f32.gmra.mxu0 %v1592
      %v1723 = vpop.f32.mrf.mxu0
      %v1724 = vadd.f32 0.0, %v1723
      %1725 = vdwg.mxu0
      %1726 = vmatpush.msra.mxu0 0.0
      %1727 = vmatpush.msra.mxu0 0.0
      %1728 = vmatpush.msra.mxu0 0.0
      %1729 = vmatpush.msra.mxu0 0.0
      %1730 = vmatpush.msra.mxu0 0.0
      %1731 = vmatpush.msra.mxu0 0.0
      %1732 = vmatpush.msra.mxu0 0.0
      %1733 = vmatpush.msra.mxu0 0.0
      %1734 = vmatpush.msra.mxu0 0.0
      %1735 = vmatpush.msra.mxu0 0.0
      %1736 = vmatpush.msra.mxu0 0.0
      %1737 = vmatpush.msra.mxu0 0.0
      %1738 = vmatpush.msra.mxu0 0.0
      %1739 = vmatpush.msra.mxu0 0.0
      %1740 = vmatpush.msra.mxu0 0.0
      %1741 = vmatpush.msra.mxu0 %v1604
      %1742 = vmatmul.f32.gmra.mxu0 %v1592
      %v1743 = vpop.f32.mrf.mxu0
      %v1744 = vadd.f32 0.0, %v1743
      %1745 = vdwg.mxu0
      %1746 = vmatpush.msra.mxu0 0.0
      %1747 = vmatpush.msra.mxu0 0.0
      %1748 = vmatpush.msra.mxu0 0.0
      %1749 = vmatpush.msra.mxu0 0.0
      %1750 = vmatpush.msra.mxu0 0.0
      %1751 = vmatpush.msra.mxu0 0.0
      %1752 = vmatpush.msra.mxu0 0.0
      %1753 = vmatpush.msra.mxu0 0.0
      %1754 = vmatpush.msra.mxu0 0.0
      %1755 = vmatpush.msra.mxu0 0.0
      %1756 = vmatpush.msra.mxu0 0.0
      %1757 = vmatpush.msra.mxu0 0.0
      %1758 = vmatpush.msra.mxu0 0.0
      %1759 = vmatpush.msra.mxu0 0.0
      %1760 = vmatpush.msra.mxu0 0.0
      %1761 = vmatpush.msra.mxu0 %v1606
      %1762 = vmatmul.f32.gmra.mxu0 %v1592
      %v1763 = vpop.f32.mrf.mxu0
      %v1764 = vadd.f32 0.0, %v1763
      %1765 = vdwg.mxu0
      %1766 = vmatpush.msra.mxu0 0.0
      %1767 = vmatpush.msra.mxu0 0.0
      %1768 = vmatpush.msra.mxu0 0.0
      %1769 = vmatpush.msra.mxu0 0.0
      %1770 = vmatpush.msra.mxu0 0.0
      %1771 = vmatpush.msra.mxu0 0.0
      %1772 = vmatpush.msra.mxu0 0.0
      %1773 = vmatpush.msra.mxu0 0.0
      %1774 = vmatpush.msra.mxu0 0.0
      %1775 = vmatpush.msra.mxu0 0.0
      %1776 = vmatpush.msra.mxu0 0.0
      %1777 = vmatpush.msra.mxu0 0.0
      %1778 = vmatpush.msra.mxu0 0.0
      %1779 = vmatpush.msra.mxu0 0.0
      %1780 = vmatpush.msra.mxu0 0.0
      %1781 = vmatpush.msra.mxu0 %v1608
      %1782 = vmatmul.f32.gmra.mxu0 %v1592
      %v1783 = vpop.f32.mrf.mxu0
      %v1784 = vadd.f32 0.0, %v1783
      %1785 = vdwg.mxu0
      %1786 = vmatpush.msra.mxu0 0.0
      %1787 = vmatpush.msra.mxu0 0.0
      %1788 = vmatpush.msra.mxu0 0.0
      %1789 = vmatpush.msra.mxu0 0.0
      %1790 = vmatpush.msra.mxu0 0.0
      %1791 = vmatpush.msra.mxu0 0.0
      %1792 = vmatpush.msra.mxu0 0.0
      %1793 = vmatpush.msra.mxu0 0.0
      %1794 = vmatpush.msra.mxu0 0.0
      %1795 = vmatpush.msra.mxu0 0.0
      %1796 = vmatpush.msra.mxu0 0.0
      %1797 = vmatpush.msra.mxu0 0.0
      %1798 = vmatpush.msra.mxu0 0.0
      %1799 = vmatpush.msra.mxu0 0.0
      %1800 = vmatpush.msra.mxu0 0.0
      %1801 = vmatpush.msra.mxu0 %v1610
      %1802 = vmatmul.f32.gmra.mxu0 %v1592
      %v1803 = vpop.f32.mrf.mxu0
      %v1804 = vadd.f32 0.0, %v1803
      %1805 = vdwg.mxu0
      %1806 = vmatpush.msra.mxu0 0.0
      %1807 = vmatpush.msra.mxu0 0.0
      %1808 = vmatpush.msra.mxu0 0.0
      %1809 = vmatpush.msra.mxu0 0.0
      %1810 = vmatpush.msra.mxu0 0.0
      %1811 = vmatpush.msra.mxu0 0.0
      %1812 = vmatpush.msra.mxu0 0.0
      %1813 = vmatpush.msra.mxu0 0.0
      %1814 = vmatpush.msra.mxu0 0.0
      %1815 = vmatpush.msra.mxu0 0.0
      %1816 = vmatpush.msra.mxu0 0.0
      %1817 = vmatpush.msra.mxu0 0.0
      %1818 = vmatpush.msra.mxu0 0.0
      %1819 = vmatpush.msra.mxu0 0.0
      %1820 = vmatpush.msra.mxu0 0.0
      %1821 = vmatpush.msra.mxu0 %v1612
      %1822 = vmatmul.f32.gmra.mxu0 %v1592
      %v1823 = vpop.f32.mrf.mxu0
      %v1824 = vadd.f32 0.0, %v1823
      %1825 = vdwg.mxu0
      %1826 = vmatpush.msra.mxu0 0.0
      %1827 = vmatpush.msra.mxu0 0.0
      %1828 = vmatpush.msra.mxu0 0.0
      %1829 = vmatpush.msra.mxu0 0.0
      %1830 = vmatpush.msra.mxu0 0.0
      %1831 = vmatpush.msra.mxu0 0.0
      %1832 = vmatpush.msra.mxu0 0.0
      %1833 = vmatpush.msra.mxu0 0.0
      %1834 = vmatpush.msra.mxu0 0.0
      %1835 = vmatpush.msra.mxu0 0.0
      %1836 = vmatpush.msra.mxu0 0.0
      %1837 = vmatpush.msra.mxu0 0.0
      %1838 = vmatpush.msra.mxu0 0.0
      %1839 = vmatpush.msra.mxu0 0.0
      %1840 = vmatpush.msra.mxu0 0.0
      %1841 = vmatpush.msra.mxu0 %v1614
      %1842 = vmatmul.f32.gmra.mxu0 %v1592
      %v1843 = vpop.f32.mrf.mxu0
      %v1844 = vadd.f32 0.0, %v1843
      %1845 = vdwg.mxu0
      %1846 = vmatpush.msra.mxu0 0.0
      %1847 = vmatpush.msra.mxu0 0.0
      %1848 = vmatpush.msra.mxu0 0.0
      %1849 = vmatpush.msra.mxu0 0.0
      %1850 = vmatpush.msra.mxu0 0.0
      %1851 = vmatpush.msra.mxu0 0.0
      %1852 = vmatpush.msra.mxu0 0.0
      %1853 = vmatpush.msra.mxu0 0.0
      %1854 = vmatpush.msra.mxu0 0.0
      %1855 = vmatpush.msra.mxu0 0.0
      %1856 = vmatpush.msra.mxu0 0.0
      %1857 = vmatpush.msra.mxu0 0.0
      %1858 = vmatpush.msra.mxu0 0.0
      %1859 = vmatpush.msra.mxu0 0.0
      %1860 = vmatpush.msra.mxu0 0.0
      %1861 = vmatpush.msra.mxu0 %v1616
      %1862 = vmatmul.f32.gmra.mxu0 %v1592
      %v1863 = vpop.f32.mrf.mxu0
      %v1864 = vadd.f32 0.0, %v1863
      %1865 = vdwg.mxu0
      %1866 = vmatpush.msra.mxu0 0.0
      %1867 = vmatpush.msra.mxu0 0.0
      %1868 = vmatpush.msra.mxu0 0.0
      %1869 = vmatpush.msra.mxu0 0.0
      %1870 = vmatpush.msra.mxu0 0.0
      %1871 = vmatpush.msra.mxu0 0.0
      %1872 = vmatpush.msra.mxu0 0.0
      %1873 = vmatpush.msra.mxu0 0.0
      %1874 = vmatpush.msra.mxu0 0.0
      %1875 = vmatpush.msra.mxu0 0.0
      %1876 = vmatpush.msra.mxu0 0.0
      %1877 = vmatpush.msra.mxu0 0.0
      %1878 = vmatpush.msra.mxu0 0.0
      %1879 = vmatpush.msra.mxu0 0.0
      %1880 = vmatpush.msra.mxu0 0.0
      %1881 = vmatpush.msra.mxu0 %v1618
      %1882 = vmatmul.f32.gmra.mxu0 %v1592
      %v1883 = vpop.f32.mrf.mxu0
      %v1884 = vadd.f32 0.0, %v1883
      %1885 = vdwg.mxu0
      %1886 = vmatpush.msra.mxu0 0.0
      %1887 = vmatpush.msra.mxu0 0.0
      %1888 = vmatpush.msra.mxu0 0.0
      %1889 = vmatpush.msra.mxu0 0.0
      %1890 = vmatpush.msra.mxu0 0.0
      %1891 = vmatpush.msra.mxu0 0.0
      %1892 = vmatpush.msra.mxu0 0.0
      %1893 = vmatpush.msra.mxu0 0.0
      %1894 = vmatpush.msra.mxu0 0.0
      %1895 = vmatpush.msra.mxu0 0.0
      %1896 = vmatpush.msra.mxu0 0.0
      %1897 = vmatpush.msra.mxu0 0.0
      %1898 = vmatpush.msra.mxu0 0.0
      %1899 = vmatpush.msra.mxu0 0.0
      %1900 = vmatpush.msra.mxu0 0.0
      %1901 = vmatpush.msra.mxu0 %v1620
      %1902 = vmatmul.f32.gmra.mxu0 %v1592
      %v1903 = vpop.f32.mrf.mxu0
      %v1904 = vadd.f32 0.0, %v1903
      %1905 = vdwg.mxu0
      %1906 = vmatpush.msra.mxu0 0.0
      %1907 = vmatpush.msra.mxu0 0.0
      %1908 = vmatpush.msra.mxu0 0.0
      %1909 = vmatpush.msra.mxu0 0.0
      %1910 = vmatpush.msra.mxu0 0.0
      %1911 = vmatpush.msra.mxu0 0.0
      %1912 = vmatpush.msra.mxu0 0.0
      %1913 = vmatpush.msra.mxu0 0.0
      %1914 = vmatpush.msra.mxu0 0.0
      %1915 = vmatpush.msra.mxu0 0.0
      %1916 = vmatpush.msra.mxu0 0.0
      %1917 = vmatpush.msra.mxu0 0.0
      %1918 = vmatpush.msra.mxu0 0.0
      %1919 = vmatpush.msra.mxu0 0.0
      %1920 = vmatpush.msra.mxu0 0.0
      %1921 = vmatpush.msra.mxu0 %v1622
      %1922 = vmatmul.f32.gmra.mxu0 %v1592
      %v1923 = vpop.f32.mrf.mxu0
      %v1924 = vadd.f32 0.0, %v1923
      %1925 = vdwg.mxu0
      %1926 = vmatpush.msra.mxu0 0.0
      %1927 = vmatpush.msra.mxu0 0.0
      %1928 = vmatpush.msra.mxu0 0.0
      %1929 = vmatpush.msra.mxu0 0.0
      %1930 = vmatpush.msra.mxu0 0.0
      %1931 = vmatpush.msra.mxu0 0.0
      %1932 = vmatpush.msra.mxu0 0.0
      %1933 = vmatpush.msra.mxu0 0.0
      %1934 = vmatpush.msra.mxu0 0.0
      %1935 = vmatpush.msra.mxu0 0.0
      %1936 = vmatpush.msra.mxu0 0.0
      %1937 = vmatpush.msra.mxu0 0.0
      %1938 = vmatpush.msra.mxu0 0.0
      %1939 = vmatpush.msra.mxu0 0.0
      %1940 = vmatpush.msra.mxu0 0.0
      %1941 = vmatpush.msra.mxu0 %v1624
      %1942 = vmatmul.f32.gmra.mxu0 %v1592
      %v1943 = vpop.f32.mrf.mxu0
      %v1944 = vadd.f32 0.0, %v1943
      %1945 = vdwg.mxu0
      %v1946 = vadd.f32 %v1530, %v1644
      %v1947 = vadd.f32 %v1531, %v1664
      %v1948 = vadd.f32 %v1532, %v1684
      %v1949 = vadd.f32 %v1533, %v1704
      %v1950 = vadd.f32 %v1534, %v1724
      %v1951 = vadd.f32 %v1535, %v1744
      %v1952 = vadd.f32 %v1536, %v1764
      %v1953 = vadd.f32 %v1537, %v1784
      %v1954 = vadd.f32 %v1538, %v1804
      %v1955 = vadd.f32 %v1539, %v1824
      %v1956 = vadd.f32 %v1540, %v1844
      %v1957 = vadd.f32 %v1541, %v1864
      %v1958 = vadd.f32 %v1542, %v1884
      %v1959 = vadd.f32 %v1543, %v1904
      %v1960 = vadd.f32 %v1544, %v1924
      %v1961 = vadd.f32 %v1545, %v1944
      %v1962 = vld [vmem:[%s224 + $0x4] sm:$0xff]
      %v1963 = vld [vmem:[%s224 + $0xc] sm:$0xff]
      %v1964 = vld [vmem:[%s224 + $0x14] sm:$0xff]
      %v1965 = vld [vmem:[%s224 + $0x1c] sm:$0xff]
      %v1966 = vld [vmem:[%s224 + $0x24] sm:$0xff]
      %v1967 = vld [vmem:[%s224 + $0x2c] sm:$0xff]
      %v1968 = vld [vmem:[%s224 + $0x34] sm:$0xff]
      %v1969 = vld [vmem:[%s224 + $0x3c] sm:$0xff]
      %v1970 = vld [vmem:[%s224 + $0x44] sm:$0xf]
      %s1971 = scalar_lea.vmem %s1, 32
      %v1972 = vld [vmem:[%s1971] sm:$0xff]
      %1982 = vst [vmem:[#allocation1] ss:$2 sm:$0xff] %v1962
      %s1983 = scalar_lea.vmem [#allocation1], 16
      %1984 = vst [vmem:[%s1983] ss:$2 sm:$0xff] %v1963
      %s1985 = scalar_lea.vmem [#allocation1], 32
      %1986 = vst [vmem:[%s1985] ss:$2 sm:$0xff] %v1964
      %s1987 = scalar_lea.vmem [#allocation1], 48
      %1988 = vst [vmem:[%s1987] ss:$2 sm:$0xff] %v1965
      %v1989 = vld.sshfl [vmem:[#allocation1] sm:$0xff pattern:$0x75316420]
      %v1990 = vld.sshfl [vmem:[#allocation1 + $0x8] sm:$0xff pattern:$0x75316420]
      %v1991 = vld.sshfl [vmem:[#allocation1 + $0x10] sm:$0xff pattern:$0x75316420]
      %v1992 = vld.sshfl [vmem:[#allocation1 + $0x18] sm:$0xff pattern:$0x75316420]
      %v1993 = vld.sshfl [vmem:[#allocation1 + $0x20] sm:$0xff pattern:$0x75316420]
      %v1994 = vld.sshfl [vmem:[#allocation1 + $0x28] sm:$0xff pattern:$0x75316420]
      %v1995 = vld.sshfl [vmem:[#allocation1 + $0x30] sm:$0xff pattern:$0x75316420]
      %v1996 = vld.sshfl [vmem:[#allocation1 + $0x38] sm:$0xff pattern:$0x75316420]
      %1997 = vst [vmem:[#allocation1] ss:$2 sm:$0xff] %v1966
      %1998 = vst [vmem:[%s1983] ss:$2 sm:$0xff] %v1967
      %1999 = vst [vmem:[%s1985] ss:$2 sm:$0xff] %v1968
      %2000 = vst [vmem:[%s1987] ss:$2 sm:$0xff] %v1969
      %v2001 = vld.sshfl [vmem:[#allocation1] sm:$0xff pattern:$0x75316420]
      %v2002 = vld.sshfl [vmem:[#allocation1 + $0x8] sm:$0xff pattern:$0x75316420]
      %v2003 = vld.sshfl [vmem:[#allocation1 + $0x10] sm:$0xff pattern:$0x75316420]
      %v2004 = vld.sshfl [vmem:[#allocation1 + $0x18] sm:$0xff pattern:$0x75316420]
      %v2005 = vld.sshfl [vmem:[#allocation1 + $0x20] sm:$0xff pattern:$0x75316420]
      %v2006 = vld.sshfl [vmem:[#allocation1 + $0x28] sm:$0xff pattern:$0x75316420]
      %v2007 = vld.sshfl [vmem:[#allocation1 + $0x30] sm:$0xff pattern:$0x75316420]
      %v2008 = vld.sshfl [vmem:[#allocation1 + $0x38] sm:$0xff pattern:$0x75316420]
      %2009 = vst [vmem:[#allocation1] ss:$2 sm:$0xff] %v1970
      %v2010 = vld.sshfl [vmem:[#allocation1] sm:$0xff pattern:$0x75316420]
      %2011 = vrot.lane.b32.xlu0 %v1989, 127
      %v2012 = vpop.permute.xlu0 %2011
      %2013 = vrot.lane.b32.xlu0 %v1990, 127
      %v2014 = vpop.permute.xlu0 %2013
      %2015 = vrot.lane.b32.xlu0 %v1991, 127
      %v2016 = vpop.permute.xlu0 %2015
      %2017 = vrot.lane.b32.xlu0 %v1992, 127
      %v2018 = vpop.permute.xlu0 %2017
      %2019 = vrot.lane.b32.xlu0 %v1993, 127
      %v2020 = vpop.permute.xlu0 %2019
      %2021 = vrot.lane.b32.xlu0 %v1994, 127
      %v2022 = vpop.permute.xlu0 %2021
      %2023 = vrot.lane.b32.xlu0 %v1995, 127
      %v2024 = vpop.permute.xlu0 %2023
      %2025 = vrot.lane.b32.xlu0 %v1996, 127
      %v2026 = vpop.permute.xlu0 %2025
      %2027 = vrot.lane.b32.xlu0 %v2001, 127
      %v2028 = vpop.permute.xlu0 %2027
      %2029 = vrot.lane.b32.xlu0 %v2002, 127
      %v2030 = vpop.permute.xlu0 %2029
      %2031 = vrot.lane.b32.xlu0 %v2003, 127
      %v2032 = vpop.permute.xlu0 %2031
      %2033 = vrot.lane.b32.xlu0 %v2004, 127
      %v2034 = vpop.permute.xlu0 %2033
      %2035 = vrot.lane.b32.xlu0 %v2005, 127
      %v2036 = vpop.permute.xlu0 %2035
      %2037 = vrot.lane.b32.xlu0 %v2006, 127
      %v2038 = vpop.permute.xlu0 %2037
      %2039 = vrot.lane.b32.xlu0 %v2007, 127
      %v2040 = vpop.permute.xlu0 %2039
      %2041 = vrot.lane.b32.xlu0 %v2008, 127
      %v2042 = vpop.permute.xlu0 %2041
      %2043 = vrot.lane.b32.xlu0 %v2010, 127
      %v2044 = vpop.permute.xlu0 %2043
      %v2045 = vsel %vm319, %v2012, %v2014
      %v2046 = vsel %vm319, %v2014, %v2016
      %v2047 = vsel %vm319, %v2016, %v2018
      %v2048 = vsel %vm319, %v2018, %v2020
      %v2049 = vsel %vm319, %v2020, %v2022
      %v2050 = vsel %vm319, %v2022, %v2024
      %v2051 = vsel %vm319, %v2024, %v2026
      %v2052 = vsel %vm319, %v2026, %v2028
      %v2053 = vsel %vm319, %v2028, %v2030
      %v2054 = vsel %vm319, %v2030, %v2032
      %v2055 = vsel %vm319, %v2032, %v2034
      %v2056 = vsel %vm319, %v2034, %v2036
      %v2057 = vsel %vm319, %v2036, %v2038
      %v2058 = vsel %vm319, %v2038, %v2040
      %v2059 = vsel %vm319, %v2040, %v2042
      %v2060 = vsel %vm319, %v2042, %v2044
      %v2062 = vsel %vm336, %v1972, 0
      %v2064 = vsel %vm340, %v2045, 0
      %v2066 = vsel %vm340, %v2046, 0
      %v2068 = vsel %vm340, %v2047, 0
      %v2070 = vsel %vm340, %v2048, 0
      %v2072 = vsel %vm340, %v2049, 0
      %v2074 = vsel %vm340, %v2050, 0
      %v2076 = vsel %vm340, %v2051, 0
      %v2078 = vsel %vm340, %v2052, 0
      %v2080 = vsel %vm340, %v2053, 0
      %v2082 = vsel %vm340, %v2054, 0
      %v2084 = vsel %vm340, %v2055, 0
      %v2086 = vsel %vm340, %v2056, 0
      %v2088 = vsel %vm340, %v2057, 0
      %v2090 = vsel %vm340, %v2058, 0
      %v2092 = vsel %vm340, %v2059, 0
      %v2094 = vsel %vm340, %v2060, 0
      %2096 = vmatpush.msra.mxu0 0.0
      %2097 = vmatpush.msra.mxu0 0.0
      %2098 = vmatpush.msra.mxu0 0.0
      %2099 = vmatpush.msra.mxu0 0.0
      %2100 = vmatpush.msra.mxu0 0.0
      %2101 = vmatpush.msra.mxu0 0.0
      %2102 = vmatpush.msra.mxu0 0.0
      %2103 = vmatpush.msra.mxu0 0.0
      %2104 = vmatpush.msra.mxu0 0.0
      %2105 = vmatpush.msra.mxu0 0.0
      %2106 = vmatpush.msra.mxu0 0.0
      %2107 = vmatpush.msra.mxu0 0.0
      %2108 = vmatpush.msra.mxu0 0.0
      %2109 = vmatpush.msra.mxu0 0.0
      %2110 = vmatpush.msra.mxu0 0.0
      %2111 = vmatpush.msra.mxu0 %v2064
      %2112 = vmatmul.f32.gmra.mxu0 %v2062
      %v2113 = vpop.f32.mrf.mxu0
      %v2114 = vadd.f32 0.0, %v2113
      %2115 = vdwg.mxu0
      %2116 = vmatpush.msra.mxu0 0.0
      %2117 = vmatpush.msra.mxu0 0.0
      %2118 = vmatpush.msra.mxu0 0.0
      %2119 = vmatpush.msra.mxu0 0.0
      %2120 = vmatpush.msra.mxu0 0.0
      %2121 = vmatpush.msra.mxu0 0.0
      %2122 = vmatpush.msra.mxu0 0.0
      %2123 = vmatpush.msra.mxu0 0.0
      %2124 = vmatpush.msra.mxu0 0.0
      %2125 = vmatpush.msra.mxu0 0.0
      %2126 = vmatpush.msra.mxu0 0.0
      %2127 = vmatpush.msra.mxu0 0.0
      %2128 = vmatpush.msra.mxu0 0.0
      %2129 = vmatpush.msra.mxu0 0.0
      %2130 = vmatpush.msra.mxu0 0.0
      %2131 = vmatpush.msra.mxu0 %v2066
      %2132 = vmatmul.f32.gmra.mxu0 %v2062
      %v2133 = vpop.f32.mrf.mxu0
      %v2134 = vadd.f32 0.0, %v2133
      %2135 = vdwg.mxu0
      %2136 = vmatpush.msra.mxu0 0.0
      %2137 = vmatpush.msra.mxu0 0.0
      %2138 = vmatpush.msra.mxu0 0.0
      %2139 = vmatpush.msra.mxu0 0.0
      %2140 = vmatpush.msra.mxu0 0.0
      %2141 = vmatpush.msra.mxu0 0.0
      %2142 = vmatpush.msra.mxu0 0.0
      %2143 = vmatpush.msra.mxu0 0.0
      %2144 = vmatpush.msra.mxu0 0.0
      %2145 = vmatpush.msra.mxu0 0.0
      %2146 = vmatpush.msra.mxu0 0.0
      %2147 = vmatpush.msra.mxu0 0.0
      %2148 = vmatpush.msra.mxu0 0.0
      %2149 = vmatpush.msra.mxu0 0.0
      %2150 = vmatpush.msra.mxu0 0.0
      %2151 = vmatpush.msra.mxu0 %v2068
      %2152 = vmatmul.f32.gmra.mxu0 %v2062
      %v2153 = vpop.f32.mrf.mxu0
      %v2154 = vadd.f32 0.0, %v2153
      %2155 = vdwg.mxu0
      %2156 = vmatpush.msra.mxu0 0.0
      %2157 = vmatpush.msra.mxu0 0.0
      %2158 = vmatpush.msra.mxu0 0.0
      %2159 = vmatpush.msra.mxu0 0.0
      %2160 = vmatpush.msra.mxu0 0.0
      %2161 = vmatpush.msra.mxu0 0.0
      %2162 = vmatpush.msra.mxu0 0.0
      %2163 = vmatpush.msra.mxu0 0.0
      %2164 = vmatpush.msra.mxu0 0.0
      %2165 = vmatpush.msra.mxu0 0.0
      %2166 = vmatpush.msra.mxu0 0.0
      %2167 = vmatpush.msra.mxu0 0.0
      %2168 = vmatpush.msra.mxu0 0.0
      %2169 = vmatpush.msra.mxu0 0.0
      %2170 = vmatpush.msra.mxu0 0.0
      %2171 = vmatpush.msra.mxu0 %v2070
      %2172 = vmatmul.f32.gmra.mxu0 %v2062
      %v2173 = vpop.f32.mrf.mxu0
      %v2174 = vadd.f32 0.0, %v2173
      %2175 = vdwg.mxu0
      %2176 = vmatpush.msra.mxu0 0.0
      %2177 = vmatpush.msra.mxu0 0.0
      %2178 = vmatpush.msra.mxu0 0.0
      %2179 = vmatpush.msra.mxu0 0.0
      %2180 = vmatpush.msra.mxu0 0.0
      %2181 = vmatpush.msra.mxu0 0.0
      %2182 = vmatpush.msra.mxu0 0.0
      %2183 = vmatpush.msra.mxu0 0.0
      %2184 = vmatpush.msra.mxu0 0.0
      %2185 = vmatpush.msra.mxu0 0.0
      %2186 = vmatpush.msra.mxu0 0.0
      %2187 = vmatpush.msra.mxu0 0.0
      %2188 = vmatpush.msra.mxu0 0.0
      %2189 = vmatpush.msra.mxu0 0.0
      %2190 = vmatpush.msra.mxu0 0.0
      %2191 = vmatpush.msra.mxu0 %v2072
      %2192 = vmatmul.f32.gmra.mxu0 %v2062
      %v2193 = vpop.f32.mrf.mxu0
      %v2194 = vadd.f32 0.0, %v2193
      %2195 = vdwg.mxu0
      %2196 = vmatpush.msra.mxu0 0.0
      %2197 = vmatpush.msra.mxu0 0.0
      %2198 = vmatpush.msra.mxu0 0.0
      %2199 = vmatpush.msra.mxu0 0.0
      %2200 = vmatpush.msra.mxu0 0.0
      %2201 = vmatpush.msra.mxu0 0.0
      %2202 = vmatpush.msra.mxu0 0.0
      %2203 = vmatpush.msra.mxu0 0.0
      %2204 = vmatpush.msra.mxu0 0.0
      %2205 = vmatpush.msra.mxu0 0.0
      %2206 = vmatpush.msra.mxu0 0.0
      %2207 = vmatpush.msra.mxu0 0.0
      %2208 = vmatpush.msra.mxu0 0.0
      %2209 = vmatpush.msra.mxu0 0.0
      %2210 = vmatpush.msra.mxu0 0.0
      %2211 = vmatpush.msra.mxu0 %v2074
      %2212 = vmatmul.f32.gmra.mxu0 %v2062
      %v2213 = vpop.f32.mrf.mxu0
      %v2214 = vadd.f32 0.0, %v2213
      %2215 = vdwg.mxu0
      %2216 = vmatpush.msra.mxu0 0.0
      %2217 = vmatpush.msra.mxu0 0.0
      %2218 = vmatpush.msra.mxu0 0.0
      %2219 = vmatpush.msra.mxu0 0.0
      %2220 = vmatpush.msra.mxu0 0.0
      %2221 = vmatpush.msra.mxu0 0.0
      %2222 = vmatpush.msra.mxu0 0.0
      %2223 = vmatpush.msra.mxu0 0.0
      %2224 = vmatpush.msra.mxu0 0.0
      %2225 = vmatpush.msra.mxu0 0.0
      %2226 = vmatpush.msra.mxu0 0.0
      %2227 = vmatpush.msra.mxu0 0.0
      %2228 = vmatpush.msra.mxu0 0.0
      %2229 = vmatpush.msra.mxu0 0.0
      %2230 = vmatpush.msra.mxu0 0.0
      %2231 = vmatpush.msra.mxu0 %v2076
      %2232 = vmatmul.f32.gmra.mxu0 %v2062
      %v2233 = vpop.f32.mrf.mxu0
      %v2234 = vadd.f32 0.0, %v2233
      %2235 = vdwg.mxu0
      %2236 = vmatpush.msra.mxu0 0.0
      %2237 = vmatpush.msra.mxu0 0.0
      %2238 = vmatpush.msra.mxu0 0.0
      %2239 = vmatpush.msra.mxu0 0.0
      %2240 = vmatpush.msra.mxu0 0.0
      %2241 = vmatpush.msra.mxu0 0.0
      %2242 = vmatpush.msra.mxu0 0.0
      %2243 = vmatpush.msra.mxu0 0.0
      %2244 = vmatpush.msra.mxu0 0.0
      %2245 = vmatpush.msra.mxu0 0.0
      %2246 = vmatpush.msra.mxu0 0.0
      %2247 = vmatpush.msra.mxu0 0.0
      %2248 = vmatpush.msra.mxu0 0.0
      %2249 = vmatpush.msra.mxu0 0.0
      %2250 = vmatpush.msra.mxu0 0.0
      %2251 = vmatpush.msra.mxu0 %v2078
      %2252 = vmatmul.f32.gmra.mxu0 %v2062
      %v2253 = vpop.f32.mrf.mxu0
      %v2254 = vadd.f32 0.0, %v2253
      %2255 = vdwg.mxu0
      %2256 = vmatpush.msra.mxu0 0.0
      %2257 = vmatpush.msra.mxu0 0.0
      %2258 = vmatpush.msra.mxu0 0.0
      %2259 = vmatpush.msra.mxu0 0.0
      %2260 = vmatpush.msra.mxu0 0.0
      %2261 = vmatpush.msra.mxu0 0.0
      %2262 = vmatpush.msra.mxu0 0.0
      %2263 = vmatpush.msra.mxu0 0.0
      %2264 = vmatpush.msra.mxu0 0.0
      %2265 = vmatpush.msra.mxu0 0.0
      %2266 = vmatpush.msra.mxu0 0.0
      %2267 = vmatpush.msra.mxu0 0.0
      %2268 = vmatpush.msra.mxu0 0.0
      %2269 = vmatpush.msra.mxu0 0.0
      %2270 = vmatpush.msra.mxu0 0.0
      %2271 = vmatpush.msra.mxu0 %v2080
      %2272 = vmatmul.f32.gmra.mxu0 %v2062
      %v2273 = vpop.f32.mrf.mxu0
      %v2274 = vadd.f32 0.0, %v2273
      %2275 = vdwg.mxu0
      %2276 = vmatpush.msra.mxu0 0.0
      %2277 = vmatpush.msra.mxu0 0.0
      %2278 = vmatpush.msra.mxu0 0.0
      %2279 = vmatpush.msra.mxu0 0.0
      %2280 = vmatpush.msra.mxu0 0.0
      %2281 = vmatpush.msra.mxu0 0.0
      %2282 = vmatpush.msra.mxu0 0.0
      %2283 = vmatpush.msra.mxu0 0.0
      %2284 = vmatpush.msra.mxu0 0.0
      %2285 = vmatpush.msra.mxu0 0.0
      %2286 = vmatpush.msra.mxu0 0.0
      %2287 = vmatpush.msra.mxu0 0.0
      %2288 = vmatpush.msra.mxu0 0.0
      %2289 = vmatpush.msra.mxu0 0.0
      %2290 = vmatpush.msra.mxu0 0.0
      %2291 = vmatpush.msra.mxu0 %v2082
      %2292 = vmatmul.f32.gmra.mxu0 %v2062
      %v2293 = vpop.f32.mrf.mxu0
      %v2294 = vadd.f32 0.0, %v2293
      %2295 = vdwg.mxu0
      %2296 = vmatpush.msra.mxu0 0.0
      %2297 = vmatpush.msra.mxu0 0.0
      %2298 = vmatpush.msra.mxu0 0.0
      %2299 = vmatpush.msra.mxu0 0.0
      %2300 = vmatpush.msra.mxu0 0.0
      %2301 = vmatpush.msra.mxu0 0.0
      %2302 = vmatpush.msra.mxu0 0.0
      %2303 = vmatpush.msra.mxu0 0.0
      %2304 = vmatpush.msra.mxu0 0.0
      %2305 = vmatpush.msra.mxu0 0.0
      %2306 = vmatpush.msra.mxu0 0.0
      %2307 = vmatpush.msra.mxu0 0.0
      %2308 = vmatpush.msra.mxu0 0.0
      %2309 = vmatpush.msra.mxu0 0.0
      %2310 = vmatpush.msra.mxu0 0.0
      %2311 = vmatpush.msra.mxu0 %v2084
      %2312 = vmatmul.f32.gmra.mxu0 %v2062
      %v2313 = vpop.f32.mrf.mxu0
      %v2314 = vadd.f32 0.0, %v2313
      %2315 = vdwg.mxu0
      %2316 = vmatpush.msra.mxu0 0.0
      %2317 = vmatpush.msra.mxu0 0.0
      %2318 = vmatpush.msra.mxu0 0.0
      %2319 = vmatpush.msra.mxu0 0.0
      %2320 = vmatpush.msra.mxu0 0.0
      %2321 = vmatpush.msra.mxu0 0.0
      %2322 = vmatpush.msra.mxu0 0.0
      %2323 = vmatpush.msra.mxu0 0.0
      %2324 = vmatpush.msra.mxu0 0.0
      %2325 = vmatpush.msra.mxu0 0.0
      %2326 = vmatpush.msra.mxu0 0.0
      %2327 = vmatpush.msra.mxu0 0.0
      %2328 = vmatpush.msra.mxu0 0.0
      %2329 = vmatpush.msra.mxu0 0.0
      %2330 = vmatpush.msra.mxu0 0.0
      %2331 = vmatpush.msra.mxu0 %v2086
      %2332 = vmatmul.f32.gmra.mxu0 %v2062
      %v2333 = vpop.f32.mrf.mxu0
      %v2334 = vadd.f32 0.0, %v2333
      %2335 = vdwg.mxu0
      %2336 = vmatpush.msra.mxu0 0.0
      %2337 = vmatpush.msra.mxu0 0.0
      %2338 = vmatpush.msra.mxu0 0.0
      %2339 = vmatpush.msra.mxu0 0.0
      %2340 = vmatpush.msra.mxu0 0.0
      %2341 = vmatpush.msra.mxu0 0.0
      %2342 = vmatpush.msra.mxu0 0.0
      %2343 = vmatpush.msra.mxu0 0.0
      %2344 = vmatpush.msra.mxu0 0.0
      %2345 = vmatpush.msra.mxu0 0.0
      %2346 = vmatpush.msra.mxu0 0.0
      %2347 = vmatpush.msra.mxu0 0.0
      %2348 = vmatpush.msra.mxu0 0.0
      %2349 = vmatpush.msra.mxu0 0.0
      %2350 = vmatpush.msra.mxu0 0.0
      %2351 = vmatpush.msra.mxu0 %v2088
      %2352 = vmatmul.f32.gmra.mxu0 %v2062
      %v2353 = vpop.f32.mrf.mxu0
      %v2354 = vadd.f32 0.0, %v2353
      %2355 = vdwg.mxu0
      %2356 = vmatpush.msra.mxu0 0.0
      %2357 = vmatpush.msra.mxu0 0.0
      %2358 = vmatpush.msra.mxu0 0.0
      %2359 = vmatpush.msra.mxu0 0.0
      %2360 = vmatpush.msra.mxu0 0.0
      %2361 = vmatpush.msra.mxu0 0.0
      %2362 = vmatpush.msra.mxu0 0.0
      %2363 = vmatpush.msra.mxu0 0.0
      %2364 = vmatpush.msra.mxu0 0.0
      %2365 = vmatpush.msra.mxu0 0.0
      %2366 = vmatpush.msra.mxu0 0.0
      %2367 = vmatpush.msra.mxu0 0.0
      %2368 = vmatpush.msra.mxu0 0.0
      %2369 = vmatpush.msra.mxu0 0.0
      %2370 = vmatpush.msra.mxu0 0.0
      %2371 = vmatpush.msra.mxu0 %v2090
      %2372 = vmatmul.f32.gmra.mxu0 %v2062
      %v2373 = vpop.f32.mrf.mxu0
      %v2374 = vadd.f32 0.0, %v2373
      %2375 = vdwg.mxu0
      %2376 = vmatpush.msra.mxu0 0.0
      %2377 = vmatpush.msra.mxu0 0.0
      %2378 = vmatpush.msra.mxu0 0.0
      %2379 = vmatpush.msra.mxu0 0.0
      %2380 = vmatpush.msra.mxu0 0.0
      %2381 = vmatpush.msra.mxu0 0.0
      %2382 = vmatpush.msra.mxu0 0.0
      %2383 = vmatpush.msra.mxu0 0.0
      %2384 = vmatpush.msra.mxu0 0.0
      %2385 = vmatpush.msra.mxu0 0.0
      %2386 = vmatpush.msra.mxu0 0.0
      %2387 = vmatpush.msra.mxu0 0.0
      %2388 = vmatpush.msra.mxu0 0.0
      %2389 = vmatpush.msra.mxu0 0.0
      %2390 = vmatpush.msra.mxu0 0.0
      %2391 = vmatpush.msra.mxu0 %v2092
      %2392 = vmatmul.f32.gmra.mxu0 %v2062
      %v2393 = vpop.f32.mrf.mxu0
      %v2394 = vadd.f32 0.0, %v2393
      %2395 = vdwg.mxu0
      %2396 = vmatpush.msra.mxu0 0.0
      %2397 = vmatpush.msra.mxu0 0.0
      %2398 = vmatpush.msra.mxu0 0.0
      %2399 = vmatpush.msra.mxu0 0.0
      %2400 = vmatpush.msra.mxu0 0.0
      %2401 = vmatpush.msra.mxu0 0.0
      %2402 = vmatpush.msra.mxu0 0.0
      %2403 = vmatpush.msra.mxu0 0.0
      %2404 = vmatpush.msra.mxu0 0.0
      %2405 = vmatpush.msra.mxu0 0.0
      %2406 = vmatpush.msra.mxu0 0.0
      %2407 = vmatpush.msra.mxu0 0.0
      %2408 = vmatpush.msra.mxu0 0.0
      %2409 = vmatpush.msra.mxu0 0.0
      %2410 = vmatpush.msra.mxu0 0.0
      %2411 = vmatpush.msra.mxu0 %v2094
      %2412 = vmatmul.f32.gmra.mxu0 %v2062
      %v2413 = vpop.f32.mrf.mxu0
      %v2414 = vadd.f32 0.0, %v2413
      %2415 = vdwg.mxu0
      %v2416 = vadd.f32 %v1946, %v2114
      %v2417 = vadd.f32 %v1947, %v2134
      %v2418 = vadd.f32 %v1948, %v2154
      %v2419 = vadd.f32 %v1949, %v2174
      %v2420 = vadd.f32 %v1950, %v2194
      %v2421 = vadd.f32 %v1951, %v2214
      %v2422 = vadd.f32 %v1952, %v2234
      %v2423 = vadd.f32 %v1953, %v2254
      %v2424 = vadd.f32 %v1954, %v2274
      %v2425 = vadd.f32 %v1955, %v2294
      %v2426 = vadd.f32 %v1956, %v2314
      %v2427 = vadd.f32 %v1957, %v2334
      %v2428 = vadd.f32 %v1958, %v2354
      %v2429 = vadd.f32 %v1959, %v2374
      %v2430 = vadd.f32 %v1960, %v2394
      %v2431 = vadd.f32 %v1961, %v2414
      %v2432 = vld [vmem:[%s224 + $0x4] sm:$0xff]
      %v2433 = vld [vmem:[%s224 + $0xc] sm:$0xff]
      %v2434 = vld [vmem:[%s224 + $0x14] sm:$0xff]
      %v2435 = vld [vmem:[%s224 + $0x1c] sm:$0xff]
      %v2436 = vld [vmem:[%s224 + $0x24] sm:$0xff]
      %v2437 = vld [vmem:[%s224 + $0x2c] sm:$0xff]
      %v2438 = vld [vmem:[%s224 + $0x34] sm:$0xff]
      %v2439 = vld [vmem:[%s224 + $0x3c] sm:$0xff]
      %v2440 = vld [vmem:[%s224 + $0x44] sm:$0xf]
      %s2441 = scalar_lea.vmem %s1, 40
      %v2442 = vld [vmem:[%s2441] sm:$0xff]
      %2452 = vst [vmem:[#allocation1] ss:$2 sm:$0xff] %v2432
      %s2453 = scalar_lea.vmem [#allocation1], 16
      %2454 = vst [vmem:[%s2453] ss:$2 sm:$0xff] %v2433
      %s2455 = scalar_lea.vmem [#allocation1], 32
      %2456 = vst [vmem:[%s2455] ss:$2 sm:$0xff] %v2434
      %s2457 = scalar_lea.vmem [#allocation1], 48
      %2458 = vst [vmem:[%s2457] ss:$2 sm:$0xff] %v2435
      %v2459 = vld.sshfl [vmem:[#allocation1] sm:$0xff pattern:$0x75316420]
      %v2460 = vld.sshfl [vmem:[#allocation1 + $0x8] sm:$0xff pattern:$0x75316420]
      %v2461 = vld.sshfl [vmem:[#allocation1 + $0x10] sm:$0xff pattern:$0x75316420]
      %v2462 = vld.sshfl [vmem:[#allocation1 + $0x18] sm:$0xff pattern:$0x75316420]
      %v2463 = vld.sshfl [vmem:[#allocation1 + $0x20] sm:$0xff pattern:$0x75316420]
      %v2464 = vld.sshfl [vmem:[#allocation1 + $0x28] sm:$0xff pattern:$0x75316420]
      %v2465 = vld.sshfl [vmem:[#allocation1 + $0x30] sm:$0xff pattern:$0x75316420]
      %v2466 = vld.sshfl [vmem:[#allocation1 + $0x38] sm:$0xff pattern:$0x75316420]
      %2467 = vst [vmem:[#allocation1] ss:$2 sm:$0xff] %v2436
      %2468 = vst [vmem:[%s2453] ss:$2 sm:$0xff] %v2437
      %2469 = vst [vmem:[%s2455] ss:$2 sm:$0xff] %v2438
      %2470 = vst [vmem:[%s2457] ss:$2 sm:$0xff] %v2439
      %v2471 = vld.sshfl [vmem:[#allocation1] sm:$0xff pattern:$0x75316420]
      %v2472 = vld.sshfl [vmem:[#allocation1 + $0x8] sm:$0xff pattern:$0x75316420]
      %v2473 = vld.sshfl [vmem:[#allocation1 + $0x10] sm:$0xff pattern:$0x75316420]
      %v2474 = vld.sshfl [vmem:[#allocation1 + $0x18] sm:$0xff pattern:$0x75316420]
      %v2475 = vld.sshfl [vmem:[#allocation1 + $0x20] sm:$0xff pattern:$0x75316420]
      %v2476 = vld.sshfl [vmem:[#allocation1 + $0x28] sm:$0xff pattern:$0x75316420]
      %v2477 = vld.sshfl [vmem:[#allocation1 + $0x30] sm:$0xff pattern:$0x75316420]
      %v2478 = vld.sshfl [vmem:[#allocation1 + $0x38] sm:$0xff pattern:$0x75316420]
      %2479 = vst [vmem:[#allocation1] ss:$2 sm:$0xff] %v2440
      %v2480 = vld.sshfl [vmem:[#allocation1] sm:$0xff pattern:$0x75316420]
      %2481 = vrot.lane.b32.xlu0 %v2459, 126
      %v2482 = vpop.permute.xlu0 %2481
      %2483 = vrot.lane.b32.xlu0 %v2460, 126
      %v2484 = vpop.permute.xlu0 %2483
      %2485 = vrot.lane.b32.xlu0 %v2461, 126
      %v2486 = vpop.permute.xlu0 %2485
      %2487 = vrot.lane.b32.xlu0 %v2462, 126
      %v2488 = vpop.permute.xlu0 %2487
      %2489 = vrot.lane.b32.xlu0 %v2463, 126
      %v2490 = vpop.permute.xlu0 %2489
      %2491 = vrot.lane.b32.xlu0 %v2464, 126
      %v2492 = vpop.permute.xlu0 %2491
      %2493 = vrot.lane.b32.xlu0 %v2465, 126
      %v2494 = vpop.permute.xlu0 %2493
      %2495 = vrot.lane.b32.xlu0 %v2466, 126
      %v2496 = vpop.permute.xlu0 %2495
      %2497 = vrot.lane.b32.xlu0 %v2471, 126
      %v2498 = vpop.permute.xlu0 %2497
      %2499 = vrot.lane.b32.xlu0 %v2472, 126
      %v2500 = vpop.permute.xlu0 %2499
      %2501 = vrot.lane.b32.xlu0 %v2473, 126
      %v2502 = vpop.permute.xlu0 %2501
      %2503 = vrot.lane.b32.xlu0 %v2474, 126
      %v2504 = vpop.permute.xlu0 %2503
      %2505 = vrot.lane.b32.xlu0 %v2475, 126
      %v2506 = vpop.permute.xlu0 %2505
      %2507 = vrot.lane.b32.xlu0 %v2476, 126
      %v2508 = vpop.permute.xlu0 %2507
      %2509 = vrot.lane.b32.xlu0 %v2477, 126
      %v2510 = vpop.permute.xlu0 %2509
      %2511 = vrot.lane.b32.xlu0 %v2478, 126
      %v2512 = vpop.permute.xlu0 %2511
      %2513 = vrot.lane.b32.xlu0 %v2480, 126
      %v2514 = vpop.permute.xlu0 %2513
      %v2515 = vsel %vm1158, %v2482, %v2484
      %v2516 = vsel %vm1158, %v2484, %v2486
      %v2517 = vsel %vm1158, %v2486, %v2488
      %v2518 = vsel %vm1158, %v2488, %v2490
      %v2519 = vsel %vm1158, %v2490, %v2492
      %v2520 = vsel %vm1158, %v2492, %v2494
      %v2521 = vsel %vm1158, %v2494, %v2496
      %v2522 = vsel %vm1158, %v2496, %v2498
      %v2523 = vsel %vm1158, %v2498, %v2500
      %v2524 = vsel %vm1158, %v2500, %v2502
      %v2525 = vsel %vm1158, %v2502, %v2504
      %v2526 = vsel %vm1158, %v2504, %v2506
      %v2527 = vsel %vm1158, %v2506, %v2508
      %v2528 = vsel %vm1158, %v2508, %v2510
      %v2529 = vsel %vm1158, %v2510, %v2512
      %v2530 = vsel %vm1158, %v2512, %v2514
      %v2532 = vsel %vm336, %v2442, 0
      %v2534 = vsel %vm340, %v2515, 0
      %v2536 = vsel %vm340, %v2516, 0
      %v2538 = vsel %vm340, %v2517, 0
      %v2540 = vsel %vm340, %v2518, 0
      %v2542 = vsel %vm340, %v2519, 0
      %v2544 = vsel %vm340, %v2520, 0
      %v2546 = vsel %vm340, %v2521, 0
      %v2548 = vsel %vm340, %v2522, 0
      %v2550 = vsel %vm340, %v2523, 0
      %v2552 = vsel %vm340, %v2524, 0
      %v2554 = vsel %vm340, %v2525, 0
      %v2556 = vsel %vm340, %v2526, 0
      %v2558 = vsel %vm340, %v2527, 0
      %v2560 = vsel %vm340, %v2528, 0
      %v2562 = vsel %vm340, %v2529, 0
      %v2564 = vsel %vm340, %v2530, 0
      %2566 = vmatpush.msra.mxu0 0.0
      %2567 = vmatpush.msra.mxu0 0.0
      %2568 = vmatpush.msra.mxu0 0.0
      %2569 = vmatpush.msra.mxu0 0.0
      %2570 = vmatpush.msra.mxu0 0.0
      %2571 = vmatpush.msra.mxu0 0.0
      %2572 = vmatpush.msra.mxu0 0.0
      %2573 = vmatpush.msra.mxu0 0.0
      %2574 = vmatpush.msra.mxu0 0.0
      %2575 = vmatpush.msra.mxu0 0.0
      %2576 = vmatpush.msra.mxu0 0.0
      %2577 = vmatpush.msra.mxu0 0.0
      %2578 = vmatpush.msra.mxu0 0.0
      %2579 = vmatpush.msra.mxu0 0.0
      %2580 = vmatpush.msra.mxu0 0.0
      %2581 = vmatpush.msra.mxu0 %v2534
      %2582 = vmatmul.f32.gmra.mxu0 %v2532
      %v2583 = vpop.f32.mrf.mxu0
      %v2584 = vadd.f32 0.0, %v2583
      %2585 = vdwg.mxu0
      %2586 = vmatpush.msra.mxu0 0.0
      %2587 = vmatpush.msra.mxu0 0.0
      %2588 = vmatpush.msra.mxu0 0.0
      %2589 = vmatpush.msra.mxu0 0.0
      %2590 = vmatpush.msra.mxu0 0.0
      %2591 = vmatpush.msra.mxu0 0.0
      %2592 = vmatpush.msra.mxu0 0.0
      %2593 = vmatpush.msra.mxu0 0.0
      %2594 = vmatpush.msra.mxu0 0.0
      %2595 = vmatpush.msra.mxu0 0.0
      %2596 = vmatpush.msra.mxu0 0.0
      %2597 = vmatpush.msra.mxu0 0.0
      %2598 = vmatpush.msra.mxu0 0.0
      %2599 = vmatpush.msra.mxu0 0.0
      %2600 = vmatpush.msra.mxu0 0.0
      %2601 = vmatpush.msra.mxu0 %v2536
      %2602 = vmatmul.f32.gmra.mxu0 %v2532
      %v2603 = vpop.f32.mrf.mxu0
      %v2604 = vadd.f32 0.0, %v2603
      %2605 = vdwg.mxu0
      %2606 = vmatpush.msra.mxu0 0.0
      %2607 = vmatpush.msra.mxu0 0.0
      %2608 = vmatpush.msra.mxu0 0.0
      %2609 = vmatpush.msra.mxu0 0.0
      %2610 = vmatpush.msra.mxu0 0.0
      %2611 = vmatpush.msra.mxu0 0.0
      %2612 = vmatpush.msra.mxu0 0.0
      %2613 = vmatpush.msra.mxu0 0.0
      %2614 = vmatpush.msra.mxu0 0.0
      %2615 = vmatpush.msra.mxu0 0.0
      %2616 = vmatpush.msra.mxu0 0.0
      %2617 = vmatpush.msra.mxu0 0.0
      %2618 = vmatpush.msra.mxu0 0.0
      %2619 = vmatpush.msra.mxu0 0.0
      %2620 = vmatpush.msra.mxu0 0.0
      %2621 = vmatpush.msra.mxu0 %v2538
      %2622 = vmatmul.f32.gmra.mxu0 %v2532
      %v2623 = vpop.f32.mrf.mxu0
      %v2624 = vadd.f32 0.0, %v2623
      %2625 = vdwg.mxu0
      %2626 = vmatpush.msra.mxu0 0.0
      %2627 = vmatpush.msra.mxu0 0.0
      %2628 = vmatpush.msra.mxu0 0.0
      %2629 = vmatpush.msra.mxu0 0.0
      %2630 = vmatpush.msra.mxu0 0.0
      %2631 = vmatpush.msra.mxu0 0.0
      %2632 = vmatpush.msra.mxu0 0.0
      %2633 = vmatpush.msra.mxu0 0.0
      %2634 = vmatpush.msra.mxu0 0.0
      %2635 = vmatpush.msra.mxu0 0.0
      %2636 = vmatpush.msra.mxu0 0.0
      %2637 = vmatpush.msra.mxu0 0.0
      %2638 = vmatpush.msra.mxu0 0.0
      %2639 = vmatpush.msra.mxu0 0.0
      %2640 = vmatpush.msra.mxu0 0.0
      %2641 = vmatpush.msra.mxu0 %v2540
      %2642 = vmatmul.f32.gmra.mxu0 %v2532
      %v2643 = vpop.f32.mrf.mxu0
      %v2644 = vadd.f32 0.0, %v2643
      %2645 = vdwg.mxu0
      %2646 = vmatpush.msra.mxu0 0.0
      %2647 = vmatpush.msra.mxu0 0.0
      %2648 = vmatpush.msra.mxu0 0.0
      %2649 = vmatpush.msra.mxu0 0.0
      %2650 = vmatpush.msra.mxu0 0.0
      %2651 = vmatpush.msra.mxu0 0.0
      %2652 = vmatpush.msra.mxu0 0.0
      %2653 = vmatpush.msra.mxu0 0.0
      %2654 = vmatpush.msra.mxu0 0.0
      %2655 = vmatpush.msra.mxu0 0.0
      %2656 = vmatpush.msra.mxu0 0.0
      %2657 = vmatpush.msra.mxu0 0.0
      %2658 = vmatpush.msra.mxu0 0.0
      %2659 = vmatpush.msra.mxu0 0.0
      %2660 = vmatpush.msra.mxu0 0.0
      %2661 = vmatpush.msra.mxu0 %v2542
      %2662 = vmatmul.f32.gmra.mxu0 %v2532
      %v2663 = vpop.f32.mrf.mxu0
      %v2664 = vadd.f32 0.0, %v2663
      %2665 = vdwg.mxu0
      %2666 = vmatpush.msra.mxu0 0.0
      %2667 = vmatpush.msra.mxu0 0.0
      %2668 = vmatpush.msra.mxu0 0.0
      %2669 = vmatpush.msra.mxu0 0.0
      %2670 = vmatpush.msra.mxu0 0.0
      %2671 = vmatpush.msra.mxu0 0.0
      %2672 = vmatpush.msra.mxu0 0.0
      %2673 = vmatpush.msra.mxu0 0.0
      %2674 = vmatpush.msra.mxu0 0.0
      %2675 = vmatpush.msra.mxu0 0.0
      %2676 = vmatpush.msra.mxu0 0.0
      %2677 = vmatpush.msra.mxu0 0.0
      %2678 = vmatpush.msra.mxu0 0.0
      %2679 = vmatpush.msra.mxu0 0.0
      %2680 = vmatpush.msra.mxu0 0.0
      %2681 = vmatpush.msra.mxu0 %v2544
      %2682 = vmatmul.f32.gmra.mxu0 %v2532
      %v2683 = vpop.f32.mrf.mxu0
      %v2684 = vadd.f32 0.0, %v2683
      %2685 = vdwg.mxu0
      %2686 = vmatpush.msra.mxu0 0.0
      %2687 = vmatpush.msra.mxu0 0.0
      %2688 = vmatpush.msra.mxu0 0.0
      %2689 = vmatpush.msra.mxu0 0.0
      %2690 = vmatpush.msra.mxu0 0.0
      %2691 = vmatpush.msra.mxu0 0.0
      %2692 = vmatpush.msra.mxu0 0.0
      %2693 = vmatpush.msra.mxu0 0.0
      %2694 = vmatpush.msra.mxu0 0.0
      %2695 = vmatpush.msra.mxu0 0.0
      %2696 = vmatpush.msra.mxu0 0.0
      %2697 = vmatpush.msra.mxu0 0.0
      %2698 = vmatpush.msra.mxu0 0.0
      %2699 = vmatpush.msra.mxu0 0.0
      %2700 = vmatpush.msra.mxu0 0.0
      %2701 = vmatpush.msra.mxu0 %v2546
      %2702 = vmatmul.f32.gmra.mxu0 %v2532
      %v2703 = vpop.f32.mrf.mxu0
      %v2704 = vadd.f32 0.0, %v2703
      %2705 = vdwg.mxu0
      %2706 = vmatpush.msra.mxu0 0.0
      %2707 = vmatpush.msra.mxu0 0.0
      %2708 = vmatpush.msra.mxu0 0.0
      %2709 = vmatpush.msra.mxu0 0.0
      %2710 = vmatpush.msra.mxu0 0.0
      %2711 = vmatpush.msra.mxu0 0.0
      %2712 = vmatpush.msra.mxu0 0.0
      %2713 = vmatpush.msra.mxu0 0.0
      %2714 = vmatpush.msra.mxu0 0.0
      %2715 = vmatpush.msra.mxu0 0.0
      %2716 = vmatpush.msra.mxu0 0.0
      %2717 = vmatpush.msra.mxu0 0.0
      %2718 = vmatpush.msra.mxu0 0.0
      %2719 = vmatpush.msra.mxu0 0.0
      %2720 = vmatpush.msra.mxu0 0.0
      %2721 = vmatpush.msra.mxu0 %v2548
      %2722 = vmatmul.f32.gmra.mxu0 %v2532
      %v2723 = vpop.f32.mrf.mxu0
      %v2724 = vadd.f32 0.0, %v2723
      %2725 = vdwg.mxu0
      %2726 = vmatpush.msra.mxu0 0.0
      %2727 = vmatpush.msra.mxu0 0.0
      %2728 = vmatpush.msra.mxu0 0.0
      %2729 = vmatpush.msra.mxu0 0.0
      %2730 = vmatpush.msra.mxu0 0.0
      %2731 = vmatpush.msra.mxu0 0.0
      %2732 = vmatpush.msra.mxu0 0.0
      %2733 = vmatpush.msra.mxu0 0.0
      %2734 = vmatpush.msra.mxu0 0.0
      %2735 = vmatpush.msra.mxu0 0.0
      %2736 = vmatpush.msra.mxu0 0.0
      %2737 = vmatpush.msra.mxu0 0.0
      %2738 = vmatpush.msra.mxu0 0.0
      %2739 = vmatpush.msra.mxu0 0.0
      %2740 = vmatpush.msra.mxu0 0.0
      %2741 = vmatpush.msra.mxu0 %v2550
      %2742 = vmatmul.f32.gmra.mxu0 %v2532
      %v2743 = vpop.f32.mrf.mxu0
      %v2744 = vadd.f32 0.0, %v2743
      %2745 = vdwg.mxu0
      %2746 = vmatpush.msra.mxu0 0.0
      %2747 = vmatpush.msra.mxu0 0.0
      %2748 = vmatpush.msra.mxu0 0.0
      %2749 = vmatpush.msra.mxu0 0.0
      %2750 = vmatpush.msra.mxu0 0.0
      %2751 = vmatpush.msra.mxu0 0.0
      %2752 = vmatpush.msra.mxu0 0.0
      %2753 = vmatpush.msra.mxu0 0.0
      %2754 = vmatpush.msra.mxu0 0.0
      %2755 = vmatpush.msra.mxu0 0.0
      %2756 = vmatpush.msra.mxu0 0.0
      %2757 = vmatpush.msra.mxu0 0.0
      %2758 = vmatpush.msra.mxu0 0.0
      %2759 = vmatpush.msra.mxu0 0.0
      %2760 = vmatpush.msra.mxu0 0.0
      %2761 = vmatpush.msra.mxu0 %v2552
      %2762 = vmatmul.f32.gmra.mxu0 %v2532
      %v2763 = vpop.f32.mrf.mxu0
      %v2764 = vadd.f32 0.0, %v2763
      %2765 = vdwg.mxu0
      %2766 = vmatpush.msra.mxu0 0.0
      %2767 = vmatpush.msra.mxu0 0.0
      %2768 = vmatpush.msra.mxu0 0.0
      %2769 = vmatpush.msra.mxu0 0.0
      %2770 = vmatpush.msra.mxu0 0.0
      %2771 = vmatpush.msra.mxu0 0.0
      %2772 = vmatpush.msra.mxu0 0.0
      %2773 = vmatpush.msra.mxu0 0.0
      %2774 = vmatpush.msra.mxu0 0.0
      %2775 = vmatpush.msra.mxu0 0.0
      %2776 = vmatpush.msra.mxu0 0.0
      %2777 = vmatpush.msra.mxu0 0.0
      %2778 = vmatpush.msra.mxu0 0.0
      %2779 = vmatpush.msra.mxu0 0.0
      %2780 = vmatpush.msra.mxu0 0.0
      %2781 = vmatpush.msra.mxu0 %v2554
      %2782 = vmatmul.f32.gmra.mxu0 %v2532
      %v2783 = vpop.f32.mrf.mxu0
      %v2784 = vadd.f32 0.0, %v2783
      %2785 = vdwg.mxu0
      %2786 = vmatpush.msra.mxu0 0.0
      %2787 = vmatpush.msra.mxu0 0.0
      %2788 = vmatpush.msra.mxu0 0.0
      %2789 = vmatpush.msra.mxu0 0.0
      %2790 = vmatpush.msra.mxu0 0.0
      %2791 = vmatpush.msra.mxu0 0.0
      %2792 = vmatpush.msra.mxu0 0.0
      %2793 = vmatpush.msra.mxu0 0.0
      %2794 = vmatpush.msra.mxu0 0.0
      %2795 = vmatpush.msra.mxu0 0.0
      %2796 = vmatpush.msra.mxu0 0.0
      %2797 = vmatpush.msra.mxu0 0.0
      %2798 = vmatpush.msra.mxu0 0.0
      %2799 = vmatpush.msra.mxu0 0.0
      %2800 = vmatpush.msra.mxu0 0.0
      %2801 = vmatpush.msra.mxu0 %v2556
      %2802 = vmatmul.f32.gmra.mxu0 %v2532
      %v2803 = vpop.f32.mrf.mxu0
      %v2804 = vadd.f32 0.0, %v2803
      %2805 = vdwg.mxu0
      %2806 = vmatpush.msra.mxu0 0.0
      %2807 = vmatpush.msra.mxu0 0.0
      %2808 = vmatpush.msra.mxu0 0.0
      %2809 = vmatpush.msra.mxu0 0.0
      %2810 = vmatpush.msra.mxu0 0.0
      %2811 = vmatpush.msra.mxu0 0.0
      %2812 = vmatpush.msra.mxu0 0.0
      %2813 = vmatpush.msra.mxu0 0.0
      %2814 = vmatpush.msra.mxu0 0.0
      %2815 = vmatpush.msra.mxu0 0.0
      %2816 = vmatpush.msra.mxu0 0.0
      %2817 = vmatpush.msra.mxu0 0.0
      %2818 = vmatpush.msra.mxu0 0.0
      %2819 = vmatpush.msra.mxu0 0.0
      %2820 = vmatpush.msra.mxu0 0.0
      %2821 = vmatpush.msra.mxu0 %v2558
      %2822 = vmatmul.f32.gmra.mxu0 %v2532
      %v2823 = vpop.f32.mrf.mxu0
      %v2824 = vadd.f32 0.0, %v2823
      %2825 = vdwg.mxu0
      %2826 = vmatpush.msra.mxu0 0.0
      %2827 = vmatpush.msra.mxu0 0.0
      %2828 = vmatpush.msra.mxu0 0.0
      %2829 = vmatpush.msra.mxu0 0.0
      %2830 = vmatpush.msra.mxu0 0.0
      %2831 = vmatpush.msra.mxu0 0.0
      %2832 = vmatpush.msra.mxu0 0.0
      %2833 = vmatpush.msra.mxu0 0.0
      %2834 = vmatpush.msra.mxu0 0.0
      %2835 = vmatpush.msra.mxu0 0.0
      %2836 = vmatpush.msra.mxu0 0.0
      %2837 = vmatpush.msra.mxu0 0.0
      %2838 = vmatpush.msra.mxu0 0.0
      %2839 = vmatpush.msra.mxu0 0.0
      %2840 = vmatpush.msra.mxu0 0.0
      %2841 = vmatpush.msra.mxu0 %v2560
      %2842 = vmatmul.f32.gmra.mxu0 %v2532
      %v2843 = vpop.f32.mrf.mxu0
      %v2844 = vadd.f32 0.0, %v2843
      %2845 = vdwg.mxu0
      %2846 = vmatpush.msra.mxu0 0.0
      %2847 = vmatpush.msra.mxu0 0.0
      %2848 = vmatpush.msra.mxu0 0.0
      %2849 = vmatpush.msra.mxu0 0.0
      %2850 = vmatpush.msra.mxu0 0.0
      %2851 = vmatpush.msra.mxu0 0.0
      %2852 = vmatpush.msra.mxu0 0.0
      %2853 = vmatpush.msra.mxu0 0.0
      %2854 = vmatpush.msra.mxu0 0.0
      %2855 = vmatpush.msra.mxu0 0.0
      %2856 = vmatpush.msra.mxu0 0.0
      %2857 = vmatpush.msra.mxu0 0.0
      %2858 = vmatpush.msra.mxu0 0.0
      %2859 = vmatpush.msra.mxu0 0.0
      %2860 = vmatpush.msra.mxu0 0.0
      %2861 = vmatpush.msra.mxu0 %v2562
      %2862 = vmatmul.f32.gmra.mxu0 %v2532
      %v2863 = vpop.f32.mrf.mxu0
      %v2864 = vadd.f32 0.0, %v2863
      %2865 = vdwg.mxu0
      %2866 = vmatpush.msra.mxu0 0.0
      %2867 = vmatpush.msra.mxu0 0.0
      %2868 = vmatpush.msra.mxu0 0.0
      %2869 = vmatpush.msra.mxu0 0.0
      %2870 = vmatpush.msra.mxu0 0.0
      %2871 = vmatpush.msra.mxu0 0.0
      %2872 = vmatpush.msra.mxu0 0.0
      %2873 = vmatpush.msra.mxu0 0.0
      %2874 = vmatpush.msra.mxu0 0.0
      %2875 = vmatpush.msra.mxu0 0.0
      %2876 = vmatpush.msra.mxu0 0.0
      %2877 = vmatpush.msra.mxu0 0.0
      %2878 = vmatpush.msra.mxu0 0.0
      %2879 = vmatpush.msra.mxu0 0.0
      %2880 = vmatpush.msra.mxu0 0.0
      %2881 = vmatpush.msra.mxu0 %v2564
      %2882 = vmatmul.f32.gmra.mxu0 %v2532
      %v2883 = vpop.f32.mrf.mxu0
      %v2884 = vadd.f32 0.0, %v2883
      %2885 = vdwg.mxu0
      %v2886 = vadd.f32 %v2416, %v2584
      %v2887 = vadd.f32 %v2417, %v2604
      %v2888 = vadd.f32 %v2418, %v2624
      %v2889 = vadd.f32 %v2419, %v2644
      %v2890 = vadd.f32 %v2420, %v2664
      %v2891 = vadd.f32 %v2421, %v2684
      %v2892 = vadd.f32 %v2422, %v2704
      %v2893 = vadd.f32 %v2423, %v2724
      %v2894 = vadd.f32 %v2424, %v2744
      %v2895 = vadd.f32 %v2425, %v2764
      %v2896 = vadd.f32 %v2426, %v2784
      %v2897 = vadd.f32 %v2427, %v2804
      %v2898 = vadd.f32 %v2428, %v2824
      %v2899 = vadd.f32 %v2429, %v2844
      %v2900 = vadd.f32 %v2430, %v2864
      %v2901 = vadd.f32 %v2431, %v2884
      %v2902 = vld [vmem:[%s224 + $0x8] sm:$0xff]
      %v2903 = vld [vmem:[%s224 + $0x10] sm:$0xff]
      %v2904 = vld [vmem:[%s224 + $0x18] sm:$0xff]
      %v2905 = vld [vmem:[%s224 + $0x20] sm:$0xff]
      %v2906 = vld [vmem:[%s224 + $0x28] sm:$0xff]
      %v2907 = vld [vmem:[%s224 + $0x30] sm:$0xff]
      %v2908 = vld [vmem:[%s224 + $0x38] sm:$0xff]
      %v2909 = vld [vmem:[%s224 + $0x40] sm:$0xff]
      %s2910 = scalar_lea.vmem %s1, 48
      %v2911 = vld [vmem:[%s2910] sm:$0xff]
      %2920 = vst [vmem:[#allocation1] ss:$2 sm:$0xff] %v2902
      %s2921 = scalar_lea.vmem [#allocation1], 16
      %2922 = vst [vmem:[%s2921] ss:$2 sm:$0xff] %v2903
      %s2923 = scalar_lea.vmem [#allocation1], 32
      %2924 = vst [vmem:[%s2923] ss:$2 sm:$0xff] %v2904
      %s2925 = scalar_lea.vmem [#allocation1], 48
      %2926 = vst [vmem:[%s2925] ss:$2 sm:$0xff] %v2905
      %v2927 = vld.sshfl [vmem:[#allocation1] sm:$0xff pattern:$0x75316420]
      %v2928 = vld.sshfl [vmem:[#allocation1 + $0x8] sm:$0xff pattern:$0x75316420]
      %v2929 = vld.sshfl [vmem:[#allocation1 + $0x10] sm:$0xff pattern:$0x75316420]
      %v2930 = vld.sshfl [vmem:[#allocation1 + $0x18] sm:$0xff pattern:$0x75316420]
      %v2931 = vld.sshfl [vmem:[#allocation1 + $0x20] sm:$0xff pattern:$0x75316420]
      %v2932 = vld.sshfl [vmem:[#allocation1 + $0x28] sm:$0xff pattern:$0x75316420]
      %v2933 = vld.sshfl [vmem:[#allocation1 + $0x30] sm:$0xff pattern:$0x75316420]
      %v2934 = vld.sshfl [vmem:[#allocation1 + $0x38] sm:$0xff pattern:$0x75316420]
      %2935 = vst [vmem:[#allocation1] ss:$2 sm:$0xff] %v2906
      %2936 = vst [vmem:[%s2921] ss:$2 sm:$0xff] %v2907
      %2937 = vst [vmem:[%s2923] ss:$2 sm:$0xff] %v2908
      %2938 = vst [vmem:[%s2925] ss:$2 sm:$0xff] %v2909
      %v2939 = vld.sshfl [vmem:[#allocation1] sm:$0xff pattern:$0x75316420]
      %v2940 = vld.sshfl [vmem:[#allocation1 + $0x8] sm:$0xff pattern:$0x75316420]
      %v2941 = vld.sshfl [vmem:[#allocation1 + $0x10] sm:$0xff pattern:$0x75316420]
      %v2942 = vld.sshfl [vmem:[#allocation1 + $0x18] sm:$0xff pattern:$0x75316420]
      %v2943 = vld.sshfl [vmem:[#allocation1 + $0x20] sm:$0xff pattern:$0x75316420]
      %v2944 = vld.sshfl [vmem:[#allocation1 + $0x28] sm:$0xff pattern:$0x75316420]
      %v2945 = vld.sshfl [vmem:[#allocation1 + $0x30] sm:$0xff pattern:$0x75316420]
      %v2946 = vld.sshfl [vmem:[#allocation1 + $0x38] sm:$0xff pattern:$0x75316420]
      %v2948 = vsel %vm336, %v2911, 0
      %v2950 = vsel %vm340, %v2927, 0
      %v2952 = vsel %vm340, %v2928, 0
      %v2954 = vsel %vm340, %v2929, 0
      %v2956 = vsel %vm340, %v2930, 0
      %v2958 = vsel %vm340, %v2931, 0
      %v2960 = vsel %vm340, %v2932, 0
      %v2962 = vsel %vm340, %v2933, 0
      %v2964 = vsel %vm340, %v2934, 0
      %v2966 = vsel %vm340, %v2939, 0
      %v2968 = vsel %vm340, %v2940, 0
      %v2970 = vsel %vm340, %v2941, 0
      %v2972 = vsel %vm340, %v2942, 0
      %v2974 = vsel %vm340, %v2943, 0
      %v2976 = vsel %vm340, %v2944, 0
      %v2978 = vsel %vm340, %v2945, 0
      %v2980 = vsel %vm340, %v2946, 0
      %2982 = vmatpush.msra.mxu0 0.0
      %2983 = vmatpush.msra.mxu0 0.0
      %2984 = vmatpush.msra.mxu0 0.0
      %2985 = vmatpush.msra.mxu0 0.0
      %2986 = vmatpush.msra.mxu0 0.0
      %2987 = vmatpush.msra.mxu0 0.0
      %2988 = vmatpush.msra.mxu0 0.0
      %2989 = vmatpush.msra.mxu0 0.0
      %2990 = vmatpush.msra.mxu0 0.0
      %2991 = vmatpush.msra.mxu0 0.0
      %2992 = vmatpush.msra.mxu0 0.0
      %2993 = vmatpush.msra.mxu0 0.0
      %2994 = vmatpush.msra.mxu0 0.0
      %2995 = vmatpush.msra.mxu0 0.0
      %2996 = vmatpush.msra.mxu0 0.0
      %2997 = vmatpush.msra.mxu0 %v2950
      %2998 = vmatmul.f32.gmra.mxu0 %v2948
      %v2999 = vpop.f32.mrf.mxu0
      %v3000 = vadd.f32 0.0, %v2999
      %3001 = vdwg.mxu0
      %3002 = vmatpush.msra.mxu0 0.0
      %3003 = vmatpush.msra.mxu0 0.0
      %3004 = vmatpush.msra.mxu0 0.0
      %3005 = vmatpush.msra.mxu0 0.0
      %3006 = vmatpush.msra.mxu0 0.0
      %3007 = vmatpush.msra.mxu0 0.0
      %3008 = vmatpush.msra.mxu0 0.0
      %3009 = vmatpush.msra.mxu0 0.0
      %3010 = vmatpush.msra.mxu0 0.0
      %3011 = vmatpush.msra.mxu0 0.0
      %3012 = vmatpush.msra.mxu0 0.0
      %3013 = vmatpush.msra.mxu0 0.0
      %3014 = vmatpush.msra.mxu0 0.0
      %3015 = vmatpush.msra.mxu0 0.0
      %3016 = vmatpush.msra.mxu0 0.0
      %3017 = vmatpush.msra.mxu0 %v2952
      %3018 = vmatmul.f32.gmra.mxu0 %v2948
      %v3019 = vpop.f32.mrf.mxu0
      %v3020 = vadd.f32 0.0, %v3019
      %3021 = vdwg.mxu0
      %3022 = vmatpush.msra.mxu0 0.0
      %3023 = vmatpush.msra.mxu0 0.0
      %3024 = vmatpush.msra.mxu0 0.0
      %3025 = vmatpush.msra.mxu0 0.0
      %3026 = vmatpush.msra.mxu0 0.0
      %3027 = vmatpush.msra.mxu0 0.0
      %3028 = vmatpush.msra.mxu0 0.0
      %3029 = vmatpush.msra.mxu0 0.0
      %3030 = vmatpush.msra.mxu0 0.0
      %3031 = vmatpush.msra.mxu0 0.0
      %3032 = vmatpush.msra.mxu0 0.0
      %3033 = vmatpush.msra.mxu0 0.0
      %3034 = vmatpush.msra.mxu0 0.0
      %3035 = vmatpush.msra.mxu0 0.0
      %3036 = vmatpush.msra.mxu0 0.0
      %3037 = vmatpush.msra.mxu0 %v2954
      %3038 = vmatmul.f32.gmra.mxu0 %v2948
      %v3039 = vpop.f32.mrf.mxu0
      %v3040 = vadd.f32 0.0, %v3039
      %3041 = vdwg.mxu0
      %3042 = vmatpush.msra.mxu0 0.0
      %3043 = vmatpush.msra.mxu0 0.0
      %3044 = vmatpush.msra.mxu0 0.0
      %3045 = vmatpush.msra.mxu0 0.0
      %3046 = vmatpush.msra.mxu0 0.0
      %3047 = vmatpush.msra.mxu0 0.0
      %3048 = vmatpush.msra.mxu0 0.0
      %3049 = vmatpush.msra.mxu0 0.0
      %3050 = vmatpush.msra.mxu0 0.0
      %3051 = vmatpush.msra.mxu0 0.0
      %3052 = vmatpush.msra.mxu0 0.0
      %3053 = vmatpush.msra.mxu0 0.0
      %3054 = vmatpush.msra.mxu0 0.0
      %3055 = vmatpush.msra.mxu0 0.0
      %3056 = vmatpush.msra.mxu0 0.0
      %3057 = vmatpush.msra.mxu0 %v2956
      %3058 = vmatmul.f32.gmra.mxu0 %v2948
      %v3059 = vpop.f32.mrf.mxu0
      %v3060 = vadd.f32 0.0, %v3059
      %3061 = vdwg.mxu0
      %3062 = vmatpush.msra.mxu0 0.0
      %3063 = vmatpush.msra.mxu0 0.0
      %3064 = vmatpush.msra.mxu0 0.0
      %3065 = vmatpush.msra.mxu0 0.0
      %3066 = vmatpush.msra.mxu0 0.0
      %3067 = vmatpush.msra.mxu0 0.0
      %3068 = vmatpush.msra.mxu0 0.0
      %3069 = vmatpush.msra.mxu0 0.0
      %3070 = vmatpush.msra.mxu0 0.0
      %3071 = vmatpush.msra.mxu0 0.0
      %3072 = vmatpush.msra.mxu0 0.0
      %3073 = vmatpush.msra.mxu0 0.0
      %3074 = vmatpush.msra.mxu0 0.0
      %3075 = vmatpush.msra.mxu0 0.0
      %3076 = vmatpush.msra.mxu0 0.0
      %3077 = vmatpush.msra.mxu0 %v2958
      %3078 = vmatmul.f32.gmra.mxu0 %v2948
      %v3079 = vpop.f32.mrf.mxu0
      %v3080 = vadd.f32 0.0, %v3079
      %3081 = vdwg.mxu0
      %3082 = vmatpush.msra.mxu0 0.0
      %3083 = vmatpush.msra.mxu0 0.0
      %3084 = vmatpush.msra.mxu0 0.0
      %3085 = vmatpush.msra.mxu0 0.0
      %3086 = vmatpush.msra.mxu0 0.0
      %3087 = vmatpush.msra.mxu0 0.0
      %3088 = vmatpush.msra.mxu0 0.0
      %3089 = vmatpush.msra.mxu0 0.0
      %3090 = vmatpush.msra.mxu0 0.0
      %3091 = vmatpush.msra.mxu0 0.0
      %3092 = vmatpush.msra.mxu0 0.0
      %3093 = vmatpush.msra.mxu0 0.0
      %3094 = vmatpush.msra.mxu0 0.0
      %3095 = vmatpush.msra.mxu0 0.0
      %3096 = vmatpush.msra.mxu0 0.0
      %3097 = vmatpush.msra.mxu0 %v2960
      %3098 = vmatmul.f32.gmra.mxu0 %v2948
      %v3099 = vpop.f32.mrf.mxu0
      %v3100 = vadd.f32 0.0, %v3099
      %3101 = vdwg.mxu0
      %3102 = vmatpush.msra.mxu0 0.0
      %3103 = vmatpush.msra.mxu0 0.0
      %3104 = vmatpush.msra.mxu0 0.0
      %3105 = vmatpush.msra.mxu0 0.0
      %3106 = vmatpush.msra.mxu0 0.0
      %3107 = vmatpush.msra.mxu0 0.0
      %3108 = vmatpush.msra.mxu0 0.0
      %3109 = vmatpush.msra.mxu0 0.0
      %3110 = vmatpush.msra.mxu0 0.0
      %3111 = vmatpush.msra.mxu0 0.0
      %3112 = vmatpush.msra.mxu0 0.0
      %3113 = vmatpush.msra.mxu0 0.0
      %3114 = vmatpush.msra.mxu0 0.0
      %3115 = vmatpush.msra.mxu0 0.0
      %3116 = vmatpush.msra.mxu0 0.0
      %3117 = vmatpush.msra.mxu0 %v2962
      %3118 = vmatmul.f32.gmra.mxu0 %v2948
      %v3119 = vpop.f32.mrf.mxu0
      %v3120 = vadd.f32 0.0, %v3119
      %3121 = vdwg.mxu0
      %3122 = vmatpush.msra.mxu0 0.0
      %3123 = vmatpush.msra.mxu0 0.0
      %3124 = vmatpush.msra.mxu0 0.0
      %3125 = vmatpush.msra.mxu0 0.0
      %3126 = vmatpush.msra.mxu0 0.0
      %3127 = vmatpush.msra.mxu0 0.0
      %3128 = vmatpush.msra.mxu0 0.0
      %3129 = vmatpush.msra.mxu0 0.0
      %3130 = vmatpush.msra.mxu0 0.0
      %3131 = vmatpush.msra.mxu0 0.0
      %3132 = vmatpush.msra.mxu0 0.0
      %3133 = vmatpush.msra.mxu0 0.0
      %3134 = vmatpush.msra.mxu0 0.0
      %3135 = vmatpush.msra.mxu0 0.0
      %3136 = vmatpush.msra.mxu0 0.0
      %3137 = vmatpush.msra.mxu0 %v2964
      %3138 = vmatmul.f32.gmra.mxu0 %v2948
      %v3139 = vpop.f32.mrf.mxu0
      %v3140 = vadd.f32 0.0, %v3139
      %3141 = vdwg.mxu0
      %3142 = vmatpush.msra.mxu0 0.0
      %3143 = vmatpush.msra.mxu0 0.0
      %3144 = vmatpush.msra.mxu0 0.0
      %3145 = vmatpush.msra.mxu0 0.0
      %3146 = vmatpush.msra.mxu0 0.0
      %3147 = vmatpush.msra.mxu0 0.0
      %3148 = vmatpush.msra.mxu0 0.0
      %3149 = vmatpush.msra.mxu0 0.0
      %3150 = vmatpush.msra.mxu0 0.0
      %3151 = vmatpush.msra.mxu0 0.0
      %3152 = vmatpush.msra.mxu0 0.0
      %3153 = vmatpush.msra.mxu0 0.0
      %3154 = vmatpush.msra.mxu0 0.0
      %3155 = vmatpush.msra.mxu0 0.0
      %3156 = vmatpush.msra.mxu0 0.0
      %3157 = vmatpush.msra.mxu0 %v2966
      %3158 = vmatmul.f32.gmra.mxu0 %v2948
      %v3159 = vpop.f32.mrf.mxu0
      %v3160 = vadd.f32 0.0, %v3159
      %3161 = vdwg.mxu0
      %3162 = vmatpush.msra.mxu0 0.0
      %3163 = vmatpush.msra.mxu0 0.0
      %3164 = vmatpush.msra.mxu0 0.0
      %3165 = vmatpush.msra.mxu0 0.0
      %3166 = vmatpush.msra.mxu0 0.0
      %3167 = vmatpush.msra.mxu0 0.0
      %3168 = vmatpush.msra.mxu0 0.0
      %3169 = vmatpush.msra.mxu0 0.0
      %3170 = vmatpush.msra.mxu0 0.0
      %3171 = vmatpush.msra.mxu0 0.0
      %3172 = vmatpush.msra.mxu0 0.0
      %3173 = vmatpush.msra.mxu0 0.0
      %3174 = vmatpush.msra.mxu0 0.0
      %3175 = vmatpush.msra.mxu0 0.0
      %3176 = vmatpush.msra.mxu0 0.0
      %3177 = vmatpush.msra.mxu0 %v2968
      %3178 = vmatmul.f32.gmra.mxu0 %v2948
      %v3179 = vpop.f32.mrf.mxu0
      %v3180 = vadd.f32 0.0, %v3179
      %3181 = vdwg.mxu0
      %3182 = vmatpush.msra.mxu0 0.0
      %3183 = vmatpush.msra.mxu0 0.0
      %3184 = vmatpush.msra.mxu0 0.0
      %3185 = vmatpush.msra.mxu0 0.0
      %3186 = vmatpush.msra.mxu0 0.0
      %3187 = vmatpush.msra.mxu0 0.0
      %3188 = vmatpush.msra.mxu0 0.0
      %3189 = vmatpush.msra.mxu0 0.0
      %3190 = vmatpush.msra.mxu0 0.0
      %3191 = vmatpush.msra.mxu0 0.0
      %3192 = vmatpush.msra.mxu0 0.0
      %3193 = vmatpush.msra.mxu0 0.0
      %3194 = vmatpush.msra.mxu0 0.0
      %3195 = vmatpush.msra.mxu0 0.0
      %3196 = vmatpush.msra.mxu0 0.0
      %3197 = vmatpush.msra.mxu0 %v2970
      %3198 = vmatmul.f32.gmra.mxu0 %v2948
      %v3199 = vpop.f32.mrf.mxu0
      %v3200 = vadd.f32 0.0, %v3199
      %3201 = vdwg.mxu0
      %3202 = vmatpush.msra.mxu0 0.0
      %3203 = vmatpush.msra.mxu0 0.0
      %3204 = vmatpush.msra.mxu0 0.0
      %3205 = vmatpush.msra.mxu0 0.0
      %3206 = vmatpush.msra.mxu0 0.0
      %3207 = vmatpush.msra.mxu0 0.0
      %3208 = vmatpush.msra.mxu0 0.0
      %3209 = vmatpush.msra.mxu0 0.0
      %3210 = vmatpush.msra.mxu0 0.0
      %3211 = vmatpush.msra.mxu0 0.0
      %3212 = vmatpush.msra.mxu0 0.0
      %3213 = vmatpush.msra.mxu0 0.0
      %3214 = vmatpush.msra.mxu0 0.0
      %3215 = vmatpush.msra.mxu0 0.0
      %3216 = vmatpush.msra.mxu0 0.0
      %3217 = vmatpush.msra.mxu0 %v2972
      %3218 = vmatmul.f32.gmra.mxu0 %v2948
      %v3219 = vpop.f32.mrf.mxu0
      %v3220 = vadd.f32 0.0, %v3219
      %3221 = vdwg.mxu0
      %3222 = vmatpush.msra.mxu0 0.0
      %3223 = vmatpush.msra.mxu0 0.0
      %3224 = vmatpush.msra.mxu0 0.0
      %3225 = vmatpush.msra.mxu0 0.0
      %3226 = vmatpush.msra.mxu0 0.0
      %3227 = vmatpush.msra.mxu0 0.0
      %3228 = vmatpush.msra.mxu0 0.0
      %3229 = vmatpush.msra.mxu0 0.0
      %3230 = vmatpush.msra.mxu0 0.0
      %3231 = vmatpush.msra.mxu0 0.0
      %3232 = vmatpush.msra.mxu0 0.0
      %3233 = vmatpush.msra.mxu0 0.0
      %3234 = vmatpush.msra.mxu0 0.0
      %3235 = vmatpush.msra.mxu0 0.0
      %3236 = vmatpush.msra.mxu0 0.0
      %3237 = vmatpush.msra.mxu0 %v2974
      %3238 = vmatmul.f32.gmra.mxu0 %v2948
      %v3239 = vpop.f32.mrf.mxu0
      %v3240 = vadd.f32 0.0, %v3239
      %3241 = vdwg.mxu0
      %3242 = vmatpush.msra.mxu0 0.0
      %3243 = vmatpush.msra.mxu0 0.0
      %3244 = vmatpush.msra.mxu0 0.0
      %3245 = vmatpush.msra.mxu0 0.0
      %3246 = vmatpush.msra.mxu0 0.0
      %3247 = vmatpush.msra.mxu0 0.0
      %3248 = vmatpush.msra.mxu0 0.0
      %3249 = vmatpush.msra.mxu0 0.0
      %3250 = vmatpush.msra.mxu0 0.0
      %3251 = vmatpush.msra.mxu0 0.0
      %3252 = vmatpush.msra.mxu0 0.0
      %3253 = vmatpush.msra.mxu0 0.0
      %3254 = vmatpush.msra.mxu0 0.0
      %3255 = vmatpush.msra.mxu0 0.0
      %3256 = vmatpush.msra.mxu0 0.0
      %3257 = vmatpush.msra.mxu0 %v2976
      %3258 = vmatmul.f32.gmra.mxu0 %v2948
      %v3259 = vpop.f32.mrf.mxu0
      %v3260 = vadd.f32 0.0, %v3259
      %3261 = vdwg.mxu0
      %3262 = vmatpush.msra.mxu0 0.0
      %3263 = vmatpush.msra.mxu0 0.0
      %3264 = vmatpush.msra.mxu0 0.0
      %3265 = vmatpush.msra.mxu0 0.0
      %3266 = vmatpush.msra.mxu0 0.0
      %3267 = vmatpush.msra.mxu0 0.0
      %3268 = vmatpush.msra.mxu0 0.0
      %3269 = vmatpush.msra.mxu0 0.0
      %3270 = vmatpush.msra.mxu0 0.0
      %3271 = vmatpush.msra.mxu0 0.0
      %3272 = vmatpush.msra.mxu0 0.0
      %3273 = vmatpush.msra.mxu0 0.0
      %3274 = vmatpush.msra.mxu0 0.0
      %3275 = vmatpush.msra.mxu0 0.0
      %3276 = vmatpush.msra.mxu0 0.0
      %3277 = vmatpush.msra.mxu0 %v2978
      %3278 = vmatmul.f32.gmra.mxu0 %v2948
      %v3279 = vpop.f32.mrf.mxu0
      %v3280 = vadd.f32 0.0, %v3279
      %3281 = vdwg.mxu0
      %3282 = vmatpush.msra.mxu0 0.0
      %3283 = vmatpush.msra.mxu0 0.0
      %3284 = vmatpush.msra.mxu0 0.0
      %3285 = vmatpush.msra.mxu0 0.0
      %3286 = vmatpush.msra.mxu0 0.0
      %3287 = vmatpush.msra.mxu0 0.0
      %3288 = vmatpush.msra.mxu0 0.0
      %3289 = vmatpush.msra.mxu0 0.0
      %3290 = vmatpush.msra.mxu0 0.0
      %3291 = vmatpush.msra.mxu0 0.0
      %3292 = vmatpush.msra.mxu0 0.0
      %3293 = vmatpush.msra.mxu0 0.0
      %3294 = vmatpush.msra.mxu0 0.0
      %3295 = vmatpush.msra.mxu0 0.0
      %3296 = vmatpush.msra.mxu0 0.0
      %3297 = vmatpush.msra.mxu0 %v2980
      %3298 = vmatmul.f32.gmra.mxu0 %v2948
      %v3299 = vpop.f32.mrf.mxu0
      %v3300 = vadd.f32 0.0, %v3299
      %3301 = vdwg.mxu0
      %v3302 = vadd.f32 %v2886, %v3000
      %v3303 = vadd.f32 %v2887, %v3020
      %v3304 = vadd.f32 %v2888, %v3040
      %v3305 = vadd.f32 %v2889, %v3060
      %v3306 = vadd.f32 %v2890, %v3080
      %v3307 = vadd.f32 %v2891, %v3100
      %v3308 = vadd.f32 %v2892, %v3120
      %v3309 = vadd.f32 %v2893, %v3140
      %v3310 = vadd.f32 %v2894, %v3160
      %v3311 = vadd.f32 %v2895, %v3180
      %v3312 = vadd.f32 %v2896, %v3200
      %v3313 = vadd.f32 %v2897, %v3220
      %v3314 = vadd.f32 %v2898, %v3240
      %v3315 = vadd.f32 %v2899, %v3260
      %v3316 = vadd.f32 %v2900, %v3280
      %v3317 = vadd.f32 %v2901, %v3300
      %v3318 = vld [vmem:[%s224 + $0x8] sm:$0xff]
      %v3319 = vld [vmem:[%s224 + $0x10] sm:$0xff]
      %v3320 = vld [vmem:[%s224 + $0x18] sm:$0xff]
      %v3321 = vld [vmem:[%s224 + $0x20] sm:$0xff]
      %v3322 = vld [vmem:[%s224 + $0x28] sm:$0xff]
      %v3323 = vld [vmem:[%s224 + $0x30] sm:$0xff]
      %v3324 = vld [vmem:[%s224 + $0x38] sm:$0xff]
      %v3325 = vld [vmem:[%s224 + $0x40] sm:$0xff]
      %v3326 = vld [vmem:[%s224 + $0x48] sm:$0xf]
      %s3327 = scalar_lea.vmem %s1, 56
      %v3328 = vld [vmem:[%s3327] sm:$0xff]
      %3338 = vst [vmem:[#allocation1] ss:$2 sm:$0xff] %v3318
      %s3339 = scalar_lea.vmem [#allocation1], 16
      %3340 = vst [vmem:[%s3339] ss:$2 sm:$0xff] %v3319
      %s3341 = scalar_lea.vmem [#allocation1], 32
      %3342 = vst [vmem:[%s3341] ss:$2 sm:$0xff] %v3320
      %s3343 = scalar_lea.vmem [#allocation1], 48
      %3344 = vst [vmem:[%s3343] ss:$2 sm:$0xff] %v3321
      %v3345 = vld.sshfl [vmem:[#allocation1] sm:$0xff pattern:$0x75316420]
      %v3346 = vld.sshfl [vmem:[#allocation1 + $0x8] sm:$0xff pattern:$0x75316420]
      %v3347 = vld.sshfl [vmem:[#allocation1 + $0x10] sm:$0xff pattern:$0x75316420]
      %v3348 = vld.sshfl [vmem:[#allocation1 + $0x18] sm:$0xff pattern:$0x75316420]
      %v3349 = vld.sshfl [vmem:[#allocation1 + $0x20] sm:$0xff pattern:$0x75316420]
      %v3350 = vld.sshfl [vmem:[#allocation1 + $0x28] sm:$0xff pattern:$0x75316420]
      %v3351 = vld.sshfl [vmem:[#allocation1 + $0x30] sm:$0xff pattern:$0x75316420]
      %v3352 = vld.sshfl [vmem:[#allocation1 + $0x38] sm:$0xff pattern:$0x75316420]
      %3353 = vst [vmem:[#allocation1] ss:$2 sm:$0xff] %v3322
      %3354 = vst [vmem:[%s3339] ss:$2 sm:$0xff] %v3323
      %3355 = vst [vmem:[%s3341] ss:$2 sm:$0xff] %v3324
      %3356 = vst [vmem:[%s3343] ss:$2 sm:$0xff] %v3325
      %v3357 = vld.sshfl [vmem:[#allocation1] sm:$0xff pattern:$0x75316420]
      %v3358 = vld.sshfl [vmem:[#allocation1 + $0x8] sm:$0xff pattern:$0x75316420]
      %v3359 = vld.sshfl [vmem:[#allocation1 + $0x10] sm:$0xff pattern:$0x75316420]
      %v3360 = vld.sshfl [vmem:[#allocation1 + $0x18] sm:$0xff pattern:$0x75316420]
      %v3361 = vld.sshfl [vmem:[#allocation1 + $0x20] sm:$0xff pattern:$0x75316420]
      %v3362 = vld.sshfl [vmem:[#allocation1 + $0x28] sm:$0xff pattern:$0x75316420]
      %v3363 = vld.sshfl [vmem:[#allocation1 + $0x30] sm:$0xff pattern:$0x75316420]
      %v3364 = vld.sshfl [vmem:[#allocation1 + $0x38] sm:$0xff pattern:$0x75316420]
      %3365 = vst [vmem:[#allocation1] ss:$2 sm:$0xff] %v3326
      %v3366 = vld.sshfl [vmem:[#allocation1] sm:$0xff pattern:$0x75316420]
      %3367 = vrot.lane.b32.xlu0 %v3345, 127
      %v3368 = vpop.permute.xlu0 %3367
      %3369 = vrot.lane.b32.xlu0 %v3346, 127
      %v3370 = vpop.permute.xlu0 %3369
      %3371 = vrot.lane.b32.xlu0 %v3347, 127
      %v3372 = vpop.permute.xlu0 %3371
      %3373 = vrot.lane.b32.xlu0 %v3348, 127
      %v3374 = vpop.permute.xlu0 %3373
      %3375 = vrot.lane.b32.xlu0 %v3349, 127
      %v3376 = vpop.permute.xlu0 %3375
      %3377 = vrot.lane.b32.xlu0 %v3350, 127
      %v3378 = vpop.permute.xlu0 %3377
      %3379 = vrot.lane.b32.xlu0 %v3351, 127
      %v3380 = vpop.permute.xlu0 %3379
      %3381 = vrot.lane.b32.xlu0 %v3352, 127
      %v3382 = vpop.permute.xlu0 %3381
      %3383 = vrot.lane.b32.xlu0 %v3357, 127
      %v3384 = vpop.permute.xlu0 %3383
      %3385 = vrot.lane.b32.xlu0 %v3358, 127
      %v3386 = vpop.permute.xlu0 %3385
      %3387 = vrot.lane.b32.xlu0 %v3359, 127
      %v3388 = vpop.permute.xlu0 %3387
      %3389 = vrot.lane.b32.xlu0 %v3360, 127
      %v3390 = vpop.permute.xlu0 %3389
      %3391 = vrot.lane.b32.xlu0 %v3361, 127
      %v3392 = vpop.permute.xlu0 %3391
      %3393 = vrot.lane.b32.xlu0 %v3362, 127
      %v3394 = vpop.permute.xlu0 %3393
      %3395 = vrot.lane.b32.xlu0 %v3363, 127
      %v3396 = vpop.permute.xlu0 %3395
      %3397 = vrot.lane.b32.xlu0 %v3364, 127
      %v3398 = vpop.permute.xlu0 %3397
      %3399 = vrot.lane.b32.xlu0 %v3366, 127
      %v3400 = vpop.permute.xlu0 %3399
      %v3401 = vsel %vm319, %v3368, %v3370
      %v3402 = vsel %vm319, %v3370, %v3372
      %v3403 = vsel %vm319, %v3372, %v3374
      %v3404 = vsel %vm319, %v3374, %v3376
      %v3405 = vsel %vm319, %v3376, %v3378
      %v3406 = vsel %vm319, %v3378, %v3380
      %v3407 = vsel %vm319, %v3380, %v3382
      %v3408 = vsel %vm319, %v3382, %v3384
      %v3409 = vsel %vm319, %v3384, %v3386
      %v3410 = vsel %vm319, %v3386, %v3388
      %v3411 = vsel %vm319, %v3388, %v3390
      %v3412 = vsel %vm319, %v3390, %v3392
      %v3413 = vsel %vm319, %v3392, %v3394
      %v3414 = vsel %vm319, %v3394, %v3396
      %v3415 = vsel %vm319, %v3396, %v3398
      %v3416 = vsel %vm319, %v3398, %v3400
      %v3418 = vsel %vm336, %v3328, 0
      %v3420 = vsel %vm340, %v3401, 0
      %v3422 = vsel %vm340, %v3402, 0
      %v3424 = vsel %vm340, %v3403, 0
      %v3426 = vsel %vm340, %v3404, 0
      %v3428 = vsel %vm340, %v3405, 0
      %v3430 = vsel %vm340, %v3406, 0
      %v3432 = vsel %vm340, %v3407, 0
      %v3434 = vsel %vm340, %v3408, 0
      %v3436 = vsel %vm340, %v3409, 0
      %v3438 = vsel %vm340, %v3410, 0
      %v3440 = vsel %vm340, %v3411, 0
      %v3442 = vsel %vm340, %v3412, 0
      %v3444 = vsel %vm340, %v3413, 0
      %v3446 = vsel %vm340, %v3414, 0
      %v3448 = vsel %vm340, %v3415, 0
      %v3450 = vsel %vm340, %v3416, 0
      %3452 = vmatpush.msra.mxu0 0.0
      %3453 = vmatpush.msra.mxu0 0.0
      %3454 = vmatpush.msra.mxu0 0.0
      %3455 = vmatpush.msra.mxu0 0.0
      %3456 = vmatpush.msra.mxu0 0.0
      %3457 = vmatpush.msra.mxu0 0.0
      %3458 = vmatpush.msra.mxu0 0.0
      %3459 = vmatpush.msra.mxu0 0.0
      %3460 = vmatpush.msra.mxu0 0.0
      %3461 = vmatpush.msra.mxu0 0.0
      %3462 = vmatpush.msra.mxu0 0.0
      %3463 = vmatpush.msra.mxu0 0.0
      %3464 = vmatpush.msra.mxu0 0.0
      %3465 = vmatpush.msra.mxu0 0.0
      %3466 = vmatpush.msra.mxu0 0.0
      %3467 = vmatpush.msra.mxu0 %v3420
      %3468 = vmatmul.f32.gmra.mxu0 %v3418
      %v3469 = vpop.f32.mrf.mxu0
      %v3470 = vadd.f32 0.0, %v3469
      %3471 = vdwg.mxu0
      %3472 = vmatpush.msra.mxu0 0.0
      %3473 = vmatpush.msra.mxu0 0.0
      %3474 = vmatpush.msra.mxu0 0.0
      %3475 = vmatpush.msra.mxu0 0.0
      %3476 = vmatpush.msra.mxu0 0.0
      %3477 = vmatpush.msra.mxu0 0.0
      %3478 = vmatpush.msra.mxu0 0.0
      %3479 = vmatpush.msra.mxu0 0.0
      %3480 = vmatpush.msra.mxu0 0.0
      %3481 = vmatpush.msra.mxu0 0.0
      %3482 = vmatpush.msra.mxu0 0.0
      %3483 = vmatpush.msra.mxu0 0.0
      %3484 = vmatpush.msra.mxu0 0.0
      %3485 = vmatpush.msra.mxu0 0.0
      %3486 = vmatpush.msra.mxu0 0.0
      %3487 = vmatpush.msra.mxu0 %v3422
      %3488 = vmatmul.f32.gmra.mxu0 %v3418
      %v3489 = vpop.f32.mrf.mxu0
      %v3490 = vadd.f32 0.0, %v3489
      %3491 = vdwg.mxu0
      %3492 = vmatpush.msra.mxu0 0.0
      %3493 = vmatpush.msra.mxu0 0.0
      %3494 = vmatpush.msra.mxu0 0.0
      %3495 = vmatpush.msra.mxu0 0.0
      %3496 = vmatpush.msra.mxu0 0.0
      %3497 = vmatpush.msra.mxu0 0.0
      %3498 = vmatpush.msra.mxu0 0.0
      %3499 = vmatpush.msra.mxu0 0.0
      %3500 = vmatpush.msra.mxu0 0.0
      %3501 = vmatpush.msra.mxu0 0.0
      %3502 = vmatpush.msra.mxu0 0.0
      %3503 = vmatpush.msra.mxu0 0.0
      %3504 = vmatpush.msra.mxu0 0.0
      %3505 = vmatpush.msra.mxu0 0.0
      %3506 = vmatpush.msra.mxu0 0.0
      %3507 = vmatpush.msra.mxu0 %v3424
      %3508 = vmatmul.f32.gmra.mxu0 %v3418
      %v3509 = vpop.f32.mrf.mxu0
      %v3510 = vadd.f32 0.0, %v3509
      %3511 = vdwg.mxu0
      %3512 = vmatpush.msra.mxu0 0.0
      %3513 = vmatpush.msra.mxu0 0.0
      %3514 = vmatpush.msra.mxu0 0.0
      %3515 = vmatpush.msra.mxu0 0.0
      %3516 = vmatpush.msra.mxu0 0.0
      %3517 = vmatpush.msra.mxu0 0.0
      %3518 = vmatpush.msra.mxu0 0.0
      %3519 = vmatpush.msra.mxu0 0.0
      %3520 = vmatpush.msra.mxu0 0.0
      %3521 = vmatpush.msra.mxu0 0.0
      %3522 = vmatpush.msra.mxu0 0.0
      %3523 = vmatpush.msra.mxu0 0.0
      %3524 = vmatpush.msra.mxu0 0.0
      %3525 = vmatpush.msra.mxu0 0.0
      %3526 = vmatpush.msra.mxu0 0.0
      %3527 = vmatpush.msra.mxu0 %v3426
      %3528 = vmatmul.f32.gmra.mxu0 %v3418
      %v3529 = vpop.f32.mrf.mxu0
      %v3530 = vadd.f32 0.0, %v3529
      %3531 = vdwg.mxu0
      %3532 = vmatpush.msra.mxu0 0.0
      %3533 = vmatpush.msra.mxu0 0.0
      %3534 = vmatpush.msra.mxu0 0.0
      %3535 = vmatpush.msra.mxu0 0.0
      %3536 = vmatpush.msra.mxu0 0.0
      %3537 = vmatpush.msra.mxu0 0.0
      %3538 = vmatpush.msra.mxu0 0.0
      %3539 = vmatpush.msra.mxu0 0.0
      %3540 = vmatpush.msra.mxu0 0.0
      %3541 = vmatpush.msra.mxu0 0.0
      %3542 = vmatpush.msra.mxu0 0.0
      %3543 = vmatpush.msra.mxu0 0.0
      %3544 = vmatpush.msra.mxu0 0.0
      %3545 = vmatpush.msra.mxu0 0.0
      %3546 = vmatpush.msra.mxu0 0.0
      %3547 = vmatpush.msra.mxu0 %v3428
      %3548 = vmatmul.f32.gmra.mxu0 %v3418
      %v3549 = vpop.f32.mrf.mxu0
      %v3550 = vadd.f32 0.0, %v3549
      %3551 = vdwg.mxu0
      %3552 = vmatpush.msra.mxu0 0.0
      %3553 = vmatpush.msra.mxu0 0.0
      %3554 = vmatpush.msra.mxu0 0.0
      %3555 = vmatpush.msra.mxu0 0.0
      %3556 = vmatpush.msra.mxu0 0.0
      %3557 = vmatpush.msra.mxu0 0.0
      %3558 = vmatpush.msra.mxu0 0.0
      %3559 = vmatpush.msra.mxu0 0.0
      %3560 = vmatpush.msra.mxu0 0.0
      %3561 = vmatpush.msra.mxu0 0.0
      %3562 = vmatpush.msra.mxu0 0.0
      %3563 = vmatpush.msra.mxu0 0.0
      %3564 = vmatpush.msra.mxu0 0.0
      %3565 = vmatpush.msra.mxu0 0.0
      %3566 = vmatpush.msra.mxu0 0.0
      %3567 = vmatpush.msra.mxu0 %v3430
      %3568 = vmatmul.f32.gmra.mxu0 %v3418
      %v3569 = vpop.f32.mrf.mxu0
      %v3570 = vadd.f32 0.0, %v3569
      %3571 = vdwg.mxu0
      %3572 = vmatpush.msra.mxu0 0.0
      %3573 = vmatpush.msra.mxu0 0.0
      %3574 = vmatpush.msra.mxu0 0.0
      %3575 = vmatpush.msra.mxu0 0.0
      %3576 = vmatpush.msra.mxu0 0.0
      %3577 = vmatpush.msra.mxu0 0.0
      %3578 = vmatpush.msra.mxu0 0.0
      %3579 = vmatpush.msra.mxu0 0.0
      %3580 = vmatpush.msra.mxu0 0.0
      %3581 = vmatpush.msra.mxu0 0.0
      %3582 = vmatpush.msra.mxu0 0.0
      %3583 = vmatpush.msra.mxu0 0.0
      %3584 = vmatpush.msra.mxu0 0.0
      %3585 = vmatpush.msra.mxu0 0.0
      %3586 = vmatpush.msra.mxu0 0.0
      %3587 = vmatpush.msra.mxu0 %v3432
      %3588 = vmatmul.f32.gmra.mxu0 %v3418
      %v3589 = vpop.f32.mrf.mxu0
      %v3590 = vadd.f32 0.0, %v3589
      %3591 = vdwg.mxu0
      %3592 = vmatpush.msra.mxu0 0.0
      %3593 = vmatpush.msra.mxu0 0.0
      %3594 = vmatpush.msra.mxu0 0.0
      %3595 = vmatpush.msra.mxu0 0.0
      %3596 = vmatpush.msra.mxu0 0.0
      %3597 = vmatpush.msra.mxu0 0.0
      %3598 = vmatpush.msra.mxu0 0.0
      %3599 = vmatpush.msra.mxu0 0.0
      %3600 = vmatpush.msra.mxu0 0.0
      %3601 = vmatpush.msra.mxu0 0.0
      %3602 = vmatpush.msra.mxu0 0.0
      %3603 = vmatpush.msra.mxu0 0.0
      %3604 = vmatpush.msra.mxu0 0.0
      %3605 = vmatpush.msra.mxu0 0.0
      %3606 = vmatpush.msra.mxu0 0.0
      %3607 = vmatpush.msra.mxu0 %v3434
      %3608 = vmatmul.f32.gmra.mxu0 %v3418
      %v3609 = vpop.f32.mrf.mxu0
      %v3610 = vadd.f32 0.0, %v3609
      %3611 = vdwg.mxu0
      %3612 = vmatpush.msra.mxu0 0.0
      %3613 = vmatpush.msra.mxu0 0.0
      %3614 = vmatpush.msra.mxu0 0.0
      %3615 = vmatpush.msra.mxu0 0.0
      %3616 = vmatpush.msra.mxu0 0.0
      %3617 = vmatpush.msra.mxu0 0.0
      %3618 = vmatpush.msra.mxu0 0.0
      %3619 = vmatpush.msra.mxu0 0.0
      %3620 = vmatpush.msra.mxu0 0.0
      %3621 = vmatpush.msra.mxu0 0.0
      %3622 = vmatpush.msra.mxu0 0.0
      %3623 = vmatpush.msra.mxu0 0.0
      %3624 = vmatpush.msra.mxu0 0.0
      %3625 = vmatpush.msra.mxu0 0.0
      %3626 = vmatpush.msra.mxu0 0.0
      %3627 = vmatpush.msra.mxu0 %v3436
      %3628 = vmatmul.f32.gmra.mxu0 %v3418
      %v3629 = vpop.f32.mrf.mxu0
      %v3630 = vadd.f32 0.0, %v3629
      %3631 = vdwg.mxu0
      %3632 = vmatpush.msra.mxu0 0.0
      %3633 = vmatpush.msra.mxu0 0.0
      %3634 = vmatpush.msra.mxu0 0.0
      %3635 = vmatpush.msra.mxu0 0.0
      %3636 = vmatpush.msra.mxu0 0.0
      %3637 = vmatpush.msra.mxu0 0.0
      %3638 = vmatpush.msra.mxu0 0.0
      %3639 = vmatpush.msra.mxu0 0.0
      %3640 = vmatpush.msra.mxu0 0.0
      %3641 = vmatpush.msra.mxu0 0.0
      %3642 = vmatpush.msra.mxu0 0.0
      %3643 = vmatpush.msra.mxu0 0.0
      %3644 = vmatpush.msra.mxu0 0.0
      %3645 = vmatpush.msra.mxu0 0.0
      %3646 = vmatpush.msra.mxu0 0.0
      %3647 = vmatpush.msra.mxu0 %v3438
      %3648 = vmatmul.f32.gmra.mxu0 %v3418
      %v3649 = vpop.f32.mrf.mxu0
      %v3650 = vadd.f32 0.0, %v3649
      %3651 = vdwg.mxu0
      %3652 = vmatpush.msra.mxu0 0.0
      %3653 = vmatpush.msra.mxu0 0.0
      %3654 = vmatpush.msra.mxu0 0.0
      %3655 = vmatpush.msra.mxu0 0.0
      %3656 = vmatpush.msra.mxu0 0.0
      %3657 = vmatpush.msra.mxu0 0.0
      %3658 = vmatpush.msra.mxu0 0.0
      %3659 = vmatpush.msra.mxu0 0.0
      %3660 = vmatpush.msra.mxu0 0.0
      %3661 = vmatpush.msra.mxu0 0.0
      %3662 = vmatpush.msra.mxu0 0.0
      %3663 = vmatpush.msra.mxu0 0.0
      %3664 = vmatpush.msra.mxu0 0.0
      %3665 = vmatpush.msra.mxu0 0.0
      %3666 = vmatpush.msra.mxu0 0.0
      %3667 = vmatpush.msra.mxu0 %v3440
      %3668 = vmatmul.f32.gmra.mxu0 %v3418
      %v3669 = vpop.f32.mrf.mxu0
      %v3670 = vadd.f32 0.0, %v3669
      %3671 = vdwg.mxu0
      %3672 = vmatpush.msra.mxu0 0.0
      %3673 = vmatpush.msra.mxu0 0.0
      %3674 = vmatpush.msra.mxu0 0.0
      %3675 = vmatpush.msra.mxu0 0.0
      %3676 = vmatpush.msra.mxu0 0.0
      %3677 = vmatpush.msra.mxu0 0.0
      %3678 = vmatpush.msra.mxu0 0.0
      %3679 = vmatpush.msra.mxu0 0.0
      %3680 = vmatpush.msra.mxu0 0.0
      %3681 = vmatpush.msra.mxu0 0.0
      %3682 = vmatpush.msra.mxu0 0.0
      %3683 = vmatpush.msra.mxu0 0.0
      %3684 = vmatpush.msra.mxu0 0.0
      %3685 = vmatpush.msra.mxu0 0.0
      %3686 = vmatpush.msra.mxu0 0.0
      %3687 = vmatpush.msra.mxu0 %v3442
      %3688 = vmatmul.f32.gmra.mxu0 %v3418
      %v3689 = vpop.f32.mrf.mxu0
      %v3690 = vadd.f32 0.0, %v3689
      %3691 = vdwg.mxu0
      %3692 = vmatpush.msra.mxu0 0.0
      %3693 = vmatpush.msra.mxu0 0.0
      %3694 = vmatpush.msra.mxu0 0.0
      %3695 = vmatpush.msra.mxu0 0.0
      %3696 = vmatpush.msra.mxu0 0.0
      %3697 = vmatpush.msra.mxu0 0.0
      %3698 = vmatpush.msra.mxu0 0.0
      %3699 = vmatpush.msra.mxu0 0.0
      %3700 = vmatpush.msra.mxu0 0.0
      %3701 = vmatpush.msra.mxu0 0.0
      %3702 = vmatpush.msra.mxu0 0.0
      %3703 = vmatpush.msra.mxu0 0.0
      %3704 = vmatpush.msra.mxu0 0.0
      %3705 = vmatpush.msra.mxu0 0.0
      %3706 = vmatpush.msra.mxu0 0.0
      %3707 = vmatpush.msra.mxu0 %v3444
      %3708 = vmatmul.f32.gmra.mxu0 %v3418
      %v3709 = vpop.f32.mrf.mxu0
      %v3710 = vadd.f32 0.0, %v3709
      %3711 = vdwg.mxu0
      %3712 = vmatpush.msra.mxu0 0.0
      %3713 = vmatpush.msra.mxu0 0.0
      %3714 = vmatpush.msra.mxu0 0.0
      %3715 = vmatpush.msra.mxu0 0.0
      %3716 = vmatpush.msra.mxu0 0.0
      %3717 = vmatpush.msra.mxu0 0.0
      %3718 = vmatpush.msra.mxu0 0.0
      %3719 = vmatpush.msra.mxu0 0.0
      %3720 = vmatpush.msra.mxu0 0.0
      %3721 = vmatpush.msra.mxu0 0.0
      %3722 = vmatpush.msra.mxu0 0.0
      %3723 = vmatpush.msra.mxu0 0.0
      %3724 = vmatpush.msra.mxu0 0.0
      %3725 = vmatpush.msra.mxu0 0.0
      %3726 = vmatpush.msra.mxu0 0.0
      %3727 = vmatpush.msra.mxu0 %v3446
      %3728 = vmatmul.f32.gmra.mxu0 %v3418
      %v3729 = vpop.f32.mrf.mxu0
      %v3730 = vadd.f32 0.0, %v3729
      %3731 = vdwg.mxu0
      %3732 = vmatpush.msra.mxu0 0.0
      %3733 = vmatpush.msra.mxu0 0.0
      %3734 = vmatpush.msra.mxu0 0.0
      %3735 = vmatpush.msra.mxu0 0.0
      %3736 = vmatpush.msra.mxu0 0.0
      %3737 = vmatpush.msra.mxu0 0.0
      %3738 = vmatpush.msra.mxu0 0.0
      %3739 = vmatpush.msra.mxu0 0.0
      %3740 = vmatpush.msra.mxu0 0.0
      %3741 = vmatpush.msra.mxu0 0.0
      %3742 = vmatpush.msra.mxu0 0.0
      %3743 = vmatpush.msra.mxu0 0.0
      %3744 = vmatpush.msra.mxu0 0.0
      %3745 = vmatpush.msra.mxu0 0.0
      %3746 = vmatpush.msra.mxu0 0.0
      %3747 = vmatpush.msra.mxu0 %v3448
      %3748 = vmatmul.f32.gmra.mxu0 %v3418
      %v3749 = vpop.f32.mrf.mxu0
      %v3750 = vadd.f32 0.0, %v3749
      %3751 = vdwg.mxu0
      %3752 = vmatpush.msra.mxu0 0.0
      %3753 = vmatpush.msra.mxu0 0.0
      %3754 = vmatpush.msra.mxu0 0.0
      %3755 = vmatpush.msra.mxu0 0.0
      %3756 = vmatpush.msra.mxu0 0.0
      %3757 = vmatpush.msra.mxu0 0.0
      %3758 = vmatpush.msra.mxu0 0.0
      %3759 = vmatpush.msra.mxu0 0.0
      %3760 = vmatpush.msra.mxu0 0.0
      %3761 = vmatpush.msra.mxu0 0.0
      %3762 = vmatpush.msra.mxu0 0.0
      %3763 = vmatpush.msra.mxu0 0.0
      %3764 = vmatpush.msra.mxu0 0.0
      %3765 = vmatpush.msra.mxu0 0.0
      %3766 = vmatpush.msra.mxu0 0.0
      %3767 = vmatpush.msra.mxu0 %v3450
      %3768 = vmatmul.f32.gmra.mxu0 %v3418
      %v3769 = vpop.f32.mrf.mxu0
      %v3770 = vadd.f32 0.0, %v3769
      %3771 = vdwg.mxu0
      %v3772 = vadd.f32 %v3302, %v3470
      %v3773 = vadd.f32 %v3303, %v3490
      %v3774 = vadd.f32 %v3304, %v3510
      %v3775 = vadd.f32 %v3305, %v3530
      %v3776 = vadd.f32 %v3306, %v3550
      %v3777 = vadd.f32 %v3307, %v3570
      %v3778 = vadd.f32 %v3308, %v3590
      %v3779 = vadd.f32 %v3309, %v3610
      %v3780 = vadd.f32 %v3310, %v3630
      %v3781 = vadd.f32 %v3311, %v3650
      %v3782 = vadd.f32 %v3312, %v3670
      %v3783 = vadd.f32 %v3313, %v3690
      %v3784 = vadd.f32 %v3314, %v3710
      %v3785 = vadd.f32 %v3315, %v3730
      %v3786 = vadd.f32 %v3316, %v3750
      %v3787 = vadd.f32 %v3317, %v3770
      %v3788 = vld [vmem:[%s224 + $0x8] sm:$0xff]
      %v3789 = vld [vmem:[%s224 + $0x10] sm:$0xff]
      %v3790 = vld [vmem:[%s224 + $0x18] sm:$0xff]
      %v3791 = vld [vmem:[%s224 + $0x20] sm:$0xff]
      %v3792 = vld [vmem:[%s224 + $0x28] sm:$0xff]
      %v3793 = vld [vmem:[%s224 + $0x30] sm:$0xff]
      %v3794 = vld [vmem:[%s224 + $0x38] sm:$0xff]
      %v3795 = vld [vmem:[%s224 + $0x40] sm:$0xff]
      %v3796 = vld [vmem:[%s224 + $0x48] sm:$0xf]
      %s3797 = scalar_lea.vmem %s1, 64
      %v3798 = vld [vmem:[%s3797] sm:$0xff]
      %3808 = vst [vmem:[#allocation1] ss:$2 sm:$0xff] %v3788
      %s3809 = scalar_lea.vmem [#allocation1], 16
      %3810 = vst [vmem:[%s3809] ss:$2 sm:$0xff] %v3789
      %s3811 = scalar_lea.vmem [#allocation1], 32
      %3812 = vst [vmem:[%s3811] ss:$2 sm:$0xff] %v3790
      %s3813 = scalar_lea.vmem [#allocation1], 48
      %3814 = vst [vmem:[%s3813] ss:$2 sm:$0xff] %v3791
      %v3815 = vld.sshfl [vmem:[#allocation1] sm:$0xff pattern:$0x75316420]
      %v3816 = vld.sshfl [vmem:[#allocation1 + $0x8] sm:$0xff pattern:$0x75316420]
      %v3817 = vld.sshfl [vmem:[#allocation1 + $0x10] sm:$0xff pattern:$0x75316420]
      %v3818 = vld.sshfl [vmem:[#allocation1 + $0x18] sm:$0xff pattern:$0x75316420]
      %v3819 = vld.sshfl [vmem:[#allocation1 + $0x20] sm:$0xff pattern:$0x75316420]
      %v3820 = vld.sshfl [vmem:[#allocation1 + $0x28] sm:$0xff pattern:$0x75316420]
      %v3821 = vld.sshfl [vmem:[#allocation1 + $0x30] sm:$0xff pattern:$0x75316420]
      %v3822 = vld.sshfl [vmem:[#allocation1 + $0x38] sm:$0xff pattern:$0x75316420]
      %3823 = vst [vmem:[#allocation1] ss:$2 sm:$0xff] %v3792
      %3824 = vst [vmem:[%s3809] ss:$2 sm:$0xff] %v3793
      %3825 = vst [vmem:[%s3811] ss:$2 sm:$0xff] %v3794
      %3826 = vst [vmem:[%s3813] ss:$2 sm:$0xff] %v3795
      %v3827 = vld.sshfl [vmem:[#allocation1] sm:$0xff pattern:$0x75316420]
      %v3828 = vld.sshfl [vmem:[#allocation1 + $0x8] sm:$0xff pattern:$0x75316420]
      %v3829 = vld.sshfl [vmem:[#allocation1 + $0x10] sm:$0xff pattern:$0x75316420]
      %v3830 = vld.sshfl [vmem:[#allocation1 + $0x18] sm:$0xff pattern:$0x75316420]
      %v3831 = vld.sshfl [vmem:[#allocation1 + $0x20] sm:$0xff pattern:$0x75316420]
      %v3832 = vld.sshfl [vmem:[#allocation1 + $0x28] sm:$0xff pattern:$0x75316420]
      %v3833 = vld.sshfl [vmem:[#allocation1 + $0x30] sm:$0xff pattern:$0x75316420]
      %v3834 = vld.sshfl [vmem:[#allocation1 + $0x38] sm:$0xff pattern:$0x75316420]
      %3835 = vst [vmem:[#allocation1] ss:$2 sm:$0xff] %v3796
      %v3836 = vld.sshfl [vmem:[#allocation1] sm:$0xff pattern:$0x75316420]
      %3837 = vrot.lane.b32.xlu0 %v3815, 126
      %v3838 = vpop.permute.xlu0 %3837
      %3839 = vrot.lane.b32.xlu0 %v3816, 126
      %v3840 = vpop.permute.xlu0 %3839
      %3841 = vrot.lane.b32.xlu0 %v3817, 126
      %v3842 = vpop.permute.xlu0 %3841
      %3843 = vrot.lane.b32.xlu0 %v3818, 126
      %v3844 = vpop.permute.xlu0 %3843
      %3845 = vrot.lane.b32.xlu0 %v3819, 126
      %v3846 = vpop.permute.xlu0 %3845
      %3847 = vrot.lane.b32.xlu0 %v3820, 126
      %v3848 = vpop.permute.xlu0 %3847
      %3849 = vrot.lane.b32.xlu0 %v3821, 126
      %v3850 = vpop.permute.xlu0 %3849
      %3851 = vrot.lane.b32.xlu0 %v3822, 126
      %v3852 = vpop.permute.xlu0 %3851
      %3853 = vrot.lane.b32.xlu0 %v3827, 126
      %v3854 = vpop.permute.xlu0 %3853
      %3855 = vrot.lane.b32.xlu0 %v3828, 126
      %v3856 = vpop.permute.xlu0 %3855
      %3857 = vrot.lane.b32.xlu0 %v3829, 126
      %v3858 = vpop.permute.xlu0 %3857
      %3859 = vrot.lane.b32.xlu0 %v3830, 126
      %v3860 = vpop.permute.xlu0 %3859
      %3861 = vrot.lane.b32.xlu0 %v3831, 126
      %v3862 = vpop.permute.xlu0 %3861
      %3863 = vrot.lane.b32.xlu0 %v3832, 126
      %v3864 = vpop.permute.xlu0 %3863
      %3865 = vrot.lane.b32.xlu0 %v3833, 126
      %v3866 = vpop.permute.xlu0 %3865
      %3867 = vrot.lane.b32.xlu0 %v3834, 126
      %v3868 = vpop.permute.xlu0 %3867
      %3869 = vrot.lane.b32.xlu0 %v3836, 126
      %v3870 = vpop.permute.xlu0 %3869
      %v3871 = vsel %vm1158, %v3838, %v3840
      %v3872 = vsel %vm1158, %v3840, %v3842
      %v3873 = vsel %vm1158, %v3842, %v3844
      %v3874 = vsel %vm1158, %v3844, %v3846
      %v3875 = vsel %vm1158, %v3846, %v3848
      %v3876 = vsel %vm1158, %v3848, %v3850
      %v3877 = vsel %vm1158, %v3850, %v3852
      %v3878 = vsel %vm1158, %v3852, %v3854
      %v3879 = vsel %vm1158, %v3854, %v3856
      %v3880 = vsel %vm1158, %v3856, %v3858
      %v3881 = vsel %vm1158, %v3858, %v3860
      %v3882 = vsel %vm1158, %v3860, %v3862
      %v3883 = vsel %vm1158, %v3862, %v3864
      %v3884 = vsel %vm1158, %v3864, %v3866
      %v3885 = vsel %vm1158, %v3866, %v3868
      %v3886 = vsel %vm1158, %v3868, %v3870
      %v3888 = vsel %vm336, %v3798, 0
      %v3890 = vsel %vm340, %v3871, 0
      %v3892 = vsel %vm340, %v3872, 0
      %v3894 = vsel %vm340, %v3873, 0
      %v3896 = vsel %vm340, %v3874, 0
      %v3898 = vsel %vm340, %v3875, 0
      %v3900 = vsel %vm340, %v3876, 0
      %v3902 = vsel %vm340, %v3877, 0
      %v3904 = vsel %vm340, %v3878, 0
      %v3906 = vsel %vm340, %v3879, 0
      %v3908 = vsel %vm340, %v3880, 0
      %v3910 = vsel %vm340, %v3881, 0
      %v3912 = vsel %vm340, %v3882, 0
      %v3914 = vsel %vm340, %v3883, 0
      %v3916 = vsel %vm340, %v3884, 0
      %v3918 = vsel %vm340, %v3885, 0
      %v3920 = vsel %vm340, %v3886, 0
      %3922 = vmatpush.msra.mxu0 0.0
      %3923 = vmatpush.msra.mxu0 0.0
      %3924 = vmatpush.msra.mxu0 0.0
      %3925 = vmatpush.msra.mxu0 0.0
      %3926 = vmatpush.msra.mxu0 0.0
      %3927 = vmatpush.msra.mxu0 0.0
      %3928 = vmatpush.msra.mxu0 0.0
      %3929 = vmatpush.msra.mxu0 0.0
      %3930 = vmatpush.msra.mxu0 0.0
      %3931 = vmatpush.msra.mxu0 0.0
      %3932 = vmatpush.msra.mxu0 0.0
      %3933 = vmatpush.msra.mxu0 0.0
      %3934 = vmatpush.msra.mxu0 0.0
      %3935 = vmatpush.msra.mxu0 0.0
      %3936 = vmatpush.msra.mxu0 0.0
      %3937 = vmatpush.msra.mxu0 %v3890
      %3938 = vmatmul.f32.gmra.mxu0 %v3888
      %v3939 = vpop.f32.mrf.mxu0
      %v3940 = vadd.f32 0.0, %v3939
      %3941 = vdwg.mxu0
      %3942 = vmatpush.msra.mxu0 0.0
      %3943 = vmatpush.msra.mxu0 0.0
      %3944 = vmatpush.msra.mxu0 0.0
      %3945 = vmatpush.msra.mxu0 0.0
      %3946 = vmatpush.msra.mxu0 0.0
      %3947 = vmatpush.msra.mxu0 0.0
      %3948 = vmatpush.msra.mxu0 0.0
      %3949 = vmatpush.msra.mxu0 0.0
      %3950 = vmatpush.msra.mxu0 0.0
      %3951 = vmatpush.msra.mxu0 0.0
      %3952 = vmatpush.msra.mxu0 0.0
      %3953 = vmatpush.msra.mxu0 0.0
      %3954 = vmatpush.msra.mxu0 0.0
      %3955 = vmatpush.msra.mxu0 0.0
      %3956 = vmatpush.msra.mxu0 0.0
      %3957 = vmatpush.msra.mxu0 %v3892
      %3958 = vmatmul.f32.gmra.mxu0 %v3888
      %v3959 = vpop.f32.mrf.mxu0
      %v3960 = vadd.f32 0.0, %v3959
      %3961 = vdwg.mxu0
      %3962 = vmatpush.msra.mxu0 0.0
      %3963 = vmatpush.msra.mxu0 0.0
      %3964 = vmatpush.msra.mxu0 0.0
      %3965 = vmatpush.msra.mxu0 0.0
      %3966 = vmatpush.msra.mxu0 0.0
      %3967 = vmatpush.msra.mxu0 0.0
      %3968 = vmatpush.msra.mxu0 0.0
      %3969 = vmatpush.msra.mxu0 0.0
      %3970 = vmatpush.msra.mxu0 0.0
      %3971 = vmatpush.msra.mxu0 0.0
      %3972 = vmatpush.msra.mxu0 0.0
      %3973 = vmatpush.msra.mxu0 0.0
      %3974 = vmatpush.msra.mxu0 0.0
      %3975 = vmatpush.msra.mxu0 0.0
      %3976 = vmatpush.msra.mxu0 0.0
      %3977 = vmatpush.msra.mxu0 %v3894
      %3978 = vmatmul.f32.gmra.mxu0 %v3888
      %v3979 = vpop.f32.mrf.mxu0
      %v3980 = vadd.f32 0.0, %v3979
      %3981 = vdwg.mxu0
      %3982 = vmatpush.msra.mxu0 0.0
      %3983 = vmatpush.msra.mxu0 0.0
      %3984 = vmatpush.msra.mxu0 0.0
      %3985 = vmatpush.msra.mxu0 0.0
      %3986 = vmatpush.msra.mxu0 0.0
      %3987 = vmatpush.msra.mxu0 0.0
      %3988 = vmatpush.msra.mxu0 0.0
      %3989 = vmatpush.msra.mxu0 0.0
      %3990 = vmatpush.msra.mxu0 0.0
      %3991 = vmatpush.msra.mxu0 0.0
      %3992 = vmatpush.msra.mxu0 0.0
      %3993 = vmatpush.msra.mxu0 0.0
      %3994 = vmatpush.msra.mxu0 0.0
      %3995 = vmatpush.msra.mxu0 0.0
      %3996 = vmatpush.msra.mxu0 0.0
      %3997 = vmatpush.msra.mxu0 %v3896
      %3998 = vmatmul.f32.gmra.mxu0 %v3888
      %v3999 = vpop.f32.mrf.mxu0
      %v4000 = vadd.f32 0.0, %v3999
      %4001 = vdwg.mxu0
      %4002 = vmatpush.msra.mxu0 0.0
      %4003 = vmatpush.msra.mxu0 0.0
      %4004 = vmatpush.msra.mxu0 0.0
      %4005 = vmatpush.msra.mxu0 0.0
      %4006 = vmatpush.msra.mxu0 0.0
      %4007 = vmatpush.msra.mxu0 0.0
      %4008 = vmatpush.msra.mxu0 0.0
      %4009 = vmatpush.msra.mxu0 0.0
      %4010 = vmatpush.msra.mxu0 0.0
      %4011 = vmatpush.msra.mxu0 0.0
      %4012 = vmatpush.msra.mxu0 0.0
      %4013 = vmatpush.msra.mxu0 0.0
      %4014 = vmatpush.msra.mxu0 0.0
      %4015 = vmatpush.msra.mxu0 0.0
      %4016 = vmatpush.msra.mxu0 0.0
      %4017 = vmatpush.msra.mxu0 %v3898
      %4018 = vmatmul.f32.gmra.mxu0 %v3888
      %v4019 = vpop.f32.mrf.mxu0
      %v4020 = vadd.f32 0.0, %v4019
      %4021 = vdwg.mxu0
      %4022 = vmatpush.msra.mxu0 0.0
      %4023 = vmatpush.msra.mxu0 0.0
      %4024 = vmatpush.msra.mxu0 0.0
      %4025 = vmatpush.msra.mxu0 0.0
      %4026 = vmatpush.msra.mxu0 0.0
      %4027 = vmatpush.msra.mxu0 0.0
      %4028 = vmatpush.msra.mxu0 0.0
      %4029 = vmatpush.msra.mxu0 0.0
      %4030 = vmatpush.msra.mxu0 0.0
      %4031 = vmatpush.msra.mxu0 0.0
      %4032 = vmatpush.msra.mxu0 0.0
      %4033 = vmatpush.msra.mxu0 0.0
      %4034 = vmatpush.msra.mxu0 0.0
      %4035 = vmatpush.msra.mxu0 0.0
      %4036 = vmatpush.msra.mxu0 0.0
      %4037 = vmatpush.msra.mxu0 %v3900
      %4038 = vmatmul.f32.gmra.mxu0 %v3888
      %v4039 = vpop.f32.mrf.mxu0
      %v4040 = vadd.f32 0.0, %v4039
      %4041 = vdwg.mxu0
      %4042 = vmatpush.msra.mxu0 0.0
      %4043 = vmatpush.msra.mxu0 0.0
      %4044 = vmatpush.msra.mxu0 0.0
      %4045 = vmatpush.msra.mxu0 0.0
      %4046 = vmatpush.msra.mxu0 0.0
      %4047 = vmatpush.msra.mxu0 0.0
      %4048 = vmatpush.msra.mxu0 0.0
      %4049 = vmatpush.msra.mxu0 0.0
      %4050 = vmatpush.msra.mxu0 0.0
      %4051 = vmatpush.msra.mxu0 0.0
      %4052 = vmatpush.msra.mxu0 0.0
      %4053 = vmatpush.msra.mxu0 0.0
      %4054 = vmatpush.msra.mxu0 0.0
      %4055 = vmatpush.msra.mxu0 0.0
      %4056 = vmatpush.msra.mxu0 0.0
      %4057 = vmatpush.msra.mxu0 %v3902
      %4058 = vmatmul.f32.gmra.mxu0 %v3888
      %v4059 = vpop.f32.mrf.mxu0
      %v4060 = vadd.f32 0.0, %v4059
      %4061 = vdwg.mxu0
      %4062 = vmatpush.msra.mxu0 0.0
      %4063 = vmatpush.msra.mxu0 0.0
      %4064 = vmatpush.msra.mxu0 0.0
      %4065 = vmatpush.msra.mxu0 0.0
      %4066 = vmatpush.msra.mxu0 0.0
      %4067 = vmatpush.msra.mxu0 0.0
      %4068 = vmatpush.msra.mxu0 0.0
      %4069 = vmatpush.msra.mxu0 0.0
      %4070 = vmatpush.msra.mxu0 0.0
      %4071 = vmatpush.msra.mxu0 0.0
      %4072 = vmatpush.msra.mxu0 0.0
      %4073 = vmatpush.msra.mxu0 0.0
      %4074 = vmatpush.msra.mxu0 0.0
      %4075 = vmatpush.msra.mxu0 0.0
      %4076 = vmatpush.msra.mxu0 0.0
      %4077 = vmatpush.msra.mxu0 %v3904
      %4078 = vmatmul.f32.gmra.mxu0 %v3888
      %v4079 = vpop.f32.mrf.mxu0
      %v4080 = vadd.f32 0.0, %v4079
      %4081 = vdwg.mxu0
      %4082 = vmatpush.msra.mxu0 0.0
      %4083 = vmatpush.msra.mxu0 0.0
      %4084 = vmatpush.msra.mxu0 0.0
      %4085 = vmatpush.msra.mxu0 0.0
      %4086 = vmatpush.msra.mxu0 0.0
      %4087 = vmatpush.msra.mxu0 0.0
      %4088 = vmatpush.msra.mxu0 0.0
      %4089 = vmatpush.msra.mxu0 0.0
      %4090 = vmatpush.msra.mxu0 0.0
      %4091 = vmatpush.msra.mxu0 0.0
      %4092 = vmatpush.msra.mxu0 0.0
      %4093 = vmatpush.msra.mxu0 0.0
      %4094 = vmatpush.msra.mxu0 0.0
      %4095 = vmatpush.msra.mxu0 0.0
      %4096 = vmatpush.msra.mxu0 0.0
      %4097 = vmatpush.msra.mxu0 %v3906
      %4098 = vmatmul.f32.gmra.mxu0 %v3888
      %v4099 = vpop.f32.mrf.mxu0
      %v4100 = vadd.f32 0.0, %v4099
      %4101 = vdwg.mxu0
      %4102 = vmatpush.msra.mxu0 0.0
      %4103 = vmatpush.msra.mxu0 0.0
      %4104 = vmatpush.msra.mxu0 0.0
      %4105 = vmatpush.msra.mxu0 0.0
      %4106 = vmatpush.msra.mxu0 0.0
      %4107 = vmatpush.msra.mxu0 0.0
      %4108 = vmatpush.msra.mxu0 0.0
      %4109 = vmatpush.msra.mxu0 0.0
      %4110 = vmatpush.msra.mxu0 0.0
      %4111 = vmatpush.msra.mxu0 0.0
      %4112 = vmatpush.msra.mxu0 0.0
      %4113 = vmatpush.msra.mxu0 0.0
      %4114 = vmatpush.msra.mxu0 0.0
      %4115 = vmatpush.msra.mxu0 0.0
      %4116 = vmatpush.msra.mxu0 0.0
      %4117 = vmatpush.msra.mxu0 %v3908
      %4118 = vmatmul.f32.gmra.mxu0 %v3888
      %v4119 = vpop.f32.mrf.mxu0
      %v4120 = vadd.f32 0.0, %v4119
      %4121 = vdwg.mxu0
      %4122 = vmatpush.msra.mxu0 0.0
      %4123 = vmatpush.msra.mxu0 0.0
      %4124 = vmatpush.msra.mxu0 0.0
      %4125 = vmatpush.msra.mxu0 0.0
      %4126 = vmatpush.msra.mxu0 0.0
      %4127 = vmatpush.msra.mxu0 0.0
      %4128 = vmatpush.msra.mxu0 0.0
      %4129 = vmatpush.msra.mxu0 0.0
      %4130 = vmatpush.msra.mxu0 0.0
      %4131 = vmatpush.msra.mxu0 0.0
      %4132 = vmatpush.msra.mxu0 0.0
      %4133 = vmatpush.msra.mxu0 0.0
      %4134 = vmatpush.msra.mxu0 0.0
      %4135 = vmatpush.msra.mxu0 0.0
      %4136 = vmatpush.msra.mxu0 0.0
      %4137 = vmatpush.msra.mxu0 %v3910
      %4138 = vmatmul.f32.gmra.mxu0 %v3888
      %v4139 = vpop.f32.mrf.mxu0
      %v4140 = vadd.f32 0.0, %v4139
      %4141 = vdwg.mxu0
      %4142 = vmatpush.msra.mxu0 0.0
      %4143 = vmatpush.msra.mxu0 0.0
      %4144 = vmatpush.msra.mxu0 0.0
      %4145 = vmatpush.msra.mxu0 0.0
      %4146 = vmatpush.msra.mxu0 0.0
      %4147 = vmatpush.msra.mxu0 0.0
      %4148 = vmatpush.msra.mxu0 0.0
      %4149 = vmatpush.msra.mxu0 0.0
      %4150 = vmatpush.msra.mxu0 0.0
      %4151 = vmatpush.msra.mxu0 0.0
      %4152 = vmatpush.msra.mxu0 0.0
      %4153 = vmatpush.msra.mxu0 0.0
      %4154 = vmatpush.msra.mxu0 0.0
      %4155 = vmatpush.msra.mxu0 0.0
      %4156 = vmatpush.msra.mxu0 0.0
      %4157 = vmatpush.msra.mxu0 %v3912
      %4158 = vmatmul.f32.gmra.mxu0 %v3888
      %v4159 = vpop.f32.mrf.mxu0
      %v4160 = vadd.f32 0.0, %v4159
      %4161 = vdwg.mxu0
      %4162 = vmatpush.msra.mxu0 0.0
      %4163 = vmatpush.msra.mxu0 0.0
      %4164 = vmatpush.msra.mxu0 0.0
      %4165 = vmatpush.msra.mxu0 0.0
      %4166 = vmatpush.msra.mxu0 0.0
      %4167 = vmatpush.msra.mxu0 0.0
      %4168 = vmatpush.msra.mxu0 0.0
      %4169 = vmatpush.msra.mxu0 0.0
      %4170 = vmatpush.msra.mxu0 0.0
      %4171 = vmatpush.msra.mxu0 0.0
      %4172 = vmatpush.msra.mxu0 0.0
      %4173 = vmatpush.msra.mxu0 0.0
      %4174 = vmatpush.msra.mxu0 0.0
      %4175 = vmatpush.msra.mxu0 0.0
      %4176 = vmatpush.msra.mxu0 0.0
      %4177 = vmatpush.msra.mxu0 %v3914
      %4178 = vmatmul.f32.gmra.mxu0 %v3888
      %v4179 = vpop.f32.mrf.mxu0
      %v4180 = vadd.f32 0.0, %v4179
      %4181 = vdwg.mxu0
      %4182 = vmatpush.msra.mxu0 0.0
      %4183 = vmatpush.msra.mxu0 0.0
      %4184 = vmatpush.msra.mxu0 0.0
      %4185 = vmatpush.msra.mxu0 0.0
      %4186 = vmatpush.msra.mxu0 0.0
      %4187 = vmatpush.msra.mxu0 0.0
      %4188 = vmatpush.msra.mxu0 0.0
      %4189 = vmatpush.msra.mxu0 0.0
      %4190 = vmatpush.msra.mxu0 0.0
      %4191 = vmatpush.msra.mxu0 0.0
      %4192 = vmatpush.msra.mxu0 0.0
      %4193 = vmatpush.msra.mxu0 0.0
      %4194 = vmatpush.msra.mxu0 0.0
      %4195 = vmatpush.msra.mxu0 0.0
      %4196 = vmatpush.msra.mxu0 0.0
      %4197 = vmatpush.msra.mxu0 %v3916
      %4198 = vmatmul.f32.gmra.mxu0 %v3888
      %v4199 = vpop.f32.mrf.mxu0
      %v4200 = vadd.f32 0.0, %v4199
      %4201 = vdwg.mxu0
      %4202 = vmatpush.msra.mxu0 0.0
      %4203 = vmatpush.msra.mxu0 0.0
      %4204 = vmatpush.msra.mxu0 0.0
      %4205 = vmatpush.msra.mxu0 0.0
      %4206 = vmatpush.msra.mxu0 0.0
      %4207 = vmatpush.msra.mxu0 0.0
      %4208 = vmatpush.msra.mxu0 0.0
      %4209 = vmatpush.msra.mxu0 0.0
      %4210 = vmatpush.msra.mxu0 0.0
      %4211 = vmatpush.msra.mxu0 0.0
      %4212 = vmatpush.msra.mxu0 0.0
      %4213 = vmatpush.msra.mxu0 0.0
      %4214 = vmatpush.msra.mxu0 0.0
      %4215 = vmatpush.msra.mxu0 0.0
      %4216 = vmatpush.msra.mxu0 0.0
      %4217 = vmatpush.msra.mxu0 %v3918
      %4218 = vmatmul.f32.gmra.mxu0 %v3888
      %v4219 = vpop.f32.mrf.mxu0
      %v4220 = vadd.f32 0.0, %v4219
      %4221 = vdwg.mxu0
      %4222 = vmatpush.msra.mxu0 0.0
      %4223 = vmatpush.msra.mxu0 0.0
      %4224 = vmatpush.msra.mxu0 0.0
      %4225 = vmatpush.msra.mxu0 0.0
      %4226 = vmatpush.msra.mxu0 0.0
      %4227 = vmatpush.msra.mxu0 0.0
      %4228 = vmatpush.msra.mxu0 0.0
      %4229 = vmatpush.msra.mxu0 0.0
      %4230 = vmatpush.msra.mxu0 0.0
      %4231 = vmatpush.msra.mxu0 0.0
      %4232 = vmatpush.msra.mxu0 0.0
      %4233 = vmatpush.msra.mxu0 0.0
      %4234 = vmatpush.msra.mxu0 0.0
      %4235 = vmatpush.msra.mxu0 0.0
      %4236 = vmatpush.msra.mxu0 0.0
      %4237 = vmatpush.msra.mxu0 %v3920
      %4238 = vmatmul.f32.gmra.mxu0 %v3888
      %v4239 = vpop.f32.mrf.mxu0
      %v4240 = vadd.f32 0.0, %v4239
      %4241 = vdwg.mxu0
      %v4242 = vadd.f32 %v3772, %v3940
      %v4243 = vadd.f32 %v3773, %v3960
      %v4244 = vadd.f32 %v3774, %v3980
      %v4245 = vadd.f32 %v3775, %v4000
      %v4246 = vadd.f32 %v3776, %v4020
      %v4247 = vadd.f32 %v3777, %v4040
      %v4248 = vadd.f32 %v3778, %v4060
      %v4249 = vadd.f32 %v3779, %v4080
      %v4250 = vadd.f32 %v3780, %v4100
      %v4251 = vadd.f32 %v3781, %v4120
      %v4252 = vadd.f32 %v3782, %v4140
      %v4253 = vadd.f32 %v3783, %v4160
      %v4254 = vadd.f32 %v3784, %v4180
      %v4255 = vadd.f32 %v3785, %v4200
      %v4256 = vadd.f32 %v3786, %v4220
      %v4257 = vadd.f32 %v3787, %v4240
      %v4258 = vld [vmem:[%s2] sm:$0xff]
      %4260 = vset.pattern.permute.xlu0 0
      %4261 = vperm.xlu0 %4260, %v4258
      %v4262 = vpop.permute.xlu0 %4261
      %v4264 = vmul.f32 %v4242, %v4262
      %v4265 = vmul.f32 %v4243, %v4262
      %v4266 = vmul.f32 %v4244, %v4262
      %v4267 = vmul.f32 %v4245, %v4262
      %v4268 = vmul.f32 %v4246, %v4262
      %v4269 = vmul.f32 %v4247, %v4262
      %v4270 = vmul.f32 %v4248, %v4262
      %v4271 = vmul.f32 %v4249, %v4262
      %v4272 = vmul.f32 %v4250, %v4262
      %v4273 = vmul.f32 %v4251, %v4262
      %v4274 = vmul.f32 %v4252, %v4262
      %v4275 = vmul.f32 %v4253, %v4262
      %v4276 = vmul.f32 %v4254, %v4262
      %v4277 = vmul.f32 %v4255, %v4262
      %v4278 = vmul.f32 %v4256, %v4262
      %v4279 = vmul.f32 %v4257, %v4262
      %v4280 = vld [vmem:[%s3] sm:$0xff]
      %4282 = vset.pattern.permute.xlu0 0
      %4283 = vperm.xlu0 %4282, %v4280
      %v4284 = vpop.permute.xlu0 %4283
      %v4286 = vadd.f32 %v4264, %v4284
      %v4287 = vadd.f32 %v4265, %v4284
      %v4288 = vadd.f32 %v4266, %v4284
      %v4289 = vadd.f32 %v4267, %v4284
      %v4290 = vadd.f32 %v4268, %v4284
      %v4291 = vadd.f32 %v4269, %v4284
      %v4292 = vadd.f32 %v4270, %v4284
      %v4293 = vadd.f32 %v4271, %v4284
      %v4294 = vadd.f32 %v4272, %v4284
      %v4295 = vadd.f32 %v4273, %v4284
      %v4296 = vadd.f32 %v4274, %v4284
      %v4297 = vadd.f32 %v4275, %v4284
      %v4298 = vadd.f32 %v4276, %v4284
      %v4299 = vadd.f32 %v4277, %v4284
      %v4300 = vadd.f32 %v4278, %v4284
      %v4301 = vadd.f32 %v4279, %v4284
      %4302 = vst [vmem:[%s233] sm:$0xff] %v4286
      %4303 = vst [vmem:[%s233 + $0x8] sm:$0xff] %v4287
      %4304 = vst [vmem:[%s233 + $0x10] sm:$0xff] %v4288
      %4305 = vst [vmem:[%s233 + $0x18] sm:$0xff] %v4289
      %4306 = vst [vmem:[%s233 + $0x20] sm:$0xff] %v4290
      %4307 = vst [vmem:[%s233 + $0x28] sm:$0xff] %v4291
      %4308 = vst [vmem:[%s233 + $0x30] sm:$0xff] %v4292
      %4309 = vst [vmem:[%s233 + $0x38] sm:$0xff] %v4293
      %4310 = vst [vmem:[%s233 + $0x40] sm:$0xff] %v4294
      %4311 = vst [vmem:[%s233 + $0x48] sm:$0xff] %v4295
      %4312 = vst [vmem:[%s233 + $0x50] sm:$0xff] %v4296
      %4313 = vst [vmem:[%s233 + $0x58] sm:$0xff] %v4297
      %4314 = vst [vmem:[%s233 + $0x60] sm:$0xff] %v4298
      %4315 = vst [vmem:[%s233 + $0x68] sm:$0xff] %v4299
      %4316 = vst [vmem:[%s233 + $0x70] sm:$0xff] %v4300
      %4317 = vst [vmem:[%s233 + $0x78] sm:$0xff] %v4301
      %s4318 = smul.u32 16, %s20
      %p4319 = scmp.lt.s32.totalorder %s19, 1
      %s4320 = scalar_select %p4319, %s19, 1
      %p4321 = scmp.lt.s32.totalorder %s4318, 15
      %s4322 = scalar_select %p4321, %s4318, 15
      %s4323 = smul.addr %s4320, 16
      %s4324 = sadd.s32 %s4322, %s4323
      %s4325 = smul.addr %s4324, 8
      %s4326 = scalar_lea.vmem %s4, %s4325
      // Predicated region
      $region37: #{conv_block_forward.3} parent=35 // pred_check
        %p4327 = pneg %p138
      $region38: #{conv_block_forward.3} parent=35 // pred_check_branch
        %4329 = sbr.rel (%p4327) target = $region40
      $region39: #{conv_block_forward.3} parent=35 // pred_region
        %s4330 = smul.u32 16, %s20
      $region40: #{conv_block_forward.3} parent=35 // pred_fallthru
        _
    $region36: #{conv_block_forward.3} parent=5 // pred_fallthru
      _
    %p4331 = scmp.le.s32.totalorder 2, %s10
    // Predicated region
    $region41: #{conv_block_forward.3} parent=5 // pred_check
      %p4332 = pneg %p4331
    $region42: #{conv_block_forward.3} parent=5 // pred_check_branch
      %4334 = sbr.rel (%p4332) target = $region44
    $region43: #{conv_block_forward.3} parent=5 // pred_region
      %s4335 = ssub.s32 %s10, 2
      // Predicated region
      $region45: #{conv_block_forward.3} parent=43 // pred_check
        %p4336 = pneg %p144
      $region46: #{conv_block_forward.3} parent=43 // pred_check_branch
        %4338 = sbr.rel (%p4336) target = $region48
      $region47: #{conv_block_forward.3} parent=43 // pred_region
        %s4339 = smul.u32 16, %s22
        %p4340 = scmp.lt.s32.totalorder %s21, 1
        %s4341 = scalar_select %p4340, %s21, 1
        %p4342 = scmp.lt.s32.totalorder %s4339, 15
        %s4343 = scalar_select %p4342, %s4339, 15
        %s4344 = smul.addr %s4341, 16
        %s4345 = sadd.s32 %s4343, %s4344
        %s4346 = smul.addr %s4345, 8
        %s4347 = scalar_lea.vmem %s4, %s4346
      $region48: #{conv_block_forward.3} parent=43 // pred_fallthru
        _
    $region44: #{conv_block_forward.3} parent=5 // pred_fallthru
      _
  $region6: #{conv_block_forward.3} parent=0 // loop_footer
    %s14 = sadd.s32 1, %s10
  $region7: #{conv_block_forward.3} parent=0 // loop_footer_branch
    %9 = sbr.rel target = $region3
  $region8: #{conv_block_forward.3} parent=0 // loop_exit
    _

</llo_original>
